<compile_context>
chip_gen: v7x
topology: tpu7x:2x2x1
jax: 0.10.0
libtpu: 0.0.40
codegen_flags: <defaults>
</compile_context>

<pallas_src>
import functools
import math

import jax
import jax.numpy as jnp
from jax.experimental import pallas as pl
from jax.experimental.pallas import tpu as pltpu


MATMUL_DTYPE = jnp.bfloat16      # MXU operand dtype (accumulation stays f32)
STREAM_DTYPE = jnp.bfloat16      # HBM dtype of the edge-attr / adjacency streams
DST_TILE_TARGET = 128            # dst-node tile for the fused aggregation kernel
ROW_TILE_TARGET = 512            # row tile for per-node linear / MLP kernels


def _vmem_limit_bytes():
    """~75% of physical VMEM: ~96 MiB on v5e/v6e, ~48 MiB on v7x (or unknown)."""
    cap = 64 * 1024 * 1024                      # conservative default (v7x physical)
    try:
        info = pltpu.get_tpu_info()
        cap = int(getattr(info, "vmem_capacity_bytes", cap))
    except Exception:
        pass
    return min((cap * 3) // 4, 96 * 1024 * 1024)


VMEM_LIMIT = _vmem_limit_bytes()
AGGR_TEMP_BUDGET = VMEM_LIMIT // 3   # budget for live [Td, Ts, D] f32 temporaries


def _mosaic(sem):
    return pltpu.CompilerParams(dimension_semantics=sem,
                                vmem_limit_bytes=VMEM_LIMIT)


def _pick_tile(dim, target):
    """Largest tile <= target that is a multiple of 8 and divides dim (else dim)."""
    if dim <= target:
        return dim
    t = (target // 8) * 8
    while t >= 8:
        if dim % t == 0:
            return t
        t -= 8
    return dim


def _row_tile(m):
    """Row tile for the per-node kernels; keeps >= 2 grid steps when possible
    so v7x's second TensorCore gets work (irrelevant on v5e/v6e)."""
    if m < 16:
        return m
    half = max(8, ((m // 2) // 8) * 8)
    return _pick_tile(m, min(ROW_TILE_TARGET, half))


def _aggr_tiles(n, d):
    """dst/src tiles for the aggregation kernel, derived from the VMEM budget
    (~5 live f32 [Td, Ts, D] temporaries per block)."""
    td_target = DST_TILE_TARGET if AGGR_TEMP_BUDGET >= (24 << 20) else DST_TILE_TARGET // 2
    td = _pick_tile(n, td_target)
    per_src_col = 5 * td * d * 4
    ts_target = max(8, AGGR_TEMP_BUDGET // max(per_src_col, 1))
    ts = _pick_tile(n, max(8, min(n, ts_target)))
    return td, ts


# ----------------------------------------------------------------------------
# Pallas kernels
# ----------------------------------------------------------------------------
def _proj_kernel(x_ref, w_ref, o_ref):
    # GENConv lin_src/lin_dst projection (no bias), bf16 weight pre-cast in HBM.
    o_ref[...] = jnp.dot(x_ref[...].astype(MATMUL_DTYPE), w_ref[...],
                         preferred_element_type=jnp.float32)


def pallas_linear(x, w):
    M, K = x.shape
    N = w.shape[1]
    T = _row_tile(M)
    return pl.pallas_call(
        _proj_kernel,
        out_shape=jax.ShapeDtypeStruct((M, N), jnp.float32),
        grid=(M // T,),
        in_specs=[pl.BlockSpec((T, K), lambda i: (i, 0)),
                  pl.BlockSpec((K, N), lambda i: (0, 0))],
        out_specs=pl.BlockSpec((T, N), lambda i: (i, 0)),
        compiler_params=_mosaic(("parallel",)),
    )(x, w)


def _mlp_kernel(*refs, has_res, relu_out, has_ln, has_score):
    """GENConv MLP: Linear -> BN(eval identity) -> ReLU -> Linear, fused with
    optional residual add, optional output ReLU (ReguBlock epilogue), optional
    LayerNorm+ReLU second output (next skip's pre-activation) and optional TopK
    score tanh(y @ w_n) third output."""
    it = iter(refs)
    x_ref, w1_ref, b1_ref, w2_ref, b2_ref = (next(it) for _ in range(5))
    res_ref = next(it) if has_res else None
    lng_ref = next(it) if has_ln else None
    lnb_ref = next(it) if has_ln else None
    sw_ref = next(it) if has_score else None
    y_ref = next(it)
    ln_ref = next(it) if has_ln else None
    sc_ref = next(it) if has_score else None

    h = jnp.dot(x_ref[...].astype(MATMUL_DTYPE), w1_ref[...],
                preferred_element_type=jnp.float32) + b1_ref[...]
    h = jnp.maximum(h, 0.0)
    y = jnp.dot(h.astype(MATMUL_DTYPE), w2_ref[...],
                preferred_element_type=jnp.float32) + b2_ref[...]
    if has_res:
        y = y + res_ref[...]
    if relu_out:
        y = jnp.maximum(y, 0.0)
    y_ref[...] = y
    if has_ln:
        mu = jnp.mean(y, axis=-1, keepdims=True)
        var = jnp.mean((y - mu) ** 2, axis=-1, keepdims=True)
        hln = (y - mu) * jax.lax.rsqrt(var + 1e-5) * lng_ref[...] + lnb_ref[...]
        ln_ref[...] = jnp.maximum(hln, 0.0)
    if has_score:
        sc_ref[...] = jnp.tanh(jnp.sum(y * sw_ref[...], axis=-1, keepdims=True))


def pallas_gen_mlp(x, w1, b1, w2, b2, res=None, relu_out=False, ln=None, score_w=None):
    M, D = x.shape
    H = w1.shape[1]
    N = w2.shape[1]
    T = _row_tile(M)
    has_res = res is not None
    has_ln = ln is not None
    has_score = score_w is not None

    in_specs = [
        pl.BlockSpec((T, D), lambda i: (i, 0)),
        pl.BlockSpec((D, H), lambda i: (0, 0)),
        pl.BlockSpec((1, H), lambda i: (0, 0)),
        pl.BlockSpec((H, N), lambda i: (0, 0)),
        pl.BlockSpec((1, N), lambda i: (0, 0)),
    ]
    args = [x, w1, b1, w2, b2]
    if has_res:
        in_specs.append(pl.BlockSpec((T, N), lambda i: (i, 0)))
        args.append(res)
    if has_ln:
        in_specs += [pl.BlockSpec((1, N), lambda i: (0, 0)),
                     pl.BlockSpec((1, N), lambda i: (0, 0))]
        args += [ln[0], ln[1]]
    if has_score:
        in_specs.append(pl.BlockSpec((1, N), lambda i: (0, 0)))
        args.append(score_w)

    out_shapes = [jax.ShapeDtypeStruct((M, N), jnp.float32)]
    out_specs = [pl.BlockSpec((T, N), lambda i: (i, 0))]
    if has_ln:
        out_shapes.append(jax.ShapeDtypeStruct((M, N), jnp.float32))
        out_specs.append(pl.BlockSpec((T, N), lambda i: (i, 0)))
    if has_score:
        out_shapes.append(jax.ShapeDtypeStruct((M, 1), jnp.float32))
        out_specs.append(pl.BlockSpec((T, 1), lambda i: (i, 0)))

    outs = pl.pallas_call(
        functools.partial(_mlp_kernel, has_res=has_res, relu_out=relu_out,
                          has_ln=has_ln, has_score=has_score),
        out_shape=tuple(out_shapes),
        grid=(M // T,),
        in_specs=in_specs,
        out_specs=tuple(out_specs),
        compiler_params=_mosaic(("parallel",)),
    )(*args)
    outs = list(outs) if isinstance(outs, (tuple, list)) else [outs]
    y = outs.pop(0)
    ln_out = outs.pop(0) if has_ln else None
    score = outs.pop(0) if has_score else None
    return y, ln_out, score


def _gen_aggr_kernel(xs_ref, xd_ref, ea_ref, adj_ref, we_ref, be_ref, t_ref, o_ref,
                     mx_sc, l_sc, acc_sc, deg_sc):
    """Fused GENConv aggregation for one (graph, dst-tile, src-chunk) block:
    edge-encoder Linear + message + ONLINE (flash-style) masked softmax with a
    learnable temperature + root add.  Scratch accumulators carry the running
    max / denominator / weighted sum / row degree across src chunks."""
    s = pl.program_id(2)

    @pl.when(s == 0)
    def _():
        mx_sc[...] = jnp.full_like(mx_sc, -jnp.inf)
        l_sc[...] = jnp.zeros_like(l_sc)
        acc_sc[...] = jnp.zeros_like(acc_sc)
        deg_sc[...] = jnp.zeros_like(deg_sc)

    xs = xs_ref[0] + be_ref[...]                   # [Ts, D] src feats + edge-enc bias
    ea = ea_ref[0].astype(jnp.float32)             # [E, Td, Ts] (bf16 in HBM)
    adj = adj_ref[0].astype(jnp.float32)           # [Td, Ts]   (bf16 in HBM)
    we = we_ref[...]                               # [E, D]
    t = t_ref[0, 0]                                # scalar temperature (SMEM)

    # edge embedding e[i, j, :] = sum_k ea[k, i, j] * we[k, :]   (E is tiny)
    E = we.shape[0]
    e = ea[0][:, :, None] * we[0, :][None, None, :]
    for k in range(1, E):
        e = e + ea[k][:, :, None] * we[k, :][None, None, :]

    m = jnp.maximum(xs[None, :, :] + e, 0.0) + 1e-7          # [Td, Ts, D] messages
    bias = (adj - 1.0) * 1e30                                 # additive mask 0 / -1e30
    logits = m * t + bias[:, :, None]

    mx_new = jnp.maximum(mx_sc[...], jnp.max(logits, axis=1))   # [Td, D]
    alpha = jnp.exp(mx_sc[...] - mx_new)
    p = jnp.exp(logits - mx_new[:, None, :])                    # masked entries -> ~0
    l_sc[...] = alpha * l_sc[...] + jnp.sum(p, axis=1)
    acc_sc[...] = alpha * acc_sc[...] + jnp.sum(p * m, axis=1)
    mx_sc[...] = mx_new
    deg_sc[...] = deg_sc[...] + jnp.sum(adj, axis=1, keepdims=True)

    @pl.when(s == pl.num_programs(2) - 1)
    def _():
        inv = pl.reciprocal(jnp.maximum(l_sc[...], 1e-16), approx=True)
        aggr = acc_sc[...] * inv
        aggr = jnp.where(deg_sc[...] > 0.0, aggr, 0.0)          # isolated dst nodes
        o_ref[0] = aggr + xd_ref[0]                             # GENConv root add


def pallas_gen_aggregate(x_src, x_dst, ea_t, adj, w_edge, b_edge, t):
    B, n, D = x_src.shape
    E = ea_t.shape[1]
    Td, Ts = _aggr_tiles(n, D)
    t_arr = jnp.asarray(t, jnp.float32).reshape(1, 1)
    cost = pl.CostEstimate(
        flops=int((2 * E + 10) * B * n * n * D),
        transcendentals=int(B * n * n * D),
        bytes_accessed=int(2 * B * n * n * (E + 1)             # bf16 ea + adj stream
                           + 4 * B * n * D * (n // Td + 2)     # x_src re-read per dst tile
                           + 4 * (E + 1) * D))
    return pl.pallas_call(
        _gen_aggr_kernel,
        out_shape=jax.ShapeDtypeStruct((B, n, D), jnp.float32),
        grid=(B, n // Td, n // Ts),
        in_specs=[
            pl.BlockSpec((1, Ts, D), lambda b, d, s: (b, s, 0)),        # src chunk
            pl.BlockSpec((1, Td, D), lambda b, d, s: (b, d, 0)),        # dst tile (root)
            pl.BlockSpec((1, E, Td, Ts), lambda b, d, s: (b, 0, d, s)),  # edge attrs
            pl.BlockSpec((1, Td, Ts), lambda b, d, s: (b, d, s)),       # adjacency mask
            pl.BlockSpec((E, D), lambda b, d, s: (0, 0)),               # edge enc. weight
            pl.BlockSpec((1, D), lambda b, d, s: (0, 0)),               # edge enc. bias
            pl.BlockSpec(memory_space=pltpu.MemorySpace.SMEM),          # temperature
        ],
        out_specs=pl.BlockSpec((1, Td, D), lambda b, d, s: (b, d, 0)),
        scratch_shapes=[pltpu.VMEM((Td, D), jnp.float32),   # running max
                        pltpu.VMEM((Td, D), jnp.float32),   # running denom
                        pltpu.VMEM((Td, D), jnp.float32),   # running weighted sum
                        pltpu.VMEM((Td, 1), jnp.float32)],  # row degree
        compiler_params=_mosaic(("parallel", "parallel", "arbitrary")),
        cost_estimate=cost,
    )(x_src, x_dst, ea_t, adj, w_edge, b_edge, t_arr)


def _pool_head_kernel(x_ref, *refs):
    """global_mean_pool + the reversed line_layers (Linear+ReLU each), fused."""
    o_ref = refs[-1]
    wbs = refs[:-1]
    h = jnp.mean(x_ref[...], axis=1)                      # [B, D]
    for i in range(0, len(wbs), 2):
        w = wbs[i][...]                                   # bf16 (pre-cast in HBM)
        b = wbs[i + 1][...]
        h = jnp.maximum(jnp.dot(h.astype(MATMUL_DTYPE), w,
                                preferred_element_type=jnp.float32) + b, 0.0)
    o_ref[...] = h


def pallas_pool_head(x, weights_and_biases):
    B, k, D = x.shape
    out_dim = weights_and_biases[-2].shape[1]
    in_specs = [pl.BlockSpec((B, k, D), lambda i: (0, 0, 0))]
    for arr in weights_and_biases:
        r, c = arr.shape
        in_specs.append(pl.BlockSpec((r, c), lambda i: (0, 0)))
    return pl.pallas_call(
        _pool_head_kernel,
        out_shape=jax.ShapeDtypeStruct((B, out_dim), jnp.float32),
        grid=(1,),
        in_specs=in_specs,
        out_specs=pl.BlockSpec((B, out_dim), lambda i: (0, 0)),
        compiler_params=_mosaic(("arbitrary",)),
    )(x, *weights_and_biases)


# ----------------------------------------------------------------------------
# Model pieces (glue around the Pallas kernels)
# ----------------------------------------------------------------------------
def gen_conv(x, adj, ea_t, p, residual=None, relu_out=False, ln=None, score_w=None):
    """GENConv(in->out): optional src/dst projection (single fused matmul with a
    pre-concatenated bf16 weight), fused online-softmax aggregation + root add,
    fused 2-layer MLP with optional residual / ReguBlock ReLU / next-layer
    LayerNorm+ReLU / TopK-score epilogues."""
    B, n, din = x.shape
    dout = p["w_edge"].shape[1]
    xf = x.reshape(B * n, din)

    if p["w_cat"] is not None:
        proj = pallas_linear(xf, p["w_cat"])                  # [B*n, 2*dout]
        x_src = proj[:, :dout].reshape(B, n, dout)
        x_dst = proj[:, dout:].reshape(B, n, dout)
    else:
        x_src = x_dst = x

    h = pallas_gen_aggregate(x_src, x_dst, ea_t, adj, p["w_edge"], p["b_edge"], p["t"])

    res_f = residual.reshape(B * n, dout) if residual is not None else None
    y, h_ln, score = pallas_gen_mlp(h.reshape(B * n, dout), p["w1"], p["b1"],
                                    p["w2"], p["b2"], res=res_f, relu_out=relu_out,
                                    ln=ln, score_w=score_w)
    y = y.reshape(B, n, dout)
    h_ln = h_ln.reshape(B, n, dout) if h_ln is not None else None
    score = score.reshape(B, n) if score is not None else None
    return y, h_ln, score


def gen_conv_block_level(x, adj, ea_t, lvl):
    """GENConvBlock ('res+' skips) + ReguBlock, with LayerNorm+ReLU and the TopK
    score fused into the epilogue of the relevant GENConv MLP kernels."""
    skips = lvl["skips"]
    n_sk = len(skips)
    is_last = (n_sk == 0)
    y, h, score = gen_conv(x, adj, ea_t, lvl["conv_in"],
                           relu_out=is_last,
                           ln=(skips[0]["ln"] if n_sk > 0 else None),
                           score_w=(lvl["score_w"] if is_last else None))
    x = y
    for si, sp in enumerate(skips):
        last = (si == n_sk - 1)
        next_ln = skips[si + 1]["ln"] if not last else None
        y, h, score = gen_conv(h, adj, ea_t, sp["conv"], residual=x,
                               relu_out=last, ln=next_ln,
                               score_w=(lvl["score_w"] if last else None))
        x = y
    return x, score


def topk_pool(x, adj, ea_t, ratio, score):
    """TopKPooling using the score fused into the previous MLP kernel."""
    B, n, D = x.shape
    k = int(math.ceil(ratio * n))
    # TODO(synk): per-graph top-k selection (sort) and the index gathers have no
    # clean Pallas equivalent here; kept in plain XLA.
    top_s, idx = jax.lax.top_k(score, k)
    x_new = jnp.take_along_axis(x, idx[:, :, None], axis=1) * top_s[:, :, None]
    adj1 = jnp.take_along_axis(adj, idx[:, :, None], axis=1)
    adj_new = jnp.take_along_axis(adj1, idx[:, None, :], axis=2)
    ea1 = jnp.take_along_axis(ea_t, idx[:, None, :, None], axis=2)
    ea_new = jnp.take_along_axis(ea1, idx[:, None, None, :], axis=3)
    return x_new, adj_new, ea_new


def dyresgen_forward(params, x, adj, ea, pool_ratio):
    # ea arrives as [B, n_dst, n_src, edge_dim]; transpose once so aggregation
    # DMAs stream with (dst, src) on (sublane, lane); store the dominant
    # streams (edge attrs + adjacency) in bf16 to halve HBM traffic.
    ea_t = jnp.transpose(ea, (0, 3, 1, 2)).astype(STREAM_DTYPE)
    adj_b = adj.astype(STREAM_DTYPE)
    for lvl in params:
        x, score = gen_conv_block_level(x, adj_b, ea_t, lvl)
        x, adj_b, ea_t = topk_pool(x, adj_b, ea_t, pool_ratio, score)
    # fused global_mean_pool + reversed line_layers (tiny shapes -> one kernel)
    wbs = []
    for lvl in params[::-1]:
        wbs.extend([lvl["line"]["w"], lvl["line"]["b"]])
    return pallas_pool_head(x, wbs)


# ----------------------------------------------------------------------------
# Deterministic parameter init (weights pre-cast / pre-fused for the kernels)
# ----------------------------------------------------------------------------
def _uniform(key, shape, fan_in):
    s = 1.0 / math.sqrt(fan_in)
    return jax.random.uniform(key, shape, jnp.float32, -s, s)


def init_genconv(key, din, dout, edge_dim):
    ks = jax.random.split(key, 8)
    if din != dout:
        w_src = _uniform(ks[0], (din, dout), din)
        w_dst = _uniform(ks[1], (din, dout), din)
        w_cat = jnp.concatenate([w_src, w_dst], axis=1).astype(MATMUL_DTYPE)
    else:
        w_cat = None
    return {
        "w_cat": w_cat,                                         # pre-concat, bf16
        "w_edge": _uniform(ks[2], (edge_dim, dout), edge_dim),  # tiny, stays f32
        "b_edge": _uniform(ks[3], (1, dout), edge_dim),
        "t": jnp.float32(1.0),                                  # learnable temperature
        "w1": _uniform(ks[4], (dout, 2 * dout), dout).astype(MATMUL_DTYPE),
        "b1": _uniform(ks[5], (1, 2 * dout), dout),
        "w2": _uniform(ks[6], (2 * dout, dout), 2 * dout).astype(MATMUL_DTYPE),
        "b2": _uniform(ks[7], (1, dout), 2 * dout),
    }


def init_model(key, input_dim, hidden_dim, output_dim, n_skip_layers, edge_dim):
    levels = []
    in_d, out_d = input_dim, output_dim
    for hid in hidden_dim:
        key, k_conv, k_skip, k_pool, k_lw, k_lb = jax.random.split(key, 6)
        conv_in = init_genconv(k_conv, in_d, hid, edge_dim)
        skips = []
        for _ in range(n_skip_layers):
            k_skip, kk = jax.random.split(k_skip)
            skips.append({
                "ln": (jnp.ones((1, hid), jnp.float32),
                       jnp.zeros((1, hid), jnp.float32)),
                "conv": init_genconv(kk, hid, hid, edge_dim),
            })
        pw = _uniform(k_pool, (hid,), hid)
        levels.append({
            "conv_in": conv_in,
            "skips": skips,
            "score_w": (pw / jnp.linalg.norm(pw)).reshape(1, hid),   # pre-normalized
            "line": {"w": _uniform(k_lw, (hid, out_d), hid).astype(MATMUL_DTYPE),
                     "b": _uniform(k_lb, (1, out_d), hid)},
        })
        in_d, out_d = hid, hid
    return levels


# ----------------------------------------------------------------------------
if __name__ == "__main__":
    B, n = 2, 16
    input_dim, edge_dim = 4, 2
    hidden_dim = [32, 16]
    output_dim = 8
    n_skip_layers = 1
    pool_ratio = 0.5

    # deterministic graph data
    dkey = jax.random.PRNGKey(0)
    kx, ke, ka = jax.random.split(dkey, 3)
    x = jax.random.normal(kx, (B, n, input_dim), jnp.float32)
    rand_adj = (jax.random.uniform(ka, (B, n, n)) < 0.25).astype(jnp.float32)
    ring = jnp.roll(jnp.eye(n, dtype=jnp.float32), 1, axis=1)
    adj = jnp.clip(rand_adj + ring[None] + ring.T[None], 0.0, 1.0)
    adj = adj * (1.0 - jnp.eye(n, dtype=jnp.float32))[None]     # no self loops
    ea = jax.random.normal(ke, (B, n, n, edge_dim), jnp.float32) * adj[..., None]

    params = init_model(jax.random.PRNGKey(42), input_dim, hidden_dim,
                        output_dim, n_skip_layers, edge_dim)

    fwd = jax.jit(functools.partial(dyresgen_forward, pool_ratio=pool_ratio))
    out = jax.block_until_ready(fwd(params, x, adj, ea))
    assert out.shape == (B, output_dim), out.shape
    assert bool(jnp.all(jnp.isfinite(out)))
    print("KERNEL_OK")
</pallas_src>

<mosaic_0001>
module attributes {stable_mosaic.version = 11 : i64} {
  func.func @_proj_kernel(%arg0: i32, %arg1: memref<16x4xf32, #tpu.memory_space<vmem>>, %arg2: memref<4x64xbf16, #tpu.memory_space<vmem>>, %arg3: memref<16x64xf32, #tpu.memory_space<vmem>>) attributes {dimension_semantics = [#tpu.dimension_semantics<parallel>], iteration_bounds = array<i64: 2>, scalar_prefetch = 0 : i64, scratch_operands = 0 : i64, tpu.core_type = #tpu.core_type<tc>, window_params = [{transform_indices = @transform_0, window_bounds = array<i64: 16, 4>}, {pipeline_mode = #tpu.pipeline_mode<synchronous>, transform_indices = @transform_1, window_bounds = array<i64: 4, 64>}, {transform_indices = @transform_2, window_bounds = array<i64: 16, 64>}]} {
    %c0 = arith.constant 0 : index
    %c0_0 = arith.constant 0 : index
    %0 = vector.load %arg1[%c0, %c0_0] : memref<16x4xf32, #tpu.memory_space<vmem>>, vector<16x4xf32>
    %1 = arith.truncf %0 : vector<16x4xf32> to vector<16x4xbf16>
    %c0_1 = arith.constant 0 : index
    %c0_2 = arith.constant 0 : index
    %2 = vector.load %arg2[%c0_1, %c0_2] : memref<4x64xbf16, #tpu.memory_space<vmem>>, vector<4x64xbf16>
    %cst = arith.constant dense<0.000000e+00> : vector<16x64xf32>
    %3 = tpu.matmul %1, %2, %cst {dimension_numbers = #tpu.dot_dimension_numbers<[1], [0], [0], [1], [0, 0, 1, 1], [], []>} : vector<16x4xbf16>, vector<4x64xbf16>, vector<16x64xf32> -> vector<16x64xf32>
    %c0_3 = arith.constant 0 : index
    %c0_4 = arith.constant 0 : index
    %4 = vector.load %arg3[%c0_3, %c0_4] : memref<16x64xf32, #tpu.memory_space<vmem>>, vector<16x64xf32>
    tpu.vector_store %arg3[%c0_3, %c0_4], %3 {strides = array<i32>} : memref<16x64xf32, #tpu.memory_space<vmem>>, vector<16x64xf32>,
    return
  }
  func.func @transform_0(%arg0: i32) -> (i32, i32) {
    %c0_i32 = arith.constant 0 : i32
    %c0_i32_0 = arith.constant 0 : i32
    return %arg0, %c0_i32 : i32, i32
  }
  func.func @transform_1(%arg0: i32) -> (i32, i32) {
    %c0_i32 = arith.constant 0 : i32
    %c0_i32_0 = arith.constant 0 : i32
    %c0_i32_1 = arith.constant 0 : i32
    return %c0_i32, %c0_i32_0 : i32, i32
  }
  func.func @transform_2(%arg0: i32) -> (i32, i32) {
    %c0_i32 = arith.constant 0 : i32
    %c0_i32_0 = arith.constant 0 : i32
    return %arg0, %c0_i32 : i32, i32
  }
}

module attributes {stable_mosaic.version = 11 : i64} {
  func.func @_gen_aggr_kernel(%arg0: i32, %arg1: i32, %arg2: i32, %arg3: memref<1x16x32xf32, #tpu.memory_space<vmem>>, %arg4: memref<1x16x32xf32, #tpu.memory_space<vmem>>, %arg5: memref<1x2x16x16xbf16, #tpu.memory_space<vmem>>, %arg6: memref<1x16x16xbf16, #tpu.memory_space<vmem>>, %arg7: memref<2x32xf32, #tpu.memory_space<vmem>>, %arg8: memref<1x32xf32, #tpu.memory_space<vmem>>, %arg9: memref<1x1xf32, #tpu.memory_space<smem>>, %arg10: memref<1x16x32xf32, #tpu.memory_space<vmem>>, %arg11: memref<16x32xf32, #tpu.memory_space<vmem>>, %arg12: memref<16x32xf32, #tpu.memory_space<vmem>>, %arg13: memref<16x32xf32, #tpu.memory_space<vmem>>, %arg14: memref<16x1xf32, #tpu.memory_space<vmem>>) attributes {dimension_semantics = [#tpu.dimension_semantics<parallel>, #tpu.dimension_semantics<parallel>, #tpu.dimension_semantics<arbitrary>], iteration_bounds = array<i64: 2, 1, 1>, scalar_prefetch = 0 : i64, scratch_operands = 4 : i64, tpu.core_type = #tpu.core_type<tc>, window_params = [{transform_indices = @transform_0, window_bounds = array<i64: 1, 16, 32>}, {transform_indices = @transform_1, window_bounds = array<i64: 1, 16, 32>}, {transform_indices = @transform_2, window_bounds = array<i64: 1, 2, 16, 16>}, {transform_indices = @transform_3, window_bounds = array<i64: 1, 16, 16>}, {pipeline_mode = #tpu.pipeline_mode<synchronous>, transform_indices = @transform_4, window_bounds = array<i64: 2, 32>}, {pipeline_mode = #tpu.pipeline_mode<synchronous>, transform_indices = @transform_5, window_bounds = array<i64: 1, 32>}, {transform_indices = @transform_6, window_bounds = array<i64: 1, 1>}, {transform_indices = @transform_7, window_bounds = array<i64: 1, 16, 32>}]} {
    %c0_i32 = arith.constant 0 : i32
    %0 = arith.cmpi eq, %arg2, %c0_i32 : i32
    %1 = arith.extui %0 : i1 to i32
    %c0_i32_0 = arith.constant 0 : i32
    %2 = arith.cmpi ne, %1, %c0_i32_0 : i32
    scf.if %2 {
      %cst_43 = arith.constant 0xFF800000 : f32
      %81 = vector.broadcast %cst_43 : f32 to vector<16x32xf32>
      %c0_44 = arith.constant 0 : index
      %c0_45 = arith.constant 0 : index
      %82 = vector.load %arg11[%c0_44, %c0_45] : memref<16x32xf32, #tpu.memory_space<vmem>>, vector<16x32xf32>
      tpu.vector_store %arg11[%c0_44, %c0_45], %81 {strides = array<i32>} : memref<16x32xf32, #tpu.memory_space<vmem>>, vector<16x32xf32>,
      %cst_46 = arith.constant 0.000000e+00 : f32
      %83 = vector.broadcast %cst_46 : f32 to vector<16x32xf32>
      %c0_47 = arith.constant 0 : index
      %c0_48 = arith.constant 0 : index
      %84 = vector.load %arg12[%c0_47, %c0_48] : memref<16x32xf32, #tpu.memory_space<vmem>>, vector<16x32xf32>
      tpu.vector_store %arg12[%c0_47, %c0_48], %83 {strides = array<i32>} : memref<16x32xf32, #tpu.memory_space<vmem>>, vector<16x32xf32>,
      %cst_49 = arith.constant 0.000000e+00 : f32
      %85 = vector.broadcast %cst_49 : f32 to vector<16x32xf32>
      %c0_50 = arith.constant 0 : index
      %c0_51 = arith.constant 0 : index
      %86 = vector.load %arg13[%c0_50, %c0_51] : memref<16x32xf32, #tpu.memory_space<vmem>>, vector<16x32xf32>
      tpu.vector_store %arg13[%c0_50, %c0_51], %85 {strides = array<i32>} : memref<16x32xf32, #tpu.memory_space<vmem>>, vector<16x32xf32>,
      %cst_52 = arith.constant 0.000000e+00 : f32
      %87 = vector.broadcast %cst_52 : f32 to vector<16x1xf32>
      %c0_53 = arith.constant 0 : index
      %c0_54 = arith.constant 0 : index
      %88 = vector.load %arg14[%c0_53, %c0_54] : memref<16x1xf32, #tpu.memory_space<vmem>>, vector<16x1xf32>
      tpu.vector_store %arg14[%c0_53, %c0_54], %87 {strides = array<i32>} : memref<16x1xf32, #tpu.memory_space<vmem>>, vector<16x1xf32>,
    } else {
    }
    %c0 = arith.constant 0 : index
    %c0_1 = arith.constant 0 : index
    %c0_2 = arith.constant 0 : index
    %3 = vector.load %arg3[%c0, %c0_1, %c0_2] : memref<1x16x32xf32, #tpu.memory_space<vmem>>, vector<1x16x32xf32>
    %4 = vector.shape_cast %3 : vector<1x16x32xf32> to vector<16x32xf32>
    %c0_3 = arith.constant 0 : index
    %c0_4 = arith.constant 0 : index
    %5 = vector.load %arg8[%c0_3, %c0_4] : memref<1x32xf32, #tpu.memory_space<vmem>>, vector<1x32xf32>
    %6 = vector.broadcast %5 : vector<1x32xf32> to vector<16x32xf32>
    %7 = arith.addf %4, %6 : vector<16x32xf32>
    %c0_5 = arith.constant 0 : index
    %c0_6 = arith.constant 0 : index
    %c0_7 = arith.constant 0 : index
    %c0_8 = arith.constant 0 : index
    %8 = vector.load %arg5[%c0_5, %c0_6, %c0_7, %c0_8] : memref<1x2x16x16xbf16, #tpu.memory_space<vmem>>, vector<1x2x16x16xbf16>
    %9 = vector.shape_cast %8 : vector<1x2x16x16xbf16> to vector<2x16x16xbf16>
    %10 = arith.extf %9 : vector<2x16x16xbf16> to vector<2x16x16xf32>
    %c0_9 = arith.constant 0 : index
    %c0_10 = arith.constant 0 : index
    %c0_11 = arith.constant 0 : index
    %11 = vector.load %arg6[%c0_9, %c0_10, %c0_11] : memref<1x16x16xbf16, #tpu.memory_space<vmem>>, vector<1x16x16xbf16>
    %12 = vector.shape_cast %11 : vector<1x16x16xbf16> to vector<16x16xbf16>
    %13 = arith.extf %12 : vector<16x16xbf16> to vector<16x16xf32>
    %c0_12 = arith.constant 0 : index
    %c0_13 = arith.constant 0 : index
    %14 = vector.load %arg7[%c0_12, %c0_13] : memref<2x32xf32, #tpu.memory_space<vmem>>, vector<2x32xf32>
    %c0_14 = arith.constant 0 : index
    %c0_15 = arith.constant 0 : index
    %15 = memref.load %arg9[%c0_14, %c0_15] : memref<1x1xf32, #tpu.memory_space<smem>>
    %16 = vector.extract_strided_slice %10 {offsets = [0, 0, 0], sizes = [1, 16, 16], strides = [1, 1, 1]} : vector<2x16x16xf32> to vector<1x16x16xf32>
    %17 = vector.shape_cast %16 : vector<1x16x16xf32> to vector<16x16xf32>
    %18 = vector.shape_cast %17 : vector<16x16xf32> to vector<16x16x1xf32>
    %19 = vector.extract_strided_slice %14 {offsets = [0, 0], sizes = [1, 32], strides = [1, 1]} : vector<2x32xf32> to vector<1x32xf32>
    %20 = vector.shape_cast %19 : vector<1x32xf32> to vector<32xf32>
    %21 = vector.shape_cast %20 : vector<32xf32> to vector<1x1x32xf32>
    %22 = vector.broadcast %18 : vector<16x16x1xf32> to vector<16x16x32xf32>
    %23 = vector.broadcast %21 : vector<1x1x32xf32> to vector<16x16x32xf32>
    %24 = arith.mulf %22, %23 : vector<16x16x32xf32>
    %25 = vector.extract_strided_slice %10 {offsets = [1, 0, 0], sizes = [1, 16, 16], strides = [1, 1, 1]} : vector<2x16x16xf32> to vector<1x16x16xf32>
    %26 = vector.shape_cast %25 : vector<1x16x16xf32> to vector<16x16xf32>
    %27 = vector.shape_cast %26 : vector<16x16xf32> to vector<16x16x1xf32>
    %28 = vector.extract_strided_slice %14 {offsets = [1, 0], sizes = [1, 32], strides = [1, 1]} : vector<2x32xf32> to vector<1x32xf32>
    %29 = vector.shape_cast %28 : vector<1x32xf32> to vector<32xf32>
    %30 = vector.shape_cast %29 : vector<32xf32> to vector<1x1x32xf32>
    %31 = vector.broadcast %27 : vector<16x16x1xf32> to vector<16x16x32xf32>
    %32 = vector.broadcast %30 : vector<1x1x32xf32> to vector<16x16x32xf32>
    %33 = arith.mulf %31, %32 : vector<16x16x32xf32>
    %34 = arith.addf %24, %33 : vector<16x16x32xf32>
    %35 = vector.shape_cast %7 : vector<16x32xf32> to vector<1x16x32xf32>
    %36 = vector.broadcast %35 : vector<1x16x32xf32> to vector<16x16x32xf32>
    %37 = arith.addf %36, %34 : vector<16x16x32xf32>
    %cst = arith.constant 0.000000e+00 : f32
    %38 = vector.broadcast %cst : f32 to vector<16x16x32xf32>
    %39 = arith.maximumf %37, %38 : vector<16x16x32xf32>
    %cst_16 = arith.constant 1.000000e-07 : f32
    %40 = vector.broadcast %cst_16 : f32 to vector<16x16x32xf32>
    %41 = arith.addf %39, %40 : vector<16x16x32xf32>
    %cst_17 = arith.constant 1.000000e+00 : f32
    %42 = vector.broadcast %cst_17 : f32 to vector<16x16xf32>
    %43 = arith.subf %13, %42 : vector<16x16xf32>
    %cst_18 = arith.constant 1.000000e+30 : f32
    %44 = vector.broadcast %cst_18 : f32 to vector<16x16xf32>
    %45 = arith.mulf %43, %44 : vector<16x16xf32>
    %46 = vector.broadcast %15 : f32 to vector<16x16x32xf32>
    %47 = arith.mulf %41, %46 : vector<16x16x32xf32>
    %48 = vector.shape_cast %45 : vector<16x16xf32> to vector<16x16x1xf32>
    %49 = vector.broadcast %48 : vector<16x16x1xf32> to vector<16x16x32xf32>
    %50 = arith.addf %47, %49 : vector<16x16x32xf32>
    %c0_19 = arith.constant 0 : index
    %c0_20 = arith.constant 0 : index
    %51 = vector.load %arg11[%c0_19, %c0_20] : memref<16x32xf32, #tpu.memory_space<vmem>>, vector<16x32xf32>
    %cst_21 = arith.constant dense<0xFF800000> : vector<16x32xf32>
    %52 = vector.multi_reduction <maximumf>, %50, %cst_21 [1] : vector<16x16x32xf32> to vector<16x32xf32>
    %53 = arith.maximumf %51, %52 : vector<16x32xf32>
    %c0_22 = arith.constant 0 : index
    %c0_23 = arith.constant 0 : index
    %54 = vector.load %arg11[%c0_22, %c0_23] : memref<16x32xf32, #tpu.memory_space<vmem>>, vector<16x32xf32>
    %55 = arith.subf %54, %53 : vector<16x32xf32>
    %56 = math.exp %55 : vector<16x32xf32>
    %57 = vector.shape_cast %53 : vector<16x32xf32> to vector<16x1x32xf32>
    %58 = vector.broadcast %57 : vector<16x1x32xf32> to vector<16x16x32xf32>
    %59 = arith.subf %50, %58 : vector<16x16x32xf32>
    %60 = math.exp %59 : vector<16x16x32xf32>
    %c0_24 = arith.constant 0 : index
    %c0_25 = arith.constant 0 : index
    %61 = vector.load %arg12[%c0_24, %c0_25] : memref<16x32xf32, #tpu.memory_space<vmem>>, vector<16x32xf32>
    %62 = arith.mulf %56, %61 : vector<16x32xf32>
    %cst_26 = arith.constant dense<0.000000e+00> : vector<16x32xf32>
    %63 = vector.multi_reduction <add>, %60, %cst_26 [1] : vector<16x16x32xf32> to vector<16x32xf32>
    %64 = arith.addf %62, %63 : vector<16x32xf32>
    %c0_27 = arith.constant 0 : index
    %c0_28 = arith.constant 0 : index
    %65 = vector.load %arg12[%c0_27, %c0_28] : memref<16x32xf32, #tpu.memory_space<vmem>>, vector<16x32xf32>
    tpu.vector_store %arg12[%c0_27, %c0_28], %64 {strides = array<i32>} : memref<16x32xf32, #tpu.memory_space<vmem>>, vector<16x32xf32>,
    %c0_29 = arith.constant 0 : index
    %c0_30 = arith.constant 0 : index
    %66 = vector.load %arg13[%c0_29, %c0_30] : memref<16x32xf32, #tpu.memory_space<vmem>>, vector<16x32xf32>
    %67 = arith.mulf %56, %66 : vector<16x32xf32>
    %68 = arith.mulf %60, %41 : vector<16x16x32xf32>
    %cst_31 = arith.constant dense<0.000000e+00> : vector<16x32xf32>
    %69 = vector.multi_reduction <add>, %68, %cst_31 [1] : vector<16x16x32xf32> to vector<16x32xf32>
    %70 = arith.addf %67, %69 : vector<16x32xf32>
    %c0_32 = arith.constant 0 : index
    %c0_33 = arith.constant 0 : index
    %71 = vector.load %arg13[%c0_32, %c0_33] : memref<16x32xf32, #tpu.memory_space<vmem>>, vector<16x32xf32>
    tpu.vector_store %arg13[%c0_32, %c0_33], %70 {strides = array<i32>} : memref<16x32xf32, #tpu.memory_space<vmem>>, vector<16x32xf32>,
    %c0_34 = arith.constant 0 : index
    %c0_35 = arith.constant 0 : index
    %72 = vector.load %arg11[%c0_34, %c0_35] : memref<16x32xf32, #tpu.memory_space<vmem>>, vector<16x32xf32>
    tpu.vector_store %arg11[%c0_34, %c0_35], %53 {strides = array<i32>} : memref<16x32xf32, #tpu.memory_space<vmem>>, vector<16x32xf32>,
    %c0_36 = arith.constant 0 : index
    %c0_37 = arith.constant 0 : index
    %73 = vector.load %arg14[%c0_36, %c0_37] : memref<16x1xf32, #tpu.memory_space<vmem>>, vector<16x1xf32>
    %cst_38 = arith.constant dense<0.000000e+00> : vector<16xf32>
    %74 = vector.multi_reduction <add>, %13, %cst_38 [1] : vector<16x16xf32> to vector<16xf32>
    %75 = vector.shape_cast %74 : vector<16xf32> to vector<16x1xf32>
    %76 = arith.addf %73, %75 : vector<16x1xf32>
    %c0_39 = arith.constant 0 : index
    %c0_40 = arith.constant 0 : index
    %77 = vector.load %arg14[%c0_39, %c0_40] : memref<16x1xf32, #tpu.memory_space<vmem>>, vector<16x1xf32>
    tpu.vector_store %arg14[%c0_39, %c0_40], %76 {strides = array<i32>} : memref<16x1xf32, #tpu.memory_space<vmem>>, vector<16x1xf32>,
    %c0_i32_41 = arith.constant 0 : i32
    %78 = arith.cmpi eq, %arg2, %c0_i32_41 : i32
    %79 = arith.extui %78 : i1 to i32
    %c0_i32_42 = arith.constant 0 : i32
    %80 = arith.cmpi ne, %79, %c0_i32_42 : i32
    scf.if %80 {
      %c0_43 = arith.constant 0 : index
      %c0_44 = arith.constant 0 : index
      %81 = vector.load %arg12[%c0_43, %c0_44] : memref<16x32xf32, #tpu.memory_space<vmem>>, vector<16x32xf32>
      %cst_45 = arith.constant 1.000000e-16 : f32
      %82 = vector.broadcast %cst_45 : f32 to vector<16x32xf32>
      %83 = arith.maximumf %81, %82 : vector<16x32xf32>
      %84 = tpu.reciprocal %83 {approx = true} : vector<16x32xf32> -> vector<16x32xf32>
      %c0_46 = arith.constant 0 : index
      %c0_47 = arith.constant 0 : index
      %85 = vector.load %arg13[%c0_46, %c0_47] : memref<16x32xf32, #tpu.memory_space<vmem>>, vector<16x32xf32>
      %86 = arith.mulf %85, %84 : vector<16x32xf32>
      %c0_48 = arith.constant 0 : index
      %c0_49 = arith.constant 0 : index
      %87 = vector.load %arg14[%c0_48, %c0_49] : memref<16x1xf32, #tpu.memory_space<vmem>>, vector<16x1xf32>
      %cst_50 = arith.constant 0.000000e+00 : f32
      %88 = vector.broadcast %cst_50 : f32 to vector<16x1xf32>
      %89 = arith.cmpf ogt, %87, %88 : vector<16x1xf32>
      %cst_51 = arith.constant 0.000000e+00 : f32
      %90 = vector.shape_cast %89 : vector<16x1xi1> to vector<16x1xi1>
      %91 = vector.broadcast %90 : vector<16x1xi1> to vector<16x32xi1>
      %92 = vector.broadcast %cst_51 : f32 to vector<16x32xf32>
      %93 = arith.select %91, %86, %92 : vector<16x32xi1>, vector<16x32xf32>
      %c0_52 = arith.constant 0 : index
      %c0_53 = arith.constant 0 : index
      %c0_54 = arith.constant 0 : index
      %94 = vector.load %arg4[%c0_52, %c0_53, %c0_54] : memref<1x16x32xf32, #tpu.memory_space<vmem>>, vector<1x16x32xf32>
      %95 = vector.shape_cast %94 : vector<1x16x32xf32> to vector<16x32xf32>
      %96 = arith.addf %93, %95 : vector<16x32xf32>
      %c0_55 = arith.constant 0 : index
      %c0_56 = arith.constant 0 : index
      %c0_57 = arith.constant 0 : index
      %97 = vector.load %arg10[%c0_55, %c0_56, %c0_57] : memref<1x16x32xf32, #tpu.memory_space<vmem>>, vector<1x16x32xf32>
      %98 = vector.shape_cast %97 : vector<1x16x32xf32> to vector<16x32xf32>
      %99 = vector.shape_cast %96 : vector<16x32xf32> to vector<1x16x32xf32>
      tpu.vector_store %arg10[%c0_55, %c0_56, %c0_57], %99 {strides = array<i32>} : memref<1x16x32xf32, #tpu.memory_space<vmem>>, vector<1x16x32xf32>,
    } else {
    }
    return
  }
  func.func @transform_0(%arg0: i32, %arg1: i32, %arg2: i32) -> (i32, i32, i32) {
    %c0_i32 = arith.constant 0 : i32
    %c0_i32_0 = arith.constant 0 : i32
    return %arg0, %arg2, %c0_i32 : i32, i32, i32
  }
  func.func @transform_1(%arg0: i32, %arg1: i32, %arg2: i32) -> (i32, i32, i32) {
    %c0_i32 = arith.constant 0 : i32
    %c0_i32_0 = arith.constant 0 : i32
    return %arg0, %arg1, %c0_i32 : i32, i32, i32
  }
  func.func @transform_2(%arg0: i32, %arg1: i32, %arg2: i32) -> (i32, i32, i32, i32) {
    %c0_i32 = arith.constant 0 : i32
    %c0_i32_0 = arith.constant 0 : i32
    return %arg0, %c0_i32, %arg1, %arg2 : i32, i32, i32, i32
  }
  func.func @transform_3(%arg0: i32, %arg1: i32, %arg2: i32) -> (i32, i32, i32) {
    %c0_i32 = arith.constant 0 : i32
    return %arg0, %arg1, %arg2 : i32, i32, i32
  }
  func.func @transform_4(%arg0: i32, %arg1: i32, %arg2: i32) -> (i32, i32) {
    %c0_i32 = arith.constant 0 : i32
    %c0_i32_0 = arith.constant 0 : i32
    %c0_i32_1 = arith.constant 0 : i32
    return %c0_i32, %c0_i32_0 : i32, i32
  }
  func.func @transform_5(%arg0: i32, %arg1: i32, %arg2: i32) -> (i32, i32) {
    %c0_i32 = arith.constant 0 : i32
    %c0_i32_0 = arith.constant 0 : i32
    %c0_i32_1 = arith.constant 0 : i32
    return %c0_i32, %c0_i32_0 : i32, i32
  }
  func.func @transform_6(%arg0: i32, %arg1: i32, %arg2: i32) -> (i32, i32) {
    %c0_i32 = arith.constant 0 : i32
    %c0_i32_0 = arith.constant 0 : i32
    %c0_i32_1 = arith.constant 0 : i32
    return %c0_i32, %c0_i32_0 : i32, i32
  }
  func.func @transform_7(%arg0: i32, %arg1: i32, %arg2: i32) -> (i32, i32, i32) {
    %c0_i32 = arith.constant 0 : i32
    %c0_i32_0 = arith.constant 0 : i32
    return %arg0, %arg1, %c0_i32 : i32, i32, i32
  }
}

module attributes {stable_mosaic.version = 11 : i64} {
  func.func @_mlp_kernel(%arg0: i32, %arg1: memref<16x32xf32, #tpu.memory_space<vmem>>, %arg2: memref<32x64xbf16, #tpu.memory_space<vmem>>, %arg3: memref<1x64xf32, #tpu.memory_space<vmem>>, %arg4: memref<64x32xbf16, #tpu.memory_space<vmem>>, %arg5: memref<1x32xf32, #tpu.memory_space<vmem>>, %arg6: memref<1x32xf32, #tpu.memory_space<vmem>>, %arg7: memref<1x32xf32, #tpu.memory_space<vmem>>, %arg8: memref<16x32xf32, #tpu.memory_space<vmem>>, %arg9: memref<16x32xf32, #tpu.memory_space<vmem>>) attributes {dimension_semantics = [#tpu.dimension_semantics<parallel>], iteration_bounds = array<i64: 2>, scalar_prefetch = 0 : i64, scratch_operands = 0 : i64, tpu.core_type = #tpu.core_type<tc>, window_params = [{transform_indices = @transform_0, window_bounds = array<i64: 16, 32>}, {pipeline_mode = #tpu.pipeline_mode<synchronous>, transform_indices = @transform_1, window_bounds = array<i64: 32, 64>}, {pipeline_mode = #tpu.pipeline_mode<synchronous>, transform_indices = @transform_2, window_bounds = array<i64: 1, 64>}, {pipeline_mode = #tpu.pipeline_mode<synchronous>, transform_indices = @transform_3, window_bounds = array<i64: 64, 32>}, {pipeline_mode = #tpu.pipeline_mode<synchronous>, transform_indices = @transform_4, window_bounds = array<i64: 1, 32>}, {pipeline_mode = #tpu.pipeline_mode<synchronous>, transform_indices = @transform_5, window_bounds = array<i64: 1, 32>}, {pipeline_mode = #tpu.pipeline_mode<synchronous>, transform_indices = @transform_6, window_bounds = array<i64: 1, 32>}, {transform_indices = @transform_7, window_bounds = array<i64: 16, 32>}, {transform_indices = @transform_8, window_bounds = array<i64: 16, 32>}]} {
    %c0 = arith.constant 0 : index
    %c0_0 = arith.constant 0 : index
    %0 = vector.load %arg1[%c0, %c0_0] : memref<16x32xf32, #tpu.memory_space<vmem>>, vector<16x32xf32>
    %1 = arith.truncf %0 : vector<16x32xf32> to vector<16x32xbf16>
    %c0_1 = arith.constant 0 : index
    %c0_2 = arith.constant 0 : index
    %2 = vector.load %arg2[%c0_1, %c0_2] : memref<32x64xbf16, #tpu.memory_space<vmem>>, vector<32x64xbf16>
    %cst = arith.constant dense<0.000000e+00> : vector<16x64xf32>
    %3 = tpu.matmul %1, %2, %cst {dimension_numbers = #tpu.dot_dimension_numbers<[1], [0], [0], [1], [0, 0, 1, 1], [], []>} : vector<16x32xbf16>, vector<32x64xbf16>, vector<16x64xf32> -> vector<16x64xf32>
    %c0_3 = arith.constant 0 : index
    %c0_4 = arith.constant 0 : index
    %4 = vector.load %arg3[%c0_3, %c0_4] : memref<1x64xf32, #tpu.memory_space<vmem>>, vector<1x64xf32>
    %5 = vector.broadcast %4 : vector<1x64xf32> to vector<16x64xf32>
    %6 = arith.addf %3, %5 : vector<16x64xf32>
    %cst_5 = arith.constant 0.000000e+00 : f32
    %7 = vector.broadcast %cst_5 : f32 to vector<16x64xf32>
    %8 = arith.maximumf %6, %7 : vector<16x64xf32>
    %9 = arith.truncf %8 : vector<16x64xf32> to vector<16x64xbf16>
    %c0_6 = arith.constant 0 : index
    %c0_7 = arith.constant 0 : index
    %10 = vector.load %arg4[%c0_6, %c0_7] : memref<64x32xbf16, #tpu.memory_space<vmem>>, vector<64x32xbf16>
    %cst_8 = arith.constant dense<0.000000e+00> : vector<16x32xf32>
    %11 = tpu.matmul %9, %10, %cst_8 {dimension_numbers = #tpu.dot_dimension_numbers<[1], [0], [0], [1], [0, 0, 1, 1], [], []>} : vector<16x64xbf16>, vector<64x32xbf16>, vector<16x32xf32> -> vector<16x32xf32>
    %c0_9 = arith.constant 0 : index
    %c0_10 = arith.constant 0 : index
    %12 = vector.load %arg5[%c0_9, %c0_10] : memref<1x32xf32, #tpu.memory_space<vmem>>, vector<1x32xf32>
    %13 = vector.broadcast %12 : vector<1x32xf32> to vector<16x32xf32>
    %14 = arith.addf %11, %13 : vector<16x32xf32>
    %c0_11 = arith.constant 0 : index
    %c0_12 = arith.constant 0 : index
    %15 = vector.load %arg8[%c0_11, %c0_12] : memref<16x32xf32, #tpu.memory_space<vmem>>, vector<16x32xf32>
    tpu.vector_store %arg8[%c0_11, %c0_12], %14 {strides = array<i32>} : memref<16x32xf32, #tpu.memory_space<vmem>>, vector<16x32xf32>,
    %cst_13 = arith.constant dense<0.000000e+00> : vector<16xf32>
    %16 = vector.multi_reduction <add>, %14, %cst_13 [1] : vector<16x32xf32> to vector<16xf32>
    %17 = vector.shape_cast %16 : vector<16xf32> to vector<16x1xf32>
    %cst_14 = arith.constant 3.200000e+01 : f32
    %18 = vector.broadcast %cst_14 : f32 to vector<16x1xf32>
    %19 = arith.divf %17, %18 : vector<16x1xf32>
    %20 = vector.broadcast %19 : vector<16x1xf32> to vector<16x32xf32>
    %21 = arith.subf %14, %20 : vector<16x32xf32>
    %22 = arith.mulf %21, %21 : vector<16x32xf32>
    %cst_15 = arith.constant dense<0.000000e+00> : vector<16xf32>
    %23 = vector.multi_reduction <add>, %22, %cst_15 [1] : vector<16x32xf32> to vector<16xf32>
    %24 = vector.shape_cast %23 : vector<16xf32> to vector<16x1xf32>
    %cst_16 = arith.constant 3.200000e+01 : f32
    %25 = vector.broadcast %cst_16 : f32 to vector<16x1xf32>
    %26 = arith.divf %24, %25 : vector<16x1xf32>
    %27 = vector.broadcast %19 : vector<16x1xf32> to vector<16x32xf32>
    %28 = arith.subf %14, %27 : vector<16x32xf32>
    %cst_17 = arith.constant 9.99999974E-6 : f32
    %29 = vector.broadcast %cst_17 : f32 to vector<16x1xf32>
    %30 = arith.addf %26, %29 : vector<16x1xf32>
    %31 = math.rsqrt %30 : vector<16x1xf32>
    %32 = vector.broadcast %31 : vector<16x1xf32> to vector<16x32xf32>
    %33 = arith.mulf %28, %32 : vector<16x32xf32>
    %c0_18 = arith.constant 0 : index
    %c0_19 = arith.constant 0 : index
    %34 = vector.load %arg6[%c0_18, %c0_19] : memref<1x32xf32, #tpu.memory_space<vmem>>, vector<1x32xf32>
    %35 = vector.broadcast %34 : vector<1x32xf32> to vector<16x32xf32>
    %36 = arith.mulf %33, %35 : vector<16x32xf32>
    %c0_20 = arith.constant 0 : index
    %c0_21 = arith.constant 0 : index
    %37 = vector.load %arg7[%c0_20, %c0_21] : memref<1x32xf32, #tpu.memory_space<vmem>>, vector<1x32xf32>
    %38 = vector.broadcast %37 : vector<1x32xf32> to vector<16x32xf32>
    %39 = arith.addf %36, %38 : vector<16x32xf32>
    %cst_22 = arith.constant 0.000000e+00 : f32
    %40 = vector.broadcast %cst_22 : f32 to vector<16x32xf32>
    %41 = arith.maximumf %39, %40 : vector<16x32xf32>
    %c0_23 = arith.constant 0 : index
    %c0_24 = arith.constant 0 : index
    %42 = vector.load %arg9[%c0_23, %c0_24] : memref<16x32xf32, #tpu.memory_space<vmem>>, vector<16x32xf32>
    tpu.vector_store %arg9[%c0_23, %c0_24], %41 {strides = array<i32>} : memref<16x32xf32, #tpu.memory_space<vmem>>, vector<16x32xf32>,
    return
  }
  func.func @transform_0(%arg0: i32) -> (i32, i32) {
    %c0_i32 = arith.constant 0 : i32
    %c0_i32_0 = arith.constant 0 : i32
    return %arg0, %c0_i32 : i32, i32
  }
  func.func @transform_1(%arg0: i32) -> (i32, i32) {
    %c0_i32 = arith.constant 0 : i32
    %c0_i32_0 = arith.constant 0 : i32
    %c0_i32_1 = arith.constant 0 : i32
    return %c0_i32, %c0_i32_0 : i32, i32
  }
  func.func @transform_2(%arg0: i32) -> (i32, i32) {
    %c0_i32 = arith.constant 0 : i32
    %c0_i32_0 = arith.constant 0 : i32
    %c0_i32_1 = arith.constant 0 : i32
    return %c0_i32, %c0_i32_0 : i32, i32
  }
  func.func @transform_3(%arg0: i32) -> (i32, i32) {
    %c0_i32 = arith.constant 0 : i32
    %c0_i32_0 = arith.constant 0 : i32
    %c0_i32_1 = arith.constant 0 : i32
    return %c0_i32, %c0_i32_0 : i32, i32
  }
  func.func @transform_4(%arg0: i32) -> (i32, i32) {
    %c0_i32 = arith.constant 0 : i32
    %c0_i32_0 = arith.constant 0 : i32
    %c0_i32_1 = arith.constant 0 : i32
    return %c0_i32, %c0_i32_0 : i32, i32
  }
  func.func @transform_5(%arg0: i32) -> (i32, i32) {
    %c0_i32 = arith.constant 0 : i32
    %c0_i32_0 = arith.constant 0 : i32
    %c0_i32_1 = arith.constant 0 : i32
    return %c0_i32, %c0_i32_0 : i32, i32
  }
  func.func @transform_6(%arg0: i32) -> (i32, i32) {
    %c0_i32 = arith.constant 0 : i32
    %c0_i32_0 = arith.constant 0 : i32
    %c0_i32_1 = arith.constant 0 : i32
    return %c0_i32, %c0_i32_0 : i32, i32
  }
  func.func @transform_7(%arg0: i32) -> (i32, i32) {
    %c0_i32 = arith.constant 0 : i32
    %c0_i32_0 = arith.constant 0 : i32
    return %arg0, %c0_i32 : i32, i32
  }
  func.func @transform_8(%arg0: i32) -> (i32, i32) {
    %c0_i32 = arith.constant 0 : i32
    %c0_i32_0 = arith.constant 0 : i32
    return %arg0, %c0_i32 : i32, i32
  }
}

module attributes {stable_mosaic.version = 11 : i64} {
  func.func @_mlp_kernel(%arg0: i32, %arg1: memref<16x32xf32, #tpu.memory_space<vmem>>, %arg2: memref<32x64xbf16, #tpu.memory_space<vmem>>, %arg3: memref<1x64xf32, #tpu.memory_space<vmem>>, %arg4: memref<64x32xbf16, #tpu.memory_space<vmem>>, %arg5: memref<1x32xf32, #tpu.memory_space<vmem>>, %arg6: memref<16x32xf32, #tpu.memory_space<vmem>>, %arg7: memref<1x32xf32, #tpu.memory_space<vmem>>, %arg8: memref<16x32xf32, #tpu.memory_space<vmem>>, %arg9: memref<16x1xf32, #tpu.memory_space<vmem>>) attributes {dimension_semantics = [#tpu.dimension_semantics<parallel>], iteration_bounds = array<i64: 2>, scalar_prefetch = 0 : i64, scratch_operands = 0 : i64, tpu.core_type = #tpu.core_type<tc>, window_params = [{transform_indices = @transform_0, window_bounds = array<i64: 16, 32>}, {pipeline_mode = #tpu.pipeline_mode<synchronous>, transform_indices = @transform_1, window_bounds = array<i64: 32, 64>}, {pipeline_mode = #tpu.pipeline_mode<synchronous>, transform_indices = @transform_2, window_bounds = array<i64: 1, 64>}, {pipeline_mode = #tpu.pipeline_mode<synchronous>, transform_indices = @transform_3, window_bounds = array<i64: 64, 32>}, {pipeline_mode = #tpu.pipeline_mode<synchronous>, transform_indices = @transform_4, window_bounds = array<i64: 1, 32>}, {transform_indices = @transform_5, window_bounds = array<i64: 16, 32>}, {pipeline_mode = #tpu.pipeline_mode<synchronous>, transform_indices = @transform_6, window_bounds = array<i64: 1, 32>}, {transform_indices = @transform_7, window_bounds = array<i64: 16, 32>}, {transform_indices = @transform_8, window_bounds = array<i64: 16, 1>}]} {
    %c0 = arith.constant 0 : index
    %c0_0 = arith.constant 0 : index
    %0 = vector.load %arg1[%c0, %c0_0] : memref<16x32xf32, #tpu.memory_space<vmem>>, vector<16x32xf32>
    %1 = arith.truncf %0 : vector<16x32xf32> to vector<16x32xbf16>
    %c0_1 = arith.constant 0 : index
    %c0_2 = arith.constant 0 : index
    %2 = vector.load %arg2[%c0_1, %c0_2] : memref<32x64xbf16, #tpu.memory_space<vmem>>, vector<32x64xbf16>
    %cst = arith.constant dense<0.000000e+00> : vector<16x64xf32>
    %3 = tpu.matmul %1, %2, %cst {dimension_numbers = #tpu.dot_dimension_numbers<[1], [0], [0], [1], [0, 0, 1, 1], [], []>} : vector<16x32xbf16>, vector<32x64xbf16>, vector<16x64xf32> -> vector<16x64xf32>
    %c0_3 = arith.constant 0 : index
    %c0_4 = arith.constant 0 : index
    %4 = vector.load %arg3[%c0_3, %c0_4] : memref<1x64xf32, #tpu.memory_space<vmem>>, vector<1x64xf32>
    %5 = vector.broadcast %4 : vector<1x64xf32> to vector<16x64xf32>
    %6 = arith.addf %3, %5 : vector<16x64xf32>
    %cst_5 = arith.constant 0.000000e+00 : f32
    %7 = vector.broadcast %cst_5 : f32 to vector<16x64xf32>
    %8 = arith.maximumf %6, %7 : vector<16x64xf32>
    %9 = arith.truncf %8 : vector<16x64xf32> to vector<16x64xbf16>
    %c0_6 = arith.constant 0 : index
    %c0_7 = arith.constant 0 : index
    %10 = vector.load %arg4[%c0_6, %c0_7] : memref<64x32xbf16, #tpu.memory_space<vmem>>, vector<64x32xbf16>
    %cst_8 = arith.constant dense<0.000000e+00> : vector<16x32xf32>
    %11 = tpu.matmul %9, %10, %cst_8 {dimension_numbers = #tpu.dot_dimension_numbers<[1], [0], [0], [1], [0, 0, 1, 1], [], []>} : vector<16x64xbf16>, vector<64x32xbf16>, vector<16x32xf32> -> vector<16x32xf32>
    %c0_9 = arith.constant 0 : index
    %c0_10 = arith.constant 0 : index
    %12 = vector.load %arg5[%c0_9, %c0_10] : memref<1x32xf32, #tpu.memory_space<vmem>>, vector<1x32xf32>
    %13 = vector.broadcast %12 : vector<1x32xf32> to vector<16x32xf32>
    %14 = arith.addf %11, %13 : vector<16x32xf32>
    %c0_11 = arith.constant 0 : index
    %c0_12 = arith.constant 0 : index
    %15 = vector.load %arg6[%c0_11, %c0_12] : memref<16x32xf32, #tpu.memory_space<vmem>>, vector<16x32xf32>
    %16 = arith.addf %14, %15 : vector<16x32xf32>
    %cst_13 = arith.constant 0.000000e+00 : f32
    %17 = vector.broadcast %cst_13 : f32 to vector<16x32xf32>
    %18 = arith.maximumf %16, %17 : vector<16x32xf32>
    %c0_14 = arith.constant 0 : index
    %c0_15 = arith.constant 0 : index
    %19 = vector.load %arg8[%c0_14, %c0_15] : memref<16x32xf32, #tpu.memory_space<vmem>>, vector<16x32xf32>
    tpu.vector_store %arg8[%c0_14, %c0_15], %18 {strides = array<i32>} : memref<16x32xf32, #tpu.memory_space<vmem>>, vector<16x32xf32>,
    %c0_16 = arith.constant 0 : index
    %c0_17 = arith.constant 0 : index
    %20 = vector.load %arg7[%c0_16, %c0_17] : memref<1x32xf32, #tpu.memory_space<vmem>>, vector<1x32xf32>
    %21 = vector.broadcast %20 : vector<1x32xf32> to vector<16x32xf32>
    %22 = arith.mulf %18, %21 : vector<16x32xf32>
    %cst_18 = arith.constant dense<0.000000e+00> : vector<16xf32>
    %23 = vector.multi_reduction <add>, %22, %cst_18 [1] : vector<16x32xf32> to vector<16xf32>
    %24 = vector.shape_cast %23 : vector<16xf32> to vector<16x1xf32>
    %25 = math.tanh %24 : vector<16x1xf32>
    %c0_19 = arith.constant 0 : index
    %c0_20 = arith.constant 0 : index
    %26 = vector.load %arg9[%c0_19, %c0_20] : memref<16x1xf32, #tpu.memory_space<vmem>>, vector<16x1xf32>
    tpu.vector_store %arg9[%c0_19, %c0_20], %25 {strides = array<i32>} : memref<16x1xf32, #tpu.memory_space<vmem>>, vector<16x1xf32>,
    return
  }
  func.func @transform_0(%arg0: i32) -> (i32, i32) {
    %c0_i32 = arith.constant 0 : i32
    %c0_i32_0 = arith.constant 0 : i32
    return %arg0, %c0_i32 : i32, i32
  }
  func.func @transform_1(%arg0: i32) -> (i32, i32) {
    %c0_i32 = arith.constant 0 : i32
    %c0_i32_0 = arith.constant 0 : i32
    %c0_i32_1 = arith.constant 0 : i32
    return %c0_i32, %c0_i32_0 : i32, i32
  }
  func.func @transform_2(%arg0: i32) -> (i32, i32) {
    %c0_i32 = arith.constant 0 : i32
    %c0_i32_0 = arith.constant 0 : i32
    %c0_i32_1 = arith.constant 0 : i32
    return %c0_i32, %c0_i32_0 : i32, i32
  }
  func.func @transform_3(%arg0: i32) -> (i32, i32) {
    %c0_i32 = arith.constant 0 : i32
    %c0_i32_0 = arith.constant 0 : i32
    %c0_i32_1 = arith.constant 0 : i32
    return %c0_i32, %c0_i32_0 : i32, i32
  }
  func.func @transform_4(%arg0: i32) -> (i32, i32) {
    %c0_i32 = arith.constant 0 : i32
    %c0_i32_0 = arith.constant 0 : i32
    %c0_i32_1 = arith.constant 0 : i32
    return %c0_i32, %c0_i32_0 : i32, i32
  }
  func.func @transform_5(%arg0: i32) -> (i32, i32) {
    %c0_i32 = arith.constant 0 : i32
    %c0_i32_0 = arith.constant 0 : i32
    return %arg0, %c0_i32 : i32, i32
  }
  func.func @transform_6(%arg0: i32) -> (i32, i32) {
    %c0_i32 = arith.constant 0 : i32
    %c0_i32_0 = arith.constant 0 : i32
    %c0_i32_1 = arith.constant 0 : i32
    return %c0_i32, %c0_i32_0 : i32, i32
  }
  func.func @transform_7(%arg0: i32) -> (i32, i32) {
    %c0_i32 = arith.constant 0 : i32
    %c0_i32_0 = arith.constant 0 : i32
    return %arg0, %c0_i32 : i32, i32
  }
  func.func @transform_8(%arg0: i32) -> (i32, i32) {
    %c0_i32 = arith.constant 0 : i32
    %c0_i32_0 = arith.constant 0 : i32
    return %arg0, %c0_i32 : i32, i32
  }
}

module attributes {stable_mosaic.version = 11 : i64} {
  func.func @_mlp_kernel(%arg0: i32, %arg1: memref<8x16xf32, #tpu.memory_space<vmem>>, %arg2: memref<16x32xbf16, #tpu.memory_space<vmem>>, %arg3: memref<1x32xf32, #tpu.memory_space<vmem>>, %arg4: memref<32x16xbf16, #tpu.memory_space<vmem>>, %arg5: memref<1x16xf32, #tpu.memory_space<vmem>>, %arg6: memref<1x16xf32, #tpu.memory_space<vmem>>, %arg7: memref<1x16xf32, #tpu.memory_space<vmem>>, %arg8: memref<8x16xf32, #tpu.memory_space<vmem>>, %arg9: memref<8x16xf32, #tpu.memory_space<vmem>>) attributes {dimension_semantics = [#tpu.dimension_semantics<parallel>], iteration_bounds = array<i64: 2>, scalar_prefetch = 0 : i64, scratch_operands = 0 : i64, tpu.core_type = #tpu.core_type<tc>, window_params = [{transform_indices = @transform_0, window_bounds = array<i64: 8, 16>}, {pipeline_mode = #tpu.pipeline_mode<synchronous>, transform_indices = @transform_1, window_bounds = array<i64: 16, 32>}, {pipeline_mode = #tpu.pipeline_mode<synchronous>, transform_indices = @transform_2, window_bounds = array<i64: 1, 32>}, {pipeline_mode = #tpu.pipeline_mode<synchronous>, transform_indices = @transform_3, window_bounds = array<i64: 32, 16>}, {pipeline_mode = #tpu.pipeline_mode<synchronous>, transform_indices = @transform_4, window_bounds = array<i64: 1, 16>}, {pipeline_mode = #tpu.pipeline_mode<synchronous>, transform_indices = @transform_5, window_bounds = array<i64: 1, 16>}, {pipeline_mode = #tpu.pipeline_mode<synchronous>, transform_indices = @transform_6, window_bounds = array<i64: 1, 16>}, {transform_indices = @transform_7, window_bounds = array<i64: 8, 16>}, {transform_indices = @transform_8, window_bounds = array<i64: 8, 16>}]} {
    %c0 = arith.constant 0 : index
    %c0_0 = arith.constant 0 : index
    %0 = vector.load %arg1[%c0, %c0_0] : memref<8x16xf32, #tpu.memory_space<vmem>>, vector<8x16xf32>
    %1 = arith.truncf %0 : vector<8x16xf32> to vector<8x16xbf16>
    %c0_1 = arith.constant 0 : index
    %c0_2 = arith.constant 0 : index
    %2 = vector.load %arg2[%c0_1, %c0_2] : memref<16x32xbf16, #tpu.memory_space<vmem>>, vector<16x32xbf16>
    %cst = arith.constant dense<0.000000e+00> : vector<8x32xf32>
    %3 = tpu.matmul %1, %2, %cst {dimension_numbers = #tpu.dot_dimension_numbers<[1], [0], [0], [1], [0, 0, 1, 1], [], []>} : vector<8x16xbf16>, vector<16x32xbf16>, vector<8x32xf32> -> vector<8x32xf32>
    %c0_3 = arith.constant 0 : index
    %c0_4 = arith.constant 0 : index
    %4 = vector.load %arg3[%c0_3, %c0_4] : memref<1x32xf32, #tpu.memory_space<vmem>>, vector<1x32xf32>
    %5 = vector.broadcast %4 : vector<1x32xf32> to vector<8x32xf32>
    %6 = arith.addf %3, %5 : vector<8x32xf32>
    %cst_5 = arith.constant 0.000000e+00 : f32
    %7 = vector.broadcast %cst_5 : f32 to vector<8x32xf32>
    %8 = arith.maximumf %6, %7 : vector<8x32xf32>
    %9 = arith.truncf %8 : vector<8x32xf32> to vector<8x32xbf16>
    %c0_6 = arith.constant 0 : index
    %c0_7 = arith.constant 0 : index
    %10 = vector.load %arg4[%c0_6, %c0_7] : memref<32x16xbf16, #tpu.memory_space<vmem>>, vector<32x16xbf16>
    %cst_8 = arith.constant dense<0.000000e+00> : vector<8x16xf32>
    %11 = tpu.matmul %9, %10, %cst_8 {dimension_numbers = #tpu.dot_dimension_numbers<[1], [0], [0], [1], [0, 0, 1, 1], [], []>} : vector<8x32xbf16>, vector<32x16xbf16>, vector<8x16xf32> -> vector<8x16xf32>
    %c0_9 = arith.constant 0 : index
    %c0_10 = arith.constant 0 : index
    %12 = vector.load %arg5[%c0_9, %c0_10] : memref<1x16xf32, #tpu.memory_space<vmem>>, vector<1x16xf32>
    %13 = vector.broadcast %12 : vector<1x16xf32> to vector<8x16xf32>
    %14 = arith.addf %11, %13 : vector<8x16xf32>
    %c0_11 = arith.constant 0 : index
    %c0_12 = arith.constant 0 : index
    %15 = vector.load %arg8[%c0_11, %c0_12] : memref<8x16xf32, #tpu.memory_space<vmem>>, vector<8x16xf32>
    tpu.vector_store %arg8[%c0_11, %c0_12], %14 {strides = array<i32>} : memref<8x16xf32, #tpu.memory_space<vmem>>, vector<8x16xf32>,
    %cst_13 = arith.constant dense<0.000000e+00> : vector<8xf32>
    %16 = vector.multi_reduction <add>, %14, %cst_13 [1] : vector<8x16xf32> to vector<8xf32>
    %17 = vector.shape_cast %16 : vector<8xf32> to vector<8x1xf32>
    %cst_14 = arith.constant 1.600000e+01 : f32
    %18 = vector.broadcast %cst_14 : f32 to vector<8x1xf32>
    %19 = arith.divf %17, %18 : vector<8x1xf32>
    %20 = vector.broadcast %19 : vector<8x1xf32> to vector<8x16xf32>
    %21 = arith.subf %14, %20 : vector<8x16xf32>
    %22 = arith.mulf %21, %21 : vector<8x16xf32>
    %cst_15 = arith.constant dense<0.000000e+00> : vector<8xf32>
    %23 = vector.multi_reduction <add>, %22, %cst_15 [1] : vector<8x16xf32> to vector<8xf32>
    %24 = vector.shape_cast %23 : vector<8xf32> to vector<8x1xf32>
    %cst_16 = arith.constant 1.600000e+01 : f32
    %25 = vector.broadcast %cst_16 : f32 to vector<8x1xf32>
    %26 = arith.divf %24, %25 : vector<8x1xf32>
    %27 = vector.broadcast %19 : vector<8x1xf32> to vector<8x16xf32>
    %28 = arith.subf %14, %27 : vector<8x16xf32>
    %cst_17 = arith.constant 9.99999974E-6 : f32
    %29 = vector.broadcast %cst_17 : f32 to vector<8x1xf32>
    %30 = arith.addf %26, %29 : vector<8x1xf32>
    %31 = math.rsqrt %30 : vector<8x1xf32>
    %32 = vector.broadcast %31 : vector<8x1xf32> to vector<8x16xf32>
    %33 = arith.mulf %28, %32 : vector<8x16xf32>
    %c0_18 = arith.constant 0 : index
    %c0_19 = arith.constant 0 : index
    %34 = vector.load %arg6[%c0_18, %c0_19] : memref<1x16xf32, #tpu.memory_space<vmem>>, vector<1x16xf32>
    %35 = vector.broadcast %34 : vector<1x16xf32> to vector<8x16xf32>
    %36 = arith.mulf %33, %35 : vector<8x16xf32>
    %c0_20 = arith.constant 0 : index
    %c0_21 = arith.constant 0 : index
    %37 = vector.load %arg7[%c0_20, %c0_21] : memref<1x16xf32, #tpu.memory_space<vmem>>, vector<1x16xf32>
    %38 = vector.broadcast %37 : vector<1x16xf32> to vector<8x16xf32>
    %39 = arith.addf %36, %38 : vector<8x16xf32>
    %cst_22 = arith.constant 0.000000e+00 : f32
    %40 = vector.broadcast %cst_22 : f32 to vector<8x16xf32>
    %41 = arith.maximumf %39, %40 : vector<8x16xf32>
    %c0_23 = arith.constant 0 : index
    %c0_24 = arith.constant 0 : index
    %42 = vector.load %arg9[%c0_23, %c0_24] : memref<8x16xf32, #tpu.memory_space<vmem>>, vector<8x16xf32>
    tpu.vector_store %arg9[%c0_23, %c0_24], %41 {strides = array<i32>} : memref<8x16xf32, #tpu.memory_space<vmem>>, vector<8x16xf32>,
    return
  }
  func.func @transform_0(%arg0: i32) -> (i32, i32) {
    %c0_i32 = arith.constant 0 : i32
    %c0_i32_0 = arith.constant 0 : i32
    return %arg0, %c0_i32 : i32, i32
  }
  func.func @transform_1(%arg0: i32) -> (i32, i32) {
    %c0_i32 = arith.constant 0 : i32
    %c0_i32_0 = arith.constant 0 : i32
    %c0_i32_1 = arith.constant 0 : i32
    return %c0_i32, %c0_i32_0 : i32, i32
  }
  func.func @transform_2(%arg0: i32) -> (i32, i32) {
    %c0_i32 = arith.constant 0 : i32
    %c0_i32_0 = arith.constant 0 : i32
    %c0_i32_1 = arith.constant 0 : i32
    return %c0_i32, %c0_i32_0 : i32, i32
  }
  func.func @transform_3(%arg0: i32) -> (i32, i32) {
    %c0_i32 = arith.constant 0 : i32
    %c0_i32_0 = arith.constant 0 : i32
    %c0_i32_1 = arith.constant 0 : i32
    return %c0_i32, %c0_i32_0 : i32, i32
  }
  func.func @transform_4(%arg0: i32) -> (i32, i32) {
    %c0_i32 = arith.constant 0 : i32
    %c0_i32_0 = arith.constant 0 : i32
    %c0_i32_1 = arith.constant 0 : i32
    return %c0_i32, %c0_i32_0 : i32, i32
  }
  func.func @transform_5(%arg0: i32) -> (i32, i32) {
    %c0_i32 = arith.constant 0 : i32
    %c0_i32_0 = arith.constant 0 : i32
    %c0_i32_1 = arith.constant 0 : i32
    return %c0_i32, %c0_i32_0 : i32, i32
  }
  func.func @transform_6(%arg0: i32) -> (i32, i32) {
    %c0_i32 = arith.constant 0 : i32
    %c0_i32_0 = arith.constant 0 : i32
    %c0_i32_1 = arith.constant 0 : i32
    return %c0_i32, %c0_i32_0 : i32, i32
  }
  func.func @transform_7(%arg0: i32) -> (i32, i32) {
    %c0_i32 = arith.constant 0 : i32
    %c0_i32_0 = arith.constant 0 : i32
    return %arg0, %c0_i32 : i32, i32
  }
  func.func @transform_8(%arg0: i32) -> (i32, i32) {
    %c0_i32 = arith.constant 0 : i32
    %c0_i32_0 = arith.constant 0 : i32
    return %arg0, %c0_i32 : i32, i32
  }
}

module attributes {stable_mosaic.version = 11 : i64} {
  func.func @_proj_kernel(%arg0: i32, %arg1: memref<8x32xf32, #tpu.memory_space<vmem>>, %arg2: memref<32x32xbf16, #tpu.memory_space<vmem>>, %arg3: memref<8x32xf32, #tpu.memory_space<vmem>>) attributes {dimension_semantics = [#tpu.dimension_semantics<parallel>], iteration_bounds = array<i64: 2>, scalar_prefetch = 0 : i64, scratch_operands = 0 : i64, tpu.core_type = #tpu.core_type<tc>, window_params = [{transform_indices = @transform_0, window_bounds = array<i64: 8, 32>}, {pipeline_mode = #tpu.pipeline_mode<synchronous>, transform_indices = @transform_1, window_bounds = array<i64: 32, 32>}, {transform_indices = @transform_2, window_bounds = array<i64: 8, 32>}]} {
    %c0 = arith.constant 0 : index
    %c0_0 = arith.constant 0 : index
    %0 = vector.load %arg1[%c0, %c0_0] : memref<8x32xf32, #tpu.memory_space<vmem>>, vector<8x32xf32>
    %1 = arith.truncf %0 : vector<8x32xf32> to vector<8x32xbf16>
    %c0_1 = arith.constant 0 : index
    %c0_2 = arith.constant 0 : index
    %2 = vector.load %arg2[%c0_1, %c0_2] : memref<32x32xbf16, #tpu.memory_space<vmem>>, vector<32x32xbf16>
    %cst = arith.constant dense<0.000000e+00> : vector<8x32xf32>
    %3 = tpu.matmul %1, %2, %cst {dimension_numbers = #tpu.dot_dimension_numbers<[1], [0], [0], [1], [0, 0, 1, 1], [], []>} : vector<8x32xbf16>, vector<32x32xbf16>, vector<8x32xf32> -> vector<8x32xf32>
    %c0_3 = arith.constant 0 : index
    %c0_4 = arith.constant 0 : index
    %4 = vector.load %arg3[%c0_3, %c0_4] : memref<8x32xf32, #tpu.memory_space<vmem>>, vector<8x32xf32>
    tpu.vector_store %arg3[%c0_3, %c0_4], %3 {strides = array<i32>} : memref<8x32xf32, #tpu.memory_space<vmem>>, vector<8x32xf32>,
    return
  }
  func.func @transform_0(%arg0: i32) -> (i32, i32) {
    %c0_i32 = arith.constant 0 : i32
    %c0_i32_0 = arith.constant 0 : i32
    return %arg0, %c0_i32 : i32, i32
  }
  func.func @transform_1(%arg0: i32) -> (i32, i32) {
    %c0_i32 = arith.constant 0 : i32
    %c0_i32_0 = arith.constant 0 : i32
    %c0_i32_1 = arith.constant 0 : i32
    return %c0_i32, %c0_i32_0 : i32, i32
  }
  func.func @transform_2(%arg0: i32) -> (i32, i32) {
    %c0_i32 = arith.constant 0 : i32
    %c0_i32_0 = arith.constant 0 : i32
    return %arg0, %c0_i32 : i32, i32
  }
}

module attributes {stable_mosaic.version = 11 : i64} {
  func.func @_gen_aggr_kernel(%arg0: i32, %arg1: i32, %arg2: i32, %arg3: memref<1x8x16xf32, #tpu.memory_space<vmem>>, %arg4: memref<1x8x16xf32, #tpu.memory_space<vmem>>, %arg5: memref<1x2x8x8xbf16, #tpu.memory_space<vmem>>, %arg6: memref<1x8x8xbf16, #tpu.memory_space<vmem>>, %arg7: memref<2x16xf32, #tpu.memory_space<vmem>>, %arg8: memref<1x16xf32, #tpu.memory_space<vmem>>, %arg9: memref<1x1xf32, #tpu.memory_space<smem>>, %arg10: memref<1x8x16xf32, #tpu.memory_space<vmem>>, %arg11: memref<8x16xf32, #tpu.memory_space<vmem>>, %arg12: memref<8x16xf32, #tpu.memory_space<vmem>>, %arg13: memref<8x16xf32, #tpu.memory_space<vmem>>, %arg14: memref<8x1xf32, #tpu.memory_space<vmem>>) attributes {dimension_semantics = [#tpu.dimension_semantics<parallel>, #tpu.dimension_semantics<parallel>, #tpu.dimension_semantics<arbitrary>], iteration_bounds = array<i64: 2, 1, 1>, scalar_prefetch = 0 : i64, scratch_operands = 4 : i64, tpu.core_type = #tpu.core_type<tc>, window_params = [{transform_indices = @transform_0, window_bounds = array<i64: 1, 8, 16>}, {transform_indices = @transform_1, window_bounds = array<i64: 1, 8, 16>}, {transform_indices = @transform_2, window_bounds = array<i64: 1, 2, 8, 8>}, {transform_indices = @transform_3, window_bounds = array<i64: 1, 8, 8>}, {pipeline_mode = #tpu.pipeline_mode<synchronous>, transform_indices = @transform_4, window_bounds = array<i64: 2, 16>}, {pipeline_mode = #tpu.pipeline_mode<synchronous>, transform_indices = @transform_5, window_bounds = array<i64: 1, 16>}, {transform_indices = @transform_6, window_bounds = array<i64: 1, 1>}, {transform_indices = @transform_7, window_bounds = array<i64: 1, 8, 16>}]} {
    %c0_i32 = arith.constant 0 : i32
    %0 = arith.cmpi eq, %arg2, %c0_i32 : i32
    %1 = arith.extui %0 : i1 to i32
    %c0_i32_0 = arith.constant 0 : i32
    %2 = arith.cmpi ne, %1, %c0_i32_0 : i32
    scf.if %2 {
      %cst_43 = arith.constant 0xFF800000 : f32
      %81 = vector.broadcast %cst_43 : f32 to vector<8x16xf32>
      %c0_44 = arith.constant 0 : index
      %c0_45 = arith.constant 0 : index
      %82 = vector.load %arg11[%c0_44, %c0_45] : memref<8x16xf32, #tpu.memory_space<vmem>>, vector<8x16xf32>
      tpu.vector_store %arg11[%c0_44, %c0_45], %81 {strides = array<i32>} : memref<8x16xf32, #tpu.memory_space<vmem>>, vector<8x16xf32>,
      %cst_46 = arith.constant 0.000000e+00 : f32
      %83 = vector.broadcast %cst_46 : f32 to vector<8x16xf32>
      %c0_47 = arith.constant 0 : index
      %c0_48 = arith.constant 0 : index
      %84 = vector.load %arg12[%c0_47, %c0_48] : memref<8x16xf32, #tpu.memory_space<vmem>>, vector<8x16xf32>
      tpu.vector_store %arg12[%c0_47, %c0_48], %83 {strides = array<i32>} : memref<8x16xf32, #tpu.memory_space<vmem>>, vector<8x16xf32>,
      %cst_49 = arith.constant 0.000000e+00 : f32
      %85 = vector.broadcast %cst_49 : f32 to vector<8x16xf32>
      %c0_50 = arith.constant 0 : index
      %c0_51 = arith.constant 0 : index
      %86 = vector.load %arg13[%c0_50, %c0_51] : memref<8x16xf32, #tpu.memory_space<vmem>>, vector<8x16xf32>
      tpu.vector_store %arg13[%c0_50, %c0_51], %85 {strides = array<i32>} : memref<8x16xf32, #tpu.memory_space<vmem>>, vector<8x16xf32>,
      %cst_52 = arith.constant 0.000000e+00 : f32
      %87 = vector.broadcast %cst_52 : f32 to vector<8x1xf32>
      %c0_53 = arith.constant 0 : index
      %c0_54 = arith.constant 0 : index
      %88 = vector.load %arg14[%c0_53, %c0_54] : memref<8x1xf32, #tpu.memory_space<vmem>>, vector<8x1xf32>
      tpu.vector_store %arg14[%c0_53, %c0_54], %87 {strides = array<i32>} : memref<8x1xf32, #tpu.memory_space<vmem>>, vector<8x1xf32>,
    } else {
    }
    %c0 = arith.constant 0 : index
    %c0_1 = arith.constant 0 : index
    %c0_2 = arith.constant 0 : index
    %3 = vector.load %arg3[%c0, %c0_1, %c0_2] : memref<1x8x16xf32, #tpu.memory_space<vmem>>, vector<1x8x16xf32>
    %4 = vector.shape_cast %3 : vector<1x8x16xf32> to vector<8x16xf32>
    %c0_3 = arith.constant 0 : index
    %c0_4 = arith.constant 0 : index
    %5 = vector.load %arg8[%c0_3, %c0_4] : memref<1x16xf32, #tpu.memory_space<vmem>>, vector<1x16xf32>
    %6 = vector.broadcast %5 : vector<1x16xf32> to vector<8x16xf32>
    %7 = arith.addf %4, %6 : vector<8x16xf32>
    %c0_5 = arith.constant 0 : index
    %c0_6 = arith.constant 0 : index
    %c0_7 = arith.constant 0 : index
    %c0_8 = arith.constant 0 : index
    %8 = vector.load %arg5[%c0_5, %c0_6, %c0_7, %c0_8] : memref<1x2x8x8xbf16, #tpu.memory_space<vmem>>, vector<1x2x8x8xbf16>
    %9 = vector.shape_cast %8 : vector<1x2x8x8xbf16> to vector<2x8x8xbf16>
    %10 = arith.extf %9 : vector<2x8x8xbf16> to vector<2x8x8xf32>
    %c0_9 = arith.constant 0 : index
    %c0_10 = arith.constant 0 : index
    %c0_11 = arith.constant 0 : index
    %11 = vector.load %arg6[%c0_9, %c0_10, %c0_11] : memref<1x8x8xbf16, #tpu.memory_space<vmem>>, vector<1x8x8xbf16>
    %12 = vector.shape_cast %11 : vector<1x8x8xbf16> to vector<8x8xbf16>
    %13 = arith.extf %12 : vector<8x8xbf16> to vector<8x8xf32>
    %c0_12 = arith.constant 0 : index
    %c0_13 = arith.constant 0 : index
    %14 = vector.load %arg7[%c0_12, %c0_13] : memref<2x16xf32, #tpu.memory_space<vmem>>, vector<2x16xf32>
    %c0_14 = arith.constant 0 : index
    %c0_15 = arith.constant 0 : index
    %15 = memref.load %arg9[%c0_14, %c0_15] : memref<1x1xf32, #tpu.memory_space<smem>>
    %16 = vector.extract_strided_slice %10 {offsets = [0, 0, 0], sizes = [1, 8, 8], strides = [1, 1, 1]} : vector<2x8x8xf32> to vector<1x8x8xf32>
    %17 = vector.shape_cast %16 : vector<1x8x8xf32> to vector<8x8xf32>
    %18 = vector.shape_cast %17 : vector<8x8xf32> to vector<8x8x1xf32>
    %19 = vector.extract_strided_slice %14 {offsets = [0, 0], sizes = [1, 16], strides = [1, 1]} : vector<2x16xf32> to vector<1x16xf32>
    %20 = vector.shape_cast %19 : vector<1x16xf32> to vector<16xf32>
    %21 = vector.shape_cast %20 : vector<16xf32> to vector<1x1x16xf32>
    %22 = vector.broadcast %18 : vector<8x8x1xf32> to vector<8x8x16xf32>
    %23 = vector.broadcast %21 : vector<1x1x16xf32> to vector<8x8x16xf32>
    %24 = arith.mulf %22, %23 : vector<8x8x16xf32>
    %25 = vector.extract_strided_slice %10 {offsets = [1, 0, 0], sizes = [1, 8, 8], strides = [1, 1, 1]} : vector<2x8x8xf32> to vector<1x8x8xf32>
    %26 = vector.shape_cast %25 : vector<1x8x8xf32> to vector<8x8xf32>
    %27 = vector.shape_cast %26 : vector<8x8xf32> to vector<8x8x1xf32>
    %28 = vector.extract_strided_slice %14 {offsets = [1, 0], sizes = [1, 16], strides = [1, 1]} : vector<2x16xf32> to vector<1x16xf32>
    %29 = vector.shape_cast %28 : vector<1x16xf32> to vector<16xf32>
    %30 = vector.shape_cast %29 : vector<16xf32> to vector<1x1x16xf32>
    %31 = vector.broadcast %27 : vector<8x8x1xf32> to vector<8x8x16xf32>
    %32 = vector.broadcast %30 : vector<1x1x16xf32> to vector<8x8x16xf32>
    %33 = arith.mulf %31, %32 : vector<8x8x16xf32>
    %34 = arith.addf %24, %33 : vector<8x8x16xf32>
    %35 = vector.shape_cast %7 : vector<8x16xf32> to vector<1x8x16xf32>
    %36 = vector.broadcast %35 : vector<1x8x16xf32> to vector<8x8x16xf32>
    %37 = arith.addf %36, %34 : vector<8x8x16xf32>
    %cst = arith.constant 0.000000e+00 : f32
    %38 = vector.broadcast %cst : f32 to vector<8x8x16xf32>
    %39 = arith.maximumf %37, %38 : vector<8x8x16xf32>
    %cst_16 = arith.constant 1.000000e-07 : f32
    %40 = vector.broadcast %cst_16 : f32 to vector<8x8x16xf32>
    %41 = arith.addf %39, %40 : vector<8x8x16xf32>
    %cst_17 = arith.constant 1.000000e+00 : f32
    %42 = vector.broadcast %cst_17 : f32 to vector<8x8xf32>
    %43 = arith.subf %13, %42 : vector<8x8xf32>
    %cst_18 = arith.constant 1.000000e+30 : f32
    %44 = vector.broadcast %cst_18 : f32 to vector<8x8xf32>
    %45 = arith.mulf %43, %44 : vector<8x8xf32>
    %46 = vector.broadcast %15 : f32 to vector<8x8x16xf32>
    %47 = arith.mulf %41, %46 : vector<8x8x16xf32>
    %48 = vector.shape_cast %45 : vector<8x8xf32> to vector<8x8x1xf32>
    %49 = vector.broadcast %48 : vector<8x8x1xf32> to vector<8x8x16xf32>
    %50 = arith.addf %47, %49 : vector<8x8x16xf32>
    %c0_19 = arith.constant 0 : index
    %c0_20 = arith.constant 0 : index
    %51 = vector.load %arg11[%c0_19, %c0_20] : memref<8x16xf32, #tpu.memory_space<vmem>>, vector<8x16xf32>
    %cst_21 = arith.constant dense<0xFF800000> : vector<8x16xf32>
    %52 = vector.multi_reduction <maximumf>, %50, %cst_21 [1] : vector<8x8x16xf32> to vector<8x16xf32>
    %53 = arith.maximumf %51, %52 : vector<8x16xf32>
    %c0_22 = arith.constant 0 : index
    %c0_23 = arith.constant 0 : index
    %54 = vector.load %arg11[%c0_22, %c0_23] : memref<8x16xf32, #tpu.memory_space<vmem>>, vector<8x16xf32>
    %55 = arith.subf %54, %53 : vector<8x16xf32>
    %56 = math.exp %55 : vector<8x16xf32>
    %57 = vector.shape_cast %53 : vector<8x16xf32> to vector<8x1x16xf32>
    %58 = vector.broadcast %57 : vector<8x1x16xf32> to vector<8x8x16xf32>
    %59 = arith.subf %50, %58 : vector<8x8x16xf32>
    %60 = math.exp %59 : vector<8x8x16xf32>
    %c0_24 = arith.constant 0 : index
    %c0_25 = arith.constant 0 : index
    %61 = vector.load %arg12[%c0_24, %c0_25] : memref<8x16xf32, #tpu.memory_space<vmem>>, vector<8x16xf32>
    %62 = arith.mulf %56, %61 : vector<8x16xf32>
    %cst_26 = arith.constant dense<0.000000e+00> : vector<8x16xf32>
    %63 = vector.multi_reduction <add>, %60, %cst_26 [1] : vector<8x8x16xf32> to vector<8x16xf32>
    %64 = arith.addf %62, %63 : vector<8x16xf32>
    %c0_27 = arith.constant 0 : index
    %c0_28 = arith.constant 0 : index
    %65 = vector.load %arg12[%c0_27, %c0_28] : memref<8x16xf32, #tpu.memory_space<vmem>>, vector<8x16xf32>
    tpu.vector_store %arg12[%c0_27, %c0_28], %64 {strides = array<i32>} : memref<8x16xf32, #tpu.memory_space<vmem>>, vector<8x16xf32>,
    %c0_29 = arith.constant 0 : index
    %c0_30 = arith.constant 0 : index
    %66 = vector.load %arg13[%c0_29, %c0_30] : memref<8x16xf32, #tpu.memory_space<vmem>>, vector<8x16xf32>
    %67 = arith.mulf %56, %66 : vector<8x16xf32>
    %68 = arith.mulf %60, %41 : vector<8x8x16xf32>
    %cst_31 = arith.constant dense<0.000000e+00> : vector<8x16xf32>
    %69 = vector.multi_reduction <add>, %68, %cst_31 [1] : vector<8x8x16xf32> to vector<8x16xf32>
    %70 = arith.addf %67, %69 : vector<8x16xf32>
    %c0_32 = arith.constant 0 : index
    %c0_33 = arith.constant 0 : index
    %71 = vector.load %arg13[%c0_32, %c0_33] : memref<8x16xf32, #tpu.memory_space<vmem>>, vector<8x16xf32>
    tpu.vector_store %arg13[%c0_32, %c0_33], %70 {strides = array<i32>} : memref<8x16xf32, #tpu.memory_space<vmem>>, vector<8x16xf32>,
    %c0_34 = arith.constant 0 : index
    %c0_35 = arith.constant 0 : index
    %72 = vector.load %arg11[%c0_34, %c0_35] : memref<8x16xf32, #tpu.memory_space<vmem>>, vector<8x16xf32>
    tpu.vector_store %arg11[%c0_34, %c0_35], %53 {strides = array<i32>} : memref<8x16xf32, #tpu.memory_space<vmem>>, vector<8x16xf32>,
    %c0_36 = arith.constant 0 : index
    %c0_37 = arith.constant 0 : index
    %73 = vector.load %arg14[%c0_36, %c0_37] : memref<8x1xf32, #tpu.memory_space<vmem>>, vector<8x1xf32>
    %cst_38 = arith.constant dense<0.000000e+00> : vector<8xf32>
    %74 = vector.multi_reduction <add>, %13, %cst_38 [1] : vector<8x8xf32> to vector<8xf32>
    %75 = vector.shape_cast %74 : vector<8xf32> to vector<8x1xf32>
    %76 = arith.addf %73, %75 : vector<8x1xf32>
    %c0_39 = arith.constant 0 : index
    %c0_40 = arith.constant 0 : index
    %77 = vector.load %arg14[%c0_39, %c0_40] : memref<8x1xf32, #tpu.memory_space<vmem>>, vector<8x1xf32>
    tpu.vector_store %arg14[%c0_39, %c0_40], %76 {strides = array<i32>} : memref<8x1xf32, #tpu.memory_space<vmem>>, vector<8x1xf32>,
    %c0_i32_41 = arith.constant 0 : i32
    %78 = arith.cmpi eq, %arg2, %c0_i32_41 : i32
    %79 = arith.extui %78 : i1 to i32
    %c0_i32_42 = arith.constant 0 : i32
    %80 = arith.cmpi ne, %79, %c0_i32_42 : i32
    scf.if %80 {
      %c0_43 = arith.constant 0 : index
      %c0_44 = arith.constant 0 : index
      %81 = vector.load %arg12[%c0_43, %c0_44] : memref<8x16xf32, #tpu.memory_space<vmem>>, vector<8x16xf32>
      %cst_45 = arith.constant 1.000000e-16 : f32
      %82 = vector.broadcast %cst_45 : f32 to vector<8x16xf32>
      %83 = arith.maximumf %81, %82 : vector<8x16xf32>
      %84 = tpu.reciprocal %83 {approx = true} : vector<8x16xf32> -> vector<8x16xf32>
      %c0_46 = arith.constant 0 : index
      %c0_47 = arith.constant 0 : index
      %85 = vector.load %arg13[%c0_46, %c0_47] : memref<8x16xf32, #tpu.memory_space<vmem>>, vector<8x16xf32>
      %86 = arith.mulf %85, %84 : vector<8x16xf32>
      %c0_48 = arith.constant 0 : index
      %c0_49 = arith.constant 0 : index
      %87 = vector.load %arg14[%c0_48, %c0_49] : memref<8x1xf32, #tpu.memory_space<vmem>>, vector<8x1xf32>
      %cst_50 = arith.constant 0.000000e+00 : f32
      %88 = vector.broadcast %cst_50 : f32 to vector<8x1xf32>
      %89 = arith.cmpf ogt, %87, %88 : vector<8x1xf32>
      %cst_51 = arith.constant 0.000000e+00 : f32
      %90 = vector.shape_cast %89 : vector<8x1xi1> to vector<8x1xi1>
      %91 = vector.broadcast %90 : vector<8x1xi1> to vector<8x16xi1>
      %92 = vector.broadcast %cst_51 : f32 to vector<8x16xf32>
      %93 = arith.select %91, %86, %92 : vector<8x16xi1>, vector<8x16xf32>
      %c0_52 = arith.constant 0 : index
      %c0_53 = arith.constant 0 : index
      %c0_54 = arith.constant 0 : index
      %94 = vector.load %arg4[%c0_52, %c0_53, %c0_54] : memref<1x8x16xf32, #tpu.memory_space<vmem>>, vector<1x8x16xf32>
      %95 = vector.shape_cast %94 : vector<1x8x16xf32> to vector<8x16xf32>
      %96 = arith.addf %93, %95 : vector<8x16xf32>
      %c0_55 = arith.constant 0 : index
      %c0_56 = arith.constant 0 : index
      %c0_57 = arith.constant 0 : index
      %97 = vector.load %arg10[%c0_55, %c0_56, %c0_57] : memref<1x8x16xf32, #tpu.memory_space<vmem>>, vector<1x8x16xf32>
      %98 = vector.shape_cast %97 : vector<1x8x16xf32> to vector<8x16xf32>
      %99 = vector.shape_cast %96 : vector<8x16xf32> to vector<1x8x16xf32>
      tpu.vector_store %arg10[%c0_55, %c0_56, %c0_57], %99 {strides = array<i32>} : memref<1x8x16xf32, #tpu.memory_space<vmem>>, vector<1x8x16xf32>,
    } else {
    }
    return
  }
  func.func @transform_0(%arg0: i32, %arg1: i32, %arg2: i32) -> (i32, i32, i32) {
    %c0_i32 = arith.constant 0 : i32
    %c0_i32_0 = arith.constant 0 : i32
    return %arg0, %arg2, %c0_i32 : i32, i32, i32
  }
  func.func @transform_1(%arg0: i32, %arg1: i32, %arg2: i32) -> (i32, i32, i32) {
    %c0_i32 = arith.constant 0 : i32
    %c0_i32_0 = arith.constant 0 : i32
    return %arg0, %arg1, %c0_i32 : i32, i32, i32
  }
  func.func @transform_2(%arg0: i32, %arg1: i32, %arg2: i32) -> (i32, i32, i32, i32) {
    %c0_i32 = arith.constant 0 : i32
    %c0_i32_0 = arith.constant 0 : i32
    return %arg0, %c0_i32, %arg1, %arg2 : i32, i32, i32, i32
  }
  func.func @transform_3(%arg0: i32, %arg1: i32, %arg2: i32) -> (i32, i32, i32) {
    %c0_i32 = arith.constant 0 : i32
    return %arg0, %arg1, %arg2 : i32, i32, i32
  }
  func.func @transform_4(%arg0: i32, %arg1: i32, %arg2: i32) -> (i32, i32) {
    %c0_i32 = arith.constant 0 : i32
    %c0_i32_0 = arith.constant 0 : i32
    %c0_i32_1 = arith.constant 0 : i32
    return %c0_i32, %c0_i32_0 : i32, i32
  }
  func.func @transform_5(%arg0: i32, %arg1: i32, %arg2: i32) -> (i32, i32) {
    %c0_i32 = arith.constant 0 : i32
    %c0_i32_0 = arith.constant 0 : i32
    %c0_i32_1 = arith.constant 0 : i32
    return %c0_i32, %c0_i32_0 : i32, i32
  }
  func.func @transform_6(%arg0: i32, %arg1: i32, %arg2: i32) -> (i32, i32) {
    %c0_i32 = arith.constant 0 : i32
    %c0_i32_0 = arith.constant 0 : i32
    %c0_i32_1 = arith.constant 0 : i32
    return %c0_i32, %c0_i32_0 : i32, i32
  }
  func.func @transform_7(%arg0: i32, %arg1: i32, %arg2: i32) -> (i32, i32, i32) {
    %c0_i32 = arith.constant 0 : i32
    %c0_i32_0 = arith.constant 0 : i32
    return %arg0, %arg1, %c0_i32 : i32, i32, i32
  }
}

module attributes {stable_mosaic.version = 11 : i64} {
  func.func @_mlp_kernel(%arg0: i32, %arg1: memref<8x16xf32, #tpu.memory_space<vmem>>, %arg2: memref<16x32xbf16, #tpu.memory_space<vmem>>, %arg3: memref<1x32xf32, #tpu.memory_space<vmem>>, %arg4: memref<32x16xbf16, #tpu.memory_space<vmem>>, %arg5: memref<1x16xf32, #tpu.memory_space<vmem>>, %arg6: memref<8x16xf32, #tpu.memory_space<vmem>>, %arg7: memref<1x16xf32, #tpu.memory_space<vmem>>, %arg8: memref<8x16xf32, #tpu.memory_space<vmem>>, %arg9: memref<8x1xf32, #tpu.memory_space<vmem>>) attributes {dimension_semantics = [#tpu.dimension_semantics<parallel>], iteration_bounds = array<i64: 2>, scalar_prefetch = 0 : i64, scratch_operands = 0 : i64, tpu.core_type = #tpu.core_type<tc>, window_params = [{transform_indices = @transform_0, window_bounds = array<i64: 8, 16>}, {pipeline_mode = #tpu.pipeline_mode<synchronous>, transform_indices = @transform_1, window_bounds = array<i64: 16, 32>}, {pipeline_mode = #tpu.pipeline_mode<synchronous>, transform_indices = @transform_2, window_bounds = array<i64: 1, 32>}, {pipeline_mode = #tpu.pipeline_mode<synchronous>, transform_indices = @transform_3, window_bounds = array<i64: 32, 16>}, {pipeline_mode = #tpu.pipeline_mode<synchronous>, transform_indices = @transform_4, window_bounds = array<i64: 1, 16>}, {transform_indices = @transform_5, window_bounds = array<i64: 8, 16>}, {pipeline_mode = #tpu.pipeline_mode<synchronous>, transform_indices = @transform_6, window_bounds = array<i64: 1, 16>}, {transform_indices = @transform_7, window_bounds = array<i64: 8, 16>}, {transform_indices = @transform_8, window_bounds = array<i64: 8, 1>}]} {
    %c0 = arith.constant 0 : index
    %c0_0 = arith.constant 0 : index
    %0 = vector.load %arg1[%c0, %c0_0] : memref<8x16xf32, #tpu.memory_space<vmem>>, vector<8x16xf32>
    %1 = arith.truncf %0 : vector<8x16xf32> to vector<8x16xbf16>
    %c0_1 = arith.constant 0 : index
    %c0_2 = arith.constant 0 : index
    %2 = vector.load %arg2[%c0_1, %c0_2] : memref<16x32xbf16, #tpu.memory_space<vmem>>, vector<16x32xbf16>
    %cst = arith.constant dense<0.000000e+00> : vector<8x32xf32>
    %3 = tpu.matmul %1, %2, %cst {dimension_numbers = #tpu.dot_dimension_numbers<[1], [0], [0], [1], [0, 0, 1, 1], [], []>} : vector<8x16xbf16>, vector<16x32xbf16>, vector<8x32xf32> -> vector<8x32xf32>
    %c0_3 = arith.constant 0 : index
    %c0_4 = arith.constant 0 : index
    %4 = vector.load %arg3[%c0_3, %c0_4] : memref<1x32xf32, #tpu.memory_space<vmem>>, vector<1x32xf32>
    %5 = vector.broadcast %4 : vector<1x32xf32> to vector<8x32xf32>
    %6 = arith.addf %3, %5 : vector<8x32xf32>
    %cst_5 = arith.constant 0.000000e+00 : f32
    %7 = vector.broadcast %cst_5 : f32 to vector<8x32xf32>
    %8 = arith.maximumf %6, %7 : vector<8x32xf32>
    %9 = arith.truncf %8 : vector<8x32xf32> to vector<8x32xbf16>
    %c0_6 = arith.constant 0 : index
    %c0_7 = arith.constant 0 : index
    %10 = vector.load %arg4[%c0_6, %c0_7] : memref<32x16xbf16, #tpu.memory_space<vmem>>, vector<32x16xbf16>
    %cst_8 = arith.constant dense<0.000000e+00> : vector<8x16xf32>
    %11 = tpu.matmul %9, %10, %cst_8 {dimension_numbers = #tpu.dot_dimension_numbers<[1], [0], [0], [1], [0, 0, 1, 1], [], []>} : vector<8x32xbf16>, vector<32x16xbf16>, vector<8x16xf32> -> vector<8x16xf32>
    %c0_9 = arith.constant 0 : index
    %c0_10 = arith.constant 0 : index
    %12 = vector.load %arg5[%c0_9, %c0_10] : memref<1x16xf32, #tpu.memory_space<vmem>>, vector<1x16xf32>
    %13 = vector.broadcast %12 : vector<1x16xf32> to vector<8x16xf32>
    %14 = arith.addf %11, %13 : vector<8x16xf32>
    %c0_11 = arith.constant 0 : index
    %c0_12 = arith.constant 0 : index
    %15 = vector.load %arg6[%c0_11, %c0_12] : memref<8x16xf32, #tpu.memory_space<vmem>>, vector<8x16xf32>
    %16 = arith.addf %14, %15 : vector<8x16xf32>
    %cst_13 = arith.constant 0.000000e+00 : f32
    %17 = vector.broadcast %cst_13 : f32 to vector<8x16xf32>
    %18 = arith.maximumf %16, %17 : vector<8x16xf32>
    %c0_14 = arith.constant 0 : index
    %c0_15 = arith.constant 0 : index
    %19 = vector.load %arg8[%c0_14, %c0_15] : memref<8x16xf32, #tpu.memory_space<vmem>>, vector<8x16xf32>
    tpu.vector_store %arg8[%c0_14, %c0_15], %18 {strides = array<i32>} : memref<8x16xf32, #tpu.memory_space<vmem>>, vector<8x16xf32>,
    %c0_16 = arith.constant 0 : index
    %c0_17 = arith.constant 0 : index
    %20 = vector.load %arg7[%c0_16, %c0_17] : memref<1x16xf32, #tpu.memory_space<vmem>>, vector<1x16xf32>
    %21 = vector.broadcast %20 : vector<1x16xf32> to vector<8x16xf32>
    %22 = arith.mulf %18, %21 : vector<8x16xf32>
    %cst_18 = arith.constant dense<0.000000e+00> : vector<8xf32>
    %23 = vector.multi_reduction <add>, %22, %cst_18 [1] : vector<8x16xf32> to vector<8xf32>
    %24 = vector.shape_cast %23 : vector<8xf32> to vector<8x1xf32>
    %25 = math.tanh %24 : vector<8x1xf32>
    %c0_19 = arith.constant 0 : index
    %c0_20 = arith.constant 0 : index
    %26 = vector.load %arg9[%c0_19, %c0_20] : memref<8x1xf32, #tpu.memory_space<vmem>>, vector<8x1xf32>
    tpu.vector_store %arg9[%c0_19, %c0_20], %25 {strides = array<i32>} : memref<8x1xf32, #tpu.memory_space<vmem>>, vector<8x1xf32>,
    return
  }
  func.func @transform_0(%arg0: i32) -> (i32, i32) {
    %c0_i32 = arith.constant 0 : i32
    %c0_i32_0 = arith.constant 0 : i32
    return %arg0, %c0_i32 : i32, i32
  }
  func.func @transform_1(%arg0: i32) -> (i32, i32) {
    %c0_i32 = arith.constant 0 : i32
    %c0_i32_0 = arith.constant 0 : i32
    %c0_i32_1 = arith.constant 0 : i32
    return %c0_i32, %c0_i32_0 : i32, i32
  }
  func.func @transform_2(%arg0: i32) -> (i32, i32) {
    %c0_i32 = arith.constant 0 : i32
    %c0_i32_0 = arith.constant 0 : i32
    %c0_i32_1 = arith.constant 0 : i32
    return %c0_i32, %c0_i32_0 : i32, i32
  }
  func.func @transform_3(%arg0: i32) -> (i32, i32) {
    %c0_i32 = arith.constant 0 : i32
    %c0_i32_0 = arith.constant 0 : i32
    %c0_i32_1 = arith.constant 0 : i32
    return %c0_i32, %c0_i32_0 : i32, i32
  }
  func.func @transform_4(%arg0: i32) -> (i32, i32) {
    %c0_i32 = arith.constant 0 : i32
    %c0_i32_0 = arith.constant 0 : i32
    %c0_i32_1 = arith.constant 0 : i32
    return %c0_i32, %c0_i32_0 : i32, i32
  }
  func.func @transform_5(%arg0: i32) -> (i32, i32) {
    %c0_i32 = arith.constant 0 : i32
    %c0_i32_0 = arith.constant 0 : i32
    return %arg0, %c0_i32 : i32, i32
  }
  func.func @transform_6(%arg0: i32) -> (i32, i32) {
    %c0_i32 = arith.constant 0 : i32
    %c0_i32_0 = arith.constant 0 : i32
    %c0_i32_1 = arith.constant 0 : i32
    return %c0_i32, %c0_i32_0 : i32, i32
  }
  func.func @transform_7(%arg0: i32) -> (i32, i32) {
    %c0_i32 = arith.constant 0 : i32
    %c0_i32_0 = arith.constant 0 : i32
    return %arg0, %c0_i32 : i32, i32
  }
  func.func @transform_8(%arg0: i32) -> (i32, i32) {
    %c0_i32 = arith.constant 0 : i32
    %c0_i32_0 = arith.constant 0 : i32
    return %arg0, %c0_i32 : i32, i32
  }
}

module attributes {stable_mosaic.version = 11 : i64} {
  func.func @_pool_head_kernel(%arg0: i32, %arg1: memref<2x4x16xf32, #tpu.memory_space<vmem>>, %arg2: memref<16x32xbf16, #tpu.memory_space<vmem>>, %arg3: memref<1x32xf32, #tpu.memory_space<vmem>>, %arg4: memref<32x8xbf16, #tpu.memory_space<vmem>>, %arg5: memref<1x8xf32, #tpu.memory_space<vmem>>, %arg6: memref<2x8xf32, #tpu.memory_space<vmem>>) attributes {dimension_semantics = [#tpu.dimension_semantics<arbitrary>], iteration_bounds = array<i64: 1>, scalar_prefetch = 0 : i64, scratch_operands = 0 : i64, tpu.core_type = #tpu.core_type<tc>, window_params = [{pipeline_mode = #tpu.pipeline_mode<synchronous>, transform_indices = @transform_0, window_bounds = array<i64: 2, 4, 16>}, {pipeline_mode = #tpu.pipeline_mode<synchronous>, transform_indices = @transform_1, window_bounds = array<i64: 16, 32>}, {pipeline_mode = #tpu.pipeline_mode<synchronous>, transform_indices = @transform_2, window_bounds = array<i64: 1, 32>}, {pipeline_mode = #tpu.pipeline_mode<synchronous>, transform_indices = @transform_3, window_bounds = array<i64: 32, 8>}, {pipeline_mode = #tpu.pipeline_mode<synchronous>, transform_indices = @transform_4, window_bounds = array<i64: 1, 8>}, {pipeline_mode = #tpu.pipeline_mode<synchronous>, transform_indices = @transform_5, window_bounds = array<i64: 2, 8>}]} {
    %c0 = arith.constant 0 : index
    %c0_0 = arith.constant 0 : index
    %c0_1 = arith.constant 0 : index
    %0 = vector.load %arg1[%c0, %c0_0, %c0_1] : memref<2x4x16xf32, #tpu.memory_space<vmem>>, vector<2x4x16xf32>
    %cst = arith.constant dense<0.000000e+00> : vector<2x16xf32>
    %1 = vector.multi_reduction <add>, %0, %cst [1] : vector<2x4x16xf32> to vector<2x16xf32>
    %cst_2 = arith.constant 4.000000e+00 : f32
    %2 = vector.broadcast %cst_2 : f32 to vector<2x16xf32>
    %3 = arith.divf %1, %2 : vector<2x16xf32>
    %c0_3 = arith.constant 0 : index
    %c0_4 = arith.constant 0 : index
    %4 = vector.load %arg2[%c0_3, %c0_4] : memref<16x32xbf16, #tpu.memory_space<vmem>>, vector<16x32xbf16>
    %c0_5 = arith.constant 0 : index
    %c0_6 = arith.constant 0 : index
    %5 = vector.load %arg3[%c0_5, %c0_6] : memref<1x32xf32, #tpu.memory_space<vmem>>, vector<1x32xf32>
    %6 = arith.truncf %3 : vector<2x16xf32> to vector<2x16xbf16>
    %cst_7 = arith.constant dense<0.000000e+00> : vector<2x32xf32>
    %7 = tpu.matmul %6, %4, %cst_7 {dimension_numbers = #tpu.dot_dimension_numbers<[1], [0], [0], [1], [0, 0, 1, 1], [], []>} : vector<2x16xbf16>, vector<16x32xbf16>, vector<2x32xf32> -> vector<2x32xf32>
    %8 = vector.broadcast %5 : vector<1x32xf32> to vector<2x32xf32>
    %9 = arith.addf %7, %8 : vector<2x32xf32>
    %cst_8 = arith.constant 0.000000e+00 : f32
    %10 = vector.broadcast %cst_8 : f32 to vector<2x32xf32>
    %11 = arith.maximumf %9, %10 : vector<2x32xf32>
    %c0_9 = arith.constant 0 : index
    %c0_10 = arith.constant 0 : index
    %12 = vector.load %arg4[%c0_9, %c0_10] : memref<32x8xbf16, #tpu.memory_space<vmem>>, vector<32x8xbf16>
    %c0_11 = arith.constant 0 : index
    %c0_12 = arith.constant 0 : index
    %13 = vector.load %arg5[%c0_11, %c0_12] : memref<1x8xf32, #tpu.memory_space<vmem>>, vector<1x8xf32>
    %14 = arith.truncf %11 : vector<2x32xf32> to vector<2x32xbf16>
    %cst_13 = arith.constant dense<0.000000e+00> : vector<2x8xf32>
    %15 = tpu.matmul %14, %12, %cst_13 {dimension_numbers = #tpu.dot_dimension_numbers<[1], [0], [0], [1], [0, 0, 1, 1], [], []>} : vector<2x32xbf16>, vector<32x8xbf16>, vector<2x8xf32> -> vector<2x8xf32>
    %16 = vector.broadcast %13 : vector<1x8xf32> to vector<2x8xf32>
    %17 = arith.addf %15, %16 : vector<2x8xf32>
    %cst_14 = arith.constant 0.000000e+00 : f32
    %18 = vector.broadcast %cst_14 : f32 to vector<2x8xf32>
    %19 = arith.maximumf %17, %18 : vector<2x8xf32>
    %c0_15 = arith.constant 0 : index
    %c0_16 = arith.constant 0 : index
    %20 = vector.load %arg6[%c0_15, %c0_16] : memref<2x8xf32, #tpu.memory_space<vmem>>, vector<2x8xf32>
    tpu.vector_store %arg6[%c0_15, %c0_16], %19 {strides = array<i32>} : memref<2x8xf32, #tpu.memory_space<vmem>>, vector<2x8xf32>,
    return
  }
  func.func @transform_0(%arg0: i32) -> (i32, i32, i32) {
    %c0_i32 = arith.constant 0 : i32
    %c0_i32_0 = arith.constant 0 : i32
    %c0_i32_1 = arith.constant 0 : i32
    %c0_i32_2 = arith.constant 0 : i32
    return %c0_i32, %c0_i32_0, %c0_i32_1 : i32, i32, i32
  }
  func.func @transform_1(%arg0: i32) -> (i32, i32) {
    %c0_i32 = arith.constant 0 : i32
    %c0_i32_0 = arith.constant 0 : i32
    %c0_i32_1 = arith.constant 0 : i32
    return %c0_i32, %c0_i32_0 : i32, i32
  }
  func.func @transform_2(%arg0: i32) -> (i32, i32) {
    %c0_i32 = arith.constant 0 : i32
    %c0_i32_0 = arith.constant 0 : i32
    %c0_i32_1 = arith.constant 0 : i32
    return %c0_i32, %c0_i32_0 : i32, i32
  }
  func.func @transform_3(%arg0: i32) -> (i32, i32) {
    %c0_i32 = arith.constant 0 : i32
    %c0_i32_0 = arith.constant 0 : i32
    %c0_i32_1 = arith.constant 0 : i32
    return %c0_i32, %c0_i32_0 : i32, i32
  }
  func.func @transform_4(%arg0: i32) -> (i32, i32) {
    %c0_i32 = arith.constant 0 : i32
    %c0_i32_0 = arith.constant 0 : i32
    %c0_i32_1 = arith.constant 0 : i32
    return %c0_i32, %c0_i32_0 : i32, i32
  }
  func.func @transform_5(%arg0: i32) -> (i32, i32) {
    %c0_i32 = arith.constant 0 : i32
    %c0_i32_0 = arith.constant 0 : i32
    %c0_i32_1 = arith.constant 0 : i32
    return %c0_i32, %c0_i32_0 : i32, i32
  }
}

</mosaic_0001>

<llo_original>
// kernel: dyresgen_forward.11
$region0: #{dyresgen_forward.11}
  #allocation0 [shape = 'u32[]', space=smem, size = 0x4, offset = 0x4, fixed_abs, tag = 'smem constant byte address 0x4 - core index']
  #allocation1 [shape = 'u32[144,128]{1,0:T(1,128)}', space=vmem, size = 0x12000, scoped, tag = 'internal scratch']
  %s0 = inlined_call_operand.vmem [shape: f32[32,4], index: 0, kind: input, shape index: {}]
  %s1 = inlined_call_operand.vmem [shape: bf16[4,64], index: 1, kind: input, shape index: {}]
  %s2 = inlined_call_operand.vmem [shape: f32[32,64], index: 2, kind: output, shape index: {}]
  %s3 = sld [smem:[#allocation0]]
  $region41: #{dyresgen_forward.11} parent=0
    _
  %s5 = ssub.s32 1, %s3
  %s6 = scalar_select 0, %s5, %s3
  loop: start=0, step=1, limit=4
  $region2: #{dyresgen_forward.11} parent=0 // loop_pre_header
    _
  $region3: #{dyresgen_forward.11} parent=0 // loop_header
    %s8 = sphi 0, %s12
    %p9 = scmp.ge.s32.totalorder %s8, 4
    %s18 = sphi 0, %s20
    %s21 = sphi 0, %s18
    %s22 = sphi 0, %s21
    %s38 = sphi 0, %s22
    %s42 = sphi 0, %s42
    %s44 = sphi 0, %s42
    %s45 = sphi 0, %s44
    %s59 = sphi 0, %s45
    %s65 = sphi 0, %s67
    %s68 = sphi 0, %s65
    %s69 = sphi 0, %s68
    %s85 = sphi 0, %s69
  $region4: #{dyresgen_forward.11} parent=0 // loop_header_branch
    %11 = sbr.rel (%p9) target = $region8
  $region5: #{dyresgen_forward.11} parent=0 // loop_body
    %s13 = ssub.s32 %s8, 1
    %s14 = ssub.s32 %s8, 2
    %s15 = sadd.s32 %s8, 1
    %s16 = ssub.s32 %s8, %s15
    %p17 = scmp.eq.s32.totalorder %s16, 0
    %s19 = sadd.s32 %s18, 1
    %s20 = scalar_select %p17, %s18, %s19
    %p23 = pneg %p17
    %p24 = scmp.eq.s32.totalorder %s8, 1
    %p25 = por %p23, %p24
    %p26 = scmp.ne.s32.totalorder %s18, %s21
    %p27 = scmp.eq.s32.totalorder %s8, 0
    %p28 = por %p26, %p27
    %p29 = scmp.ne.s32.totalorder %s18, %s21
    %p30 = scmp.eq.s32.totalorder %s13, 1
    %p31 = por %p29, %p30
    %p32 = scmp.ne.s32.totalorder %s21, %s22
    %p33 = scmp.eq.s32.totalorder %s13, 0
    %p34 = por %p32, %p33
    %p35 = scmp.ne.s32.totalorder %s21, %s22
    %p36 = scmp.eq.s32.totalorder %s14, 1
    %p37 = por %p35, %p36
    %p39 = scmp.ne.s32.totalorder %s22, %s38
    %p40 = scmp.eq.s32.totalorder %s14, 0
    %p41 = por %p39, %p40
    %s43 = sadd.s32 %s42, 1
    %p46 = scmp.eq.s32.totalorder %s8, 1
    %p47 = scmp.ne.s32.totalorder %s42, %s44
    %p48 = scmp.eq.s32.totalorder %s8, 0
    %p49 = por %p47, %p48
    %p50 = scmp.ne.s32.totalorder %s42, %s44
    %p51 = scmp.eq.s32.totalorder %s13, 1
    %p52 = por %p50, %p51
    %p53 = scmp.ne.s32.totalorder %s44, %s45
    %p54 = scmp.eq.s32.totalorder %s13, 0
    %p55 = por %p53, %p54
    %p56 = scmp.ne.s32.totalorder %s44, %s45
    %p57 = scmp.eq.s32.totalorder %s14, 1
    %p58 = por %p56, %p57
    %p60 = scmp.ne.s32.totalorder %s45, %s59
    %p61 = scmp.eq.s32.totalorder %s14, 0
    %p62 = por %p60, %p61
    %s63 = ssub.s32 %s8, %s15
    %p64 = scmp.eq.s32.totalorder %s63, 0
    %s66 = sadd.s32 %s65, 1
    %s67 = scalar_select %p64, %s65, %s66
    %p70 = pneg %p64
    %p71 = scmp.eq.s32.totalorder %s8, 1
    %p72 = por %p70, %p71
    %p73 = scmp.ne.s32.totalorder %s65, %s68
    %p74 = scmp.eq.s32.totalorder %s8, 0
    %p75 = por %p73, %p74
    %p76 = scmp.ne.s32.totalorder %s65, %s68
    %p77 = scmp.eq.s32.totalorder %s13, 1
    %p78 = por %p76, %p77
    %p79 = scmp.ne.s32.totalorder %s68, %s69
    %p80 = scmp.eq.s32.totalorder %s13, 0
    %p81 = por %p79, %p80
    %p82 = scmp.ne.s32.totalorder %s68, %s69
    %p83 = scmp.eq.s32.totalorder %s14, 1
    %p84 = por %p82, %p83
    %p86 = scmp.ne.s32.totalorder %s69, %s85
    %p87 = scmp.eq.s32.totalorder %s14, 0
    %p88 = por %p86, %p87
    %p89 = scmp.le.s32.totalorder 1, %s8
    %p90 = scmp.lt.s32.totalorder %s8, 3
    %p91 = pnand %p89, %p90
    %p92 = pneg %p91
    // Predicated region
    $region9: #{dyresgen_forward.11} parent=5 // pred_check
      _
    $region10: #{dyresgen_forward.11} parent=5 // pred_check_branch
      %94 = sbr.rel (%p91) target = $region12
    $region11: #{dyresgen_forward.11} parent=5 // pred_region
      %s95 = ssub.s32 %s8, 1
      // Predicated region
      $region13: #{dyresgen_forward.11} parent=11 // pred_check
        %p96 = pneg %p55
      $region14: #{dyresgen_forward.11} parent=11 // pred_check_branch
        %98 = sbr.rel (%p96) target = $region16
      $region15: #{dyresgen_forward.11} parent=11 // pred_region
        _
      $region16: #{dyresgen_forward.11} parent=11 // pred_fallthru
        _
    $region12: #{dyresgen_forward.11} parent=5 // pred_fallthru
      _
    %p99 = scmp.lt.s32.totalorder %s8, 2
    // Predicated region
    $region17: #{dyresgen_forward.11} parent=5 // pred_check
      %p100 = pneg %p99
    $region18: #{dyresgen_forward.11} parent=5 // pred_check_branch
      %102 = sbr.rel (%p100) target = $region20
    $region19: #{dyresgen_forward.11} parent=5 // pred_region
      // Predicated region
      $region21: #{dyresgen_forward.11} parent=19 // pred_check
        %p103 = pneg %p28
      $region22: #{dyresgen_forward.11} parent=19 // pred_check_branch
        %105 = sbr.rel (%p103) target = $region24
      $region23: #{dyresgen_forward.11} parent=19 // pred_region
        %s106 = smul.u32 2, %s8
        %p107 = scmp.lt.s32.totalorder %s106, 3
        %s108 = scalar_select %p107, %s106, 3
        %s109 = smul.addr %s108, 8
        %s110 = scalar_lea.vmem %s0, %s109
        %s111 = smul.u32 2, %s8
      $region24: #{dyresgen_forward.11} parent=19 // pred_fallthru
        _
    $region20: #{dyresgen_forward.11} parent=5 // pred_fallthru
      _
    %p112 = scmp.le.s32.totalorder 1, %s8
    %p113 = scmp.lt.s32.totalorder %s8, 3
    %p114 = pnand %p112, %p113
    %p115 = pneg %p114
    // Predicated region
    $region25: #{dyresgen_forward.11} parent=5 // pred_check
      _
    $region26: #{dyresgen_forward.11} parent=5 // pred_check_branch
      %117 = sbr.rel (%p114) target = $region28
    $region27: #{dyresgen_forward.11} parent=5 // pred_region
      %s118 = ssub.s32 %s8, 1
      %s119 = smul.u32 2, %s13
      %p120 = scmp.lt.s32.totalorder %s119, 3
      %s121 = scalar_select %p120, %s119, 3
      %s122 = smul.addr %s121, 8
      %s123 = scalar_lea.vmem %s0, %s122
      %p124 = pneg %p34
      %p125 = pneg %p31
      %p126 = pneg %p55
      %p127 = pneg %p52
      %p128 = pneg %p81
      %p129 = pneg %p78
      %s130 = smul.u32 2, %s13
      %p131 = scmp.lt.s32.totalorder %s130, 3
      %s132 = scalar_select %p131, %s130, 3
      %s133 = smul.addr %s132, 8
      %s134 = scalar_lea.vmem %s2, %s133
      %s135 = smul.u32 2, %s13
      %p136 = scmp.lt.s32.totalorder %s135, 3
      %s137 = scalar_select %p136, %s135, 3
      %s138 = smul.addr %s137, 8
      %s139 = scalar_lea.vmem %s0, %s138
      %s140 = smul.u32 2, %s13
      %s141 = smul.u32 2, %s13
      %p142 = scmp.lt.s32.totalorder %s141, 3
      %s143 = scalar_select %p142, %s141, 3
      %s144 = smul.addr %s143, 8
      %s145 = scalar_lea.vmem %s2, %s144
      %s146 = smul.u32 2, %s13
      %v148 = vld [vmem:[%s139] sm:$0xff]
      %v149 = vld [vmem:[%s139 + $0x8] sm:$0xff]
      %v150 = vpack.c.bf16 %v149, %v148
      %v151 = vld [vmem:[%s1] sm:$0x3]
      %vm152 = vcmask 31744
      %v154 = vsel %vm152, %v150, 0
      %vm156 = vcmask 1041408
      %v158 = vsel %vm156, %v151, 0
      %160 = vmatprep.subr.bf16.mxu0 0
      %161 = vmatpush1.bf16.msra.mxu0 %v158
      %162 = vmatprep.subr.bf16.mxu0 0
      %163 = vmatpush1.bf16.msra.mxu0 0
      %164 = vmatprep.subr.bf16.mxu0 0
      %165 = vmatpush1.bf16.msra.mxu0 0
      %166 = vmatprep.subr.bf16.mxu0 0
      %167 = vmatpush1.bf16.msra.mxu0 0
      %168 = vmatprep.subr.bf16.mxu0 0
      %169 = vmatpush1.bf16.msra.mxu0 0
      %170 = vmatprep.subr.bf16.mxu0 0
      %171 = vmatpush1.bf16.msra.mxu0 0
      %172 = vmatprep.subr.bf16.mxu0 0
      %173 = vmatpush1.bf16.msra.mxu0 0
      %174 = vmatprep.subr.bf16.mxu0 0
      %175 = vmatpush1.bf16.msra.mxu0 0
      %176 = vmatprep.subr.bf16.mxu0 0
      %177 = vmatpush1.bf16.msra.mxu0 0
      %178 = vmatprep.subr.bf16.mxu0 0
      %179 = vmatpush1.bf16.msra.mxu0 0
      %180 = vmatprep.subr.bf16.mxu0 0
      %181 = vmatpush1.bf16.msra.mxu0 0
      %182 = vmatprep.subr.bf16.mxu0 0
      %183 = vmatpush1.bf16.msra.mxu0 0
      %184 = vmatprep.subr.bf16.mxu0 0
      %185 = vmatpush1.bf16.msra.mxu0 0
      %186 = vmatprep.subr.bf16.mxu0 0
      %187 = vmatpush1.bf16.msra.mxu0 0
      %188 = vmatprep.subr.bf16.mxu0 0
      %189 = vmatpush1.bf16.msra.mxu0 0
      %190 = vmatprep.subr.bf16.mxu0 0
      %191 = vmatpush1.bf16.msra.mxu0 0
      %192 = vmatprep.mubr.bf16.mxu0 0
      %193 = vmatmul.mubr.bf16.gmra.mrb[0].mxu0 %v154
      %v194 = vpop.f32.mrb[0].mxu0
      %v195 = vadd.f32 0.0, %v194
      %v196 = vpop.f32.mrb[0].mxu0
      %v197 = vpop.f32.mrb[0].mxu0
      %v198 = vadd.f32 0.0, %v197
      %v199 = vpop.f32.mrb[0].mxu0
      %200 = vdwg.mxu0
      %vm201 = vcmask 523264
      %202 = vst.msk [vmem:[%s145] sm:$0xff] %vm201, %v195
      %203 = vst.msk [vmem:[%s145 + $0x8] sm:$0xff] %vm201, %v198
      %s204 = smul.u32 2, %s13
      %p205 = scmp.lt.s32.totalorder %s204, 3
      %s206 = scalar_select %p205, %s204, 3
      %s207 = smul.addr %s206, 8
      %s208 = scalar_lea.vmem %s2, %s207
      // Predicated region
      $region29: #{dyresgen_forward.11} parent=27 // pred_check
        %p209 = pneg %p78
      $region30: #{dyresgen_forward.11} parent=27 // pred_check_branch
        %211 = sbr.rel (%p209) target = $region32
      $region31: #{dyresgen_forward.11} parent=27 // pred_region
        %s212 = smul.u32 2, %s13
      $region32: #{dyresgen_forward.11} parent=27 // pred_fallthru
        _
    $region28: #{dyresgen_forward.11} parent=5 // pred_fallthru
      _
    %p213 = scmp.le.s32.totalorder 2, %s8
    // Predicated region
    $region33: #{dyresgen_forward.11} parent=5 // pred_check
      %p214 = pneg %p213
    $region34: #{dyresgen_forward.11} parent=5 // pred_check_branch
      %216 = sbr.rel (%p214) target = $region36
    $region35: #{dyresgen_forward.11} parent=5 // pred_region
      %s217 = ssub.s32 %s8, 2
      // Predicated region
      $region37: #{dyresgen_forward.11} parent=35 // pred_check
        %p218 = pneg %p84
      $region38: #{dyresgen_forward.11} parent=35 // pred_check_branch
        %220 = sbr.rel (%p218) target = $region40
      $region39: #{dyresgen_forward.11} parent=35 // pred_region
        %s221 = smul.u32 2, %s14
        %p222 = scmp.lt.s32.totalorder %s221, 3
        %s223 = scalar_select %p222, %s221, 3
        %s224 = smul.addr %s223, 8
        %s225 = scalar_lea.vmem %s2, %s224
      $region40: #{dyresgen_forward.11} parent=35 // pred_fallthru
        _
    $region36: #{dyresgen_forward.11} parent=5 // pred_fallthru
      _
  $region6: #{dyresgen_forward.11} parent=0 // loop_footer
    %s12 = sadd.s32 1, %s8
  $region7: #{dyresgen_forward.11} parent=0 // loop_footer_branch
    %7 = sbr.rel target = $region3
  $region8: #{dyresgen_forward.11} parent=0 // loop_exit
    _

// kernel: dyresgen_forward.15
$region0: #{dyresgen_forward.15}
  #allocation0 [shape = 'u32[]', space=smem, size = 0x4, offset = 0x4, fixed_abs, tag = 'smem constant byte address 0x4 - core index']
  #allocation1 [shape = 'u32[144,128]{1,0:T(1,128)}', space=vmem, size = 0x12000, scoped, tag = 'internal scratch']
  %s0 = inlined_call_operand.vmem [shape: f32[32,32], index: 0, kind: input, shape index: {}]
  %s1 = inlined_call_operand.vmem [shape: bf16[32,64], index: 1, kind: input, shape index: {}]
  %s2 = inlined_call_operand.vmem [shape: f32[1,64], index: 2, kind: input, shape index: {}]
  %s3 = inlined_call_operand.vmem [shape: bf16[64,32], index: 3, kind: input, shape index: {}]
  %s4 = inlined_call_operand.vmem [shape: f32[1,32], index: 4, kind: input, shape index: {}]
  %s5 = inlined_call_operand.vmem [shape: f32[32,32], index: 5, kind: input, shape index: {}]
  %s6 = inlined_call_operand.vmem [shape: f32[1,32], index: 6, kind: input, shape index: {}]
  %s7 = inlined_call_operand.vmem [shape: f32[32,32], index: 7, kind: output, shape index: {0}]
  %s8 = inlined_call_operand.vmem [shape: f32[32,1], index: 8, kind: output, shape index: {1}]
  %9 = xla_tuple %s7, %s8
  %s10 = sld [smem:[#allocation0]]
  $region69: #{dyresgen_forward.15} parent=0
    _
  %s12 = ssub.s32 1, %s10
  %s13 = scalar_select 0, %s12, %s10
  loop: start=0, step=1, limit=4
  $region2: #{dyresgen_forward.15} parent=0 // loop_pre_header
    _
  $region3: #{dyresgen_forward.15} parent=0 // loop_header
    %s15 = sphi 0, %s19
    %p16 = scmp.ge.s32.totalorder %s15, 4
    %s25 = sphi 0, %s27
    %s28 = sphi 0, %s25
    %s29 = sphi 0, %s28
    %s45 = sphi 0, %s29
    %s49 = sphi 0, %s49
    %s51 = sphi 0, %s49
    %s52 = sphi 0, %s51
    %s66 = sphi 0, %s52
    %s70 = sphi 0, %s70
    %s72 = sphi 0, %s70
    %s73 = sphi 0, %s72
    %s87 = sphi 0, %s73
    %s91 = sphi 0, %s91
    %s93 = sphi 0, %s91
    %s94 = sphi 0, %s93
    %s108 = sphi 0, %s94
    %s112 = sphi 0, %s112
    %s114 = sphi 0, %s112
    %s115 = sphi 0, %s114
    %s129 = sphi 0, %s115
    %s135 = sphi 0, %s137
    %s138 = sphi 0, %s135
    %s139 = sphi 0, %s138
    %s155 = sphi 0, %s139
    %s159 = sphi 0, %s159
    %s161 = sphi 0, %s159
    %s162 = sphi 0, %s161
    %s176 = sphi 0, %s162
    %s182 = sphi 0, %s184
    %s185 = sphi 0, %s182
    %s186 = sphi 0, %s185
    %s202 = sphi 0, %s186
    %s208 = sphi 0, %s210
    %s211 = sphi 0, %s208
    %s212 = sphi 0, %s211
    %s228 = sphi 0, %s212
  $region4: #{dyresgen_forward.15} parent=0 // loop_header_branch
    %18 = sbr.rel (%p16) target = $region8
  $region5: #{dyresgen_forward.15} parent=0 // loop_body
    %s20 = ssub.s32 %s15, 1
    %s21 = ssub.s32 %s15, 2
    %s22 = sadd.s32 %s15, 1
    %s23 = ssub.s32 %s15, %s22
    %p24 = scmp.eq.s32.totalorder %s23, 0
    %s26 = sadd.s32 %s25, 1
    %s27 = scalar_select %p24, %s25, %s26
    %p30 = pneg %p24
    %p31 = scmp.eq.s32.totalorder %s15, 1
    %p32 = por %p30, %p31
    %p33 = scmp.ne.s32.totalorder %s25, %s28
    %p34 = scmp.eq.s32.totalorder %s15, 0
    %p35 = por %p33, %p34
    %p36 = scmp.ne.s32.totalorder %s25, %s28
    %p37 = scmp.eq.s32.totalorder %s20, 1
    %p38 = por %p36, %p37
    %p39 = scmp.ne.s32.totalorder %s28, %s29
    %p40 = scmp.eq.s32.totalorder %s20, 0
    %p41 = por %p39, %p40
    %p42 = scmp.ne.s32.totalorder %s28, %s29
    %p43 = scmp.eq.s32.totalorder %s21, 1
    %p44 = por %p42, %p43
    %p46 = scmp.ne.s32.totalorder %s29, %s45
    %p47 = scmp.eq.s32.totalorder %s21, 0
    %p48 = por %p46, %p47
    %s50 = sadd.s32 %s49, 1
    %p53 = scmp.eq.s32.totalorder %s15, 1
    %p54 = scmp.ne.s32.totalorder %s49, %s51
    %p55 = scmp.eq.s32.totalorder %s15, 0
    %p56 = por %p54, %p55
    %p57 = scmp.ne.s32.totalorder %s49, %s51
    %p58 = scmp.eq.s32.totalorder %s20, 1
    %p59 = por %p57, %p58
    %p60 = scmp.ne.s32.totalorder %s51, %s52
    %p61 = scmp.eq.s32.totalorder %s20, 0
    %p62 = por %p60, %p61
    %p63 = scmp.ne.s32.totalorder %s51, %s52
    %p64 = scmp.eq.s32.totalorder %s21, 1
    %p65 = por %p63, %p64
    %p67 = scmp.ne.s32.totalorder %s52, %s66
    %p68 = scmp.eq.s32.totalorder %s21, 0
    %p69 = por %p67, %p68
    %s71 = sadd.s32 %s70, 1
    %p74 = scmp.eq.s32.totalorder %s15, 1
    %p75 = scmp.ne.s32.totalorder %s70, %s72
    %p76 = scmp.eq.s32.totalorder %s15, 0
    %p77 = por %p75, %p76
    %p78 = scmp.ne.s32.totalorder %s70, %s72
    %p79 = scmp.eq.s32.totalorder %s20, 1
    %p80 = por %p78, %p79
    %p81 = scmp.ne.s32.totalorder %s72, %s73
    %p82 = scmp.eq.s32.totalorder %s20, 0
    %p83 = por %p81, %p82
    %p84 = scmp.ne.s32.totalorder %s72, %s73
    %p85 = scmp.eq.s32.totalorder %s21, 1
    %p86 = por %p84, %p85
    %p88 = scmp.ne.s32.totalorder %s73, %s87
    %p89 = scmp.eq.s32.totalorder %s21, 0
    %p90 = por %p88, %p89
    %s92 = sadd.s32 %s91, 1
    %p95 = scmp.eq.s32.totalorder %s15, 1
    %p96 = scmp.ne.s32.totalorder %s91, %s93
    %p97 = scmp.eq.s32.totalorder %s15, 0
    %p98 = por %p96, %p97
    %p99 = scmp.ne.s32.totalorder %s91, %s93
    %p100 = scmp.eq.s32.totalorder %s20, 1
    %p101 = por %p99, %p100
    %p102 = scmp.ne.s32.totalorder %s93, %s94
    %p103 = scmp.eq.s32.totalorder %s20, 0
    %p104 = por %p102, %p103
    %p105 = scmp.ne.s32.totalorder %s93, %s94
    %p106 = scmp.eq.s32.totalorder %s21, 1
    %p107 = por %p105, %p106
    %p109 = scmp.ne.s32.totalorder %s94, %s108
    %p110 = scmp.eq.s32.totalorder %s21, 0
    %p111 = por %p109, %p110
    %s113 = sadd.s32 %s112, 1
    %p116 = scmp.eq.s32.totalorder %s15, 1
    %p117 = scmp.ne.s32.totalorder %s112, %s114
    %p118 = scmp.eq.s32.totalorder %s15, 0
    %p119 = por %p117, %p118
    %p120 = scmp.ne.s32.totalorder %s112, %s114
    %p121 = scmp.eq.s32.totalorder %s20, 1
    %p122 = por %p120, %p121
    %p123 = scmp.ne.s32.totalorder %s114, %s115
    %p124 = scmp.eq.s32.totalorder %s20, 0
    %p125 = por %p123, %p124
    %p126 = scmp.ne.s32.totalorder %s114, %s115
    %p127 = scmp.eq.s32.totalorder %s21, 1
    %p128 = por %p126, %p127
    %p130 = scmp.ne.s32.totalorder %s115, %s129
    %p131 = scmp.eq.s32.totalorder %s21, 0
    %p132 = por %p130, %p131
    %s133 = ssub.s32 %s15, %s22
    %p134 = scmp.eq.s32.totalorder %s133, 0
    %s136 = sadd.s32 %s135, 1
    %s137 = scalar_select %p134, %s135, %s136
    %p140 = pneg %p134
    %p141 = scmp.eq.s32.totalorder %s15, 1
    %p142 = por %p140, %p141
    %p143 = scmp.ne.s32.totalorder %s135, %s138
    %p144 = scmp.eq.s32.totalorder %s15, 0
    %p145 = por %p143, %p144
    %p146 = scmp.ne.s32.totalorder %s135, %s138
    %p147 = scmp.eq.s32.totalorder %s20, 1
    %p148 = por %p146, %p147
    %p149 = scmp.ne.s32.totalorder %s138, %s139
    %p150 = scmp.eq.s32.totalorder %s20, 0
    %p151 = por %p149, %p150
    %p152 = scmp.ne.s32.totalorder %s138, %s139
    %p153 = scmp.eq.s32.totalorder %s21, 1
    %p154 = por %p152, %p153
    %p156 = scmp.ne.s32.totalorder %s139, %s155
    %p157 = scmp.eq.s32.totalorder %s21, 0
    %p158 = por %p156, %p157
    %s160 = sadd.s32 %s159, 1
    %p163 = scmp.eq.s32.totalorder %s15, 1
    %p164 = scmp.ne.s32.totalorder %s159, %s161
    %p165 = scmp.eq.s32.totalorder %s15, 0
    %p166 = por %p164, %p165
    %p167 = scmp.ne.s32.totalorder %s159, %s161
    %p168 = scmp.eq.s32.totalorder %s20, 1
    %p169 = por %p167, %p168
    %p170 = scmp.ne.s32.totalorder %s161, %s162
    %p171 = scmp.eq.s32.totalorder %s20, 0
    %p172 = por %p170, %p171
    %p173 = scmp.ne.s32.totalorder %s161, %s162
    %p174 = scmp.eq.s32.totalorder %s21, 1
    %p175 = por %p173, %p174
    %p177 = scmp.ne.s32.totalorder %s162, %s176
    %p178 = scmp.eq.s32.totalorder %s21, 0
    %p179 = por %p177, %p178
    %s180 = ssub.s32 %s15, %s22
    %p181 = scmp.eq.s32.totalorder %s180, 0
    %s183 = sadd.s32 %s182, 1
    %s184 = scalar_select %p181, %s182, %s183
    %p187 = pneg %p181
    %p188 = scmp.eq.s32.totalorder %s15, 1
    %p189 = por %p187, %p188
    %p190 = scmp.ne.s32.totalorder %s182, %s185
    %p191 = scmp.eq.s32.totalorder %s15, 0
    %p192 = por %p190, %p191
    %p193 = scmp.ne.s32.totalorder %s182, %s185
    %p194 = scmp.eq.s32.totalorder %s20, 1
    %p195 = por %p193, %p194
    %p196 = scmp.ne.s32.totalorder %s185, %s186
    %p197 = scmp.eq.s32.totalorder %s20, 0
    %p198 = por %p196, %p197
    %p199 = scmp.ne.s32.totalorder %s185, %s186
    %p200 = scmp.eq.s32.totalorder %s21, 1
    %p201 = por %p199, %p200
    %p203 = scmp.ne.s32.totalorder %s186, %s202
    %p204 = scmp.eq.s32.totalorder %s21, 0
    %p205 = por %p203, %p204
    %s206 = ssub.s32 %s15, %s22
    %p207 = scmp.eq.s32.totalorder %s206, 0
    %s209 = sadd.s32 %s208, 1
    %s210 = scalar_select %p207, %s208, %s209
    %p213 = pneg %p207
    %p214 = scmp.eq.s32.totalorder %s15, 1
    %p215 = por %p213, %p214
    %p216 = scmp.ne.s32.totalorder %s208, %s211
    %p217 = scmp.eq.s32.totalorder %s15, 0
    %p218 = por %p216, %p217
    %p219 = scmp.ne.s32.totalorder %s208, %s211
    %p220 = scmp.eq.s32.totalorder %s20, 1
    %p221 = por %p219, %p220
    %p222 = scmp.ne.s32.totalorder %s211, %s212
    %p223 = scmp.eq.s32.totalorder %s20, 0
    %p224 = por %p222, %p223
    %p225 = scmp.ne.s32.totalorder %s211, %s212
    %p226 = scmp.eq.s32.totalorder %s21, 1
    %p227 = por %p225, %p226
    %p229 = scmp.ne.s32.totalorder %s212, %s228
    %p230 = scmp.eq.s32.totalorder %s21, 0
    %p231 = por %p229, %p230
    %p232 = scmp.le.s32.totalorder 1, %s15
    %p233 = scmp.lt.s32.totalorder %s15, 3
    %p234 = pnand %p232, %p233
    %p235 = pneg %p234
    // Predicated region
    $region9: #{dyresgen_forward.15} parent=5 // pred_check
      _
    $region10: #{dyresgen_forward.15} parent=5 // pred_check_branch
      %237 = sbr.rel (%p234) target = $region12
    $region11: #{dyresgen_forward.15} parent=5 // pred_region
      %s238 = ssub.s32 %s15, 1
      // Predicated region
      $region13: #{dyresgen_forward.15} parent=11 // pred_check
        %p239 = pneg %p62
      $region14: #{dyresgen_forward.15} parent=11 // pred_check_branch
        %241 = sbr.rel (%p239) target = $region16
      $region15: #{dyresgen_forward.15} parent=11 // pred_region
        _
      $region16: #{dyresgen_forward.15} parent=11 // pred_fallthru
        _
      // Predicated region
      $region17: #{dyresgen_forward.15} parent=11 // pred_check
        %p242 = pneg %p83
      $region18: #{dyresgen_forward.15} parent=11 // pred_check_branch
        %244 = sbr.rel (%p242) target = $region20
      $region19: #{dyresgen_forward.15} parent=11 // pred_region
        _
      $region20: #{dyresgen_forward.15} parent=11 // pred_fallthru
        _
      // Predicated region
      $region21: #{dyresgen_forward.15} parent=11 // pred_check
        %p245 = pneg %p104
      $region22: #{dyresgen_forward.15} parent=11 // pred_check_branch
        %247 = sbr.rel (%p245) target = $region24
      $region23: #{dyresgen_forward.15} parent=11 // pred_region
        _
      $region24: #{dyresgen_forward.15} parent=11 // pred_fallthru
        _
      // Predicated region
      $region25: #{dyresgen_forward.15} parent=11 // pred_check
        %p248 = pneg %p125
      $region26: #{dyresgen_forward.15} parent=11 // pred_check_branch
        %250 = sbr.rel (%p248) target = $region28
      $region27: #{dyresgen_forward.15} parent=11 // pred_region
        _
      $region28: #{dyresgen_forward.15} parent=11 // pred_fallthru
        _
      // Predicated region
      $region29: #{dyresgen_forward.15} parent=11 // pred_check
        %p251 = pneg %p172
      $region30: #{dyresgen_forward.15} parent=11 // pred_check_branch
        %253 = sbr.rel (%p251) target = $region32
      $region31: #{dyresgen_forward.15} parent=11 // pred_region
        _
      $region32: #{dyresgen_forward.15} parent=11 // pred_fallthru
        _
    $region12: #{dyresgen_forward.15} parent=5 // pred_fallthru
      _
    %p254 = scmp.lt.s32.totalorder %s15, 2
    // Predicated region
    $region33: #{dyresgen_forward.15} parent=5 // pred_check
      %p255 = pneg %p254
    $region34: #{dyresgen_forward.15} parent=5 // pred_check_branch
      %257 = sbr.rel (%p255) target = $region36
    $region35: #{dyresgen_forward.15} parent=5 // pred_region
      // Predicated region
      $region37: #{dyresgen_forward.15} parent=35 // pred_check
        %p258 = pneg %p35
      $region38: #{dyresgen_forward.15} parent=35 // pred_check_branch
        %260 = sbr.rel (%p258) target = $region40
      $region39: #{dyresgen_forward.15} parent=35 // pred_region
        %s261 = smul.u32 2, %s15
        %p262 = scmp.lt.s32.totalorder %s261, 3
        %s263 = scalar_select %p262, %s261, 3
        %s264 = smul.addr %s263, 8
        %s265 = scalar_lea.vmem %s0, %s264
        %s266 = smul.u32 2, %s15
      $region40: #{dyresgen_forward.15} parent=35 // pred_fallthru
        _
      // Predicated region
      $region41: #{dyresgen_forward.15} parent=35 // pred_check
        %p267 = pneg %p145
      $region42: #{dyresgen_forward.15} parent=35 // pred_check_branch
        %269 = sbr.rel (%p267) target = $region44
      $region43: #{dyresgen_forward.15} parent=35 // pred_region
        %s270 = smul.u32 2, %s15
        %p271 = scmp.lt.s32.totalorder %s270, 3
        %s272 = scalar_select %p271, %s270, 3
        %s273 = smul.addr %s272, 8
        %s274 = scalar_lea.vmem %s5, %s273
        %s275 = smul.u32 2, %s15
      $region44: #{dyresgen_forward.15} parent=35 // pred_fallthru
        _
    $region36: #{dyresgen_forward.15} parent=5 // pred_fallthru
      _
    %p276 = scmp.le.s32.totalorder 1, %s15
    %p277 = scmp.lt.s32.totalorder %s15, 3
    %p278 = pnand %p276, %p277
    %p279 = pneg %p278
    // Predicated region
    $region45: #{dyresgen_forward.15} parent=5 // pred_check
      _
    $region46: #{dyresgen_forward.15} parent=5 // pred_check_branch
      %281 = sbr.rel (%p278) target = $region48
    $region47: #{dyresgen_forward.15} parent=5 // pred_region
      %s282 = ssub.s32 %s15, 1
      %s283 = smul.u32 2, %s20
      %p284 = scmp.lt.s32.totalorder %s283, 3
      %s285 = scalar_select %p284, %s283, 3
      %s286 = smul.addr %s285, 8
      %s287 = scalar_lea.vmem %s0, %s286
      %p288 = pneg %p41
      %p289 = pneg %p38
      %p290 = pneg %p62
      %p291 = pneg %p59
      %p292 = pneg %p83
      %p293 = pneg %p80
      %p294 = pneg %p104
      %p295 = pneg %p101
      %p296 = pneg %p125
      %p297 = pneg %p122
      %s298 = smul.u32 2, %s20
      %p299 = scmp.lt.s32.totalorder %s298, 3
      %s300 = scalar_select %p299, %s298, 3
      %s301 = smul.addr %s300, 8
      %s302 = scalar_lea.vmem %s5, %s301
      %p303 = pneg %p151
      %p304 = pneg %p148
      %p305 = pneg %p172
      %p306 = pneg %p169
      %p307 = pneg %p198
      %p308 = pneg %p195
      %s309 = smul.u32 2, %s20
      %p310 = scmp.lt.s32.totalorder %s309, 3
      %s311 = scalar_select %p310, %s309, 3
      %s312 = smul.addr %s311, 8
      %s313 = scalar_lea.vmem %s7, %s312
      %p314 = pneg %p224
      %p315 = pneg %p221
      %s316 = smul.u32 2, %s20
      %p317 = scmp.lt.s32.totalorder %s316, 3
      %s318 = scalar_select %p317, %s316, 3
      %s319 = smul.addr %s318, 8
      %s320 = scalar_lea.vmem %s8, %s319
      %s321 = smul.u32 2, %s20
      %p322 = scmp.lt.s32.totalorder %s321, 3
      %s323 = scalar_select %p322, %s321, 3
      %s324 = smul.addr %s323, 8
      %s325 = scalar_lea.vmem %s0, %s324
      %s326 = smul.u32 2, %s20
      %s327 = smul.u32 2, %s20
      %p328 = scmp.lt.s32.totalorder %s327, 3
      %s329 = scalar_select %p328, %s327, 3
      %s330 = smul.addr %s329, 8
      %s331 = scalar_lea.vmem %s5, %s330
      %s332 = smul.u32 2, %s20
      %s333 = smul.u32 2, %s20
      %p334 = scmp.lt.s32.totalorder %s333, 3
      %s335 = scalar_select %p334, %s333, 3
      %s336 = smul.addr %s335, 8
      %s337 = scalar_lea.vmem %s7, %s336
      %s338 = smul.u32 2, %s20
      %s339 = smul.u32 2, %s20
      %p340 = scmp.lt.s32.totalorder %s339, 3
      %s341 = scalar_select %p340, %s339, 3
      %s342 = smul.addr %s341, 8
      %s343 = scalar_lea.vmem %s8, %s342
      %s344 = smul.u32 2, %s20
      %v346 = vld [vmem:[%s325] sm:$0xff]
      %v347 = vld [vmem:[%s325 + $0x8] sm:$0xff]
      %v348 = vpack.c.bf16 %v347, %v346
      %v349 = vld [vmem:[%s1] sm:$0xf]
      %v350 = vld [vmem:[%s1 + $0x4] sm:$0xf]
      %v351 = vld [vmem:[%s1 + $0x8] sm:$0xf]
      %v352 = vld [vmem:[%s1 + $0xc] sm:$0xf]
      %v353 = vld [vmem:[%s2] sm:$0x1]
      %v355 = vlaneseq
      %v356 = vshrl.u32 %v355, 7
      %v357 = vsub.s32 0, %v356
      %v358 = vrot.slane %v353, %v357
      %v364 = vunpack.c.l.b16 %v349
      %v365 = vunpack.c.l.b16 %v350
      %v366 = vunpack.c.l.b16 %v351
      %v367 = vunpack.c.l.b16 %v352
      %v368 = vpack.c.b16 %v365, %v364
      %v369 = vpack.c.b16 %v367, %v366
      %vm372 = vcmask 261120
      %v374 = vsel %vm372, %v348, 0
      %376 = vmatprep.subr.bf16.mxu0 0
      %377 = vmatpush1.bf16.msra.mxu0 %v368
      %378 = vmatprep.subr.bf16.mxu0 0
      %379 = vmatpush1.bf16.msra.mxu0 %v369
      %380 = vmatprep.subr.bf16.mxu0 0
      %381 = vmatpush1.bf16.msra.mxu0 0
      %382 = vmatprep.subr.bf16.mxu0 0
      %383 = vmatpush1.bf16.msra.mxu0 0
      %384 = vmatprep.subr.bf16.mxu0 0
      %385 = vmatpush1.bf16.msra.mxu0 0
      %386 = vmatprep.subr.bf16.mxu0 0
      %387 = vmatpush1.bf16.msra.mxu0 0
      %388 = vmatprep.subr.bf16.mxu0 0
      %389 = vmatpush1.bf16.msra.mxu0 0
      %390 = vmatprep.subr.bf16.mxu0 0
      %391 = vmatpush1.bf16.msra.mxu0 0
      %392 = vmatprep.subr.bf16.mxu0 0
      %393 = vmatpush1.bf16.msra.mxu0 0
      %394 = vmatprep.subr.bf16.mxu0 0
      %395 = vmatpush1.bf16.msra.mxu0 0
      %396 = vmatprep.subr.bf16.mxu0 0
      %397 = vmatpush1.bf16.msra.mxu0 0
      %398 = vmatprep.subr.bf16.mxu0 0
      %399 = vmatpush1.bf16.msra.mxu0 0
      %400 = vmatprep.subr.bf16.mxu0 0
      %401 = vmatpush1.bf16.msra.mxu0 0
      %402 = vmatprep.subr.bf16.mxu0 0
      %403 = vmatpush1.bf16.msra.mxu0 0
      %404 = vmatprep.subr.bf16.mxu0 0
      %405 = vmatpush1.bf16.msra.mxu0 0
      %406 = vmatprep.subr.bf16.mxu0 0
      %407 = vmatpush1.bf16.msra.mxu0 0
      %408 = vmatprep.mubr.bf16.mxu0 0
      %409 = vmatmul.mubr.bf16.gmra.mrb[0].mxu0 %v374
      %v410 = vpop.f32.mrb[0].mxu0
      %v411 = vadd.f32 %v358, %v410
      %v412 = vpop.f32.mrb[0].mxu0
      %v413 = vpop.f32.mrb[0].mxu0
      %v414 = vadd.f32 %v358, %v413
      %v415 = vpop.f32.mrb[0].mxu0
      %416 = vdwg.mxu0
      %v417 = vmax.f32 %v411, 0.0
      %v418 = vmax.f32 %v414, 0.0
      %v419 = vpack.c.bf16 %v418, %v417
      %v420 = vld [vmem:[%s3] sm:$0xf]
      %v421 = vld [vmem:[%s3 + $0x4] sm:$0xf]
      %v422 = vld [vmem:[%s3 + $0x8] sm:$0xf]
      %v423 = vld [vmem:[%s3 + $0xc] sm:$0xf]
      %v424 = vld [vmem:[%s3 + $0x10] sm:$0xf]
      %v425 = vld [vmem:[%s3 + $0x14] sm:$0xf]
      %v426 = vld [vmem:[%s3 + $0x18] sm:$0xf]
      %v427 = vld [vmem:[%s3 + $0x1c] sm:$0xf]
      %v428 = vld [vmem:[%s4] sm:$0x1]
      %v430 = vlaneseq
      %v431 = vshrl.u32 %v430, 7
      %v432 = vsub.s32 0, %v431
      %v433 = vrot.slane %v428, %v432
      %v443 = vunpack.c.l.b16 %v420
      %v444 = vunpack.c.l.b16 %v421
      %v445 = vunpack.c.l.b16 %v422
      %v446 = vunpack.c.l.b16 %v423
      %v447 = vunpack.c.l.b16 %v424
      %v448 = vunpack.c.l.b16 %v425
      %v449 = vunpack.c.l.b16 %v426
      %v450 = vunpack.c.l.b16 %v427
      %v451 = vpack.c.b16 %v444, %v443
      %v452 = vpack.c.b16 %v446, %v445
      %v453 = vpack.c.b16 %v448, %v447
      %v454 = vpack.c.b16 %v450, %v449
      %vm459 = vcmask 523264
      %v461 = vsel %vm459, %v419, 0
      %463 = vmatprep.subr.bf16.mxu0 0
      %464 = vmatpush1.bf16.msra.mxu0 %v451
      %465 = vmatprep.subr.bf16.mxu0 0
      %466 = vmatpush1.bf16.msra.mxu0 %v452
      %467 = vmatprep.subr.bf16.mxu0 0
      %468 = vmatpush1.bf16.msra.mxu0 %v453
      %469 = vmatprep.subr.bf16.mxu0 0
      %470 = vmatpush1.bf16.msra.mxu0 %v454
      %471 = vmatprep.subr.bf16.mxu0 0
      %472 = vmatpush1.bf16.msra.mxu0 0
      %473 = vmatprep.subr.bf16.mxu0 0
      %474 = vmatpush1.bf16.msra.mxu0 0
      %475 = vmatprep.subr.bf16.mxu0 0
      %476 = vmatpush1.bf16.msra.mxu0 0
      %477 = vmatprep.subr.bf16.mxu0 0
      %478 = vmatpush1.bf16.msra.mxu0 0
      %479 = vmatprep.subr.bf16.mxu0 0
      %480 = vmatpush1.bf16.msra.mxu0 0
      %481 = vmatprep.subr.bf16.mxu0 0
      %482 = vmatpush1.bf16.msra.mxu0 0
      %483 = vmatprep.subr.bf16.mxu0 0
      %484 = vmatpush1.bf16.msra.mxu0 0
      %485 = vmatprep.subr.bf16.mxu0 0
      %486 = vmatpush1.bf16.msra.mxu0 0
      %487 = vmatprep.subr.bf16.mxu0 0
      %488 = vmatpush1.bf16.msra.mxu0 0
      %489 = vmatprep.subr.bf16.mxu0 0
      %490 = vmatpush1.bf16.msra.mxu0 0
      %491 = vmatprep.subr.bf16.mxu0 0
      %492 = vmatpush1.bf16.msra.mxu0 0
      %493 = vmatprep.subr.bf16.mxu0 0
      %494 = vmatpush1.bf16.msra.mxu0 0
      %495 = vmatprep.mubr.bf16.mxu0 0
      %496 = vmatmul.mubr.bf16.gmra.mrb[0].mxu0 %v461
      %v497 = vpop.f32.mrb[0].mxu0
      %v498 = vadd.f32 %v433, %v497
      %v499 = vpop.f32.mrb[0].mxu0
      %v500 = vpop.f32.mrb[0].mxu0
      %v501 = vadd.f32 %v433, %v500
      %v502 = vpop.f32.mrb[0].mxu0
      %503 = vdwg.mxu0
      %v504 = vld [vmem:[%s331] sm:$0xff]
      %v505 = vld [vmem:[%s331 + $0x8] sm:$0xff]
      %v506 = vadd.f32 %v498, %v504
      %v507 = vadd.f32 %v501, %v505
      %v508 = vmax.f32 %v506, 0.0
      %v509 = vmax.f32 %v507, 0.0
      %510 = vst.msk [vmem:[%s337] sm:$0xff] %vm372, %v508
      %511 = vst.msk [vmem:[%s337 + $0x8] sm:$0xff] %vm372, %v509
      %v512 = vld [vmem:[%s6] sm:$0x1]
      %v514 = vlaneseq
      %v515 = vshrl.u32 %v514, 7
      %v516 = vsub.s32 0, %v515
      %v517 = vrot.slane %v512, %v516
      %v519 = vmul.f32 %v508, %v517
      %v520 = vmul.f32 %v509, %v517
      %v521 = vsel %vm372, %v519, 0.0
      %522 = vadd.xlane.f32.xlu0 %v521
      %v523 = vpop.xlane.xlu0 %522
      %v524 = vsel %vm372, %v520, 0.0
      %525 = vadd.xlane.f32.xlu0 %v524
      %v526 = vpop.xlane.xlu0 %525
      %v527 = vtanh.pop %v523
      %v528 = vtanh.pop %v526
      %vm529 = vcmask 7168
      %530 = vst.msk [vmem:[%s343] sm:$0xff] %vm529, %v527
      %531 = vst.msk [vmem:[%s343 + $0x8] sm:$0xff] %vm529, %v528
      %s532 = smul.u32 2, %s20
      %p533 = scmp.lt.s32.totalorder %s532, 3
      %s534 = scalar_select %p533, %s532, 3
      %s535 = smul.addr %s534, 8
      %s536 = scalar_lea.vmem %s7, %s535
      %s537 = smul.u32 2, %s20
      %p538 = scmp.lt.s32.totalorder %s537, 3
      %s539 = scalar_select %p538, %s537, 3
      %s540 = smul.addr %s539, 8
      %s541 = scalar_lea.vmem %s8, %s540
      // Predicated region
      $region49: #{dyresgen_forward.15} parent=47 // pred_check
        %p542 = pneg %p195
      $region50: #{dyresgen_forward.15} parent=47 // pred_check_branch
        %544 = sbr.rel (%p542) target = $region52
      $region51: #{dyresgen_forward.15} parent=47 // pred_region
        %s545 = smul.u32 2, %s20
      $region52: #{dyresgen_forward.15} parent=47 // pred_fallthru
        _
      // Predicated region
      $region53: #{dyresgen_forward.15} parent=47 // pred_check
        %p546 = pneg %p221
      $region54: #{dyresgen_forward.15} parent=47 // pred_check_branch
        %548 = sbr.rel (%p546) target = $region56
      $region55: #{dyresgen_forward.15} parent=47 // pred_region
        %s549 = smul.u32 2, %s20
      $region56: #{dyresgen_forward.15} parent=47 // pred_fallthru
        _
    $region48: #{dyresgen_forward.15} parent=5 // pred_fallthru
      _
    %p550 = scmp.le.s32.totalorder 2, %s15
    // Predicated region
    $region57: #{dyresgen_forward.15} parent=5 // pred_check
      %p551 = pneg %p550
    $region58: #{dyresgen_forward.15} parent=5 // pred_check_branch
      %553 = sbr.rel (%p551) target = $region60
    $region59: #{dyresgen_forward.15} parent=5 // pred_region
      %s554 = ssub.s32 %s15, 2
      // Predicated region
      $region61: #{dyresgen_forward.15} parent=59 // pred_check
        %p555 = pneg %p201
      $region62: #{dyresgen_forward.15} parent=59 // pred_check_branch
        %557 = sbr.rel (%p555) target = $region64
      $region63: #{dyresgen_forward.15} parent=59 // pred_region
        %s558 = smul.u32 2, %s21
        %p559 = scmp.lt.s32.totalorder %s558, 3
        %s560 = scalar_select %p559, %s558, 3
        %s561 = smul.addr %s560, 8
        %s562 = scalar_lea.vmem %s7, %s561
      $region64: #{dyresgen_forward.15} parent=59 // pred_fallthru
        _
      // Predicated region
      $region65: #{dyresgen_forward.15} parent=59 // pred_check
        %p563 = pneg %p227
      $region66: #{dyresgen_forward.15} parent=59 // pred_check_branch
        %565 = sbr.rel (%p563) target = $region68
      $region67: #{dyresgen_forward.15} parent=59 // pred_region
        %s566 = smul.u32 2, %s21
        %p567 = scmp.lt.s32.totalorder %s566, 3
        %s568 = scalar_select %p567, %s566, 3
        %s569 = smul.addr %s568, 8
        %s570 = scalar_lea.vmem %s8, %s569
      $region68: #{dyresgen_forward.15} parent=59 // pred_fallthru
        _
    $region60: #{dyresgen_forward.15} parent=5 // pred_fallthru
      _
  $region6: #{dyresgen_forward.15} parent=0 // loop_footer
    %s19 = sadd.s32 1, %s15
  $region7: #{dyresgen_forward.15} parent=0 // loop_footer_branch
    %14 = sbr.rel target = $region3
  $region8: #{dyresgen_forward.15} parent=0 // loop_exit
    _

// kernel: dyresgen_forward.13
$region0: #{dyresgen_forward.13}
  #allocation0 [shape = 'u32[]', space=smem, size = 0x4, offset = 0x4, fixed_abs, tag = 'smem constant byte address 0x4 - core index']
  #allocation1 [shape = 'u32[144,128]{1,0:T(1,128)}', space=vmem, size = 0x12000, scoped, tag = 'internal scratch']
  %s0 = inlined_call_operand.vmem [shape: f32[32,32], index: 0, kind: input, shape index: {}]
  %s1 = inlined_call_operand.vmem [shape: bf16[32,64], index: 1, kind: input, shape index: {}]
  %s2 = inlined_call_operand.vmem [shape: f32[1,64], index: 2, kind: input, shape index: {}]
  %s3 = inlined_call_operand.vmem [shape: bf16[64,32], index: 3, kind: input, shape index: {}]
  %s4 = inlined_call_operand.vmem [shape: f32[1,32], index: 4, kind: input, shape index: {}]
  %s5 = inlined_call_operand.vmem [shape: f32[1,32], index: 5, kind: input, shape index: {}]
  %s6 = inlined_call_operand.vmem [shape: f32[1,32], index: 6, kind: input, shape index: {}]
  %s7 = inlined_call_operand.vmem [shape: f32[32,32], index: 7, kind: output, shape index: {0}]
  %s8 = inlined_call_operand.vmem [shape: f32[32,32], index: 8, kind: output, shape index: {1}]
  %9 = xla_tuple %s7, %s8
  %s10 = sld [smem:[#allocation0]]
  $region69: #{dyresgen_forward.13} parent=0
    _
  %s12 = ssub.s32 1, %s10
  %s13 = scalar_select 0, %s12, %s10
  loop: start=0, step=1, limit=4
  $region2: #{dyresgen_forward.13} parent=0 // loop_pre_header
    _
  $region3: #{dyresgen_forward.13} parent=0 // loop_header
    %s15 = sphi 0, %s19
    %p16 = scmp.ge.s32.totalorder %s15, 4
    %s25 = sphi 0, %s27
    %s28 = sphi 0, %s25
    %s29 = sphi 0, %s28
    %s45 = sphi 0, %s29
    %s49 = sphi 0, %s49
    %s51 = sphi 0, %s49
    %s52 = sphi 0, %s51
    %s66 = sphi 0, %s52
    %s70 = sphi 0, %s70
    %s72 = sphi 0, %s70
    %s73 = sphi 0, %s72
    %s87 = sphi 0, %s73
    %s91 = sphi 0, %s91
    %s93 = sphi 0, %s91
    %s94 = sphi 0, %s93
    %s108 = sphi 0, %s94
    %s112 = sphi 0, %s112
    %s114 = sphi 0, %s112
    %s115 = sphi 0, %s114
    %s129 = sphi 0, %s115
    %s133 = sphi 0, %s133
    %s135 = sphi 0, %s133
    %s136 = sphi 0, %s135
    %s150 = sphi 0, %s136
    %s154 = sphi 0, %s154
    %s156 = sphi 0, %s154
    %s157 = sphi 0, %s156
    %s171 = sphi 0, %s157
    %s177 = sphi 0, %s179
    %s180 = sphi 0, %s177
    %s181 = sphi 0, %s180
    %s197 = sphi 0, %s181
    %s203 = sphi 0, %s205
    %s206 = sphi 0, %s203
    %s207 = sphi 0, %s206
    %s223 = sphi 0, %s207
  $region4: #{dyresgen_forward.13} parent=0 // loop_header_branch
    %18 = sbr.rel (%p16) target = $region8
  $region5: #{dyresgen_forward.13} parent=0 // loop_body
    %s20 = ssub.s32 %s15, 1
    %s21 = ssub.s32 %s15, 2
    %s22 = sadd.s32 %s15, 1
    %s23 = ssub.s32 %s15, %s22
    %p24 = scmp.eq.s32.totalorder %s23, 0
    %s26 = sadd.s32 %s25, 1
    %s27 = scalar_select %p24, %s25, %s26
    %p30 = pneg %p24
    %p31 = scmp.eq.s32.totalorder %s15, 1
    %p32 = por %p30, %p31
    %p33 = scmp.ne.s32.totalorder %s25, %s28
    %p34 = scmp.eq.s32.totalorder %s15, 0
    %p35 = por %p33, %p34
    %p36 = scmp.ne.s32.totalorder %s25, %s28
    %p37 = scmp.eq.s32.totalorder %s20, 1
    %p38 = por %p36, %p37
    %p39 = scmp.ne.s32.totalorder %s28, %s29
    %p40 = scmp.eq.s32.totalorder %s20, 0
    %p41 = por %p39, %p40
    %p42 = scmp.ne.s32.totalorder %s28, %s29
    %p43 = scmp.eq.s32.totalorder %s21, 1
    %p44 = por %p42, %p43
    %p46 = scmp.ne.s32.totalorder %s29, %s45
    %p47 = scmp.eq.s32.totalorder %s21, 0
    %p48 = por %p46, %p47
    %s50 = sadd.s32 %s49, 1
    %p53 = scmp.eq.s32.totalorder %s15, 1
    %p54 = scmp.ne.s32.totalorder %s49, %s51
    %p55 = scmp.eq.s32.totalorder %s15, 0
    %p56 = por %p54, %p55
    %p57 = scmp.ne.s32.totalorder %s49, %s51
    %p58 = scmp.eq.s32.totalorder %s20, 1
    %p59 = por %p57, %p58
    %p60 = scmp.ne.s32.totalorder %s51, %s52
    %p61 = scmp.eq.s32.totalorder %s20, 0
    %p62 = por %p60, %p61
    %p63 = scmp.ne.s32.totalorder %s51, %s52
    %p64 = scmp.eq.s32.totalorder %s21, 1
    %p65 = por %p63, %p64
    %p67 = scmp.ne.s32.totalorder %s52, %s66
    %p68 = scmp.eq.s32.totalorder %s21, 0
    %p69 = por %p67, %p68
    %s71 = sadd.s32 %s70, 1
    %p74 = scmp.eq.s32.totalorder %s15, 1
    %p75 = scmp.ne.s32.totalorder %s70, %s72
    %p76 = scmp.eq.s32.totalorder %s15, 0
    %p77 = por %p75, %p76
    %p78 = scmp.ne.s32.totalorder %s70, %s72
    %p79 = scmp.eq.s32.totalorder %s20, 1
    %p80 = por %p78, %p79
    %p81 = scmp.ne.s32.totalorder %s72, %s73
    %p82 = scmp.eq.s32.totalorder %s20, 0
    %p83 = por %p81, %p82
    %p84 = scmp.ne.s32.totalorder %s72, %s73
    %p85 = scmp.eq.s32.totalorder %s21, 1
    %p86 = por %p84, %p85
    %p88 = scmp.ne.s32.totalorder %s73, %s87
    %p89 = scmp.eq.s32.totalorder %s21, 0
    %p90 = por %p88, %p89
    %s92 = sadd.s32 %s91, 1
    %p95 = scmp.eq.s32.totalorder %s15, 1
    %p96 = scmp.ne.s32.totalorder %s91, %s93
    %p97 = scmp.eq.s32.totalorder %s15, 0
    %p98 = por %p96, %p97
    %p99 = scmp.ne.s32.totalorder %s91, %s93
    %p100 = scmp.eq.s32.totalorder %s20, 1
    %p101 = por %p99, %p100
    %p102 = scmp.ne.s32.totalorder %s93, %s94
    %p103 = scmp.eq.s32.totalorder %s20, 0
    %p104 = por %p102, %p103
    %p105 = scmp.ne.s32.totalorder %s93, %s94
    %p106 = scmp.eq.s32.totalorder %s21, 1
    %p107 = por %p105, %p106
    %p109 = scmp.ne.s32.totalorder %s94, %s108
    %p110 = scmp.eq.s32.totalorder %s21, 0
    %p111 = por %p109, %p110
    %s113 = sadd.s32 %s112, 1
    %p116 = scmp.eq.s32.totalorder %s15, 1
    %p117 = scmp.ne.s32.totalorder %s112, %s114
    %p118 = scmp.eq.s32.totalorder %s15, 0
    %p119 = por %p117, %p118
    %p120 = scmp.ne.s32.totalorder %s112, %s114
    %p121 = scmp.eq.s32.totalorder %s20, 1
    %p122 = por %p120, %p121
    %p123 = scmp.ne.s32.totalorder %s114, %s115
    %p124 = scmp.eq.s32.totalorder %s20, 0
    %p125 = por %p123, %p124
    %p126 = scmp.ne.s32.totalorder %s114, %s115
    %p127 = scmp.eq.s32.totalorder %s21, 1
    %p128 = por %p126, %p127
    %p130 = scmp.ne.s32.totalorder %s115, %s129
    %p131 = scmp.eq.s32.totalorder %s21, 0
    %p132 = por %p130, %p131
    %s134 = sadd.s32 %s133, 1
    %p137 = scmp.eq.s32.totalorder %s15, 1
    %p138 = scmp.ne.s32.totalorder %s133, %s135
    %p139 = scmp.eq.s32.totalorder %s15, 0
    %p140 = por %p138, %p139
    %p141 = scmp.ne.s32.totalorder %s133, %s135
    %p142 = scmp.eq.s32.totalorder %s20, 1
    %p143 = por %p141, %p142
    %p144 = scmp.ne.s32.totalorder %s135, %s136
    %p145 = scmp.eq.s32.totalorder %s20, 0
    %p146 = por %p144, %p145
    %p147 = scmp.ne.s32.totalorder %s135, %s136
    %p148 = scmp.eq.s32.totalorder %s21, 1
    %p149 = por %p147, %p148
    %p151 = scmp.ne.s32.totalorder %s136, %s150
    %p152 = scmp.eq.s32.totalorder %s21, 0
    %p153 = por %p151, %p152
    %s155 = sadd.s32 %s154, 1
    %p158 = scmp.eq.s32.totalorder %s15, 1
    %p159 = scmp.ne.s32.totalorder %s154, %s156
    %p160 = scmp.eq.s32.totalorder %s15, 0
    %p161 = por %p159, %p160
    %p162 = scmp.ne.s32.totalorder %s154, %s156
    %p163 = scmp.eq.s32.totalorder %s20, 1
    %p164 = por %p162, %p163
    %p165 = scmp.ne.s32.totalorder %s156, %s157
    %p166 = scmp.eq.s32.totalorder %s20, 0
    %p167 = por %p165, %p166
    %p168 = scmp.ne.s32.totalorder %s156, %s157
    %p169 = scmp.eq.s32.totalorder %s21, 1
    %p170 = por %p168, %p169
    %p172 = scmp.ne.s32.totalorder %s157, %s171
    %p173 = scmp.eq.s32.totalorder %s21, 0
    %p174 = por %p172, %p173
    %s175 = ssub.s32 %s15, %s22
    %p176 = scmp.eq.s32.totalorder %s175, 0
    %s178 = sadd.s32 %s177, 1
    %s179 = scalar_select %p176, %s177, %s178
    %p182 = pneg %p176
    %p183 = scmp.eq.s32.totalorder %s15, 1
    %p184 = por %p182, %p183
    %p185 = scmp.ne.s32.totalorder %s177, %s180
    %p186 = scmp.eq.s32.totalorder %s15, 0
    %p187 = por %p185, %p186
    %p188 = scmp.ne.s32.totalorder %s177, %s180
    %p189 = scmp.eq.s32.totalorder %s20, 1
    %p190 = por %p188, %p189
    %p191 = scmp.ne.s32.totalorder %s180, %s181
    %p192 = scmp.eq.s32.totalorder %s20, 0
    %p193 = por %p191, %p192
    %p194 = scmp.ne.s32.totalorder %s180, %s181
    %p195 = scmp.eq.s32.totalorder %s21, 1
    %p196 = por %p194, %p195
    %p198 = scmp.ne.s32.totalorder %s181, %s197
    %p199 = scmp.eq.s32.totalorder %s21, 0
    %p200 = por %p198, %p199
    %s201 = ssub.s32 %s15, %s22
    %p202 = scmp.eq.s32.totalorder %s201, 0
    %s204 = sadd.s32 %s203, 1
    %s205 = scalar_select %p202, %s203, %s204
    %p208 = pneg %p202
    %p209 = scmp.eq.s32.totalorder %s15, 1
    %p210 = por %p208, %p209
    %p211 = scmp.ne.s32.totalorder %s203, %s206
    %p212 = scmp.eq.s32.totalorder %s15, 0
    %p213 = por %p211, %p212
    %p214 = scmp.ne.s32.totalorder %s203, %s206
    %p215 = scmp.eq.s32.totalorder %s20, 1
    %p216 = por %p214, %p215
    %p217 = scmp.ne.s32.totalorder %s206, %s207
    %p218 = scmp.eq.s32.totalorder %s20, 0
    %p219 = por %p217, %p218
    %p220 = scmp.ne.s32.totalorder %s206, %s207
    %p221 = scmp.eq.s32.totalorder %s21, 1
    %p222 = por %p220, %p221
    %p224 = scmp.ne.s32.totalorder %s207, %s223
    %p225 = scmp.eq.s32.totalorder %s21, 0
    %p226 = por %p224, %p225
    %p227 = scmp.le.s32.totalorder 1, %s15
    %p228 = scmp.lt.s32.totalorder %s15, 3
    %p229 = pnand %p227, %p228
    %p230 = pneg %p229
    // Predicated region
    $region9: #{dyresgen_forward.13} parent=5 // pred_check
      _
    $region10: #{dyresgen_forward.13} parent=5 // pred_check_branch
      %232 = sbr.rel (%p229) target = $region12
    $region11: #{dyresgen_forward.13} parent=5 // pred_region
      %s233 = ssub.s32 %s15, 1
      // Predicated region
      $region13: #{dyresgen_forward.13} parent=11 // pred_check
        %p234 = pneg %p62
      $region14: #{dyresgen_forward.13} parent=11 // pred_check_branch
        %236 = sbr.rel (%p234) target = $region16
      $region15: #{dyresgen_forward.13} parent=11 // pred_region
        _
      $region16: #{dyresgen_forward.13} parent=11 // pred_fallthru
        _
      // Predicated region
      $region17: #{dyresgen_forward.13} parent=11 // pred_check
        %p237 = pneg %p83
      $region18: #{dyresgen_forward.13} parent=11 // pred_check_branch
        %239 = sbr.rel (%p237) target = $region20
      $region19: #{dyresgen_forward.13} parent=11 // pred_region
        _
      $region20: #{dyresgen_forward.13} parent=11 // pred_fallthru
        _
      // Predicated region
      $region21: #{dyresgen_forward.13} parent=11 // pred_check
        %p240 = pneg %p104
      $region22: #{dyresgen_forward.13} parent=11 // pred_check_branch
        %242 = sbr.rel (%p240) target = $region24
      $region23: #{dyresgen_forward.13} parent=11 // pred_region
        _
      $region24: #{dyresgen_forward.13} parent=11 // pred_fallthru
        _
      // Predicated region
      $region25: #{dyresgen_forward.13} parent=11 // pred_check
        %p243 = pneg %p125
      $region26: #{dyresgen_forward.13} parent=11 // pred_check_branch
        %245 = sbr.rel (%p243) target = $region28
      $region27: #{dyresgen_forward.13} parent=11 // pred_region
        _
      $region28: #{dyresgen_forward.13} parent=11 // pred_fallthru
        _
      // Predicated region
      $region29: #{dyresgen_forward.13} parent=11 // pred_check
        %p246 = pneg %p146
      $region30: #{dyresgen_forward.13} parent=11 // pred_check_branch
        %248 = sbr.rel (%p246) target = $region32
      $region31: #{dyresgen_forward.13} parent=11 // pred_region
        _
      $region32: #{dyresgen_forward.13} parent=11 // pred_fallthru
        _
      // Predicated region
      $region33: #{dyresgen_forward.13} parent=11 // pred_check
        %p249 = pneg %p167
      $region34: #{dyresgen_forward.13} parent=11 // pred_check_branch
        %251 = sbr.rel (%p249) target = $region36
      $region35: #{dyresgen_forward.13} parent=11 // pred_region
        _
      $region36: #{dyresgen_forward.13} parent=11 // pred_fallthru
        _
    $region12: #{dyresgen_forward.13} parent=5 // pred_fallthru
      _
    %p252 = scmp.lt.s32.totalorder %s15, 2
    // Predicated region
    $region37: #{dyresgen_forward.13} parent=5 // pred_check
      %p253 = pneg %p252
    $region38: #{dyresgen_forward.13} parent=5 // pred_check_branch
      %255 = sbr.rel (%p253) target = $region40
    $region39: #{dyresgen_forward.13} parent=5 // pred_region
      // Predicated region
      $region41: #{dyresgen_forward.13} parent=39 // pred_check
        %p256 = pneg %p35
      $region42: #{dyresgen_forward.13} parent=39 // pred_check_branch
        %258 = sbr.rel (%p256) target = $region44
      $region43: #{dyresgen_forward.13} parent=39 // pred_region
        %s259 = smul.u32 2, %s15
        %p260 = scmp.lt.s32.totalorder %s259, 3
        %s261 = scalar_select %p260, %s259, 3
        %s262 = smul.addr %s261, 8
        %s263 = scalar_lea.vmem %s0, %s262
        %s264 = smul.u32 2, %s15
      $region44: #{dyresgen_forward.13} parent=39 // pred_fallthru
        _
    $region40: #{dyresgen_forward.13} parent=5 // pred_fallthru
      _
    %p265 = scmp.le.s32.totalorder 1, %s15
    %p266 = scmp.lt.s32.totalorder %s15, 3
    %p267 = pnand %p265, %p266
    %p268 = pneg %p267
    // Predicated region
    $region45: #{dyresgen_forward.13} parent=5 // pred_check
      _
    $region46: #{dyresgen_forward.13} parent=5 // pred_check_branch
      %270 = sbr.rel (%p267) target = $region48
    $region47: #{dyresgen_forward.13} parent=5 // pred_region
      %s271 = ssub.s32 %s15, 1
      %s272 = smul.u32 2, %s20
      %p273 = scmp.lt.s32.totalorder %s272, 3
      %s274 = scalar_select %p273, %s272, 3
      %s275 = smul.addr %s274, 8
      %s276 = scalar_lea.vmem %s0, %s275
      %p277 = pneg %p41
      %p278 = pneg %p38
      %p279 = pneg %p62
      %p280 = pneg %p59
      %p281 = pneg %p83
      %p282 = pneg %p80
      %p283 = pneg %p104
      %p284 = pneg %p101
      %p285 = pneg %p125
      %p286 = pneg %p122
      %p287 = pneg %p146
      %p288 = pneg %p143
      %p289 = pneg %p167
      %p290 = pneg %p164
      %p291 = pneg %p193
      %p292 = pneg %p190
      %s293 = smul.u32 2, %s20
      %p294 = scmp.lt.s32.totalorder %s293, 3
      %s295 = scalar_select %p294, %s293, 3
      %s296 = smul.addr %s295, 8
      %s297 = scalar_lea.vmem %s7, %s296
      %p298 = pneg %p219
      %p299 = pneg %p216
      %s300 = smul.u32 2, %s20
      %p301 = scmp.lt.s32.totalorder %s300, 3
      %s302 = scalar_select %p301, %s300, 3
      %s303 = smul.addr %s302, 8
      %s304 = scalar_lea.vmem %s8, %s303
      %s305 = smul.u32 2, %s20
      %p306 = scmp.lt.s32.totalorder %s305, 3
      %s307 = scalar_select %p306, %s305, 3
      %s308 = smul.addr %s307, 8
      %s309 = scalar_lea.vmem %s0, %s308
      %s310 = smul.u32 2, %s20
      %s311 = smul.u32 2, %s20
      %p312 = scmp.lt.s32.totalorder %s311, 3
      %s313 = scalar_select %p312, %s311, 3
      %s314 = smul.addr %s313, 8
      %s315 = scalar_lea.vmem %s7, %s314
      %s316 = smul.u32 2, %s20
      %s317 = smul.u32 2, %s20
      %p318 = scmp.lt.s32.totalorder %s317, 3
      %s319 = scalar_select %p318, %s317, 3
      %s320 = smul.addr %s319, 8
      %s321 = scalar_lea.vmem %s8, %s320
      %s322 = smul.u32 2, %s20
      %v324 = vld [vmem:[%s309] sm:$0xff]
      %v325 = vld [vmem:[%s309 + $0x8] sm:$0xff]
      %v326 = vpack.c.bf16 %v325, %v324
      %v327 = vld [vmem:[%s1] sm:$0xf]
      %v328 = vld [vmem:[%s1 + $0x4] sm:$0xf]
      %v329 = vld [vmem:[%s1 + $0x8] sm:$0xf]
      %v330 = vld [vmem:[%s1 + $0xc] sm:$0xf]
      %v331 = vld [vmem:[%s2] sm:$0x1]
      %v333 = vlaneseq
      %v334 = vshrl.u32 %v333, 7
      %v335 = vsub.s32 0, %v334
      %v336 = vrot.slane %v331, %v335
      %v342 = vunpack.c.l.b16 %v327
      %v343 = vunpack.c.l.b16 %v328
      %v344 = vunpack.c.l.b16 %v329
      %v345 = vunpack.c.l.b16 %v330
      %v346 = vpack.c.b16 %v343, %v342
      %v347 = vpack.c.b16 %v345, %v344
      %vm350 = vcmask 261120
      %v352 = vsel %vm350, %v326, 0
      %354 = vmatprep.subr.bf16.mxu0 0
      %355 = vmatpush1.bf16.msra.mxu0 %v346
      %356 = vmatprep.subr.bf16.mxu0 0
      %357 = vmatpush1.bf16.msra.mxu0 %v347
      %358 = vmatprep.subr.bf16.mxu0 0
      %359 = vmatpush1.bf16.msra.mxu0 0
      %360 = vmatprep.subr.bf16.mxu0 0
      %361 = vmatpush1.bf16.msra.mxu0 0
      %362 = vmatprep.subr.bf16.mxu0 0
      %363 = vmatpush1.bf16.msra.mxu0 0
      %364 = vmatprep.subr.bf16.mxu0 0
      %365 = vmatpush1.bf16.msra.mxu0 0
      %366 = vmatprep.subr.bf16.mxu0 0
      %367 = vmatpush1.bf16.msra.mxu0 0
      %368 = vmatprep.subr.bf16.mxu0 0
      %369 = vmatpush1.bf16.msra.mxu0 0
      %370 = vmatprep.subr.bf16.mxu0 0
      %371 = vmatpush1.bf16.msra.mxu0 0
      %372 = vmatprep.subr.bf16.mxu0 0
      %373 = vmatpush1.bf16.msra.mxu0 0
      %374 = vmatprep.subr.bf16.mxu0 0
      %375 = vmatpush1.bf16.msra.mxu0 0
      %376 = vmatprep.subr.bf16.mxu0 0
      %377 = vmatpush1.bf16.msra.mxu0 0
      %378 = vmatprep.subr.bf16.mxu0 0
      %379 = vmatpush1.bf16.msra.mxu0 0
      %380 = vmatprep.subr.bf16.mxu0 0
      %381 = vmatpush1.bf16.msra.mxu0 0
      %382 = vmatprep.subr.bf16.mxu0 0
      %383 = vmatpush1.bf16.msra.mxu0 0
      %384 = vmatprep.subr.bf16.mxu0 0
      %385 = vmatpush1.bf16.msra.mxu0 0
      %386 = vmatprep.mubr.bf16.mxu0 0
      %387 = vmatmul.mubr.bf16.gmra.mrb[0].mxu0 %v352
      %v388 = vpop.f32.mrb[0].mxu0
      %v389 = vadd.f32 %v336, %v388
      %v390 = vpop.f32.mrb[0].mxu0
      %v391 = vpop.f32.mrb[0].mxu0
      %v392 = vadd.f32 %v336, %v391
      %v393 = vpop.f32.mrb[0].mxu0
      %394 = vdwg.mxu0
      %v395 = vmax.f32 %v389, 0.0
      %v396 = vmax.f32 %v392, 0.0
      %v397 = vpack.c.bf16 %v396, %v395
      %v398 = vld [vmem:[%s3] sm:$0xf]
      %v399 = vld [vmem:[%s3 + $0x4] sm:$0xf]
      %v400 = vld [vmem:[%s3 + $0x8] sm:$0xf]
      %v401 = vld [vmem:[%s3 + $0xc] sm:$0xf]
      %v402 = vld [vmem:[%s3 + $0x10] sm:$0xf]
      %v403 = vld [vmem:[%s3 + $0x14] sm:$0xf]
      %v404 = vld [vmem:[%s3 + $0x18] sm:$0xf]
      %v405 = vld [vmem:[%s3 + $0x1c] sm:$0xf]
      %v406 = vld [vmem:[%s4] sm:$0x1]
      %v408 = vlaneseq
      %v409 = vshrl.u32 %v408, 7
      %v410 = vsub.s32 0, %v409
      %v411 = vrot.slane %v406, %v410
      %v421 = vunpack.c.l.b16 %v398
      %v422 = vunpack.c.l.b16 %v399
      %v423 = vunpack.c.l.b16 %v400
      %v424 = vunpack.c.l.b16 %v401
      %v425 = vunpack.c.l.b16 %v402
      %v426 = vunpack.c.l.b16 %v403
      %v427 = vunpack.c.l.b16 %v404
      %v428 = vunpack.c.l.b16 %v405
      %v429 = vpack.c.b16 %v422, %v421
      %v430 = vpack.c.b16 %v424, %v423
      %v431 = vpack.c.b16 %v426, %v425
      %v432 = vpack.c.b16 %v428, %v427
      %vm437 = vcmask 523264
      %v439 = vsel %vm437, %v397, 0
      %441 = vmatprep.subr.bf16.mxu0 0
      %442 = vmatpush1.bf16.msra.mxu0 %v429
      %443 = vmatprep.subr.bf16.mxu0 0
      %444 = vmatpush1.bf16.msra.mxu0 %v430
      %445 = vmatprep.subr.bf16.mxu0 0
      %446 = vmatpush1.bf16.msra.mxu0 %v431
      %447 = vmatprep.subr.bf16.mxu0 0
      %448 = vmatpush1.bf16.msra.mxu0 %v432
      %449 = vmatprep.subr.bf16.mxu0 0
      %450 = vmatpush1.bf16.msra.mxu0 0
      %451 = vmatprep.subr.bf16.mxu0 0
      %452 = vmatpush1.bf16.msra.mxu0 0
      %453 = vmatprep.subr.bf16.mxu0 0
      %454 = vmatpush1.bf16.msra.mxu0 0
      %455 = vmatprep.subr.bf16.mxu0 0
      %456 = vmatpush1.bf16.msra.mxu0 0
      %457 = vmatprep.subr.bf16.mxu0 0
      %458 = vmatpush1.bf16.msra.mxu0 0
      %459 = vmatprep.subr.bf16.mxu0 0
      %460 = vmatpush1.bf16.msra.mxu0 0
      %461 = vmatprep.subr.bf16.mxu0 0
      %462 = vmatpush1.bf16.msra.mxu0 0
      %463 = vmatprep.subr.bf16.mxu0 0
      %464 = vmatpush1.bf16.msra.mxu0 0
      %465 = vmatprep.subr.bf16.mxu0 0
      %466 = vmatpush1.bf16.msra.mxu0 0
      %467 = vmatprep.subr.bf16.mxu0 0
      %468 = vmatpush1.bf16.msra.mxu0 0
      %469 = vmatprep.subr.bf16.mxu0 0
      %470 = vmatpush1.bf16.msra.mxu0 0
      %471 = vmatprep.subr.bf16.mxu0 0
      %472 = vmatpush1.bf16.msra.mxu0 0
      %473 = vmatprep.mubr.bf16.mxu0 0
      %474 = vmatmul.mubr.bf16.gmra.mrb[0].mxu0 %v439
      %v475 = vpop.f32.mrb[0].mxu0
      %v476 = vadd.f32 %v411, %v475
      %v477 = vpop.f32.mrb[0].mxu0
      %v478 = vpop.f32.mrb[0].mxu0
      %v479 = vadd.f32 %v411, %v478
      %v480 = vpop.f32.mrb[0].mxu0
      %481 = vdwg.mxu0
      %482 = vst.msk [vmem:[%s315] sm:$0xff] %vm350, %v476
      %483 = vst.msk [vmem:[%s315 + $0x8] sm:$0xff] %vm350, %v479
      %v484 = vsel %vm350, %v476, 0.0
      %485 = vadd.xlane.f32.xlu0 %v484
      %v486 = vpop.xlane.xlu0 %485
      %v487 = vsel %vm350, %v479, 0.0
      %488 = vadd.xlane.f32.xlu0 %v487
      %v489 = vpop.xlane.xlu0 %488
      %v490 = vrcp.pop 32.0
      %v491 = vmul.f32 %v486, %v490
      %v492 = vmul.f32 %v489, %v490
      %v493 = vsub.f32 %v476, %v491
      %v494 = vsub.f32 %v479, %v492
      %v495 = vmul.f32 %v493, %v493
      %v496 = vmul.f32 %v494, %v494
      %v497 = vsel %vm350, %v495, 0.0
      %498 = vadd.xlane.f32.xlu0 %v497
      %v499 = vpop.xlane.xlu0 %498
      %v500 = vsel %vm350, %v496, 0.0
      %501 = vadd.xlane.f32.xlu0 %v500
      %v502 = vpop.xlane.xlu0 %501
      %v503 = vmul.f32 %v499, %v490
      %v504 = vmul.f32 %v502, %v490
      %v505 = vadd.f32 %v503, 1e-05
      %v506 = vadd.f32 %v504, 1e-05
      %v507 = vrsqrt.pop %v505
      %v508 = vrsqrt.pop %v506
      %v509 = vmul.f32 %v493, %v507
      %v510 = vmul.f32 %v494, %v508
      %v511 = vld [vmem:[%s5] sm:$0x1]
      %v513 = vlaneseq
      %v514 = vshrl.u32 %v513, 7
      %v515 = vsub.s32 0, %v514
      %v516 = vrot.slane %v511, %v515
      %v518 = vmul.f32 %v509, %v516
      %v519 = vmul.f32 %v510, %v516
      %v520 = vld [vmem:[%s6] sm:$0x1]
      %v522 = vlaneseq
      %v523 = vshrl.u32 %v522, 7
      %v524 = vsub.s32 0, %v523
      %v525 = vrot.slane %v520, %v524
      %v527 = vadd.f32 %v518, %v525
      %v528 = vadd.f32 %v519, %v525
      %v529 = vmax.f32 %v527, 0.0
      %v530 = vmax.f32 %v528, 0.0
      %531 = vst.msk [vmem:[%s321] sm:$0xff] %vm350, %v529
      %532 = vst.msk [vmem:[%s321 + $0x8] sm:$0xff] %vm350, %v530
      %s533 = smul.u32 2, %s20
      %p534 = scmp.lt.s32.totalorder %s533, 3
      %s535 = scalar_select %p534, %s533, 3
      %s536 = smul.addr %s535, 8
      %s537 = scalar_lea.vmem %s7, %s536
      %s538 = smul.u32 2, %s20
      %p539 = scmp.lt.s32.totalorder %s538, 3
      %s540 = scalar_select %p539, %s538, 3
      %s541 = smul.addr %s540, 8
      %s542 = scalar_lea.vmem %s8, %s541
      // Predicated region
      $region49: #{dyresgen_forward.13} parent=47 // pred_check
        %p543 = pneg %p190
      $region50: #{dyresgen_forward.13} parent=47 // pred_check_branch
        %545 = sbr.rel (%p543) target = $region52
      $region51: #{dyresgen_forward.13} parent=47 // pred_region
        %s546 = smul.u32 2, %s20
      $region52: #{dyresgen_forward.13} parent=47 // pred_fallthru
        _
      // Predicated region
      $region53: #{dyresgen_forward.13} parent=47 // pred_check
        %p547 = pneg %p216
      $region54: #{dyresgen_forward.13} parent=47 // pred_check_branch
        %549 = sbr.rel (%p547) target = $region56
      $region55: #{dyresgen_forward.13} parent=47 // pred_region
        %s550 = smul.u32 2, %s20
      $region56: #{dyresgen_forward.13} parent=47 // pred_fallthru
        _
    $region48: #{dyresgen_forward.13} parent=5 // pred_fallthru
      _
    %p551 = scmp.le.s32.totalorder 2, %s15
    // Predicated region
    $region57: #{dyresgen_forward.13} parent=5 // pred_check
      %p552 = pneg %p551
    $region58: #{dyresgen_forward.13} parent=5 // pred_check_branch
      %554 = sbr.rel (%p552) target = $region60
    $region59: #{dyresgen_forward.13} parent=5 // pred_region
      %s555 = ssub.s32 %s15, 2
      // Predicated region
      $region61: #{dyresgen_forward.13} parent=59 // pred_check
        %p556 = pneg %p196
      $region62: #{dyresgen_forward.13} parent=59 // pred_check_branch
        %558 = sbr.rel (%p556) target = $region64
      $region63: #{dyresgen_forward.13} parent=59 // pred_region
        %s559 = smul.u32 2, %s21
        %p560 = scmp.lt.s32.totalorder %s559, 3
        %s561 = scalar_select %p560, %s559, 3
        %s562 = smul.addr %s561, 8
        %s563 = scalar_lea.vmem %s7, %s562
      $region64: #{dyresgen_forward.13} parent=59 // pred_fallthru
        _
      // Predicated region
      $region65: #{dyresgen_forward.13} parent=59 // pred_check
        %p564 = pneg %p222
      $region66: #{dyresgen_forward.13} parent=59 // pred_check_branch
        %566 = sbr.rel (%p564) target = $region68
      $region67: #{dyresgen_forward.13} parent=59 // pred_region
        %s567 = smul.u32 2, %s21
        %p568 = scmp.lt.s32.totalorder %s567, 3
        %s569 = scalar_select %p568, %s567, 3
        %s570 = smul.addr %s569, 8
        %s571 = scalar_lea.vmem %s8, %s570
      $region68: #{dyresgen_forward.13} parent=59 // pred_fallthru
        _
    $region60: #{dyresgen_forward.13} parent=5 // pred_fallthru
      _
  $region6: #{dyresgen_forward.13} parent=0 // loop_footer
    %s19 = sadd.s32 1, %s15
  $region7: #{dyresgen_forward.13} parent=0 // loop_footer_branch
    %14 = sbr.rel target = $region3
  $region8: #{dyresgen_forward.13} parent=0 // loop_exit
    _

// kernel: dyresgen_forward.12
$region0: #{dyresgen_forward.12}
  #allocation0 [shape = 'u32[]', space=smem, size = 0x4, offset = 0x4, fixed_abs, tag = 'smem constant byte address 0x4 - core index']
  #allocation1 [shape = 'u32[144,128]{1,0:T(1,128)}', space=vmem, size = 0x12000, scoped, tag = 'internal scratch']
  #allocation2 [shape = 'f32[16,32]{1,0:T(8,128)}', space=vmem, size = 0x2000, scoped, tag = 'scratch operand']
  #allocation3 [shape = 'f32[16,32]{1,0:T(8,128)}', space=vmem, size = 0x2000, scoped, tag = 'scratch operand']
  #allocation4 [shape = 'f32[16,32]{1,0:T(8,128)}', space=vmem, size = 0x2000, scoped, tag = 'scratch operand']
  #allocation5 [shape = 'f32[16,1]{1,0:T(8,128)}', space=vmem, size = 0x2000, scoped, tag = 'scratch operand']
  #allocation6 [shape = 'f32[1,1]{1,0:T(1,128)S(6)}', space=smem, size = 0x200, scoped, tag = 'scoped memory for dyresgen_forward.12']
  %s0 = inlined_call_operand.vmem [shape: f32[2,16,32], index: 0, kind: input, shape index: {}, may-alias: {0,1}]
  %s1 = inlined_call_operand.vmem [shape: f32[2,16,32], index: 1, kind: input, shape index: {}, may-alias: {0,1}]
  %s2 = inlined_call_operand.vmem [shape: bf16[2,2,16,16], index: 2, kind: input, shape index: {}]
  %s3 = inlined_call_operand.vmem [shape: bf16[2,16,16], index: 3, kind: input, shape index: {}]
  %s4 = inlined_call_operand.vmem [shape: f32[2,32], index: 4, kind: input, shape index: {}]
  %s5 = inlined_call_operand.vmem [shape: f32[1,32], index: 5, kind: input, shape index: {}]
  %s6 = inlined_call_operand.<no memory space> [shape: f32[1,1], index: 6, kind: input, shape index: {}]
  %s7 = inlined_call_operand.vmem [shape: f32[2,16,32], index: 7, kind: output, shape index: {}]
  %s8 = sld [smem:[#allocation0]]
  $region69: #{dyresgen_forward.12} parent=0
    _
  %s10 = ssub.s32 1, %s8
  %s11 = scalar_select 0, %s10, %s8
  %12 = sst [smem:[#allocation6]] %s6
  loop: start=0, step=1, limit=4
  $region2: #{dyresgen_forward.12} parent=0 // loop_pre_header
    _
  $region3: #{dyresgen_forward.12} parent=0 // loop_header
    %s14 = sphi 0, %s18
    %p15 = scmp.ge.s32.totalorder %s14, 4
    %s21 = sphi 0, %s40
    %s22 = sphi 0, %s36
    %s23 = sphi 0, %s32
    %s24 = sphi 0, %s21
    %s25 = sphi 0, %s22
    %s26 = sphi 0, %s23
    %s27 = sphi 0, %s24
    %s28 = sphi 0, %s25
    %s29 = sphi 0, %s26
    %s45 = sphi 0, %s47
    %s48 = sphi 0, %s45
    %s49 = sphi 0, %s48
    %s65 = sphi 0, %s49
    %s73 = sphi 0, %s75
    %s76 = sphi 0, %s73
    %s77 = sphi 0, %s76
    %s93 = sphi 0, %s77
    %s103 = sphi 0, %s105
    %s106 = sphi 0, %s103
    %s107 = sphi 0, %s106
    %s123 = sphi 0, %s107
    %s133 = sphi 0, %s135
    %s136 = sphi 0, %s133
    %s137 = sphi 0, %s136
    %s153 = sphi 0, %s137
    %s157 = sphi 0, %s157
    %s159 = sphi 0, %s157
    %s160 = sphi 0, %s159
    %s174 = sphi 0, %s160
    %s178 = sphi 0, %s178
    %s180 = sphi 0, %s178
    %s181 = sphi 0, %s180
    %s195 = sphi 0, %s181
    %s199 = sphi 0, %s199
    %s201 = sphi 0, %s199
    %s202 = sphi 0, %s201
    %s216 = sphi 0, %s202
    %s224 = sphi 0, %s226
    %s227 = sphi 0, %s224
    %s228 = sphi 0, %s227
    %s244 = sphi 0, %s228
  $region4: #{dyresgen_forward.12} parent=0 // loop_header_branch
    %17 = sbr.rel (%p15) target = $region8
  $region5: #{dyresgen_forward.12} parent=0 // loop_body
    %s19 = ssub.s32 %s14, 1
    %s20 = ssub.s32 %s14, 2
    %s30 = sadd.s32 1, %s23
    %p31 = scmp.ge.s32.totalorder %s30, 1
    %s32 = scalar_select %p31, 0, %s30
    %s33 = sadd.s32 1, %s22
    %s34 = scalar_select %p31, %s33, %s22
    %p35 = scmp.ge.s32.totalorder %s34, 1
    %s36 = scalar_select %p35, 0, %s34
    %s37 = sadd.s32 1, %s21
    %s38 = scalar_select %p35, %s37, %s21
    %p39 = scmp.ge.s32.totalorder %s38, 2
    %s40 = scalar_select %p39, 0, %s38
    %s41 = ssub.s32 %s21, %s40
    %s42 = ssub.s32 %s23, %s32
    %s43 = sor.u32 %s41, %s42
    %p44 = scmp.eq.s32.totalorder %s43, 0
    %s46 = sadd.s32 %s45, 1
    %s47 = scalar_select %p44, %s45, %s46
    %p50 = pneg %p44
    %p51 = scmp.eq.s32.totalorder %s14, 1
    %p52 = por %p50, %p51
    %p53 = scmp.ne.s32.totalorder %s45, %s48
    %p54 = scmp.eq.s32.totalorder %s14, 0
    %p55 = por %p53, %p54
    %p56 = scmp.ne.s32.totalorder %s45, %s48
    %p57 = scmp.eq.s32.totalorder %s19, 1
    %p58 = por %p56, %p57
    %p59 = scmp.ne.s32.totalorder %s48, %s49
    %p60 = scmp.eq.s32.totalorder %s19, 0
    %p61 = por %p59, %p60
    %p62 = scmp.ne.s32.totalorder %s48, %s49
    %p63 = scmp.eq.s32.totalorder %s20, 1
    %p64 = por %p62, %p63
    %p66 = scmp.ne.s32.totalorder %s49, %s65
    %p67 = scmp.eq.s32.totalorder %s20, 0
    %p68 = por %p66, %p67
    %s69 = ssub.s32 %s21, %s40
    %s70 = ssub.s32 %s22, %s36
    %s71 = sor.u32 %s69, %s70
    %p72 = scmp.eq.s32.totalorder %s71, 0
    %s74 = sadd.s32 %s73, 1
    %s75 = scalar_select %p72, %s73, %s74
    %p78 = pneg %p72
    %p79 = scmp.eq.s32.totalorder %s14, 1
    %p80 = por %p78, %p79
    %p81 = scmp.ne.s32.totalorder %s73, %s76
    %p82 = scmp.eq.s32.totalorder %s14, 0
    %p83 = por %p81, %p82
    %p84 = scmp.ne.s32.totalorder %s73, %s76
    %p85 = scmp.eq.s32.totalorder %s19, 1
    %p86 = por %p84, %p85
    %p87 = scmp.ne.s32.totalorder %s76, %s77
    %p88 = scmp.eq.s32.totalorder %s19, 0
    %p89 = por %p87, %p88
    %p90 = scmp.ne.s32.totalorder %s76, %s77
    %p91 = scmp.eq.s32.totalorder %s20, 1
    %p92 = por %p90, %p91
    %p94 = scmp.ne.s32.totalorder %s77, %s93
    %p95 = scmp.eq.s32.totalorder %s20, 0
    %p96 = por %p94, %p95
    %s97 = ssub.s32 %s21, %s40
    %s98 = ssub.s32 %s22, %s36
    %s99 = sor.u32 %s97, %s98
    %s100 = ssub.s32 %s23, %s32
    %s101 = sor.u32 %s99, %s100
    %p102 = scmp.eq.s32.totalorder %s101, 0
    %s104 = sadd.s32 %s103, 1
    %s105 = scalar_select %p102, %s103, %s104
    %p108 = pneg %p102
    %p109 = scmp.eq.s32.totalorder %s14, 1
    %p110 = por %p108, %p109
    %p111 = scmp.ne.s32.totalorder %s103, %s106
    %p112 = scmp.eq.s32.totalorder %s14, 0
    %p113 = por %p111, %p112
    %p114 = scmp.ne.s32.totalorder %s103, %s106
    %p115 = scmp.eq.s32.totalorder %s19, 1
    %p116 = por %p114, %p115
    %p117 = scmp.ne.s32.totalorder %s106, %s107
    %p118 = scmp.eq.s32.totalorder %s19, 0
    %p119 = por %p117, %p118
    %p120 = scmp.ne.s32.totalorder %s106, %s107
    %p121 = scmp.eq.s32.totalorder %s20, 1
    %p122 = por %p120, %p121
    %p124 = scmp.ne.s32.totalorder %s107, %s123
    %p125 = scmp.eq.s32.totalorder %s20, 0
    %p126 = por %p124, %p125
    %s127 = ssub.s32 %s21, %s40
    %s128 = ssub.s32 %s22, %s36
    %s129 = sor.u32 %s127, %s128
    %s130 = ssub.s32 %s23, %s32
    %s131 = sor.u32 %s129, %s130
    %p132 = scmp.eq.s32.totalorder %s131, 0
    %s134 = sadd.s32 %s133, 1
    %s135 = scalar_select %p132, %s133, %s134
    %p138 = pneg %p132
    %p139 = scmp.eq.s32.totalorder %s14, 1
    %p140 = por %p138, %p139
    %p141 = scmp.ne.s32.totalorder %s133, %s136
    %p142 = scmp.eq.s32.totalorder %s14, 0
    %p143 = por %p141, %p142
    %p144 = scmp.ne.s32.totalorder %s133, %s136
    %p145 = scmp.eq.s32.totalorder %s19, 1
    %p146 = por %p144, %p145
    %p147 = scmp.ne.s32.totalorder %s136, %s137
    %p148 = scmp.eq.s32.totalorder %s19, 0
    %p149 = por %p147, %p148
    %p150 = scmp.ne.s32.totalorder %s136, %s137
    %p151 = scmp.eq.s32.totalorder %s20, 1
    %p152 = por %p150, %p151
    %p154 = scmp.ne.s32.totalorder %s137, %s153
    %p155 = scmp.eq.s32.totalorder %s20, 0
    %p156 = por %p154, %p155
    %s158 = sadd.s32 %s157, 1
    %p161 = scmp.eq.s32.totalorder %s14, 1
    %p162 = scmp.ne.s32.totalorder %s157, %s159
    %p163 = scmp.eq.s32.totalorder %s14, 0
    %p164 = por %p162, %p163
    %p165 = scmp.ne.s32.totalorder %s157, %s159
    %p166 = scmp.eq.s32.totalorder %s19, 1
    %p167 = por %p165, %p166
    %p168 = scmp.ne.s32.totalorder %s159, %s160
    %p169 = scmp.eq.s32.totalorder %s19, 0
    %p170 = por %p168, %p169
    %p171 = scmp.ne.s32.totalorder %s159, %s160
    %p172 = scmp.eq.s32.totalorder %s20, 1
    %p173 = por %p171, %p172
    %p175 = scmp.ne.s32.totalorder %s160, %s174
    %p176 = scmp.eq.s32.totalorder %s20, 0
    %p177 = por %p175, %p176
    %s179 = sadd.s32 %s178, 1
    %p182 = scmp.eq.s32.totalorder %s14, 1
    %p183 = scmp.ne.s32.totalorder %s178, %s180
    %p184 = scmp.eq.s32.totalorder %s14, 0
    %p185 = por %p183, %p184
    %p186 = scmp.ne.s32.totalorder %s178, %s180
    %p187 = scmp.eq.s32.totalorder %s19, 1
    %p188 = por %p186, %p187
    %p189 = scmp.ne.s32.totalorder %s180, %s181
    %p190 = scmp.eq.s32.totalorder %s19, 0
    %p191 = por %p189, %p190
    %p192 = scmp.ne.s32.totalorder %s180, %s181
    %p193 = scmp.eq.s32.totalorder %s20, 1
    %p194 = por %p192, %p193
    %p196 = scmp.ne.s32.totalorder %s181, %s195
    %p197 = scmp.eq.s32.totalorder %s20, 0
    %p198 = por %p196, %p197
    %s200 = sadd.s32 %s199, 1
    %p203 = scmp.eq.s32.totalorder %s14, 1
    %p204 = scmp.ne.s32.totalorder %s199, %s201
    %p205 = scmp.eq.s32.totalorder %s14, 0
    %p206 = por %p204, %p205
    %p207 = scmp.ne.s32.totalorder %s199, %s201
    %p208 = scmp.eq.s32.totalorder %s19, 1
    %p209 = por %p207, %p208
    %p210 = scmp.ne.s32.totalorder %s201, %s202
    %p211 = scmp.eq.s32.totalorder %s19, 0
    %p212 = por %p210, %p211
    %p213 = scmp.ne.s32.totalorder %s201, %s202
    %p214 = scmp.eq.s32.totalorder %s20, 1
    %p215 = por %p213, %p214
    %p217 = scmp.ne.s32.totalorder %s202, %s216
    %p218 = scmp.eq.s32.totalorder %s20, 0
    %p219 = por %p217, %p218
    %s220 = ssub.s32 %s21, %s40
    %s221 = ssub.s32 %s22, %s36
    %s222 = sor.u32 %s220, %s221
    %p223 = scmp.eq.s32.totalorder %s222, 0
    %s225 = sadd.s32 %s224, 1
    %s226 = scalar_select %p223, %s224, %s225
    %p229 = pneg %p223
    %p230 = scmp.eq.s32.totalorder %s14, 1
    %p231 = por %p229, %p230
    %p232 = scmp.ne.s32.totalorder %s224, %s227
    %p233 = scmp.eq.s32.totalorder %s14, 0
    %p234 = por %p232, %p233
    %p235 = scmp.ne.s32.totalorder %s224, %s227
    %p236 = scmp.eq.s32.totalorder %s19, 1
    %p237 = por %p235, %p236
    %p238 = scmp.ne.s32.totalorder %s227, %s228
    %p239 = scmp.eq.s32.totalorder %s19, 0
    %p240 = por %p238, %p239
    %p241 = scmp.ne.s32.totalorder %s227, %s228
    %p242 = scmp.eq.s32.totalorder %s20, 1
    %p243 = por %p241, %p242
    %p245 = scmp.ne.s32.totalorder %s228, %s244
    %p246 = scmp.eq.s32.totalorder %s20, 0
    %p247 = por %p245, %p246
    %p248 = scmp.le.s32.totalorder 1, %s14
    %p249 = scmp.lt.s32.totalorder %s14, 3
    %p250 = pnand %p248, %p249
    %p251 = pneg %p250
    // Predicated region
    $region9: #{dyresgen_forward.12} parent=5 // pred_check
      _
    $region10: #{dyresgen_forward.12} parent=5 // pred_check_branch
      %253 = sbr.rel (%p250) target = $region12
    $region11: #{dyresgen_forward.12} parent=5 // pred_region
      %s254 = ssub.s32 %s14, 1
      // Predicated region
      $region13: #{dyresgen_forward.12} parent=11 // pred_check
        %p255 = pneg %p170
      $region14: #{dyresgen_forward.12} parent=11 // pred_check_branch
        %257 = sbr.rel (%p255) target = $region16
      $region15: #{dyresgen_forward.12} parent=11 // pred_region
        _
      $region16: #{dyresgen_forward.12} parent=11 // pred_fallthru
        _
      // Predicated region
      $region17: #{dyresgen_forward.12} parent=11 // pred_check
        %p258 = pneg %p191
      $region18: #{dyresgen_forward.12} parent=11 // pred_check_branch
        %260 = sbr.rel (%p258) target = $region20
      $region19: #{dyresgen_forward.12} parent=11 // pred_region
        _
      $region20: #{dyresgen_forward.12} parent=11 // pred_fallthru
        _
      // Predicated region
      $region21: #{dyresgen_forward.12} parent=11 // pred_check
        %p261 = pneg %p212
      $region22: #{dyresgen_forward.12} parent=11 // pred_check_branch
        %263 = sbr.rel (%p261) target = $region24
      $region23: #{dyresgen_forward.12} parent=11 // pred_region
        _
      $region24: #{dyresgen_forward.12} parent=11 // pred_fallthru
        _
    $region12: #{dyresgen_forward.12} parent=5 // pred_fallthru
      _
    %p264 = scmp.lt.s32.totalorder %s14, 2
    // Predicated region
    $region25: #{dyresgen_forward.12} parent=5 // pred_check
      %p265 = pneg %p264
    $region26: #{dyresgen_forward.12} parent=5 // pred_check_branch
      %267 = sbr.rel (%p265) target = $region28
    $region27: #{dyresgen_forward.12} parent=5 // pred_region
      // Predicated region
      $region29: #{dyresgen_forward.12} parent=27 // pred_check
        %p268 = pneg %p55
      $region30: #{dyresgen_forward.12} parent=27 // pred_check_branch
        %270 = sbr.rel (%p268) target = $region32
      $region31: #{dyresgen_forward.12} parent=27 // pred_region
        %s271 = smul.u32 2, %s23
        %p272 = scmp.lt.s32.totalorder %s21, 1
        %s273 = scalar_select %p272, %s21, 1
        %p274 = scmp.lt.s32.totalorder %s271, 1
        %s275 = scalar_select %p274, %s271, 1
        %s276 = smul.addr %s273, 2
        %s277 = sadd.s32 %s275, %s276
        %s278 = smul.addr %s277, 8
        %s279 = scalar_lea.vmem %s0, %s278
        %s280 = smul.u32 2, %s23
      $region32: #{dyresgen_forward.12} parent=27 // pred_fallthru
        _
      // Predicated region
      $region33: #{dyresgen_forward.12} parent=27 // pred_check
        %p281 = pneg %p83
      $region34: #{dyresgen_forward.12} parent=27 // pred_check_branch
        %283 = sbr.rel (%p281) target = $region36
      $region35: #{dyresgen_forward.12} parent=27 // pred_region
        %s284 = smul.u32 2, %s22
        %p285 = scmp.lt.s32.totalorder %s21, 1
        %s286 = scalar_select %p285, %s21, 1
        %p287 = scmp.lt.s32.totalorder %s284, 1
        %s288 = scalar_select %p287, %s284, 1
        %s289 = smul.addr %s286, 2
        %s290 = sadd.s32 %s288, %s289
        %s291 = smul.addr %s290, 8
        %s292 = scalar_lea.vmem %s1, %s291
        %s293 = smul.u32 2, %s22
      $region36: #{dyresgen_forward.12} parent=27 // pred_fallthru
        _
      // Predicated region
      $region37: #{dyresgen_forward.12} parent=27 // pred_check
        %p294 = pneg %p113
      $region38: #{dyresgen_forward.12} parent=27 // pred_check_branch
        %296 = sbr.rel (%p294) target = $region40
      $region39: #{dyresgen_forward.12} parent=27 // pred_region
        %s297 = smul.u32 2, %s22
        %p298 = scmp.lt.s32.totalorder %s21, 1
        %s299 = scalar_select %p298, %s21, 1
        %p300 = scmp.lt.s32.totalorder %s297, 1
        %s301 = scalar_select %p300, %s297, 1
        %p302 = scmp.lt.s32.totalorder %s23, 0
        %s303 = scalar_select %p302, %s23, 0
        %s304 = sadd.s32 %s303, %s301
        %s305 = smul.addr %s299, 4
        %s306 = sadd.s32 %s304, %s305
        %s307 = smul.addr %s306, 4
        %s308 = scalar_lea.vmem %s2, %s307
        %s309 = smul.u32 2, %s22
      $region40: #{dyresgen_forward.12} parent=27 // pred_fallthru
        _
      // Predicated region
      $region41: #{dyresgen_forward.12} parent=27 // pred_check
        %p310 = pneg %p143
      $region42: #{dyresgen_forward.12} parent=27 // pred_check_branch
        %312 = sbr.rel (%p310) target = $region44
      $region43: #{dyresgen_forward.12} parent=27 // pred_region
        %s313 = smul.u32 2, %s22
        %p314 = scmp.lt.s32.totalorder %s21, 1
        %s315 = scalar_select %p314, %s21, 1
        %p316 = scmp.lt.s32.totalorder %s313, 1
        %s317 = scalar_select %p316, %s313, 1
        %p318 = scmp.lt.s32.totalorder %s23, 0
        %s319 = scalar_select %p318, %s23, 0
        %s320 = sadd.s32 %s319, %s317
        %s321 = smul.addr %s315, 2
        %s322 = sadd.s32 %s320, %s321
        %s323 = smul.addr %s322, 4
        %s324 = scalar_lea.vmem %s3, %s323
        %s325 = smul.u32 2, %s22
      $region44: #{dyresgen_forward.12} parent=27 // pred_fallthru
        _
    $region28: #{dyresgen_forward.12} parent=5 // pred_fallthru
      _
    %p326 = scmp.le.s32.totalorder 1, %s14
    %p327 = scmp.lt.s32.totalorder %s14, 3
    %p328 = pnand %p326, %p327
    %p329 = pneg %p328
    // Predicated region
    $region45: #{dyresgen_forward.12} parent=5 // pred_check
      _
    $region46: #{dyresgen_forward.12} parent=5 // pred_check_branch
      %331 = sbr.rel (%p328) target = $region48
    $region47: #{dyresgen_forward.12} parent=5 // pred_region
      %s332 = ssub.s32 %s14, 1
      %s333 = smul.u32 2, %s26
      %p334 = scmp.lt.s32.totalorder %s24, 1
      %s335 = scalar_select %p334, %s24, 1
      %p336 = scmp.lt.s32.totalorder %s333, 1
      %s337 = scalar_select %p336, %s333, 1
      %s338 = smul.addr %s335, 2
      %s339 = sadd.s32 %s337, %s338
      %s340 = smul.addr %s339, 8
      %s341 = scalar_lea.vmem %s0, %s340
      %p342 = pneg %p61
      %p343 = pneg %p58
      %s344 = smul.u32 2, %s25
      %p345 = scmp.lt.s32.totalorder %s24, 1
      %s346 = scalar_select %p345, %s24, 1
      %p347 = scmp.lt.s32.totalorder %s344, 1
      %s348 = scalar_select %p347, %s344, 1
      %s349 = smul.addr %s346, 2
      %s350 = sadd.s32 %s348, %s349
      %s351 = smul.addr %s350, 8
      %s352 = scalar_lea.vmem %s1, %s351
      %p353 = pneg %p89
      %p354 = pneg %p86
      %s355 = smul.u32 2, %s25
      %p356 = scmp.lt.s32.totalorder %s24, 1
      %s357 = scalar_select %p356, %s24, 1
      %p358 = scmp.lt.s32.totalorder %s355, 1
      %s359 = scalar_select %p358, %s355, 1
      %p360 = scmp.lt.s32.totalorder %s26, 0
      %s361 = scalar_select %p360, %s26, 0
      %s362 = sadd.s32 %s361, %s359
      %s363 = smul.addr %s357, 4
      %s364 = sadd.s32 %s362, %s363
      %s365 = smul.addr %s364, 4
      %s366 = scalar_lea.vmem %s2, %s365
      %p367 = pneg %p119
      %p368 = pneg %p116
      %s369 = smul.u32 2, %s25
      %p370 = scmp.lt.s32.totalorder %s24, 1
      %s371 = scalar_select %p370, %s24, 1
      %p372 = scmp.lt.s32.totalorder %s369, 1
      %s373 = scalar_select %p372, %s369, 1
      %p374 = scmp.lt.s32.totalorder %s26, 0
      %s375 = scalar_select %p374, %s26, 0
      %s376 = sadd.s32 %s375, %s373
      %s377 = smul.addr %s371, 2
      %s378 = sadd.s32 %s376, %s377
      %s379 = smul.addr %s378, 4
      %s380 = scalar_lea.vmem %s3, %s379
      %p381 = pneg %p149
      %p382 = pneg %p146
      %p383 = pneg %p170
      %p384 = pneg %p167
      %p385 = pneg %p191
      %p386 = pneg %p188
      %p387 = pneg %p212
      %p388 = pneg %p209
      %p389 = pneg %p240
      %p390 = pneg %p237
      %s391 = smul.u32 2, %s25
      %p392 = scmp.lt.s32.totalorder %s24, 1
      %s393 = scalar_select %p392, %s24, 1
      %p394 = scmp.lt.s32.totalorder %s391, 1
      %s395 = scalar_select %p394, %s391, 1
      %s396 = smul.addr %s393, 2
      %s397 = sadd.s32 %s395, %s396
      %s398 = smul.addr %s397, 8
      %s399 = scalar_lea.vmem %s7, %s398
      %s400 = smul.u32 2, %s26
      %p401 = scmp.lt.s32.totalorder %s24, 1
      %s402 = scalar_select %p401, %s24, 1
      %p403 = scmp.lt.s32.totalorder %s400, 1
      %s404 = scalar_select %p403, %s400, 1
      %s405 = smul.addr %s402, 2
      %s406 = sadd.s32 %s404, %s405
      %s407 = smul.addr %s406, 8
      %s408 = scalar_lea.vmem %s0, %s407
      %s409 = smul.u32 2, %s26
      %s410 = smul.u32 2, %s25
      %p411 = scmp.lt.s32.totalorder %s24, 1
      %s412 = scalar_select %p411, %s24, 1
      %p413 = scmp.lt.s32.totalorder %s410, 1
      %s414 = scalar_select %p413, %s410, 1
      %s415 = smul.addr %s412, 2
      %s416 = sadd.s32 %s414, %s415
      %s417 = smul.addr %s416, 8
      %s418 = scalar_lea.vmem %s1, %s417
      %s419 = smul.u32 2, %s25
      %s420 = smul.u32 2, %s25
      %p421 = scmp.lt.s32.totalorder %s24, 1
      %s422 = scalar_select %p421, %s24, 1
      %p423 = scmp.lt.s32.totalorder %s420, 1
      %s424 = scalar_select %p423, %s420, 1
      %p425 = scmp.lt.s32.totalorder %s26, 0
      %s426 = scalar_select %p425, %s26, 0
      %s427 = sadd.s32 %s426, %s424
      %s428 = smul.addr %s422, 4
      %s429 = sadd.s32 %s427, %s428
      %s430 = smul.addr %s429, 4
      %s431 = scalar_lea.vmem %s2, %s430
      %s432 = smul.u32 2, %s25
      %s433 = smul.u32 2, %s25
      %p434 = scmp.lt.s32.totalorder %s24, 1
      %s435 = scalar_select %p434, %s24, 1
      %p436 = scmp.lt.s32.totalorder %s433, 1
      %s437 = scalar_select %p436, %s433, 1
      %p438 = scmp.lt.s32.totalorder %s26, 0
      %s439 = scalar_select %p438, %s26, 0
      %s440 = sadd.s32 %s439, %s437
      %s441 = smul.addr %s435, 2
      %s442 = sadd.s32 %s440, %s441
      %s443 = smul.addr %s442, 4
      %s444 = scalar_lea.vmem %s3, %s443
      %s445 = smul.u32 2, %s25
      %s446 = smul.u32 2, %s25
      %p447 = scmp.lt.s32.totalorder %s24, 1
      %s448 = scalar_select %p447, %s24, 1
      %p449 = scmp.lt.s32.totalorder %s446, 1
      %s450 = scalar_select %p449, %s446, 1
      %s451 = smul.addr %s448, 2
      %s452 = sadd.s32 %s450, %s451
      %s453 = smul.addr %s452, 8
      %s454 = scalar_lea.vmem %s7, %s453
      %s455 = smul.u32 2, %s25
      %p456 = scmp.eq.s32.totalorder %s26, 0
      // Predicated region
      $region49: #{dyresgen_forward.12} parent=47 // pred_check
        %p457 = pneg %p456
      $region50: #{dyresgen_forward.12} parent=47 // pred_check_branch
        %459 = sbr.rel (%p457) target = $region52
      $region51: #{dyresgen_forward.12} parent=47 // pred_region
        %vm460 = vcmask 261120
        %461 = vst.msk [vmem:[#allocation2] sm:$0xff] %vm460, -inf
        %462 = vst.msk [vmem:[#allocation2 + $0x8] sm:$0xff] %vm460, -inf
        %463 = vst.msk [vmem:[#allocation3] sm:$0xff] %vm460, 0.0
        %464 = vst.msk [vmem:[#allocation3 + $0x8] sm:$0xff] %vm460, 0.0
        %465 = vst.msk [vmem:[#allocation4] sm:$0xff] %vm460, 0.0
        %466 = vst.msk [vmem:[#allocation4 + $0x8] sm:$0xff] %vm460, 0.0
        %vm467 = vcmask 7168
        %468 = vst.msk [vmem:[#allocation5] sm:$0xff] %vm467, 0.0
        %469 = vst.msk [vmem:[#allocation5 + $0x8] sm:$0xff] %vm467, 0.0
      $region52: #{dyresgen_forward.12} parent=47 // pred_fallthru
        _
      %v470 = vld [vmem:[%s408] sm:$0xff]
      %v471 = vld [vmem:[%s408 + $0x8] sm:$0xff]
      %v472 = vld [vmem:[%s5] sm:$0x1]
      %v474 = vlaneseq
      %v475 = vshrl.u32 %v474, 7
      %v476 = vsub.s32 0, %v475
      %v477 = vrot.slane %v472, %v476
      %v479 = vadd.f32 %v470, %v477
      %v480 = vadd.f32 %v471, %v477
      %v481 = vld [vmem:[%s431] sm:$0xf]
      %v482 = vld [vmem:[%s431 + $0x4] sm:$0xf]
      %v483 = vld [vmem:[%s431 + $0x8] sm:$0xf]
      %v484 = vld [vmem:[%s431 + $0xc] sm:$0xf]
      %v485 = vunpack.c.l.bf16 %v481
      %v486 = vunpack.c.l.bf16 %v482
      %v487 = vunpack.c.l.bf16 %v483
      %v488 = vunpack.c.l.bf16 %v484
      %v489 = vld [vmem:[%s444] sm:$0xf]
      %v490 = vld [vmem:[%s444 + $0x4] sm:$0xf]
      %v491 = vunpack.c.l.bf16 %v489
      %v492 = vunpack.c.l.bf16 %v490
      %v493 = vld [vmem:[%s4] sm:$0x3]
      %s494 = sld [smem:[#allocation6]]
      %v495 = vlaneseq
      %v496 = vshrl.u32 %v495, 7
      %v497 = vsub.s32 0, %v496
      %v498 = vrot.slane %v485, %v497
      %500 = vbcast.lane.b32.xlu0 %v498, 256
      %v501 = vpop.permute.xlu0 %500
      %s503 = sor.u32 256, 8
      %504 = vbcast.lane.b32.xlu0 %v498, %s503
      %v505 = vpop.permute.xlu0 %504
      %v506 = vlaneseq
      %v507 = vshrl.u32 %v506, 7
      %v508 = vsub.s32 1, %v507
      %v509 = vrot.slane %v485, %v508
      %511 = vbcast.lane.b32.xlu0 %v509, 256
      %v512 = vpop.permute.xlu0 %511
      %s514 = sor.u32 256, 8
      %515 = vbcast.lane.b32.xlu0 %v509, %s514
      %v516 = vpop.permute.xlu0 %515
      %v517 = vlaneseq
      %v518 = vshrl.u32 %v517, 7
      %v519 = vsub.s32 2, %v518
      %v520 = vrot.slane %v485, %v519
      %522 = vbcast.lane.b32.xlu0 %v520, 256
      %v523 = vpop.permute.xlu0 %522
      %s525 = sor.u32 256, 8
      %526 = vbcast.lane.b32.xlu0 %v520, %s525
      %v527 = vpop.permute.xlu0 %526
      %v528 = vlaneseq
      %v529 = vshrl.u32 %v528, 7
      %v530 = vsub.s32 3, %v529
      %v531 = vrot.slane %v485, %v530
      %533 = vbcast.lane.b32.xlu0 %v531, 256
      %v534 = vpop.permute.xlu0 %533
      %s536 = sor.u32 256, 8
      %537 = vbcast.lane.b32.xlu0 %v531, %s536
      %v538 = vpop.permute.xlu0 %537
      %v539 = vlaneseq
      %v540 = vshrl.u32 %v539, 7
      %v541 = vsub.s32 4, %v540
      %v542 = vrot.slane %v485, %v541
      %544 = vbcast.lane.b32.xlu0 %v542, 256
      %v545 = vpop.permute.xlu0 %544
      %s547 = sor.u32 256, 8
      %548 = vbcast.lane.b32.xlu0 %v542, %s547
      %v549 = vpop.permute.xlu0 %548
      %v550 = vlaneseq
      %v551 = vshrl.u32 %v550, 7
      %v552 = vsub.s32 5, %v551
      %v553 = vrot.slane %v485, %v552
      %555 = vbcast.lane.b32.xlu0 %v553, 256
      %v556 = vpop.permute.xlu0 %555
      %s558 = sor.u32 256, 8
      %559 = vbcast.lane.b32.xlu0 %v553, %s558
      %v560 = vpop.permute.xlu0 %559
      %v561 = vlaneseq
      %v562 = vshrl.u32 %v561, 7
      %v563 = vsub.s32 6, %v562
      %v564 = vrot.slane %v485, %v563
      %566 = vbcast.lane.b32.xlu0 %v564, 256
      %v567 = vpop.permute.xlu0 %566
      %s569 = sor.u32 256, 8
      %570 = vbcast.lane.b32.xlu0 %v564, %s569
      %v571 = vpop.permute.xlu0 %570
      %v572 = vlaneseq
      %v573 = vshrl.u32 %v572, 7
      %v574 = vsub.s32 7, %v573
      %v575 = vrot.slane %v485, %v574
      %577 = vbcast.lane.b32.xlu0 %v575, 256
      %v578 = vpop.permute.xlu0 %577
      %s580 = sor.u32 256, 8
      %581 = vbcast.lane.b32.xlu0 %v575, %s580
      %v582 = vpop.permute.xlu0 %581
      %v583 = vlaneseq
      %v584 = vshrl.u32 %v583, 7
      %v585 = vsub.s32 0, %v584
      %v586 = vrot.slane %v486, %v585
      %588 = vbcast.lane.b32.xlu0 %v586, 256
      %v589 = vpop.permute.xlu0 %588
      %s591 = sor.u32 256, 8
      %592 = vbcast.lane.b32.xlu0 %v586, %s591
      %v593 = vpop.permute.xlu0 %592
      %v594 = vlaneseq
      %v595 = vshrl.u32 %v594, 7
      %v596 = vsub.s32 1, %v595
      %v597 = vrot.slane %v486, %v596
      %599 = vbcast.lane.b32.xlu0 %v597, 256
      %v600 = vpop.permute.xlu0 %599
      %s602 = sor.u32 256, 8
      %603 = vbcast.lane.b32.xlu0 %v597, %s602
      %v604 = vpop.permute.xlu0 %603
      %v605 = vlaneseq
      %v606 = vshrl.u32 %v605, 7
      %v607 = vsub.s32 2, %v606
      %v608 = vrot.slane %v486, %v607
      %610 = vbcast.lane.b32.xlu0 %v608, 256
      %v611 = vpop.permute.xlu0 %610
      %s613 = sor.u32 256, 8
      %614 = vbcast.lane.b32.xlu0 %v608, %s613
      %v615 = vpop.permute.xlu0 %614
      %v616 = vlaneseq
      %v617 = vshrl.u32 %v616, 7
      %v618 = vsub.s32 3, %v617
      %v619 = vrot.slane %v486, %v618
      %621 = vbcast.lane.b32.xlu0 %v619, 256
      %v622 = vpop.permute.xlu0 %621
      %s624 = sor.u32 256, 8
      %625 = vbcast.lane.b32.xlu0 %v619, %s624
      %v626 = vpop.permute.xlu0 %625
      %v627 = vlaneseq
      %v628 = vshrl.u32 %v627, 7
      %v629 = vsub.s32 4, %v628
      %v630 = vrot.slane %v486, %v629
      %632 = vbcast.lane.b32.xlu0 %v630, 256
      %v633 = vpop.permute.xlu0 %632
      %s635 = sor.u32 256, 8
      %636 = vbcast.lane.b32.xlu0 %v630, %s635
      %v637 = vpop.permute.xlu0 %636
      %v638 = vlaneseq
      %v639 = vshrl.u32 %v638, 7
      %v640 = vsub.s32 5, %v639
      %v641 = vrot.slane %v486, %v640
      %643 = vbcast.lane.b32.xlu0 %v641, 256
      %v644 = vpop.permute.xlu0 %643
      %s646 = sor.u32 256, 8
      %647 = vbcast.lane.b32.xlu0 %v641, %s646
      %v648 = vpop.permute.xlu0 %647
      %v649 = vlaneseq
      %v650 = vshrl.u32 %v649, 7
      %v651 = vsub.s32 6, %v650
      %v652 = vrot.slane %v486, %v651
      %654 = vbcast.lane.b32.xlu0 %v652, 256
      %v655 = vpop.permute.xlu0 %654
      %s657 = sor.u32 256, 8
      %658 = vbcast.lane.b32.xlu0 %v652, %s657
      %v659 = vpop.permute.xlu0 %658
      %v660 = vlaneseq
      %v661 = vshrl.u32 %v660, 7
      %v662 = vsub.s32 7, %v661
      %v663 = vrot.slane %v486, %v662
      %665 = vbcast.lane.b32.xlu0 %v663, 256
      %v666 = vpop.permute.xlu0 %665
      %s668 = sor.u32 256, 8
      %669 = vbcast.lane.b32.xlu0 %v663, %s668
      %v670 = vpop.permute.xlu0 %669
      %v671 = vlaneseq
      %v672 = vshrl.u32 %v671, 7
      %v673 = vsub.s32 0, %v672
      %v674 = vrot.slane %v493, %v673
      %v675 = vmul.f32 %v501, %v674
      %v676 = vmul.f32 %v505, %v674
      %v677 = vmul.f32 %v512, %v674
      %v678 = vmul.f32 %v516, %v674
      %v679 = vmul.f32 %v523, %v674
      %v680 = vmul.f32 %v527, %v674
      %v681 = vmul.f32 %v534, %v674
      %v682 = vmul.f32 %v538, %v674
      %v683 = vmul.f32 %v545, %v674
      %v684 = vmul.f32 %v549, %v674
      %v685 = vmul.f32 %v556, %v674
      %v686 = vmul.f32 %v560, %v674
      %v687 = vmul.f32 %v567, %v674
      %v688 = vmul.f32 %v571, %v674
      %v689 = vmul.f32 %v578, %v674
      %v690 = vmul.f32 %v582, %v674
      %v691 = vmul.f32 %v589, %v674
      %v692 = vmul.f32 %v593, %v674
      %v693 = vmul.f32 %v600, %v674
      %v694 = vmul.f32 %v604, %v674
      %v695 = vmul.f32 %v611, %v674
      %v696 = vmul.f32 %v615, %v674
      %v697 = vmul.f32 %v622, %v674
      %v698 = vmul.f32 %v626, %v674
      %v699 = vmul.f32 %v633, %v674
      %v700 = vmul.f32 %v637, %v674
      %v701 = vmul.f32 %v644, %v674
      %v702 = vmul.f32 %v648, %v674
      %v703 = vmul.f32 %v655, %v674
      %v704 = vmul.f32 %v659, %v674
      %v705 = vmul.f32 %v666, %v674
      %v706 = vmul.f32 %v670, %v674
      %v707 = vlaneseq
      %v708 = vshrl.u32 %v707, 7
      %v709 = vsub.s32 0, %v708
      %v710 = vrot.slane %v487, %v709
      %712 = vbcast.lane.b32.xlu0 %v710, 256
      %v713 = vpop.permute.xlu0 %712
      %s715 = sor.u32 256, 8
      %716 = vbcast.lane.b32.xlu0 %v710, %s715
      %v717 = vpop.permute.xlu0 %716
      %v718 = vlaneseq
      %v719 = vshrl.u32 %v718, 7
      %v720 = vsub.s32 1, %v719
      %v721 = vrot.slane %v487, %v720
      %723 = vbcast.lane.b32.xlu0 %v721, 256
      %v724 = vpop.permute.xlu0 %723
      %s726 = sor.u32 256, 8
      %727 = vbcast.lane.b32.xlu0 %v721, %s726
      %v728 = vpop.permute.xlu0 %727
      %v729 = vlaneseq
      %v730 = vshrl.u32 %v729, 7
      %v731 = vsub.s32 2, %v730
      %v732 = vrot.slane %v487, %v731
      %734 = vbcast.lane.b32.xlu0 %v732, 256
      %v735 = vpop.permute.xlu0 %734
      %s737 = sor.u32 256, 8
      %738 = vbcast.lane.b32.xlu0 %v732, %s737
      %v739 = vpop.permute.xlu0 %738
      %v740 = vlaneseq
      %v741 = vshrl.u32 %v740, 7
      %v742 = vsub.s32 3, %v741
      %v743 = vrot.slane %v487, %v742
      %745 = vbcast.lane.b32.xlu0 %v743, 256
      %v746 = vpop.permute.xlu0 %745
      %s748 = sor.u32 256, 8
      %749 = vbcast.lane.b32.xlu0 %v743, %s748
      %v750 = vpop.permute.xlu0 %749
      %v751 = vlaneseq
      %v752 = vshrl.u32 %v751, 7
      %v753 = vsub.s32 4, %v752
      %v754 = vrot.slane %v487, %v753
      %756 = vbcast.lane.b32.xlu0 %v754, 256
      %v757 = vpop.permute.xlu0 %756
      %s759 = sor.u32 256, 8
      %760 = vbcast.lane.b32.xlu0 %v754, %s759
      %v761 = vpop.permute.xlu0 %760
      %v762 = vlaneseq
      %v763 = vshrl.u32 %v762, 7
      %v764 = vsub.s32 5, %v763
      %v765 = vrot.slane %v487, %v764
      %767 = vbcast.lane.b32.xlu0 %v765, 256
      %v768 = vpop.permute.xlu0 %767
      %s770 = sor.u32 256, 8
      %771 = vbcast.lane.b32.xlu0 %v765, %s770
      %v772 = vpop.permute.xlu0 %771
      %v773 = vlaneseq
      %v774 = vshrl.u32 %v773, 7
      %v775 = vsub.s32 6, %v774
      %v776 = vrot.slane %v487, %v775
      %778 = vbcast.lane.b32.xlu0 %v776, 256
      %v779 = vpop.permute.xlu0 %778
      %s781 = sor.u32 256, 8
      %782 = vbcast.lane.b32.xlu0 %v776, %s781
      %v783 = vpop.permute.xlu0 %782
      %v784 = vlaneseq
      %v785 = vshrl.u32 %v784, 7
      %v786 = vsub.s32 7, %v785
      %v787 = vrot.slane %v487, %v786
      %789 = vbcast.lane.b32.xlu0 %v787, 256
      %v790 = vpop.permute.xlu0 %789
      %s792 = sor.u32 256, 8
      %793 = vbcast.lane.b32.xlu0 %v787, %s792
      %v794 = vpop.permute.xlu0 %793
      %v795 = vlaneseq
      %v796 = vshrl.u32 %v795, 7
      %v797 = vsub.s32 0, %v796
      %v798 = vrot.slane %v488, %v797
      %800 = vbcast.lane.b32.xlu0 %v798, 256
      %v801 = vpop.permute.xlu0 %800
      %s803 = sor.u32 256, 8
      %804 = vbcast.lane.b32.xlu0 %v798, %s803
      %v805 = vpop.permute.xlu0 %804
      %v806 = vlaneseq
      %v807 = vshrl.u32 %v806, 7
      %v808 = vsub.s32 1, %v807
      %v809 = vrot.slane %v488, %v808
      %811 = vbcast.lane.b32.xlu0 %v809, 256
      %v812 = vpop.permute.xlu0 %811
      %s814 = sor.u32 256, 8
      %815 = vbcast.lane.b32.xlu0 %v809, %s814
      %v816 = vpop.permute.xlu0 %815
      %v817 = vlaneseq
      %v818 = vshrl.u32 %v817, 7
      %v819 = vsub.s32 2, %v818
      %v820 = vrot.slane %v488, %v819
      %822 = vbcast.lane.b32.xlu0 %v820, 256
      %v823 = vpop.permute.xlu0 %822
      %s825 = sor.u32 256, 8
      %826 = vbcast.lane.b32.xlu0 %v820, %s825
      %v827 = vpop.permute.xlu0 %826
      %v828 = vlaneseq
      %v829 = vshrl.u32 %v828, 7
      %v830 = vsub.s32 3, %v829
      %v831 = vrot.slane %v488, %v830
      %833 = vbcast.lane.b32.xlu0 %v831, 256
      %v834 = vpop.permute.xlu0 %833
      %s836 = sor.u32 256, 8
      %837 = vbcast.lane.b32.xlu0 %v831, %s836
      %v838 = vpop.permute.xlu0 %837
      %v839 = vlaneseq
      %v840 = vshrl.u32 %v839, 7
      %v841 = vsub.s32 4, %v840
      %v842 = vrot.slane %v488, %v841
      %844 = vbcast.lane.b32.xlu0 %v842, 256
      %v845 = vpop.permute.xlu0 %844
      %s847 = sor.u32 256, 8
      %848 = vbcast.lane.b32.xlu0 %v842, %s847
      %v849 = vpop.permute.xlu0 %848
      %v850 = vlaneseq
      %v851 = vshrl.u32 %v850, 7
      %v852 = vsub.s32 5, %v851
      %v853 = vrot.slane %v488, %v852
      %855 = vbcast.lane.b32.xlu0 %v853, 256
      %v856 = vpop.permute.xlu0 %855
      %s858 = sor.u32 256, 8
      %859 = vbcast.lane.b32.xlu0 %v853, %s858
      %v860 = vpop.permute.xlu0 %859
      %v861 = vlaneseq
      %v862 = vshrl.u32 %v861, 7
      %v863 = vsub.s32 6, %v862
      %v864 = vrot.slane %v488, %v863
      %866 = vbcast.lane.b32.xlu0 %v864, 256
      %v867 = vpop.permute.xlu0 %866
      %s869 = sor.u32 256, 8
      %870 = vbcast.lane.b32.xlu0 %v864, %s869
      %v871 = vpop.permute.xlu0 %870
      %v872 = vlaneseq
      %v873 = vshrl.u32 %v872, 7
      %v874 = vsub.s32 7, %v873
      %v875 = vrot.slane %v488, %v874
      %877 = vbcast.lane.b32.xlu0 %v875, 256
      %v878 = vpop.permute.xlu0 %877
      %s880 = sor.u32 256, 8
      %881 = vbcast.lane.b32.xlu0 %v875, %s880
      %v882 = vpop.permute.xlu0 %881
      %v883 = vlaneseq
      %v884 = vshrl.u32 %v883, 7
      %v885 = vsub.s32 1, %v884
      %v886 = vrot.slane %v493, %v885
      %v887 = vmul.f32 %v713, %v886
      %v888 = vmul.f32 %v717, %v886
      %v889 = vmul.f32 %v724, %v886
      %v890 = vmul.f32 %v728, %v886
      %v891 = vmul.f32 %v735, %v886
      %v892 = vmul.f32 %v739, %v886
      %v893 = vmul.f32 %v746, %v886
      %v894 = vmul.f32 %v750, %v886
      %v895 = vmul.f32 %v757, %v886
      %v896 = vmul.f32 %v761, %v886
      %v897 = vmul.f32 %v768, %v886
      %v898 = vmul.f32 %v772, %v886
      %v899 = vmul.f32 %v779, %v886
      %v900 = vmul.f32 %v783, %v886
      %v901 = vmul.f32 %v790, %v886
      %v902 = vmul.f32 %v794, %v886
      %v903 = vmul.f32 %v801, %v886
      %v904 = vmul.f32 %v805, %v886
      %v905 = vmul.f32 %v812, %v886
      %v906 = vmul.f32 %v816, %v886
      %v907 = vmul.f32 %v823, %v886
      %v908 = vmul.f32 %v827, %v886
      %v909 = vmul.f32 %v834, %v886
      %v910 = vmul.f32 %v838, %v886
      %v911 = vmul.f32 %v845, %v886
      %v912 = vmul.f32 %v849, %v886
      %v913 = vmul.f32 %v856, %v886
      %v914 = vmul.f32 %v860, %v886
      %v915 = vmul.f32 %v867, %v886
      %v916 = vmul.f32 %v871, %v886
      %v917 = vmul.f32 %v878, %v886
      %v918 = vmul.f32 %v882, %v886
      %v919 = vadd.f32 %v675, %v887
      %v920 = vadd.f32 %v676, %v888
      %v921 = vadd.f32 %v677, %v889
      %v922 = vadd.f32 %v678, %v890
      %v923 = vadd.f32 %v679, %v891
      %v924 = vadd.f32 %v680, %v892
      %v925 = vadd.f32 %v681, %v893
      %v926 = vadd.f32 %v682, %v894
      %v927 = vadd.f32 %v683, %v895
      %v928 = vadd.f32 %v684, %v896
      %v929 = vadd.f32 %v685, %v897
      %v930 = vadd.f32 %v686, %v898
      %v931 = vadd.f32 %v687, %v899
      %v932 = vadd.f32 %v688, %v900
      %v933 = vadd.f32 %v689, %v901
      %v934 = vadd.f32 %v690, %v902
      %v935 = vadd.f32 %v691, %v903
      %v936 = vadd.f32 %v692, %v904
      %v937 = vadd.f32 %v693, %v905
      %v938 = vadd.f32 %v694, %v906
      %v939 = vadd.f32 %v695, %v907
      %v940 = vadd.f32 %v696, %v908
      %v941 = vadd.f32 %v697, %v909
      %v942 = vadd.f32 %v698, %v910
      %v943 = vadd.f32 %v699, %v911
      %v944 = vadd.f32 %v700, %v912
      %v945 = vadd.f32 %v701, %v913
      %v946 = vadd.f32 %v702, %v914
      %v947 = vadd.f32 %v703, %v915
      %v948 = vadd.f32 %v704, %v916
      %v949 = vadd.f32 %v705, %v917
      %v950 = vadd.f32 %v706, %v918
      %v951 = vadd.f32 %v479, %v919
      %v952 = vadd.f32 %v480, %v920
      %v953 = vadd.f32 %v479, %v921
      %v954 = vadd.f32 %v480, %v922
      %v955 = vadd.f32 %v479, %v923
      %v956 = vadd.f32 %v480, %v924
      %v957 = vadd.f32 %v479, %v925
      %v958 = vadd.f32 %v480, %v926
      %v959 = vadd.f32 %v479, %v927
      %v960 = vadd.f32 %v480, %v928
      %v961 = vadd.f32 %v479, %v929
      %v962 = vadd.f32 %v480, %v930
      %v963 = vadd.f32 %v479, %v931
      %v964 = vadd.f32 %v480, %v932
      %v965 = vadd.f32 %v479, %v933
      %v966 = vadd.f32 %v480, %v934
      %v967 = vadd.f32 %v479, %v935
      %v968 = vadd.f32 %v480, %v936
      %v969 = vadd.f32 %v479, %v937
      %v970 = vadd.f32 %v480, %v938
      %v971 = vadd.f32 %v479, %v939
      %v972 = vadd.f32 %v480, %v940
      %v973 = vadd.f32 %v479, %v941
      %v974 = vadd.f32 %v480, %v942
      %v975 = vadd.f32 %v479, %v943
      %v976 = vadd.f32 %v480, %v944
      %v977 = vadd.f32 %v479, %v945
      %v978 = vadd.f32 %v480, %v946
      %v979 = vadd.f32 %v479, %v947
      %v980 = vadd.f32 %v480, %v948
      %v981 = vadd.f32 %v479, %v949
      %v982 = vadd.f32 %v480, %v950
      %v983 = vmax.f32 %v951, 0.0
      %v984 = vmax.f32 %v952, 0.0
      %v985 = vmax.f32 %v953, 0.0
      %v986 = vmax.f32 %v954, 0.0
      %v987 = vmax.f32 %v955, 0.0
      %v988 = vmax.f32 %v956, 0.0
      %v989 = vmax.f32 %v957, 0.0
      %v990 = vmax.f32 %v958, 0.0
      %v991 = vmax.f32 %v959, 0.0
      %v992 = vmax.f32 %v960, 0.0
      %v993 = vmax.f32 %v961, 0.0
      %v994 = vmax.f32 %v962, 0.0
      %v995 = vmax.f32 %v963, 0.0
      %v996 = vmax.f32 %v964, 0.0
      %v997 = vmax.f32 %v965, 0.0
      %v998 = vmax.f32 %v966, 0.0
      %v999 = vmax.f32 %v967, 0.0
      %v1000 = vmax.f32 %v968, 0.0
      %v1001 = vmax.f32 %v969, 0.0
      %v1002 = vmax.f32 %v970, 0.0
      %v1003 = vmax.f32 %v971, 0.0
      %v1004 = vmax.f32 %v972, 0.0
      %v1005 = vmax.f32 %v973, 0.0
      %v1006 = vmax.f32 %v974, 0.0
      %v1007 = vmax.f32 %v975, 0.0
      %v1008 = vmax.f32 %v976, 0.0
      %v1009 = vmax.f32 %v977, 0.0
      %v1010 = vmax.f32 %v978, 0.0
      %v1011 = vmax.f32 %v979, 0.0
      %v1012 = vmax.f32 %v980, 0.0
      %v1013 = vmax.f32 %v981, 0.0
      %v1014 = vmax.f32 %v982, 0.0
      %v1015 = vadd.f32 %v983, 1e-07
      %v1016 = vadd.f32 %v984, 1e-07
      %v1017 = vadd.f32 %v985, 1e-07
      %v1018 = vadd.f32 %v986, 1e-07
      %v1019 = vadd.f32 %v987, 1e-07
      %v1020 = vadd.f32 %v988, 1e-07
      %v1021 = vadd.f32 %v989, 1e-07
      %v1022 = vadd.f32 %v990, 1e-07
      %v1023 = vadd.f32 %v991, 1e-07
      %v1024 = vadd.f32 %v992, 1e-07
      %v1025 = vadd.f32 %v993, 1e-07
      %v1026 = vadd.f32 %v994, 1e-07
      %v1027 = vadd.f32 %v995, 1e-07
      %v1028 = vadd.f32 %v996, 1e-07
      %v1029 = vadd.f32 %v997, 1e-07
      %v1030 = vadd.f32 %v998, 1e-07
      %v1031 = vadd.f32 %v999, 1e-07
      %v1032 = vadd.f32 %v1000, 1e-07
      %v1033 = vadd.f32 %v1001, 1e-07
      %v1034 = vadd.f32 %v1002, 1e-07
      %v1035 = vadd.f32 %v1003, 1e-07
      %v1036 = vadd.f32 %v1004, 1e-07
      %v1037 = vadd.f32 %v1005, 1e-07
      %v1038 = vadd.f32 %v1006, 1e-07
      %v1039 = vadd.f32 %v1007, 1e-07
      %v1040 = vadd.f32 %v1008, 1e-07
      %v1041 = vadd.f32 %v1009, 1e-07
      %v1042 = vadd.f32 %v1010, 1e-07
      %v1043 = vadd.f32 %v1011, 1e-07
      %v1044 = vadd.f32 %v1012, 1e-07
      %v1045 = vadd.f32 %v1013, 1e-07
      %v1046 = vadd.f32 %v1014, 1e-07
      %v1047 = vsub.f32 %v491, 1.0
      %v1048 = vsub.f32 %v492, 1.0
      %v1049 = vmul.f32 %v1047, 1e+30
      %v1050 = vmul.f32 %v1048, 1e+30
      %v1051 = vstv %s494
      %v1052 = vmul.f32 %v1015, %v1051
      %v1053 = vmul.f32 %v1016, %v1051
      %v1054 = vmul.f32 %v1017, %v1051
      %v1055 = vmul.f32 %v1018, %v1051
      %v1056 = vmul.f32 %v1019, %v1051
      %v1057 = vmul.f32 %v1020, %v1051
      %v1058 = vmul.f32 %v1021, %v1051
      %v1059 = vmul.f32 %v1022, %v1051
      %v1060 = vmul.f32 %v1023, %v1051
      %v1061 = vmul.f32 %v1024, %v1051
      %v1062 = vmul.f32 %v1025, %v1051
      %v1063 = vmul.f32 %v1026, %v1051
      %v1064 = vmul.f32 %v1027, %v1051
      %v1065 = vmul.f32 %v1028, %v1051
      %v1066 = vmul.f32 %v1029, %v1051
      %v1067 = vmul.f32 %v1030, %v1051
      %v1068 = vmul.f32 %v1031, %v1051
      %v1069 = vmul.f32 %v1032, %v1051
      %v1070 = vmul.f32 %v1033, %v1051
      %v1071 = vmul.f32 %v1034, %v1051
      %v1072 = vmul.f32 %v1035, %v1051
      %v1073 = vmul.f32 %v1036, %v1051
      %v1074 = vmul.f32 %v1037, %v1051
      %v1075 = vmul.f32 %v1038, %v1051
      %v1076 = vmul.f32 %v1039, %v1051
      %v1077 = vmul.f32 %v1040, %v1051
      %v1078 = vmul.f32 %v1041, %v1051
      %v1079 = vmul.f32 %v1042, %v1051
      %v1080 = vmul.f32 %v1043, %v1051
      %v1081 = vmul.f32 %v1044, %v1051
      %v1082 = vmul.f32 %v1045, %v1051
      %v1083 = vmul.f32 %v1046, %v1051
      %v1084 = vlaneseq
      %v1085 = vshrl.u32 %v1084, 7
      %v1086 = vsub.s32 0, %v1085
      %v1087 = vrot.slane %v1049, %v1086
      %1089 = vbcast.lane.b32.xlu0 %v1087, 256
      %v1090 = vpop.permute.xlu0 %1089
      %s1092 = sor.u32 256, 8
      %1093 = vbcast.lane.b32.xlu0 %v1087, %s1092
      %v1094 = vpop.permute.xlu0 %1093
      %v1095 = vlaneseq
      %v1096 = vshrl.u32 %v1095, 7
      %v1097 = vsub.s32 1, %v1096
      %v1098 = vrot.slane %v1049, %v1097
      %1100 = vbcast.lane.b32.xlu0 %v1098, 256
      %v1101 = vpop.permute.xlu0 %1100
      %s1103 = sor.u32 256, 8
      %1104 = vbcast.lane.b32.xlu0 %v1098, %s1103
      %v1105 = vpop.permute.xlu0 %1104
      %v1106 = vlaneseq
      %v1107 = vshrl.u32 %v1106, 7
      %v1108 = vsub.s32 2, %v1107
      %v1109 = vrot.slane %v1049, %v1108
      %1111 = vbcast.lane.b32.xlu0 %v1109, 256
      %v1112 = vpop.permute.xlu0 %1111
      %s1114 = sor.u32 256, 8
      %1115 = vbcast.lane.b32.xlu0 %v1109, %s1114
      %v1116 = vpop.permute.xlu0 %1115
      %v1117 = vlaneseq
      %v1118 = vshrl.u32 %v1117, 7
      %v1119 = vsub.s32 3, %v1118
      %v1120 = vrot.slane %v1049, %v1119
      %1122 = vbcast.lane.b32.xlu0 %v1120, 256
      %v1123 = vpop.permute.xlu0 %1122
      %s1125 = sor.u32 256, 8
      %1126 = vbcast.lane.b32.xlu0 %v1120, %s1125
      %v1127 = vpop.permute.xlu0 %1126
      %v1128 = vlaneseq
      %v1129 = vshrl.u32 %v1128, 7
      %v1130 = vsub.s32 4, %v1129
      %v1131 = vrot.slane %v1049, %v1130
      %1133 = vbcast.lane.b32.xlu0 %v1131, 256
      %v1134 = vpop.permute.xlu0 %1133
      %s1136 = sor.u32 256, 8
      %1137 = vbcast.lane.b32.xlu0 %v1131, %s1136
      %v1138 = vpop.permute.xlu0 %1137
      %v1139 = vlaneseq
      %v1140 = vshrl.u32 %v1139, 7
      %v1141 = vsub.s32 5, %v1140
      %v1142 = vrot.slane %v1049, %v1141
      %1144 = vbcast.lane.b32.xlu0 %v1142, 256
      %v1145 = vpop.permute.xlu0 %1144
      %s1147 = sor.u32 256, 8
      %1148 = vbcast.lane.b32.xlu0 %v1142, %s1147
      %v1149 = vpop.permute.xlu0 %1148
      %v1150 = vlaneseq
      %v1151 = vshrl.u32 %v1150, 7
      %v1152 = vsub.s32 6, %v1151
      %v1153 = vrot.slane %v1049, %v1152
      %1155 = vbcast.lane.b32.xlu0 %v1153, 256
      %v1156 = vpop.permute.xlu0 %1155
      %s1158 = sor.u32 256, 8
      %1159 = vbcast.lane.b32.xlu0 %v1153, %s1158
      %v1160 = vpop.permute.xlu0 %1159
      %v1161 = vlaneseq
      %v1162 = vshrl.u32 %v1161, 7
      %v1163 = vsub.s32 7, %v1162
      %v1164 = vrot.slane %v1049, %v1163
      %1166 = vbcast.lane.b32.xlu0 %v1164, 256
      %v1167 = vpop.permute.xlu0 %1166
      %s1169 = sor.u32 256, 8
      %1170 = vbcast.lane.b32.xlu0 %v1164, %s1169
      %v1171 = vpop.permute.xlu0 %1170
      %v1172 = vlaneseq
      %v1173 = vshrl.u32 %v1172, 7
      %v1174 = vsub.s32 0, %v1173
      %v1175 = vrot.slane %v1050, %v1174
      %1177 = vbcast.lane.b32.xlu0 %v1175, 256
      %v1178 = vpop.permute.xlu0 %1177
      %s1180 = sor.u32 256, 8
      %1181 = vbcast.lane.b32.xlu0 %v1175, %s1180
      %v1182 = vpop.permute.xlu0 %1181
      %v1183 = vlaneseq
      %v1184 = vshrl.u32 %v1183, 7
      %v1185 = vsub.s32 1, %v1184
      %v1186 = vrot.slane %v1050, %v1185
      %1188 = vbcast.lane.b32.xlu0 %v1186, 256
      %v1189 = vpop.permute.xlu0 %1188
      %s1191 = sor.u32 256, 8
      %1192 = vbcast.lane.b32.xlu0 %v1186, %s1191
      %v1193 = vpop.permute.xlu0 %1192
      %v1194 = vlaneseq
      %v1195 = vshrl.u32 %v1194, 7
      %v1196 = vsub.s32 2, %v1195
      %v1197 = vrot.slane %v1050, %v1196
      %1199 = vbcast.lane.b32.xlu0 %v1197, 256
      %v1200 = vpop.permute.xlu0 %1199
      %s1202 = sor.u32 256, 8
      %1203 = vbcast.lane.b32.xlu0 %v1197, %s1202
      %v1204 = vpop.permute.xlu0 %1203
      %v1205 = vlaneseq
      %v1206 = vshrl.u32 %v1205, 7
      %v1207 = vsub.s32 3, %v1206
      %v1208 = vrot.slane %v1050, %v1207
      %1210 = vbcast.lane.b32.xlu0 %v1208, 256
      %v1211 = vpop.permute.xlu0 %1210
      %s1213 = sor.u32 256, 8
      %1214 = vbcast.lane.b32.xlu0 %v1208, %s1213
      %v1215 = vpop.permute.xlu0 %1214
      %v1216 = vlaneseq
      %v1217 = vshrl.u32 %v1216, 7
      %v1218 = vsub.s32 4, %v1217
      %v1219 = vrot.slane %v1050, %v1218
      %1221 = vbcast.lane.b32.xlu0 %v1219, 256
      %v1222 = vpop.permute.xlu0 %1221
      %s1224 = sor.u32 256, 8
      %1225 = vbcast.lane.b32.xlu0 %v1219, %s1224
      %v1226 = vpop.permute.xlu0 %1225
      %v1227 = vlaneseq
      %v1228 = vshrl.u32 %v1227, 7
      %v1229 = vsub.s32 5, %v1228
      %v1230 = vrot.slane %v1050, %v1229
      %1232 = vbcast.lane.b32.xlu0 %v1230, 256
      %v1233 = vpop.permute.xlu0 %1232
      %s1235 = sor.u32 256, 8
      %1236 = vbcast.lane.b32.xlu0 %v1230, %s1235
      %v1237 = vpop.permute.xlu0 %1236
      %v1238 = vlaneseq
      %v1239 = vshrl.u32 %v1238, 7
      %v1240 = vsub.s32 6, %v1239
      %v1241 = vrot.slane %v1050, %v1240
      %1243 = vbcast.lane.b32.xlu0 %v1241, 256
      %v1244 = vpop.permute.xlu0 %1243
      %s1246 = sor.u32 256, 8
      %1247 = vbcast.lane.b32.xlu0 %v1241, %s1246
      %v1248 = vpop.permute.xlu0 %1247
      %v1249 = vlaneseq
      %v1250 = vshrl.u32 %v1249, 7
      %v1251 = vsub.s32 7, %v1250
      %v1252 = vrot.slane %v1050, %v1251
      %1254 = vbcast.lane.b32.xlu0 %v1252, 256
      %v1255 = vpop.permute.xlu0 %1254
      %s1257 = sor.u32 256, 8
      %1258 = vbcast.lane.b32.xlu0 %v1252, %s1257
      %v1259 = vpop.permute.xlu0 %1258
      %v1260 = vadd.f32 %v1052, %v1090
      %v1261 = vadd.f32 %v1053, %v1094
      %v1262 = vadd.f32 %v1054, %v1101
      %v1263 = vadd.f32 %v1055, %v1105
      %v1264 = vadd.f32 %v1056, %v1112
      %v1265 = vadd.f32 %v1057, %v1116
      %v1266 = vadd.f32 %v1058, %v1123
      %v1267 = vadd.f32 %v1059, %v1127
      %v1268 = vadd.f32 %v1060, %v1134
      %v1269 = vadd.f32 %v1061, %v1138
      %v1270 = vadd.f32 %v1062, %v1145
      %v1271 = vadd.f32 %v1063, %v1149
      %v1272 = vadd.f32 %v1064, %v1156
      %v1273 = vadd.f32 %v1065, %v1160
      %v1274 = vadd.f32 %v1066, %v1167
      %v1275 = vadd.f32 %v1067, %v1171
      %v1276 = vadd.f32 %v1068, %v1178
      %v1277 = vadd.f32 %v1069, %v1182
      %v1278 = vadd.f32 %v1070, %v1189
      %v1279 = vadd.f32 %v1071, %v1193
      %v1280 = vadd.f32 %v1072, %v1200
      %v1281 = vadd.f32 %v1073, %v1204
      %v1282 = vadd.f32 %v1074, %v1211
      %v1283 = vadd.f32 %v1075, %v1215
      %v1284 = vadd.f32 %v1076, %v1222
      %v1285 = vadd.f32 %v1077, %v1226
      %v1286 = vadd.f32 %v1078, %v1233
      %v1287 = vadd.f32 %v1079, %v1237
      %v1288 = vadd.f32 %v1080, %v1244
      %v1289 = vadd.f32 %v1081, %v1248
      %v1290 = vadd.f32 %v1082, %v1255
      %v1291 = vadd.f32 %v1083, %v1259
      %v1292 = vld [vmem:[#allocation2] sm:$0xff]
      %v1293 = vld [vmem:[#allocation2 + $0x8] sm:$0xff]
      %vm1294 = vcmask 261120
      %v1295 = vsel %vm1294, %v1260, -inf
      %v1296 = vsel %vm1294, %v1261, -inf
      %v1297 = vmax.f32 %v1295, %v1296
      %v1298 = vrot.slane %v1297, 4
      %v1299 = vmax.f32 %v1297, %v1298
      %v1300 = vrot.slane %v1299, 2
      %v1301 = vmax.f32 %v1299, %v1300
      %v1302 = vrot.slane %v1301, 1
      %v1303 = vmax.f32 %v1301, %v1302
      %v1304 = vsel %vm1294, %v1262, -inf
      %v1305 = vsel %vm1294, %v1263, -inf
      %v1306 = vmax.f32 %v1304, %v1305
      %v1307 = vrot.slane %v1306, 4
      %v1308 = vmax.f32 %v1306, %v1307
      %v1309 = vrot.slane %v1308, 2
      %v1310 = vmax.f32 %v1308, %v1309
      %v1311 = vrot.slane %v1310, 1
      %v1312 = vmax.f32 %v1310, %v1311
      %v1313 = vsel %vm1294, %v1264, -inf
      %v1314 = vsel %vm1294, %v1265, -inf
      %v1315 = vmax.f32 %v1313, %v1314
      %v1316 = vrot.slane %v1315, 4
      %v1317 = vmax.f32 %v1315, %v1316
      %v1318 = vrot.slane %v1317, 2
      %v1319 = vmax.f32 %v1317, %v1318
      %v1320 = vrot.slane %v1319, 1
      %v1321 = vmax.f32 %v1319, %v1320
      %v1322 = vsel %vm1294, %v1266, -inf
      %v1323 = vsel %vm1294, %v1267, -inf
      %v1324 = vmax.f32 %v1322, %v1323
      %v1325 = vrot.slane %v1324, 4
      %v1326 = vmax.f32 %v1324, %v1325
      %v1327 = vrot.slane %v1326, 2
      %v1328 = vmax.f32 %v1326, %v1327
      %v1329 = vrot.slane %v1328, 1
      %v1330 = vmax.f32 %v1328, %v1329
      %v1331 = vsel %vm1294, %v1268, -inf
      %v1332 = vsel %vm1294, %v1269, -inf
      %v1333 = vmax.f32 %v1331, %v1332
      %v1334 = vrot.slane %v1333, 4
      %v1335 = vmax.f32 %v1333, %v1334
      %v1336 = vrot.slane %v1335, 2
      %v1337 = vmax.f32 %v1335, %v1336
      %v1338 = vrot.slane %v1337, 1
      %v1339 = vmax.f32 %v1337, %v1338
      %v1340 = vsel %vm1294, %v1270, -inf
      %v1341 = vsel %vm1294, %v1271, -inf
      %v1342 = vmax.f32 %v1340, %v1341
      %v1343 = vrot.slane %v1342, 4
      %v1344 = vmax.f32 %v1342, %v1343
      %v1345 = vrot.slane %v1344, 2
      %v1346 = vmax.f32 %v1344, %v1345
      %v1347 = vrot.slane %v1346, 1
      %v1348 = vmax.f32 %v1346, %v1347
      %v1349 = vsel %vm1294, %v1272, -inf
      %v1350 = vsel %vm1294, %v1273, -inf
      %v1351 = vmax.f32 %v1349, %v1350
      %v1352 = vrot.slane %v1351, 4
      %v1353 = vmax.f32 %v1351, %v1352
      %v1354 = vrot.slane %v1353, 2
      %v1355 = vmax.f32 %v1353, %v1354
      %v1356 = vrot.slane %v1355, 1
      %v1357 = vmax.f32 %v1355, %v1356
      %v1358 = vsel %vm1294, %v1274, -inf
      %v1359 = vsel %vm1294, %v1275, -inf
      %v1360 = vmax.f32 %v1358, %v1359
      %v1361 = vrot.slane %v1360, 4
      %v1362 = vmax.f32 %v1360, %v1361
      %v1363 = vrot.slane %v1362, 2
      %v1364 = vmax.f32 %v1362, %v1363
      %v1365 = vrot.slane %v1364, 1
      %v1366 = vmax.f32 %v1364, %v1365
      %v1367 = vsel %vm1294, %v1276, -inf
      %v1368 = vsel %vm1294, %v1277, -inf
      %v1369 = vmax.f32 %v1367, %v1368
      %v1370 = vrot.slane %v1369, 4
      %v1371 = vmax.f32 %v1369, %v1370
      %v1372 = vrot.slane %v1371, 2
      %v1373 = vmax.f32 %v1371, %v1372
      %v1374 = vrot.slane %v1373, 1
      %v1375 = vmax.f32 %v1373, %v1374
      %v1376 = vsel %vm1294, %v1278, -inf
      %v1377 = vsel %vm1294, %v1279, -inf
      %v1378 = vmax.f32 %v1376, %v1377
      %v1379 = vrot.slane %v1378, 4
      %v1380 = vmax.f32 %v1378, %v1379
      %v1381 = vrot.slane %v1380, 2
      %v1382 = vmax.f32 %v1380, %v1381
      %v1383 = vrot.slane %v1382, 1
      %v1384 = vmax.f32 %v1382, %v1383
      %v1385 = vsel %vm1294, %v1280, -inf
      %v1386 = vsel %vm1294, %v1281, -inf
      %v1387 = vmax.f32 %v1385, %v1386
      %v1388 = vrot.slane %v1387, 4
      %v1389 = vmax.f32 %v1387, %v1388
      %v1390 = vrot.slane %v1389, 2
      %v1391 = vmax.f32 %v1389, %v1390
      %v1392 = vrot.slane %v1391, 1
      %v1393 = vmax.f32 %v1391, %v1392
      %v1394 = vsel %vm1294, %v1282, -inf
      %v1395 = vsel %vm1294, %v1283, -inf
      %v1396 = vmax.f32 %v1394, %v1395
      %v1397 = vrot.slane %v1396, 4
      %v1398 = vmax.f32 %v1396, %v1397
      %v1399 = vrot.slane %v1398, 2
      %v1400 = vmax.f32 %v1398, %v1399
      %v1401 = vrot.slane %v1400, 1
      %v1402 = vmax.f32 %v1400, %v1401
      %v1403 = vsel %vm1294, %v1284, -inf
      %v1404 = vsel %vm1294, %v1285, -inf
      %v1405 = vmax.f32 %v1403, %v1404
      %v1406 = vrot.slane %v1405, 4
      %v1407 = vmax.f32 %v1405, %v1406
      %v1408 = vrot.slane %v1407, 2
      %v1409 = vmax.f32 %v1407, %v1408
      %v1410 = vrot.slane %v1409, 1
      %v1411 = vmax.f32 %v1409, %v1410
      %v1412 = vsel %vm1294, %v1286, -inf
      %v1413 = vsel %vm1294, %v1287, -inf
      %v1414 = vmax.f32 %v1412, %v1413
      %v1415 = vrot.slane %v1414, 4
      %v1416 = vmax.f32 %v1414, %v1415
      %v1417 = vrot.slane %v1416, 2
      %v1418 = vmax.f32 %v1416, %v1417
      %v1419 = vrot.slane %v1418, 1
      %v1420 = vmax.f32 %v1418, %v1419
      %v1421 = vsel %vm1294, %v1288, -inf
      %v1422 = vsel %vm1294, %v1289, -inf
      %v1423 = vmax.f32 %v1421, %v1422
      %v1424 = vrot.slane %v1423, 4
      %v1425 = vmax.f32 %v1423, %v1424
      %v1426 = vrot.slane %v1425, 2
      %v1427 = vmax.f32 %v1425, %v1426
      %v1428 = vrot.slane %v1427, 1
      %v1429 = vmax.f32 %v1427, %v1428
      %v1430 = vsel %vm1294, %v1290, -inf
      %v1431 = vsel %vm1294, %v1291, -inf
      %v1432 = vmax.f32 %v1430, %v1431
      %v1433 = vrot.slane %v1432, 4
      %v1434 = vmax.f32 %v1432, %v1433
      %v1435 = vrot.slane %v1434, 2
      %v1436 = vmax.f32 %v1434, %v1435
      %v1437 = vrot.slane %v1436, 1
      %v1438 = vmax.f32 %v1436, %v1437
      %vm1455 = vcmask 1041409
      %v1456 = vsel %vm1455, %v1312, %v1303
      %vm1457 = vcmask 1042434
      %v1458 = vsel %vm1457, %v1321, %v1456
      %vm1459 = vcmask 1043459
      %v1460 = vsel %vm1459, %v1330, %v1458
      %vm1461 = vcmask 1044484
      %v1462 = vsel %vm1461, %v1339, %v1460
      %vm1463 = vcmask 1045509
      %v1464 = vsel %vm1463, %v1348, %v1462
      %vm1465 = vcmask 1046534
      %v1466 = vsel %vm1465, %v1357, %v1464
      %vm1467 = vcmask 1047559
      %v1468 = vsel %vm1467, %v1366, %v1466
      %v1469 = vsel %vm1455, %v1384, %v1375
      %v1470 = vsel %vm1457, %v1393, %v1469
      %v1471 = vsel %vm1459, %v1402, %v1470
      %v1472 = vsel %vm1461, %v1411, %v1471
      %v1473 = vsel %vm1463, %v1420, %v1472
      %v1474 = vsel %vm1465, %v1429, %v1473
      %v1475 = vsel %vm1467, %v1438, %v1474
      %v1478 = vmax.f32 %v1292, %v1468
      %v1479 = vmax.f32 %v1293, %v1475
      %v1480 = vsub.f32 %v1292, %v1478
      %v1481 = vsub.f32 %v1293, %v1479
      %v1482 = vmul.f32 %v1480, 1.442695
      %v1483 = vpow.pop %v1482
      %v1484 = vmul.f32 %v1481, 1.442695
      %v1485 = vpow.pop %v1484
      %v1488 = vcombine.high %v1478, %v1478
      %v1490 = vunpack.c.l.s4 1966171168
      %v1491 = vunpack.c.0.s8 %v1490
      %v1492 = vlaneseq
      %v1493 = vshrl.u32 %v1492, 7
      %v1494 = vsub.s32 %v1491, %v1493
      %v1495 = vrot.slane %v1478, %v1494
      %v1497 = vunpack.c.l.s4 1966171168
      %v1498 = vunpack.c.0.s8 %v1497
      %v1499 = vlaneseq
      %v1500 = vshrl.u32 %v1499, 7
      %v1501 = vsub.s32 %v1498, %v1500
      %v1502 = vrot.slane %v1488, %v1501
      %v1503 = vcombine.high %v1495, %v1495
      %v1504 = vcombine.high %v1502, %v1502
      %v1506 = vunpack.c.l.s4 1966171168
      %v1507 = vunpack.c.0.s8 %v1506
      %v1508 = vlaneseq
      %v1509 = vshrl.u32 %v1508, 7
      %v1510 = vsub.s32 %v1507, %v1509
      %v1511 = vrot.slane %v1495, %v1510
      %v1513 = vunpack.c.l.s4 1966171168
      %v1514 = vunpack.c.0.s8 %v1513
      %v1515 = vlaneseq
      %v1516 = vshrl.u32 %v1515, 7
      %v1517 = vsub.s32 %v1514, %v1516
      %v1518 = vrot.slane %v1502, %v1517
      %v1520 = vunpack.c.l.s4 1966171168
      %v1521 = vunpack.c.0.s8 %v1520
      %v1522 = vlaneseq
      %v1523 = vshrl.u32 %v1522, 7
      %v1524 = vsub.s32 %v1521, %v1523
      %v1525 = vrot.slane %v1503, %v1524
      %v1527 = vunpack.c.l.s4 1966171168
      %v1528 = vunpack.c.0.s8 %v1527
      %v1529 = vlaneseq
      %v1530 = vshrl.u32 %v1529, 7
      %v1531 = vsub.s32 %v1528, %v1530
      %v1532 = vrot.slane %v1504, %v1531
      %v1533 = vcombine.high %v1511, %v1511
      %v1534 = vcombine.high %v1518, %v1518
      %v1535 = vcombine.high %v1525, %v1525
      %v1536 = vcombine.high %v1532, %v1532
      %v1537 = vcombine.high %v1479, %v1479
      %v1539 = vunpack.c.l.s4 1966171168
      %v1540 = vunpack.c.0.s8 %v1539
      %v1541 = vlaneseq
      %v1542 = vshrl.u32 %v1541, 7
      %v1543 = vsub.s32 %v1540, %v1542
      %v1544 = vrot.slane %v1479, %v1543
      %v1546 = vunpack.c.l.s4 1966171168
      %v1547 = vunpack.c.0.s8 %v1546
      %v1548 = vlaneseq
      %v1549 = vshrl.u32 %v1548, 7
      %v1550 = vsub.s32 %v1547, %v1549
      %v1551 = vrot.slane %v1537, %v1550
      %v1552 = vcombine.high %v1544, %v1544
      %v1553 = vcombine.high %v1551, %v1551
      %v1555 = vunpack.c.l.s4 1966171168
      %v1556 = vunpack.c.0.s8 %v1555
      %v1557 = vlaneseq
      %v1558 = vshrl.u32 %v1557, 7
      %v1559 = vsub.s32 %v1556, %v1558
      %v1560 = vrot.slane %v1544, %v1559
      %v1562 = vunpack.c.l.s4 1966171168
      %v1563 = vunpack.c.0.s8 %v1562
      %v1564 = vlaneseq
      %v1565 = vshrl.u32 %v1564, 7
      %v1566 = vsub.s32 %v1563, %v1565
      %v1567 = vrot.slane %v1551, %v1566
      %v1569 = vunpack.c.l.s4 1966171168
      %v1570 = vunpack.c.0.s8 %v1569
      %v1571 = vlaneseq
      %v1572 = vshrl.u32 %v1571, 7
      %v1573 = vsub.s32 %v1570, %v1572
      %v1574 = vrot.slane %v1552, %v1573
      %v1576 = vunpack.c.l.s4 1966171168
      %v1577 = vunpack.c.0.s8 %v1576
      %v1578 = vlaneseq
      %v1579 = vshrl.u32 %v1578, 7
      %v1580 = vsub.s32 %v1577, %v1579
      %v1581 = vrot.slane %v1553, %v1580
      %v1582 = vcombine.high %v1560, %v1560
      %v1583 = vcombine.high %v1567, %v1567
      %v1584 = vcombine.high %v1574, %v1574
      %v1585 = vcombine.high %v1581, %v1581
      %v1586 = vlaneseq
      %v1587 = vshrl.u32 %v1586, 7
      %v1588 = vsub.s32 0, %v1587
      %v1589 = vrot.slane %v1511, %v1588
      %v1590 = vlaneseq
      %v1591 = vshrl.u32 %v1590, 7
      %v1592 = vsub.s32 0, %v1591
      %v1593 = vrot.slane %v1525, %v1592
      %v1594 = vlaneseq
      %v1595 = vshrl.u32 %v1594, 7
      %v1596 = vsub.s32 0, %v1595
      %v1597 = vrot.slane %v1533, %v1596
      %v1598 = vlaneseq
      %v1599 = vshrl.u32 %v1598, 7
      %v1600 = vsub.s32 0, %v1599
      %v1601 = vrot.slane %v1535, %v1600
      %v1602 = vlaneseq
      %v1603 = vshrl.u32 %v1602, 7
      %v1604 = vsub.s32 0, %v1603
      %v1605 = vrot.slane %v1518, %v1604
      %v1606 = vlaneseq
      %v1607 = vshrl.u32 %v1606, 7
      %v1608 = vsub.s32 0, %v1607
      %v1609 = vrot.slane %v1532, %v1608
      %v1610 = vlaneseq
      %v1611 = vshrl.u32 %v1610, 7
      %v1612 = vsub.s32 0, %v1611
      %v1613 = vrot.slane %v1534, %v1612
      %v1614 = vlaneseq
      %v1615 = vshrl.u32 %v1614, 7
      %v1616 = vsub.s32 0, %v1615
      %v1617 = vrot.slane %v1536, %v1616
      %v1618 = vlaneseq
      %v1619 = vshrl.u32 %v1618, 7
      %v1620 = vsub.s32 0, %v1619
      %v1621 = vrot.slane %v1560, %v1620
      %v1622 = vlaneseq
      %v1623 = vshrl.u32 %v1622, 7
      %v1624 = vsub.s32 0, %v1623
      %v1625 = vrot.slane %v1574, %v1624
      %v1626 = vlaneseq
      %v1627 = vshrl.u32 %v1626, 7
      %v1628 = vsub.s32 0, %v1627
      %v1629 = vrot.slane %v1582, %v1628
      %v1630 = vlaneseq
      %v1631 = vshrl.u32 %v1630, 7
      %v1632 = vsub.s32 0, %v1631
      %v1633 = vrot.slane %v1584, %v1632
      %v1634 = vlaneseq
      %v1635 = vshrl.u32 %v1634, 7
      %v1636 = vsub.s32 0, %v1635
      %v1637 = vrot.slane %v1567, %v1636
      %v1638 = vlaneseq
      %v1639 = vshrl.u32 %v1638, 7
      %v1640 = vsub.s32 0, %v1639
      %v1641 = vrot.slane %v1581, %v1640
      %v1642 = vlaneseq
      %v1643 = vshrl.u32 %v1642, 7
      %v1644 = vsub.s32 0, %v1643
      %v1645 = vrot.slane %v1583, %v1644
      %v1646 = vlaneseq
      %v1647 = vshrl.u32 %v1646, 7
      %v1648 = vsub.s32 0, %v1647
      %v1649 = vrot.slane %v1585, %v1648
      %v1666 = vsub.f32 %v1260, %v1589
      %v1667 = vsub.f32 %v1261, %v1589
      %v1668 = vsub.f32 %v1262, %v1593
      %v1669 = vsub.f32 %v1263, %v1593
      %v1670 = vsub.f32 %v1264, %v1597
      %v1671 = vsub.f32 %v1265, %v1597
      %v1672 = vsub.f32 %v1266, %v1601
      %v1673 = vsub.f32 %v1267, %v1601
      %v1674 = vsub.f32 %v1268, %v1605
      %v1675 = vsub.f32 %v1269, %v1605
      %v1676 = vsub.f32 %v1270, %v1609
      %v1677 = vsub.f32 %v1271, %v1609
      %v1678 = vsub.f32 %v1272, %v1613
      %v1679 = vsub.f32 %v1273, %v1613
      %v1680 = vsub.f32 %v1274, %v1617
      %v1681 = vsub.f32 %v1275, %v1617
      %v1682 = vsub.f32 %v1276, %v1621
      %v1683 = vsub.f32 %v1277, %v1621
      %v1684 = vsub.f32 %v1278, %v1625
      %v1685 = vsub.f32 %v1279, %v1625
      %v1686 = vsub.f32 %v1280, %v1629
      %v1687 = vsub.f32 %v1281, %v1629
      %v1688 = vsub.f32 %v1282, %v1633
      %v1689 = vsub.f32 %v1283, %v1633
      %v1690 = vsub.f32 %v1284, %v1637
      %v1691 = vsub.f32 %v1285, %v1637
      %v1692 = vsub.f32 %v1286, %v1641
      %v1693 = vsub.f32 %v1287, %v1641
      %v1694 = vsub.f32 %v1288, %v1645
      %v1695 = vsub.f32 %v1289, %v1645
      %v1696 = vsub.f32 %v1290, %v1649
      %v1697 = vsub.f32 %v1291, %v1649
      %v1698 = vmul.f32 %v1666, 1.442695
      %v1699 = vpow.pop %v1698
      %v1700 = vmul.f32 %v1667, 1.442695
      %v1701 = vpow.pop %v1700
      %v1702 = vmul.f32 %v1668, 1.442695
      %v1703 = vpow.pop %v1702
      %v1704 = vmul.f32 %v1669, 1.442695
      %v1705 = vpow.pop %v1704
      %v1706 = vmul.f32 %v1670, 1.442695
      %v1707 = vpow.pop %v1706
      %v1708 = vmul.f32 %v1671, 1.442695
      %v1709 = vpow.pop %v1708
      %v1710 = vmul.f32 %v1672, 1.442695
      %v1711 = vpow.pop %v1710
      %v1712 = vmul.f32 %v1673, 1.442695
      %v1713 = vpow.pop %v1712
      %v1714 = vmul.f32 %v1674, 1.442695
      %v1715 = vpow.pop %v1714
      %v1716 = vmul.f32 %v1675, 1.442695
      %v1717 = vpow.pop %v1716
      %v1718 = vmul.f32 %v1676, 1.442695
      %v1719 = vpow.pop %v1718
      %v1720 = vmul.f32 %v1677, 1.442695
      %v1721 = vpow.pop %v1720
      %v1722 = vmul.f32 %v1678, 1.442695
      %v1723 = vpow.pop %v1722
      %v1724 = vmul.f32 %v1679, 1.442695
      %v1725 = vpow.pop %v1724
      %v1726 = vmul.f32 %v1680, 1.442695
      %v1727 = vpow.pop %v1726
      %v1728 = vmul.f32 %v1681, 1.442695
      %v1729 = vpow.pop %v1728
      %v1730 = vmul.f32 %v1682, 1.442695
      %v1731 = vpow.pop %v1730
      %v1732 = vmul.f32 %v1683, 1.442695
      %v1733 = vpow.pop %v1732
      %v1734 = vmul.f32 %v1684, 1.442695
      %v1735 = vpow.pop %v1734
      %v1736 = vmul.f32 %v1685, 1.442695
      %v1737 = vpow.pop %v1736
      %v1738 = vmul.f32 %v1686, 1.442695
      %v1739 = vpow.pop %v1738
      %v1740 = vmul.f32 %v1687, 1.442695
      %v1741 = vpow.pop %v1740
      %v1742 = vmul.f32 %v1688, 1.442695
      %v1743 = vpow.pop %v1742
      %v1744 = vmul.f32 %v1689, 1.442695
      %v1745 = vpow.pop %v1744
      %v1746 = vmul.f32 %v1690, 1.442695
      %v1747 = vpow.pop %v1746
      %v1748 = vmul.f32 %v1691, 1.442695
      %v1749 = vpow.pop %v1748
      %v1750 = vmul.f32 %v1692, 1.442695
      %v1751 = vpow.pop %v1750
      %v1752 = vmul.f32 %v1693, 1.442695
      %v1753 = vpow.pop %v1752
      %v1754 = vmul.f32 %v1694, 1.442695
      %v1755 = vpow.pop %v1754
      %v1756 = vmul.f32 %v1695, 1.442695
      %v1757 = vpow.pop %v1756
      %v1758 = vmul.f32 %v1696, 1.442695
      %v1759 = vpow.pop %v1758
      %v1760 = vmul.f32 %v1697, 1.442695
      %v1761 = vpow.pop %v1760
      %v1762 = vld [vmem:[#allocation3] sm:$0xff]
      %v1763 = vld [vmem:[#allocation3 + $0x8] sm:$0xff]
      %v1764 = vmul.f32 %v1483, %v1762
      %v1765 = vmul.f32 %v1485, %v1763
      %v1766 = vsel %vm1294, %v1699, 0.0
      %v1767 = vsel %vm1294, %v1701, 0.0
      %v1768 = vadd.f32 %v1766, %v1767
      %v1769 = vrot.slane %v1768, 4
      %v1770 = vadd.f32 %v1768, %v1769
      %v1771 = vrot.slane %v1770, 2
      %v1772 = vadd.f32 %v1770, %v1771
      %v1773 = vrot.slane %v1772, 1
      %v1774 = vadd.f32 %v1772, %v1773
      %v1775 = vsel %vm1294, %v1703, 0.0
      %v1776 = vsel %vm1294, %v1705, 0.0
      %v1777 = vadd.f32 %v1775, %v1776
      %v1778 = vrot.slane %v1777, 4
      %v1779 = vadd.f32 %v1777, %v1778
      %v1780 = vrot.slane %v1779, 2
      %v1781 = vadd.f32 %v1779, %v1780
      %v1782 = vrot.slane %v1781, 1
      %v1783 = vadd.f32 %v1781, %v1782
      %v1784 = vsel %vm1294, %v1707, 0.0
      %v1785 = vsel %vm1294, %v1709, 0.0
      %v1786 = vadd.f32 %v1784, %v1785
      %v1787 = vrot.slane %v1786, 4
      %v1788 = vadd.f32 %v1786, %v1787
      %v1789 = vrot.slane %v1788, 2
      %v1790 = vadd.f32 %v1788, %v1789
      %v1791 = vrot.slane %v1790, 1
      %v1792 = vadd.f32 %v1790, %v1791
      %v1793 = vsel %vm1294, %v1711, 0.0
      %v1794 = vsel %vm1294, %v1713, 0.0
      %v1795 = vadd.f32 %v1793, %v1794
      %v1796 = vrot.slane %v1795, 4
      %v1797 = vadd.f32 %v1795, %v1796
      %v1798 = vrot.slane %v1797, 2
      %v1799 = vadd.f32 %v1797, %v1798
      %v1800 = vrot.slane %v1799, 1
      %v1801 = vadd.f32 %v1799, %v1800
      %v1802 = vsel %vm1294, %v1715, 0.0
      %v1803 = vsel %vm1294, %v1717, 0.0
      %v1804 = vadd.f32 %v1802, %v1803
      %v1805 = vrot.slane %v1804, 4
      %v1806 = vadd.f32 %v1804, %v1805
      %v1807 = vrot.slane %v1806, 2
      %v1808 = vadd.f32 %v1806, %v1807
      %v1809 = vrot.slane %v1808, 1
      %v1810 = vadd.f32 %v1808, %v1809
      %v1811 = vsel %vm1294, %v1719, 0.0
      %v1812 = vsel %vm1294, %v1721, 0.0
      %v1813 = vadd.f32 %v1811, %v1812
      %v1814 = vrot.slane %v1813, 4
      %v1815 = vadd.f32 %v1813, %v1814
      %v1816 = vrot.slane %v1815, 2
      %v1817 = vadd.f32 %v1815, %v1816
      %v1818 = vrot.slane %v1817, 1
      %v1819 = vadd.f32 %v1817, %v1818
      %v1820 = vsel %vm1294, %v1723, 0.0
      %v1821 = vsel %vm1294, %v1725, 0.0
      %v1822 = vadd.f32 %v1820, %v1821
      %v1823 = vrot.slane %v1822, 4
      %v1824 = vadd.f32 %v1822, %v1823
      %v1825 = vrot.slane %v1824, 2
      %v1826 = vadd.f32 %v1824, %v1825
      %v1827 = vrot.slane %v1826, 1
      %v1828 = vadd.f32 %v1826, %v1827
      %v1829 = vsel %vm1294, %v1727, 0.0
      %v1830 = vsel %vm1294, %v1729, 0.0
      %v1831 = vadd.f32 %v1829, %v1830
      %v1832 = vrot.slane %v1831, 4
      %v1833 = vadd.f32 %v1831, %v1832
      %v1834 = vrot.slane %v1833, 2
      %v1835 = vadd.f32 %v1833, %v1834
      %v1836 = vrot.slane %v1835, 1
      %v1837 = vadd.f32 %v1835, %v1836
      %v1838 = vsel %vm1294, %v1731, 0.0
      %v1839 = vsel %vm1294, %v1733, 0.0
      %v1840 = vadd.f32 %v1838, %v1839
      %v1841 = vrot.slane %v1840, 4
      %v1842 = vadd.f32 %v1840, %v1841
      %v1843 = vrot.slane %v1842, 2
      %v1844 = vadd.f32 %v1842, %v1843
      %v1845 = vrot.slane %v1844, 1
      %v1846 = vadd.f32 %v1844, %v1845
      %v1847 = vsel %vm1294, %v1735, 0.0
      %v1848 = vsel %vm1294, %v1737, 0.0
      %v1849 = vadd.f32 %v1847, %v1848
      %v1850 = vrot.slane %v1849, 4
      %v1851 = vadd.f32 %v1849, %v1850
      %v1852 = vrot.slane %v1851, 2
      %v1853 = vadd.f32 %v1851, %v1852
      %v1854 = vrot.slane %v1853, 1
      %v1855 = vadd.f32 %v1853, %v1854
      %v1856 = vsel %vm1294, %v1739, 0.0
      %v1857 = vsel %vm1294, %v1741, 0.0
      %v1858 = vadd.f32 %v1856, %v1857
      %v1859 = vrot.slane %v1858, 4
      %v1860 = vadd.f32 %v1858, %v1859
      %v1861 = vrot.slane %v1860, 2
      %v1862 = vadd.f32 %v1860, %v1861
      %v1863 = vrot.slane %v1862, 1
      %v1864 = vadd.f32 %v1862, %v1863
      %v1865 = vsel %vm1294, %v1743, 0.0
      %v1866 = vsel %vm1294, %v1745, 0.0
      %v1867 = vadd.f32 %v1865, %v1866
      %v1868 = vrot.slane %v1867, 4
      %v1869 = vadd.f32 %v1867, %v1868
      %v1870 = vrot.slane %v1869, 2
      %v1871 = vadd.f32 %v1869, %v1870
      %v1872 = vrot.slane %v1871, 1
      %v1873 = vadd.f32 %v1871, %v1872
      %v1874 = vsel %vm1294, %v1747, 0.0
      %v1875 = vsel %vm1294, %v1749, 0.0
      %v1876 = vadd.f32 %v1874, %v1875
      %v1877 = vrot.slane %v1876, 4
      %v1878 = vadd.f32 %v1876, %v1877
      %v1879 = vrot.slane %v1878, 2
      %v1880 = vadd.f32 %v1878, %v1879
      %v1881 = vrot.slane %v1880, 1
      %v1882 = vadd.f32 %v1880, %v1881
      %v1883 = vsel %vm1294, %v1751, 0.0
      %v1884 = vsel %vm1294, %v1753, 0.0
      %v1885 = vadd.f32 %v1883, %v1884
      %v1886 = vrot.slane %v1885, 4
      %v1887 = vadd.f32 %v1885, %v1886
      %v1888 = vrot.slane %v1887, 2
      %v1889 = vadd.f32 %v1887, %v1888
      %v1890 = vrot.slane %v1889, 1
      %v1891 = vadd.f32 %v1889, %v1890
      %v1892 = vsel %vm1294, %v1755, 0.0
      %v1893 = vsel %vm1294, %v1757, 0.0
      %v1894 = vadd.f32 %v1892, %v1893
      %v1895 = vrot.slane %v1894, 4
      %v1896 = vadd.f32 %v1894, %v1895
      %v1897 = vrot.slane %v1896, 2
      %v1898 = vadd.f32 %v1896, %v1897
      %v1899 = vrot.slane %v1898, 1
      %v1900 = vadd.f32 %v1898, %v1899
      %v1901 = vsel %vm1294, %v1759, 0.0
      %v1902 = vsel %vm1294, %v1761, 0.0
      %v1903 = vadd.f32 %v1901, %v1902
      %v1904 = vrot.slane %v1903, 4
      %v1905 = vadd.f32 %v1903, %v1904
      %v1906 = vrot.slane %v1905, 2
      %v1907 = vadd.f32 %v1905, %v1906
      %v1908 = vrot.slane %v1907, 1
      %v1909 = vadd.f32 %v1907, %v1908
      %v1926 = vsel %vm1455, %v1783, %v1774
      %v1927 = vsel %vm1457, %v1792, %v1926
      %v1928 = vsel %vm1459, %v1801, %v1927
      %v1929 = vsel %vm1461, %v1810, %v1928
      %v1930 = vsel %vm1463, %v1819, %v1929
      %v1931 = vsel %vm1465, %v1828, %v1930
      %v1932 = vsel %vm1467, %v1837, %v1931
      %v1933 = vsel %vm1455, %v1855, %v1846
      %v1934 = vsel %vm1457, %v1864, %v1933
      %v1935 = vsel %vm1459, %v1873, %v1934
      %v1936 = vsel %vm1461, %v1882, %v1935
      %v1937 = vsel %vm1463, %v1891, %v1936
      %v1938 = vsel %vm1465, %v1900, %v1937
      %v1939 = vsel %vm1467, %v1909, %v1938
      %v1942 = vadd.f32 %v1764, %v1932
      %v1943 = vadd.f32 %v1765, %v1939
      %1944 = vst.msk [vmem:[#allocation3] sm:$0xff] %vm1294, %v1942
      %1945 = vst.msk [vmem:[#allocation3 + $0x8] sm:$0xff] %vm1294, %v1943
      %v1946 = vld [vmem:[#allocation4] sm:$0xff]
      %v1947 = vld [vmem:[#allocation4 + $0x8] sm:$0xff]
      %v1948 = vmul.f32 %v1483, %v1946
      %v1949 = vmul.f32 %v1485, %v1947
      %v1950 = vmul.f32 %v1699, %v1015
      %v1951 = vmul.f32 %v1701, %v1016
      %v1952 = vmul.f32 %v1703, %v1017
      %v1953 = vmul.f32 %v1705, %v1018
      %v1954 = vmul.f32 %v1707, %v1019
      %v1955 = vmul.f32 %v1709, %v1020
      %v1956 = vmul.f32 %v1711, %v1021
      %v1957 = vmul.f32 %v1713, %v1022
      %v1958 = vmul.f32 %v1715, %v1023
      %v1959 = vmul.f32 %v1717, %v1024
      %v1960 = vmul.f32 %v1719, %v1025
      %v1961 = vmul.f32 %v1721, %v1026
      %v1962 = vmul.f32 %v1723, %v1027
      %v1963 = vmul.f32 %v1725, %v1028
      %v1964 = vmul.f32 %v1727, %v1029
      %v1965 = vmul.f32 %v1729, %v1030
      %v1966 = vmul.f32 %v1731, %v1031
      %v1967 = vmul.f32 %v1733, %v1032
      %v1968 = vmul.f32 %v1735, %v1033
      %v1969 = vmul.f32 %v1737, %v1034
      %v1970 = vmul.f32 %v1739, %v1035
      %v1971 = vmul.f32 %v1741, %v1036
      %v1972 = vmul.f32 %v1743, %v1037
      %v1973 = vmul.f32 %v1745, %v1038
      %v1974 = vmul.f32 %v1747, %v1039
      %v1975 = vmul.f32 %v1749, %v1040
      %v1976 = vmul.f32 %v1751, %v1041
      %v1977 = vmul.f32 %v1753, %v1042
      %v1978 = vmul.f32 %v1755, %v1043
      %v1979 = vmul.f32 %v1757, %v1044
      %v1980 = vmul.f32 %v1759, %v1045
      %v1981 = vmul.f32 %v1761, %v1046
      %v1982 = vsel %vm1294, %v1950, 0.0
      %v1983 = vsel %vm1294, %v1951, 0.0
      %v1984 = vadd.f32 %v1982, %v1983
      %v1985 = vrot.slane %v1984, 4
      %v1986 = vadd.f32 %v1984, %v1985
      %v1987 = vrot.slane %v1986, 2
      %v1988 = vadd.f32 %v1986, %v1987
      %v1989 = vrot.slane %v1988, 1
      %v1990 = vadd.f32 %v1988, %v1989
      %v1991 = vsel %vm1294, %v1952, 0.0
      %v1992 = vsel %vm1294, %v1953, 0.0
      %v1993 = vadd.f32 %v1991, %v1992
      %v1994 = vrot.slane %v1993, 4
      %v1995 = vadd.f32 %v1993, %v1994
      %v1996 = vrot.slane %v1995, 2
      %v1997 = vadd.f32 %v1995, %v1996
      %v1998 = vrot.slane %v1997, 1
      %v1999 = vadd.f32 %v1997, %v1998
      %v2000 = vsel %vm1294, %v1954, 0.0
      %v2001 = vsel %vm1294, %v1955, 0.0
      %v2002 = vadd.f32 %v2000, %v2001
      %v2003 = vrot.slane %v2002, 4
      %v2004 = vadd.f32 %v2002, %v2003
      %v2005 = vrot.slane %v2004, 2
      %v2006 = vadd.f32 %v2004, %v2005
      %v2007 = vrot.slane %v2006, 1
      %v2008 = vadd.f32 %v2006, %v2007
      %v2009 = vsel %vm1294, %v1956, 0.0
      %v2010 = vsel %vm1294, %v1957, 0.0
      %v2011 = vadd.f32 %v2009, %v2010
      %v2012 = vrot.slane %v2011, 4
      %v2013 = vadd.f32 %v2011, %v2012
      %v2014 = vrot.slane %v2013, 2
      %v2015 = vadd.f32 %v2013, %v2014
      %v2016 = vrot.slane %v2015, 1
      %v2017 = vadd.f32 %v2015, %v2016
      %v2018 = vsel %vm1294, %v1958, 0.0
      %v2019 = vsel %vm1294, %v1959, 0.0
      %v2020 = vadd.f32 %v2018, %v2019
      %v2021 = vrot.slane %v2020, 4
      %v2022 = vadd.f32 %v2020, %v2021
      %v2023 = vrot.slane %v2022, 2
      %v2024 = vadd.f32 %v2022, %v2023
      %v2025 = vrot.slane %v2024, 1
      %v2026 = vadd.f32 %v2024, %v2025
      %v2027 = vsel %vm1294, %v1960, 0.0
      %v2028 = vsel %vm1294, %v1961, 0.0
      %v2029 = vadd.f32 %v2027, %v2028
      %v2030 = vrot.slane %v2029, 4
      %v2031 = vadd.f32 %v2029, %v2030
      %v2032 = vrot.slane %v2031, 2
      %v2033 = vadd.f32 %v2031, %v2032
      %v2034 = vrot.slane %v2033, 1
      %v2035 = vadd.f32 %v2033, %v2034
      %v2036 = vsel %vm1294, %v1962, 0.0
      %v2037 = vsel %vm1294, %v1963, 0.0
      %v2038 = vadd.f32 %v2036, %v2037
      %v2039 = vrot.slane %v2038, 4
      %v2040 = vadd.f32 %v2038, %v2039
      %v2041 = vrot.slane %v2040, 2
      %v2042 = vadd.f32 %v2040, %v2041
      %v2043 = vrot.slane %v2042, 1
      %v2044 = vadd.f32 %v2042, %v2043
      %v2045 = vsel %vm1294, %v1964, 0.0
      %v2046 = vsel %vm1294, %v1965, 0.0
      %v2047 = vadd.f32 %v2045, %v2046
      %v2048 = vrot.slane %v2047, 4
      %v2049 = vadd.f32 %v2047, %v2048
      %v2050 = vrot.slane %v2049, 2
      %v2051 = vadd.f32 %v2049, %v2050
      %v2052 = vrot.slane %v2051, 1
      %v2053 = vadd.f32 %v2051, %v2052
      %v2054 = vsel %vm1294, %v1966, 0.0
      %v2055 = vsel %vm1294, %v1967, 0.0
      %v2056 = vadd.f32 %v2054, %v2055
      %v2057 = vrot.slane %v2056, 4
      %v2058 = vadd.f32 %v2056, %v2057
      %v2059 = vrot.slane %v2058, 2
      %v2060 = vadd.f32 %v2058, %v2059
      %v2061 = vrot.slane %v2060, 1
      %v2062 = vadd.f32 %v2060, %v2061
      %v2063 = vsel %vm1294, %v1968, 0.0
      %v2064 = vsel %vm1294, %v1969, 0.0
      %v2065 = vadd.f32 %v2063, %v2064
      %v2066 = vrot.slane %v2065, 4
      %v2067 = vadd.f32 %v2065, %v2066
      %v2068 = vrot.slane %v2067, 2
      %v2069 = vadd.f32 %v2067, %v2068
      %v2070 = vrot.slane %v2069, 1
      %v2071 = vadd.f32 %v2069, %v2070
      %v2072 = vsel %vm1294, %v1970, 0.0
      %v2073 = vsel %vm1294, %v1971, 0.0
      %v2074 = vadd.f32 %v2072, %v2073
      %v2075 = vrot.slane %v2074, 4
      %v2076 = vadd.f32 %v2074, %v2075
      %v2077 = vrot.slane %v2076, 2
      %v2078 = vadd.f32 %v2076, %v2077
      %v2079 = vrot.slane %v2078, 1
      %v2080 = vadd.f32 %v2078, %v2079
      %v2081 = vsel %vm1294, %v1972, 0.0
      %v2082 = vsel %vm1294, %v1973, 0.0
      %v2083 = vadd.f32 %v2081, %v2082
      %v2084 = vrot.slane %v2083, 4
      %v2085 = vadd.f32 %v2083, %v2084
      %v2086 = vrot.slane %v2085, 2
      %v2087 = vadd.f32 %v2085, %v2086
      %v2088 = vrot.slane %v2087, 1
      %v2089 = vadd.f32 %v2087, %v2088
      %v2090 = vsel %vm1294, %v1974, 0.0
      %v2091 = vsel %vm1294, %v1975, 0.0
      %v2092 = vadd.f32 %v2090, %v2091
      %v2093 = vrot.slane %v2092, 4
      %v2094 = vadd.f32 %v2092, %v2093
      %v2095 = vrot.slane %v2094, 2
      %v2096 = vadd.f32 %v2094, %v2095
      %v2097 = vrot.slane %v2096, 1
      %v2098 = vadd.f32 %v2096, %v2097
      %v2099 = vsel %vm1294, %v1976, 0.0
      %v2100 = vsel %vm1294, %v1977, 0.0
      %v2101 = vadd.f32 %v2099, %v2100
      %v2102 = vrot.slane %v2101, 4
      %v2103 = vadd.f32 %v2101, %v2102
      %v2104 = vrot.slane %v2103, 2
      %v2105 = vadd.f32 %v2103, %v2104
      %v2106 = vrot.slane %v2105, 1
      %v2107 = vadd.f32 %v2105, %v2106
      %v2108 = vsel %vm1294, %v1978, 0.0
      %v2109 = vsel %vm1294, %v1979, 0.0
      %v2110 = vadd.f32 %v2108, %v2109
      %v2111 = vrot.slane %v2110, 4
      %v2112 = vadd.f32 %v2110, %v2111
      %v2113 = vrot.slane %v2112, 2
      %v2114 = vadd.f32 %v2112, %v2113
      %v2115 = vrot.slane %v2114, 1
      %v2116 = vadd.f32 %v2114, %v2115
      %v2117 = vsel %vm1294, %v1980, 0.0
      %v2118 = vsel %vm1294, %v1981, 0.0
      %v2119 = vadd.f32 %v2117, %v2118
      %v2120 = vrot.slane %v2119, 4
      %v2121 = vadd.f32 %v2119, %v2120
      %v2122 = vrot.slane %v2121, 2
      %v2123 = vadd.f32 %v2121, %v2122
      %v2124 = vrot.slane %v2123, 1
      %v2125 = vadd.f32 %v2123, %v2124
      %v2142 = vsel %vm1455, %v1999, %v1990
      %v2143 = vsel %vm1457, %v2008, %v2142
      %v2144 = vsel %vm1459, %v2017, %v2143
      %v2145 = vsel %vm1461, %v2026, %v2144
      %v2146 = vsel %vm1463, %v2035, %v2145
      %v2147 = vsel %vm1465, %v2044, %v2146
      %v2148 = vsel %vm1467, %v2053, %v2147
      %v2149 = vsel %vm1455, %v2071, %v2062
      %v2150 = vsel %vm1457, %v2080, %v2149
      %v2151 = vsel %vm1459, %v2089, %v2150
      %v2152 = vsel %vm1461, %v2098, %v2151
      %v2153 = vsel %vm1463, %v2107, %v2152
      %v2154 = vsel %vm1465, %v2116, %v2153
      %v2155 = vsel %vm1467, %v2125, %v2154
      %v2158 = vadd.f32 %v1948, %v2148
      %v2159 = vadd.f32 %v1949, %v2155
      %2160 = vst.msk [vmem:[#allocation4] sm:$0xff] %vm1294, %v2158
      %2161 = vst.msk [vmem:[#allocation4 + $0x8] sm:$0xff] %vm1294, %v2159
      %2162 = vst.msk [vmem:[#allocation2] sm:$0xff] %vm1294, %v1478
      %2163 = vst.msk [vmem:[#allocation2 + $0x8] sm:$0xff] %vm1294, %v1479
      %v2164 = vld [vmem:[#allocation5] sm:$0xff]
      %v2165 = vld [vmem:[#allocation5 + $0x8] sm:$0xff]
      %vm2166 = vcmask 130048
      %v2167 = vsel %vm2166, %v491, 0.0
      %2168 = vadd.xlane.f32.xlu0 %v2167
      %v2169 = vpop.xlane.xlu0 %2168
      %v2170 = vsel %vm2166, %v492, 0.0
      %2171 = vadd.xlane.f32.xlu0 %v2170
      %v2172 = vpop.xlane.xlu0 %2171
      %v2173 = vadd.f32 %v2164, %v2169
      %v2174 = vadd.f32 %v2165, %v2172
      %vm2175 = vcmask 7168
      %2176 = vst.msk [vmem:[#allocation5] sm:$0xff] %vm2175, %v2173
      %2177 = vst.msk [vmem:[#allocation5 + $0x8] sm:$0xff] %vm2175, %v2174
      // Predicated region
      $region53: #{dyresgen_forward.12} parent=47 // pred_check
        %p2178 = pneg %p456
      $region54: #{dyresgen_forward.12} parent=47 // pred_check_branch
        %2180 = sbr.rel (%p2178) target = $region56
      $region55: #{dyresgen_forward.12} parent=47 // pred_region
        %v2181 = vld [vmem:[#allocation3] sm:$0xff]
        %v2182 = vld [vmem:[#allocation3 + $0x8] sm:$0xff]
        %v2183 = vmax.f32 %v2181, 1e-16
        %v2184 = vmax.f32 %v2182, 1e-16
        %v2185 = vrcp.pop %v2183
        %v2186 = vrcp.pop %v2184
        %v2187 = vld [vmem:[#allocation4] sm:$0xff]
        %v2188 = vld [vmem:[#allocation4 + $0x8] sm:$0xff]
        %v2189 = vmul.f32 %v2187, %v2185
        %v2190 = vmul.f32 %v2188, %v2186
        %v2191 = vld [vmem:[#allocation5] sm:$0xff]
        %v2192 = vld [vmem:[#allocation5 + $0x8] sm:$0xff]
        %vm2193 = vcmp.gt.f32.partialorder %v2191, 0.0
        %vm2194 = vcmp.gt.f32.partialorder %v2192, 0.0
        %v2195 = vsel %vm2193, 1, 0
        %v2196 = vsel %vm2194, 1, 0
        %2197 = vset.pattern.permute.xlu0 0
        %2198 = vperm.xlu0 %2197, %v2195
        %v2199 = vpop.permute.xlu0 %2198
        %2200 = vset.pattern.permute.xlu0 0
        %2201 = vperm.xlu0 %2200, %v2196
        %v2202 = vpop.permute.xlu0 %2201
        %vm2203 = vcmp.eq.s32.totalorder %v2199, 1
        %vm2204 = vcmp.eq.s32.totalorder %v2202, 1
        %v2205 = vsel %vm2203, %v2189, 0.0
        %v2206 = vsel %vm2204, %v2190, 0.0
        %v2207 = vld [vmem:[%s418] sm:$0xff]
        %v2208 = vld [vmem:[%s418 + $0x8] sm:$0xff]
        %v2209 = vadd.f32 %v2205, %v2207
        %v2210 = vadd.f32 %v2206, %v2208
        %2211 = vst.msk [vmem:[%s454] sm:$0xff] %vm1294, %v2209
        %2212 = vst.msk [vmem:[%s454 + $0x8] sm:$0xff] %vm1294, %v2210
      $region56: #{dyresgen_forward.12} parent=47 // pred_fallthru
        _
      %s2213 = smul.u32 2, %s25
      %p2214 = scmp.lt.s32.totalorder %s24, 1
      %s2215 = scalar_select %p2214, %s24, 1
      %p2216 = scmp.lt.s32.totalorder %s2213, 1
      %s2217 = scalar_select %p2216, %s2213, 1
      %s2218 = smul.addr %s2215, 2
      %s2219 = sadd.s32 %s2217, %s2218
      %s2220 = smul.addr %s2219, 8
      %s2221 = scalar_lea.vmem %s7, %s2220
      // Predicated region
      $region57: #{dyresgen_forward.12} parent=47 // pred_check
        %p2222 = pneg %p237
      $region58: #{dyresgen_forward.12} parent=47 // pred_check_branch
        %2224 = sbr.rel (%p2222) target = $region60
      $region59: #{dyresgen_forward.12} parent=47 // pred_region
        %s2225 = smul.u32 2, %s25
      $region60: #{dyresgen_forward.12} parent=47 // pred_fallthru
        _
    $region48: #{dyresgen_forward.12} parent=5 // pred_fallthru
      _
    %p2226 = scmp.le.s32.totalorder 2, %s14
    // Predicated region
    $region61: #{dyresgen_forward.12} parent=5 // pred_check
      %p2227 = pneg %p2226
    $region62: #{dyresgen_forward.12} parent=5 // pred_check_branch
      %2229 = sbr.rel (%p2227) target = $region64
    $region63: #{dyresgen_forward.12} parent=5 // pred_region
      %s2230 = ssub.s32 %s14, 2
      // Predicated region
      $region65: #{dyresgen_forward.12} parent=63 // pred_check
        %p2231 = pneg %p243
      $region66: #{dyresgen_forward.12} parent=63 // pred_check_branch
        %2233 = sbr.rel (%p2231) target = $region68
      $region67: #{dyresgen_forward.12} parent=63 // pred_region
        %s2234 = smul.u32 2, %s28
        %p2235 = scmp.lt.s32.totalorder %s27, 1
        %s2236 = scalar_select %p2235, %s27, 1
        %p2237 = scmp.lt.s32.totalorder %s2234, 1
        %s2238 = scalar_select %p2237, %s2234, 1
        %s2239 = smul.addr %s2236, 2
        %s2240 = sadd.s32 %s2238, %s2239
        %s2241 = smul.addr %s2240, 8
        %s2242 = scalar_lea.vmem %s7, %s2241
      $region68: #{dyresgen_forward.12} parent=63 // pred_fallthru
        _
    $region64: #{dyresgen_forward.12} parent=5 // pred_fallthru
      _
  $region6: #{dyresgen_forward.12} parent=0 // loop_footer
    %s18 = sadd.s32 1, %s14
  $region7: #{dyresgen_forward.12} parent=0 // loop_footer_branch
    %13 = sbr.rel target = $region3
  $region8: #{dyresgen_forward.12} parent=0 // loop_exit
    _

// kernel: dyresgen_forward.16
$region0: #{dyresgen_forward.16}
  #allocation0 [shape = 'u32[]', space=smem, size = 0x4, offset = 0x4, fixed_abs, tag = 'smem constant byte address 0x4 - core index']
  #allocation1 [shape = 'u32[144,128]{1,0:T(1,128)}', space=vmem, size = 0x12000, scoped, tag = 'internal scratch']
  %s0 = inlined_call_operand.vmem [shape: f32[16,32], index: 0, kind: input, shape index: {}]
  %s1 = inlined_call_operand.vmem [shape: bf16[32,32], index: 1, kind: input, shape index: {}]
  %s2 = inlined_call_operand.vmem [shape: f32[16,32], index: 2, kind: output, shape index: {}]
  %s3 = sld [smem:[#allocation0]]
  $region41: #{dyresgen_forward.16} parent=0
    _
  %s5 = ssub.s32 1, %s3
  %s6 = scalar_select 0, %s5, %s3
  loop: start=0, step=1, limit=4
  $region2: #{dyresgen_forward.16} parent=0 // loop_pre_header
    _
  $region3: #{dyresgen_forward.16} parent=0 // loop_header
    %s8 = sphi 0, %s12
    %p9 = scmp.ge.s32.totalorder %s8, 4
    %s18 = sphi 0, %s20
    %s21 = sphi 0, %s18
    %s22 = sphi 0, %s21
    %s38 = sphi 0, %s22
    %s42 = sphi 0, %s42
    %s44 = sphi 0, %s42
    %s45 = sphi 0, %s44
    %s59 = sphi 0, %s45
    %s65 = sphi 0, %s67
    %s68 = sphi 0, %s65
    %s69 = sphi 0, %s68
    %s85 = sphi 0, %s69
  $region4: #{dyresgen_forward.16} parent=0 // loop_header_branch
    %11 = sbr.rel (%p9) target = $region8
  $region5: #{dyresgen_forward.16} parent=0 // loop_body
    %s13 = ssub.s32 %s8, 1
    %s14 = ssub.s32 %s8, 2
    %s15 = sadd.s32 %s8, 1
    %s16 = ssub.s32 %s8, %s15
    %p17 = scmp.eq.s32.totalorder %s16, 0
    %s19 = sadd.s32 %s18, 1
    %s20 = scalar_select %p17, %s18, %s19
    %p23 = pneg %p17
    %p24 = scmp.eq.s32.totalorder %s8, 1
    %p25 = por %p23, %p24
    %p26 = scmp.ne.s32.totalorder %s18, %s21
    %p27 = scmp.eq.s32.totalorder %s8, 0
    %p28 = por %p26, %p27
    %p29 = scmp.ne.s32.totalorder %s18, %s21
    %p30 = scmp.eq.s32.totalorder %s13, 1
    %p31 = por %p29, %p30
    %p32 = scmp.ne.s32.totalorder %s21, %s22
    %p33 = scmp.eq.s32.totalorder %s13, 0
    %p34 = por %p32, %p33
    %p35 = scmp.ne.s32.totalorder %s21, %s22
    %p36 = scmp.eq.s32.totalorder %s14, 1
    %p37 = por %p35, %p36
    %p39 = scmp.ne.s32.totalorder %s22, %s38
    %p40 = scmp.eq.s32.totalorder %s14, 0
    %p41 = por %p39, %p40
    %s43 = sadd.s32 %s42, 1
    %p46 = scmp.eq.s32.totalorder %s8, 1
    %p47 = scmp.ne.s32.totalorder %s42, %s44
    %p48 = scmp.eq.s32.totalorder %s8, 0
    %p49 = por %p47, %p48
    %p50 = scmp.ne.s32.totalorder %s42, %s44
    %p51 = scmp.eq.s32.totalorder %s13, 1
    %p52 = por %p50, %p51
    %p53 = scmp.ne.s32.totalorder %s44, %s45
    %p54 = scmp.eq.s32.totalorder %s13, 0
    %p55 = por %p53, %p54
    %p56 = scmp.ne.s32.totalorder %s44, %s45
    %p57 = scmp.eq.s32.totalorder %s14, 1
    %p58 = por %p56, %p57
    %p60 = scmp.ne.s32.totalorder %s45, %s59
    %p61 = scmp.eq.s32.totalorder %s14, 0
    %p62 = por %p60, %p61
    %s63 = ssub.s32 %s8, %s15
    %p64 = scmp.eq.s32.totalorder %s63, 0
    %s66 = sadd.s32 %s65, 1
    %s67 = scalar_select %p64, %s65, %s66
    %p70 = pneg %p64
    %p71 = scmp.eq.s32.totalorder %s8, 1
    %p72 = por %p70, %p71
    %p73 = scmp.ne.s32.totalorder %s65, %s68
    %p74 = scmp.eq.s32.totalorder %s8, 0
    %p75 = por %p73, %p74
    %p76 = scmp.ne.s32.totalorder %s65, %s68
    %p77 = scmp.eq.s32.totalorder %s13, 1
    %p78 = por %p76, %p77
    %p79 = scmp.ne.s32.totalorder %s68, %s69
    %p80 = scmp.eq.s32.totalorder %s13, 0
    %p81 = por %p79, %p80
    %p82 = scmp.ne.s32.totalorder %s68, %s69
    %p83 = scmp.eq.s32.totalorder %s14, 1
    %p84 = por %p82, %p83
    %p86 = scmp.ne.s32.totalorder %s69, %s85
    %p87 = scmp.eq.s32.totalorder %s14, 0
    %p88 = por %p86, %p87
    %p89 = scmp.le.s32.totalorder 1, %s8
    %p90 = scmp.lt.s32.totalorder %s8, 3
    %p91 = pnand %p89, %p90
    %p92 = pneg %p91
    // Predicated region
    $region9: #{dyresgen_forward.16} parent=5 // pred_check
      _
    $region10: #{dyresgen_forward.16} parent=5 // pred_check_branch
      %94 = sbr.rel (%p91) target = $region12
    $region11: #{dyresgen_forward.16} parent=5 // pred_region
      %s95 = ssub.s32 %s8, 1
      // Predicated region
      $region13: #{dyresgen_forward.16} parent=11 // pred_check
        %p96 = pneg %p55
      $region14: #{dyresgen_forward.16} parent=11 // pred_check_branch
        %98 = sbr.rel (%p96) target = $region16
      $region15: #{dyresgen_forward.16} parent=11 // pred_region
        _
      $region16: #{dyresgen_forward.16} parent=11 // pred_fallthru
        _
    $region12: #{dyresgen_forward.16} parent=5 // pred_fallthru
      _
    %p99 = scmp.lt.s32.totalorder %s8, 2
    // Predicated region
    $region17: #{dyresgen_forward.16} parent=5 // pred_check
      %p100 = pneg %p99
    $region18: #{dyresgen_forward.16} parent=5 // pred_check_branch
      %102 = sbr.rel (%p100) target = $region20
    $region19: #{dyresgen_forward.16} parent=5 // pred_region
      // Predicated region
      $region21: #{dyresgen_forward.16} parent=19 // pred_check
        %p103 = pneg %p28
      $region22: #{dyresgen_forward.16} parent=19 // pred_check_branch
        %105 = sbr.rel (%p103) target = $region24
      $region23: #{dyresgen_forward.16} parent=19 // pred_region
        %p106 = scmp.lt.s32.totalorder %s8, 1
        %s107 = scalar_select %p106, %s8, 1
        %s108 = smul.addr %s107, 8
        %s109 = scalar_lea.vmem %s0, %s108
      $region24: #{dyresgen_forward.16} parent=19 // pred_fallthru
        _
    $region20: #{dyresgen_forward.16} parent=5 // pred_fallthru
      _
    %p110 = scmp.le.s32.totalorder 1, %s8
    %p111 = scmp.lt.s32.totalorder %s8, 3
    %p112 = pnand %p110, %p111
    %p113 = pneg %p112
    // Predicated region
    $region25: #{dyresgen_forward.16} parent=5 // pred_check
      _
    $region26: #{dyresgen_forward.16} parent=5 // pred_check_branch
      %115 = sbr.rel (%p112) target = $region28
    $region27: #{dyresgen_forward.16} parent=5 // pred_region
      %s116 = ssub.s32 %s8, 1
      %p117 = scmp.lt.s32.totalorder %s13, 1
      %s118 = scalar_select %p117, %s13, 1
      %s119 = smul.addr %s118, 8
      %s120 = scalar_lea.vmem %s0, %s119
      %p121 = pneg %p34
      %p122 = pneg %p31
      %p123 = pneg %p55
      %p124 = pneg %p52
      %p125 = pneg %p81
      %p126 = pneg %p78
      %p127 = scmp.lt.s32.totalorder %s13, 1
      %s128 = scalar_select %p127, %s13, 1
      %s129 = smul.addr %s128, 8
      %s130 = scalar_lea.vmem %s2, %s129
      %p131 = scmp.lt.s32.totalorder %s13, 1
      %s132 = scalar_select %p131, %s13, 1
      %s133 = smul.addr %s132, 8
      %s134 = scalar_lea.vmem %s0, %s133
      %p135 = scmp.lt.s32.totalorder %s13, 1
      %s136 = scalar_select %p135, %s13, 1
      %s137 = smul.addr %s136, 8
      %s138 = scalar_lea.vmem %s2, %s137
      %v140 = vld [vmem:[%s134] sm:$0xff]
      %v141 = vpack.c.bf16 %v140, %v140
      %v142 = vld [vmem:[%s1] sm:$0xf]
      %v143 = vld [vmem:[%s1 + $0x4] sm:$0xf]
      %v144 = vld [vmem:[%s1 + $0x8] sm:$0xf]
      %v145 = vld [vmem:[%s1 + $0xc] sm:$0xf]
      %v150 = vunpack.c.l.b16 %v142
      %v151 = vunpack.c.l.b16 %v143
      %v152 = vunpack.c.l.b16 %v144
      %v153 = vunpack.c.l.b16 %v145
      %v154 = vpack.c.b16 %v151, %v150
      %v155 = vpack.c.b16 %v153, %v152
      %vm158 = vcmask 261120
      %v160 = vsel %vm158, %v141, 0
      %162 = vmatprep.subr.bf16.mxu0 0
      %163 = vmatpush1.bf16.msra.mxu0 %v154
      %164 = vmatprep.subr.bf16.mxu0 0
      %165 = vmatpush1.bf16.msra.mxu0 %v155
      %166 = vmatprep.subr.bf16.mxu0 0
      %167 = vmatpush1.bf16.msra.mxu0 0
      %168 = vmatprep.subr.bf16.mxu0 0
      %169 = vmatpush1.bf16.msra.mxu0 0
      %170 = vmatprep.subr.bf16.mxu0 0
      %171 = vmatpush1.bf16.msra.mxu0 0
      %172 = vmatprep.subr.bf16.mxu0 0
      %173 = vmatpush1.bf16.msra.mxu0 0
      %174 = vmatprep.subr.bf16.mxu0 0
      %175 = vmatpush1.bf16.msra.mxu0 0
      %176 = vmatprep.subr.bf16.mxu0 0
      %177 = vmatpush1.bf16.msra.mxu0 0
      %178 = vmatprep.subr.bf16.mxu0 0
      %179 = vmatpush1.bf16.msra.mxu0 0
      %180 = vmatprep.subr.bf16.mxu0 0
      %181 = vmatpush1.bf16.msra.mxu0 0
      %182 = vmatprep.subr.bf16.mxu0 0
      %183 = vmatpush1.bf16.msra.mxu0 0
      %184 = vmatprep.subr.bf16.mxu0 0
      %185 = vmatpush1.bf16.msra.mxu0 0
      %186 = vmatprep.subr.bf16.mxu0 0
      %187 = vmatpush1.bf16.msra.mxu0 0
      %188 = vmatprep.subr.bf16.mxu0 0
      %189 = vmatpush1.bf16.msra.mxu0 0
      %190 = vmatprep.subr.bf16.mxu0 0
      %191 = vmatpush1.bf16.msra.mxu0 0
      %192 = vmatprep.subr.bf16.mxu0 0
      %193 = vmatpush1.bf16.msra.mxu0 0
      %194 = vmatprep.mubr.bf16.mxu0 0
      %195 = vmatmul.mubr.bf16.gmra.mrb[0].mxu0 %v160
      %v196 = vpop.f32.mrb[0].mxu0
      %v197 = vadd.f32 0.0, %v196
      %v198 = vpop.f32.mrb[0].mxu0
      %v199 = vpop.f32.mrb[0].mxu0
      %v200 = vpop.f32.mrb[0].mxu0
      %201 = vdwg.mxu0
      %202 = vst.msk [vmem:[%s138] sm:$0xff] %vm158, %v197
      %p203 = scmp.lt.s32.totalorder %s13, 1
      %s204 = scalar_select %p203, %s13, 1
      %s205 = smul.addr %s204, 8
      %s206 = scalar_lea.vmem %s2, %s205
      // Predicated region
      $region29: #{dyresgen_forward.16} parent=27 // pred_check
        %p207 = pneg %p78
      $region30: #{dyresgen_forward.16} parent=27 // pred_check_branch
        %209 = sbr.rel (%p207) target = $region32
      $region31: #{dyresgen_forward.16} parent=27 // pred_region
        _
      $region32: #{dyresgen_forward.16} parent=27 // pred_fallthru
        _
    $region28: #{dyresgen_forward.16} parent=5 // pred_fallthru
      _
    %p210 = scmp.le.s32.totalorder 2, %s8
    // Predicated region
    $region33: #{dyresgen_forward.16} parent=5 // pred_check
      %p211 = pneg %p210
    $region34: #{dyresgen_forward.16} parent=5 // pred_check_branch
      %213 = sbr.rel (%p211) target = $region36
    $region35: #{dyresgen_forward.16} parent=5 // pred_region
      %s214 = ssub.s32 %s8, 2
      // Predicated region
      $region37: #{dyresgen_forward.16} parent=35 // pred_check
        %p215 = pneg %p84
      $region38: #{dyresgen_forward.16} parent=35 // pred_check_branch
        %217 = sbr.rel (%p215) target = $region40
      $region39: #{dyresgen_forward.16} parent=35 // pred_region
        %p218 = scmp.lt.s32.totalorder %s14, 1
        %s219 = scalar_select %p218, %s14, 1
        %s220 = smul.addr %s219, 8
        %s221 = scalar_lea.vmem %s2, %s220
      $region40: #{dyresgen_forward.16} parent=35 // pred_fallthru
        _
    $region36: #{dyresgen_forward.16} parent=5 // pred_fallthru
      _
  $region6: #{dyresgen_forward.16} parent=0 // loop_footer
    %s12 = sadd.s32 1, %s8
  $region7: #{dyresgen_forward.16} parent=0 // loop_footer_branch
    %7 = sbr.rel target = $region3
  $region8: #{dyresgen_forward.16} parent=0 // loop_exit
    _

// kernel: dyresgen_forward.18
$region0: #{dyresgen_forward.18}
  #allocation0 [shape = 'u32[]', space=smem, size = 0x4, offset = 0x4, fixed_abs, tag = 'smem constant byte address 0x4 - core index']
  #allocation1 [shape = 'u32[144,128]{1,0:T(1,128)}', space=vmem, size = 0x12000, scoped, tag = 'internal scratch']
  %s0 = inlined_call_operand.vmem [shape: f32[16,16], index: 0, kind: input, shape index: {}]
  %s1 = inlined_call_operand.vmem [shape: bf16[16,32], index: 1, kind: input, shape index: {}]
  %s2 = inlined_call_operand.vmem [shape: f32[1,32], index: 2, kind: input, shape index: {}]
  %s3 = inlined_call_operand.vmem [shape: bf16[32,16], index: 3, kind: input, shape index: {}]
  %s4 = inlined_call_operand.vmem [shape: f32[1,16], index: 4, kind: input, shape index: {}]
  %s5 = inlined_call_operand.vmem [shape: f32[1,16], index: 5, kind: input, shape index: {}]
  %s6 = inlined_call_operand.vmem [shape: f32[1,16], index: 6, kind: input, shape index: {}]
  %s7 = inlined_call_operand.vmem [shape: f32[16,16], index: 7, kind: output, shape index: {0}]
  %s8 = inlined_call_operand.vmem [shape: f32[16,16], index: 8, kind: output, shape index: {1}]
  %9 = xla_tuple %s7, %s8
  %s10 = sld [smem:[#allocation0]]
  $region69: #{dyresgen_forward.18} parent=0
    _
  %s12 = ssub.s32 1, %s10
  %s13 = scalar_select 0, %s12, %s10
  loop: start=0, step=1, limit=4
  $region2: #{dyresgen_forward.18} parent=0 // loop_pre_header
    _
  $region3: #{dyresgen_forward.18} parent=0 // loop_header
    %s15 = sphi 0, %s19
    %p16 = scmp.ge.s32.totalorder %s15, 4
    %s25 = sphi 0, %s27
    %s28 = sphi 0, %s25
    %s29 = sphi 0, %s28
    %s45 = sphi 0, %s29
    %s49 = sphi 0, %s49
    %s51 = sphi 0, %s49
    %s52 = sphi 0, %s51
    %s66 = sphi 0, %s52
    %s70 = sphi 0, %s70
    %s72 = sphi 0, %s70
    %s73 = sphi 0, %s72
    %s87 = sphi 0, %s73
    %s91 = sphi 0, %s91
    %s93 = sphi 0, %s91
    %s94 = sphi 0, %s93
    %s108 = sphi 0, %s94
    %s112 = sphi 0, %s112
    %s114 = sphi 0, %s112
    %s115 = sphi 0, %s114
    %s129 = sphi 0, %s115
    %s133 = sphi 0, %s133
    %s135 = sphi 0, %s133
    %s136 = sphi 0, %s135
    %s150 = sphi 0, %s136
    %s154 = sphi 0, %s154
    %s156 = sphi 0, %s154
    %s157 = sphi 0, %s156
    %s171 = sphi 0, %s157
    %s177 = sphi 0, %s179
    %s180 = sphi 0, %s177
    %s181 = sphi 0, %s180
    %s197 = sphi 0, %s181
    %s203 = sphi 0, %s205
    %s206 = sphi 0, %s203
    %s207 = sphi 0, %s206
    %s223 = sphi 0, %s207
  $region4: #{dyresgen_forward.18} parent=0 // loop_header_branch
    %18 = sbr.rel (%p16) target = $region8
  $region5: #{dyresgen_forward.18} parent=0 // loop_body
    %s20 = ssub.s32 %s15, 1
    %s21 = ssub.s32 %s15, 2
    %s22 = sadd.s32 %s15, 1
    %s23 = ssub.s32 %s15, %s22
    %p24 = scmp.eq.s32.totalorder %s23, 0
    %s26 = sadd.s32 %s25, 1
    %s27 = scalar_select %p24, %s25, %s26
    %p30 = pneg %p24
    %p31 = scmp.eq.s32.totalorder %s15, 1
    %p32 = por %p30, %p31
    %p33 = scmp.ne.s32.totalorder %s25, %s28
    %p34 = scmp.eq.s32.totalorder %s15, 0
    %p35 = por %p33, %p34
    %p36 = scmp.ne.s32.totalorder %s25, %s28
    %p37 = scmp.eq.s32.totalorder %s20, 1
    %p38 = por %p36, %p37
    %p39 = scmp.ne.s32.totalorder %s28, %s29
    %p40 = scmp.eq.s32.totalorder %s20, 0
    %p41 = por %p39, %p40
    %p42 = scmp.ne.s32.totalorder %s28, %s29
    %p43 = scmp.eq.s32.totalorder %s21, 1
    %p44 = por %p42, %p43
    %p46 = scmp.ne.s32.totalorder %s29, %s45
    %p47 = scmp.eq.s32.totalorder %s21, 0
    %p48 = por %p46, %p47
    %s50 = sadd.s32 %s49, 1
    %p53 = scmp.eq.s32.totalorder %s15, 1
    %p54 = scmp.ne.s32.totalorder %s49, %s51
    %p55 = scmp.eq.s32.totalorder %s15, 0
    %p56 = por %p54, %p55
    %p57 = scmp.ne.s32.totalorder %s49, %s51
    %p58 = scmp.eq.s32.totalorder %s20, 1
    %p59 = por %p57, %p58
    %p60 = scmp.ne.s32.totalorder %s51, %s52
    %p61 = scmp.eq.s32.totalorder %s20, 0
    %p62 = por %p60, %p61
    %p63 = scmp.ne.s32.totalorder %s51, %s52
    %p64 = scmp.eq.s32.totalorder %s21, 1
    %p65 = por %p63, %p64
    %p67 = scmp.ne.s32.totalorder %s52, %s66
    %p68 = scmp.eq.s32.totalorder %s21, 0
    %p69 = por %p67, %p68
    %s71 = sadd.s32 %s70, 1
    %p74 = scmp.eq.s32.totalorder %s15, 1
    %p75 = scmp.ne.s32.totalorder %s70, %s72
    %p76 = scmp.eq.s32.totalorder %s15, 0
    %p77 = por %p75, %p76
    %p78 = scmp.ne.s32.totalorder %s70, %s72
    %p79 = scmp.eq.s32.totalorder %s20, 1
    %p80 = por %p78, %p79
    %p81 = scmp.ne.s32.totalorder %s72, %s73
    %p82 = scmp.eq.s32.totalorder %s20, 0
    %p83 = por %p81, %p82
    %p84 = scmp.ne.s32.totalorder %s72, %s73
    %p85 = scmp.eq.s32.totalorder %s21, 1
    %p86 = por %p84, %p85
    %p88 = scmp.ne.s32.totalorder %s73, %s87
    %p89 = scmp.eq.s32.totalorder %s21, 0
    %p90 = por %p88, %p89
    %s92 = sadd.s32 %s91, 1
    %p95 = scmp.eq.s32.totalorder %s15, 1
    %p96 = scmp.ne.s32.totalorder %s91, %s93
    %p97 = scmp.eq.s32.totalorder %s15, 0
    %p98 = por %p96, %p97
    %p99 = scmp.ne.s32.totalorder %s91, %s93
    %p100 = scmp.eq.s32.totalorder %s20, 1
    %p101 = por %p99, %p100
    %p102 = scmp.ne.s32.totalorder %s93, %s94
    %p103 = scmp.eq.s32.totalorder %s20, 0
    %p104 = por %p102, %p103
    %p105 = scmp.ne.s32.totalorder %s93, %s94
    %p106 = scmp.eq.s32.totalorder %s21, 1
    %p107 = por %p105, %p106
    %p109 = scmp.ne.s32.totalorder %s94, %s108
    %p110 = scmp.eq.s32.totalorder %s21, 0
    %p111 = por %p109, %p110
    %s113 = sadd.s32 %s112, 1
    %p116 = scmp.eq.s32.totalorder %s15, 1
    %p117 = scmp.ne.s32.totalorder %s112, %s114
    %p118 = scmp.eq.s32.totalorder %s15, 0
    %p119 = por %p117, %p118
    %p120 = scmp.ne.s32.totalorder %s112, %s114
    %p121 = scmp.eq.s32.totalorder %s20, 1
    %p122 = por %p120, %p121
    %p123 = scmp.ne.s32.totalorder %s114, %s115
    %p124 = scmp.eq.s32.totalorder %s20, 0
    %p125 = por %p123, %p124
    %p126 = scmp.ne.s32.totalorder %s114, %s115
    %p127 = scmp.eq.s32.totalorder %s21, 1
    %p128 = por %p126, %p127
    %p130 = scmp.ne.s32.totalorder %s115, %s129
    %p131 = scmp.eq.s32.totalorder %s21, 0
    %p132 = por %p130, %p131
    %s134 = sadd.s32 %s133, 1
    %p137 = scmp.eq.s32.totalorder %s15, 1
    %p138 = scmp.ne.s32.totalorder %s133, %s135
    %p139 = scmp.eq.s32.totalorder %s15, 0
    %p140 = por %p138, %p139
    %p141 = scmp.ne.s32.totalorder %s133, %s135
    %p142 = scmp.eq.s32.totalorder %s20, 1
    %p143 = por %p141, %p142
    %p144 = scmp.ne.s32.totalorder %s135, %s136
    %p145 = scmp.eq.s32.totalorder %s20, 0
    %p146 = por %p144, %p145
    %p147 = scmp.ne.s32.totalorder %s135, %s136
    %p148 = scmp.eq.s32.totalorder %s21, 1
    %p149 = por %p147, %p148
    %p151 = scmp.ne.s32.totalorder %s136, %s150
    %p152 = scmp.eq.s32.totalorder %s21, 0
    %p153 = por %p151, %p152
    %s155 = sadd.s32 %s154, 1
    %p158 = scmp.eq.s32.totalorder %s15, 1
    %p159 = scmp.ne.s32.totalorder %s154, %s156
    %p160 = scmp.eq.s32.totalorder %s15, 0
    %p161 = por %p159, %p160
    %p162 = scmp.ne.s32.totalorder %s154, %s156
    %p163 = scmp.eq.s32.totalorder %s20, 1
    %p164 = por %p162, %p163
    %p165 = scmp.ne.s32.totalorder %s156, %s157
    %p166 = scmp.eq.s32.totalorder %s20, 0
    %p167 = por %p165, %p166
    %p168 = scmp.ne.s32.totalorder %s156, %s157
    %p169 = scmp.eq.s32.totalorder %s21, 1
    %p170 = por %p168, %p169
    %p172 = scmp.ne.s32.totalorder %s157, %s171
    %p173 = scmp.eq.s32.totalorder %s21, 0
    %p174 = por %p172, %p173
    %s175 = ssub.s32 %s15, %s22
    %p176 = scmp.eq.s32.totalorder %s175, 0
    %s178 = sadd.s32 %s177, 1
    %s179 = scalar_select %p176, %s177, %s178
    %p182 = pneg %p176
    %p183 = scmp.eq.s32.totalorder %s15, 1
    %p184 = por %p182, %p183
    %p185 = scmp.ne.s32.totalorder %s177, %s180
    %p186 = scmp.eq.s32.totalorder %s15, 0
    %p187 = por %p185, %p186
    %p188 = scmp.ne.s32.totalorder %s177, %s180
    %p189 = scmp.eq.s32.totalorder %s20, 1
    %p190 = por %p188, %p189
    %p191 = scmp.ne.s32.totalorder %s180, %s181
    %p192 = scmp.eq.s32.totalorder %s20, 0
    %p193 = por %p191, %p192
    %p194 = scmp.ne.s32.totalorder %s180, %s181
    %p195 = scmp.eq.s32.totalorder %s21, 1
    %p196 = por %p194, %p195
    %p198 = scmp.ne.s32.totalorder %s181, %s197
    %p199 = scmp.eq.s32.totalorder %s21, 0
    %p200 = por %p198, %p199
    %s201 = ssub.s32 %s15, %s22
    %p202 = scmp.eq.s32.totalorder %s201, 0
    %s204 = sadd.s32 %s203, 1
    %s205 = scalar_select %p202, %s203, %s204
    %p208 = pneg %p202
    %p209 = scmp.eq.s32.totalorder %s15, 1
    %p210 = por %p208, %p209
    %p211 = scmp.ne.s32.totalorder %s203, %s206
    %p212 = scmp.eq.s32.totalorder %s15, 0
    %p213 = por %p211, %p212
    %p214 = scmp.ne.s32.totalorder %s203, %s206
    %p215 = scmp.eq.s32.totalorder %s20, 1
    %p216 = por %p214, %p215
    %p217 = scmp.ne.s32.totalorder %s206, %s207
    %p218 = scmp.eq.s32.totalorder %s20, 0
    %p219 = por %p217, %p218
    %p220 = scmp.ne.s32.totalorder %s206, %s207
    %p221 = scmp.eq.s32.totalorder %s21, 1
    %p222 = por %p220, %p221
    %p224 = scmp.ne.s32.totalorder %s207, %s223
    %p225 = scmp.eq.s32.totalorder %s21, 0
    %p226 = por %p224, %p225
    %p227 = scmp.le.s32.totalorder 1, %s15
    %p228 = scmp.lt.s32.totalorder %s15, 3
    %p229 = pnand %p227, %p228
    %p230 = pneg %p229
    // Predicated region
    $region9: #{dyresgen_forward.18} parent=5 // pred_check
      _
    $region10: #{dyresgen_forward.18} parent=5 // pred_check_branch
      %232 = sbr.rel (%p229) target = $region12
    $region11: #{dyresgen_forward.18} parent=5 // pred_region
      %s233 = ssub.s32 %s15, 1
      // Predicated region
      $region13: #{dyresgen_forward.18} parent=11 // pred_check
        %p234 = pneg %p62
      $region14: #{dyresgen_forward.18} parent=11 // pred_check_branch
        %236 = sbr.rel (%p234) target = $region16
      $region15: #{dyresgen_forward.18} parent=11 // pred_region
        _
      $region16: #{dyresgen_forward.18} parent=11 // pred_fallthru
        _
      // Predicated region
      $region17: #{dyresgen_forward.18} parent=11 // pred_check
        %p237 = pneg %p83
      $region18: #{dyresgen_forward.18} parent=11 // pred_check_branch
        %239 = sbr.rel (%p237) target = $region20
      $region19: #{dyresgen_forward.18} parent=11 // pred_region
        _
      $region20: #{dyresgen_forward.18} parent=11 // pred_fallthru
        _
      // Predicated region
      $region21: #{dyresgen_forward.18} parent=11 // pred_check
        %p240 = pneg %p104
      $region22: #{dyresgen_forward.18} parent=11 // pred_check_branch
        %242 = sbr.rel (%p240) target = $region24
      $region23: #{dyresgen_forward.18} parent=11 // pred_region
        _
      $region24: #{dyresgen_forward.18} parent=11 // pred_fallthru
        _
      // Predicated region
      $region25: #{dyresgen_forward.18} parent=11 // pred_check
        %p243 = pneg %p125
      $region26: #{dyresgen_forward.18} parent=11 // pred_check_branch
        %245 = sbr.rel (%p243) target = $region28
      $region27: #{dyresgen_forward.18} parent=11 // pred_region
        _
      $region28: #{dyresgen_forward.18} parent=11 // pred_fallthru
        _
      // Predicated region
      $region29: #{dyresgen_forward.18} parent=11 // pred_check
        %p246 = pneg %p146
      $region30: #{dyresgen_forward.18} parent=11 // pred_check_branch
        %248 = sbr.rel (%p246) target = $region32
      $region31: #{dyresgen_forward.18} parent=11 // pred_region
        _
      $region32: #{dyresgen_forward.18} parent=11 // pred_fallthru
        _
      // Predicated region
      $region33: #{dyresgen_forward.18} parent=11 // pred_check
        %p249 = pneg %p167
      $region34: #{dyresgen_forward.18} parent=11 // pred_check_branch
        %251 = sbr.rel (%p249) target = $region36
      $region35: #{dyresgen_forward.18} parent=11 // pred_region
        _
      $region36: #{dyresgen_forward.18} parent=11 // pred_fallthru
        _
    $region12: #{dyresgen_forward.18} parent=5 // pred_fallthru
      _
    %p252 = scmp.lt.s32.totalorder %s15, 2
    // Predicated region
    $region37: #{dyresgen_forward.18} parent=5 // pred_check
      %p253 = pneg %p252
    $region38: #{dyresgen_forward.18} parent=5 // pred_check_branch
      %255 = sbr.rel (%p253) target = $region40
    $region39: #{dyresgen_forward.18} parent=5 // pred_region
      // Predicated region
      $region41: #{dyresgen_forward.18} parent=39 // pred_check
        %p256 = pneg %p35
      $region42: #{dyresgen_forward.18} parent=39 // pred_check_branch
        %258 = sbr.rel (%p256) target = $region44
      $region43: #{dyresgen_forward.18} parent=39 // pred_region
        %p259 = scmp.lt.s32.totalorder %s15, 1
        %s260 = scalar_select %p259, %s15, 1
        %s261 = smul.addr %s260, 8
        %s262 = scalar_lea.vmem %s0, %s261
      $region44: #{dyresgen_forward.18} parent=39 // pred_fallthru
        _
    $region40: #{dyresgen_forward.18} parent=5 // pred_fallthru
      _
    %p263 = scmp.le.s32.totalorder 1, %s15
    %p264 = scmp.lt.s32.totalorder %s15, 3
    %p265 = pnand %p263, %p264
    %p266 = pneg %p265
    // Predicated region
    $region45: #{dyresgen_forward.18} parent=5 // pred_check
      _
    $region46: #{dyresgen_forward.18} parent=5 // pred_check_branch
      %268 = sbr.rel (%p265) target = $region48
    $region47: #{dyresgen_forward.18} parent=5 // pred_region
      %s269 = ssub.s32 %s15, 1
      %p270 = scmp.lt.s32.totalorder %s20, 1
      %s271 = scalar_select %p270, %s20, 1
      %s272 = smul.addr %s271, 8
      %s273 = scalar_lea.vmem %s0, %s272
      %p274 = pneg %p41
      %p275 = pneg %p38
      %p276 = pneg %p62
      %p277 = pneg %p59
      %p278 = pneg %p83
      %p279 = pneg %p80
      %p280 = pneg %p104
      %p281 = pneg %p101
      %p282 = pneg %p125
      %p283 = pneg %p122
      %p284 = pneg %p146
      %p285 = pneg %p143
      %p286 = pneg %p167
      %p287 = pneg %p164
      %p288 = pneg %p193
      %p289 = pneg %p190
      %p290 = scmp.lt.s32.totalorder %s20, 1
      %s291 = scalar_select %p290, %s20, 1
      %s292 = smul.addr %s291, 8
      %s293 = scalar_lea.vmem %s7, %s292
      %p294 = pneg %p219
      %p295 = pneg %p216
      %p296 = scmp.lt.s32.totalorder %s20, 1
      %s297 = scalar_select %p296, %s20, 1
      %s298 = smul.addr %s297, 8
      %s299 = scalar_lea.vmem %s8, %s298
      %p300 = scmp.lt.s32.totalorder %s20, 1
      %s301 = scalar_select %p300, %s20, 1
      %s302 = smul.addr %s301, 8
      %s303 = scalar_lea.vmem %s0, %s302
      %p304 = scmp.lt.s32.totalorder %s20, 1
      %s305 = scalar_select %p304, %s20, 1
      %s306 = smul.addr %s305, 8
      %s307 = scalar_lea.vmem %s7, %s306
      %p308 = scmp.lt.s32.totalorder %s20, 1
      %s309 = scalar_select %p308, %s20, 1
      %s310 = smul.addr %s309, 8
      %s311 = scalar_lea.vmem %s8, %s310
      %v313 = vld [vmem:[%s303] sm:$0xff]
      %v314 = vpack.c.bf16 %v313, %v313
      %v315 = vld [vmem:[%s1] sm:$0xf]
      %v316 = vld [vmem:[%s1 + $0x4] sm:$0xf]
      %v317 = vld [vmem:[%s2] sm:$0x1]
      %v319 = vlaneseq
      %v320 = vshrl.u32 %v319, 7
      %v321 = vsub.s32 0, %v320
      %v322 = vrot.slane %v317, %v321
      %v326 = vunpack.c.l.b16 %v315
      %v327 = vunpack.c.l.b16 %v316
      %v328 = vpack.c.b16 %v327, %v326
      %vm330 = vcmask 130048
      %v332 = vsel %vm330, %v314, 0
      %334 = vmatprep.subr.bf16.mxu0 0
      %335 = vmatpush1.bf16.msra.mxu0 %v328
      %336 = vmatprep.subr.bf16.mxu0 0
      %337 = vmatpush1.bf16.msra.mxu0 0
      %338 = vmatprep.subr.bf16.mxu0 0
      %339 = vmatpush1.bf16.msra.mxu0 0
      %340 = vmatprep.subr.bf16.mxu0 0
      %341 = vmatpush1.bf16.msra.mxu0 0
      %342 = vmatprep.subr.bf16.mxu0 0
      %343 = vmatpush1.bf16.msra.mxu0 0
      %344 = vmatprep.subr.bf16.mxu0 0
      %345 = vmatpush1.bf16.msra.mxu0 0
      %346 = vmatprep.subr.bf16.mxu0 0
      %347 = vmatpush1.bf16.msra.mxu0 0
      %348 = vmatprep.subr.bf16.mxu0 0
      %349 = vmatpush1.bf16.msra.mxu0 0
      %350 = vmatprep.subr.bf16.mxu0 0
      %351 = vmatpush1.bf16.msra.mxu0 0
      %352 = vmatprep.subr.bf16.mxu0 0
      %353 = vmatpush1.bf16.msra.mxu0 0
      %354 = vmatprep.subr.bf16.mxu0 0
      %355 = vmatpush1.bf16.msra.mxu0 0
      %356 = vmatprep.subr.bf16.mxu0 0
      %357 = vmatpush1.bf16.msra.mxu0 0
      %358 = vmatprep.subr.bf16.mxu0 0
      %359 = vmatpush1.bf16.msra.mxu0 0
      %360 = vmatprep.subr.bf16.mxu0 0
      %361 = vmatpush1.bf16.msra.mxu0 0
      %362 = vmatprep.subr.bf16.mxu0 0
      %363 = vmatpush1.bf16.msra.mxu0 0
      %364 = vmatprep.subr.bf16.mxu0 0
      %365 = vmatpush1.bf16.msra.mxu0 0
      %366 = vmatprep.mubr.bf16.mxu0 0
      %367 = vmatmul.mubr.bf16.gmra.mrb[0].mxu0 %v332
      %v368 = vpop.f32.mrb[0].mxu0
      %v369 = vadd.f32 %v322, %v368
      %v370 = vpop.f32.mrb[0].mxu0
      %v371 = vpop.f32.mrb[0].mxu0
      %v372 = vpop.f32.mrb[0].mxu0
      %373 = vdwg.mxu0
      %v374 = vmax.f32 %v369, 0.0
      %v375 = vpack.c.bf16 %v374, %v374
      %v376 = vld [vmem:[%s3] sm:$0xf]
      %v377 = vld [vmem:[%s3 + $0x4] sm:$0xf]
      %v378 = vld [vmem:[%s3 + $0x8] sm:$0xf]
      %v379 = vld [vmem:[%s3 + $0xc] sm:$0xf]
      %v380 = vld [vmem:[%s4] sm:$0x1]
      %v382 = vlaneseq
      %v383 = vshrl.u32 %v382, 7
      %v384 = vsub.s32 0, %v383
      %v385 = vrot.slane %v380, %v384
      %v391 = vunpack.c.l.b16 %v376
      %v392 = vunpack.c.l.b16 %v377
      %v393 = vunpack.c.l.b16 %v378
      %v394 = vunpack.c.l.b16 %v379
      %v395 = vpack.c.b16 %v392, %v391
      %v396 = vpack.c.b16 %v394, %v393
      %vm399 = vcmask 261120
      %v401 = vsel %vm399, %v375, 0
      %403 = vmatprep.subr.bf16.mxu0 0
      %404 = vmatpush1.bf16.msra.mxu0 %v395
      %405 = vmatprep.subr.bf16.mxu0 0
      %406 = vmatpush1.bf16.msra.mxu0 %v396
      %407 = vmatprep.subr.bf16.mxu0 0
      %408 = vmatpush1.bf16.msra.mxu0 0
      %409 = vmatprep.subr.bf16.mxu0 0
      %410 = vmatpush1.bf16.msra.mxu0 0
      %411 = vmatprep.subr.bf16.mxu0 0
      %412 = vmatpush1.bf16.msra.mxu0 0
      %413 = vmatprep.subr.bf16.mxu0 0
      %414 = vmatpush1.bf16.msra.mxu0 0
      %415 = vmatprep.subr.bf16.mxu0 0
      %416 = vmatpush1.bf16.msra.mxu0 0
      %417 = vmatprep.subr.bf16.mxu0 0
      %418 = vmatpush1.bf16.msra.mxu0 0
      %419 = vmatprep.subr.bf16.mxu0 0
      %420 = vmatpush1.bf16.msra.mxu0 0
      %421 = vmatprep.subr.bf16.mxu0 0
      %422 = vmatpush1.bf16.msra.mxu0 0
      %423 = vmatprep.subr.bf16.mxu0 0
      %424 = vmatpush1.bf16.msra.mxu0 0
      %425 = vmatprep.subr.bf16.mxu0 0
      %426 = vmatpush1.bf16.msra.mxu0 0
      %427 = vmatprep.subr.bf16.mxu0 0
      %428 = vmatpush1.bf16.msra.mxu0 0
      %429 = vmatprep.subr.bf16.mxu0 0
      %430 = vmatpush1.bf16.msra.mxu0 0
      %431 = vmatprep.subr.bf16.mxu0 0
      %432 = vmatpush1.bf16.msra.mxu0 0
      %433 = vmatprep.subr.bf16.mxu0 0
      %434 = vmatpush1.bf16.msra.mxu0 0
      %435 = vmatprep.mubr.bf16.mxu0 0
      %436 = vmatmul.mubr.bf16.gmra.mrb[0].mxu0 %v401
      %v437 = vpop.f32.mrb[0].mxu0
      %v438 = vadd.f32 %v385, %v437
      %v439 = vpop.f32.mrb[0].mxu0
      %v440 = vpop.f32.mrb[0].mxu0
      %v441 = vpop.f32.mrb[0].mxu0
      %442 = vdwg.mxu0
      %443 = vst.msk [vmem:[%s307] sm:$0xff] %vm330, %v438
      %v444 = vsel %vm330, %v438, 0.0
      %445 = vadd.xlane.f32.xlu0 %v444
      %v446 = vpop.xlane.xlu0 %445
      %v447 = vrcp.pop 16.0
      %v448 = vmul.f32 %v446, %v447
      %v449 = vsub.f32 %v438, %v448
      %v450 = vmul.f32 %v449, %v449
      %v451 = vsel %vm330, %v450, 0.0
      %452 = vadd.xlane.f32.xlu0 %v451
      %v453 = vpop.xlane.xlu0 %452
      %v454 = vmul.f32 %v453, %v447
      %v455 = vadd.f32 %v454, 1e-05
      %v456 = vrsqrt.pop %v455
      %v457 = vmul.f32 %v449, %v456
      %v458 = vld [vmem:[%s5] sm:$0x1]
      %v460 = vlaneseq
      %v461 = vshrl.u32 %v460, 7
      %v462 = vsub.s32 0, %v461
      %v463 = vrot.slane %v458, %v462
      %v465 = vmul.f32 %v457, %v463
      %v466 = vld [vmem:[%s6] sm:$0x1]
      %v468 = vlaneseq
      %v469 = vshrl.u32 %v468, 7
      %v470 = vsub.s32 0, %v469
      %v471 = vrot.slane %v466, %v470
      %v473 = vadd.f32 %v465, %v471
      %v474 = vmax.f32 %v473, 0.0
      %475 = vst.msk [vmem:[%s311] sm:$0xff] %vm330, %v474
      %p476 = scmp.lt.s32.totalorder %s20, 1
      %s477 = scalar_select %p476, %s20, 1
      %s478 = smul.addr %s477, 8
      %s479 = scalar_lea.vmem %s7, %s478
      %p480 = scmp.lt.s32.totalorder %s20, 1
      %s481 = scalar_select %p480, %s20, 1
      %s482 = smul.addr %s481, 8
      %s483 = scalar_lea.vmem %s8, %s482
      // Predicated region
      $region49: #{dyresgen_forward.18} parent=47 // pred_check
        %p484 = pneg %p190
      $region50: #{dyresgen_forward.18} parent=47 // pred_check_branch
        %486 = sbr.rel (%p484) target = $region52
      $region51: #{dyresgen_forward.18} parent=47 // pred_region
        _
      $region52: #{dyresgen_forward.18} parent=47 // pred_fallthru
        _
      // Predicated region
      $region53: #{dyresgen_forward.18} parent=47 // pred_check
        %p487 = pneg %p216
      $region54: #{dyresgen_forward.18} parent=47 // pred_check_branch
        %489 = sbr.rel (%p487) target = $region56
      $region55: #{dyresgen_forward.18} parent=47 // pred_region
        _
      $region56: #{dyresgen_forward.18} parent=47 // pred_fallthru
        _
    $region48: #{dyresgen_forward.18} parent=5 // pred_fallthru
      _
    %p490 = scmp.le.s32.totalorder 2, %s15
    // Predicated region
    $region57: #{dyresgen_forward.18} parent=5 // pred_check
      %p491 = pneg %p490
    $region58: #{dyresgen_forward.18} parent=5 // pred_check_branch
      %493 = sbr.rel (%p491) target = $region60
    $region59: #{dyresgen_forward.18} parent=5 // pred_region
      %s494 = ssub.s32 %s15, 2
      // Predicated region
      $region61: #{dyresgen_forward.18} parent=59 // pred_check
        %p495 = pneg %p196
      $region62: #{dyresgen_forward.18} parent=59 // pred_check_branch
        %497 = sbr.rel (%p495) target = $region64
      $region63: #{dyresgen_forward.18} parent=59 // pred_region
        %p498 = scmp.lt.s32.totalorder %s21, 1
        %s499 = scalar_select %p498, %s21, 1
        %s500 = smul.addr %s499, 8
        %s501 = scalar_lea.vmem %s7, %s500
      $region64: #{dyresgen_forward.18} parent=59 // pred_fallthru
        _
      // Predicated region
      $region65: #{dyresgen_forward.18} parent=59 // pred_check
        %p502 = pneg %p222
      $region66: #{dyresgen_forward.18} parent=59 // pred_check_branch
        %504 = sbr.rel (%p502) target = $region68
      $region67: #{dyresgen_forward.18} parent=59 // pred_region
        %p505 = scmp.lt.s32.totalorder %s21, 1
        %s506 = scalar_select %p505, %s21, 1
        %s507 = smul.addr %s506, 8
        %s508 = scalar_lea.vmem %s8, %s507
      $region68: #{dyresgen_forward.18} parent=59 // pred_fallthru
        _
    $region60: #{dyresgen_forward.18} parent=5 // pred_fallthru
      _
  $region6: #{dyresgen_forward.18} parent=0 // loop_footer
    %s19 = sadd.s32 1, %s15
  $region7: #{dyresgen_forward.18} parent=0 // loop_footer_branch
    %14 = sbr.rel target = $region3
  $region8: #{dyresgen_forward.18} parent=0 // loop_exit
    _

// kernel: dyresgen_forward.20
$region0: #{dyresgen_forward.20}
  #allocation0 [shape = 'u32[]', space=smem, size = 0x4, offset = 0x4, fixed_abs, tag = 'smem constant byte address 0x4 - core index']
  #allocation1 [shape = 'u32[144,128]{1,0:T(1,128)}', space=vmem, size = 0x12000, scoped, tag = 'internal scratch']
  %s0 = inlined_call_operand.vmem [shape: f32[16,16], index: 0, kind: input, shape index: {}]
  %s1 = inlined_call_operand.vmem [shape: bf16[16,32], index: 1, kind: input, shape index: {}]
  %s2 = inlined_call_operand.vmem [shape: f32[1,32], index: 2, kind: input, shape index: {}]
  %s3 = inlined_call_operand.vmem [shape: bf16[32,16], index: 3, kind: input, shape index: {}]
  %s4 = inlined_call_operand.vmem [shape: f32[1,16], index: 4, kind: input, shape index: {}]
  %s5 = inlined_call_operand.vmem [shape: f32[16,16], index: 5, kind: input, shape index: {}]
  %s6 = inlined_call_operand.vmem [shape: f32[1,16], index: 6, kind: input, shape index: {}]
  %s7 = inlined_call_operand.vmem [shape: f32[16,16], index: 7, kind: output, shape index: {0}]
  %s8 = inlined_call_operand.vmem [shape: f32[16,1], index: 8, kind: output, shape index: {1}]
  %9 = xla_tuple %s7, %s8
  %s10 = sld [smem:[#allocation0]]
  $region69: #{dyresgen_forward.20} parent=0
    _
  %s12 = ssub.s32 1, %s10
  %s13 = scalar_select 0, %s12, %s10
  loop: start=0, step=1, limit=4
  $region2: #{dyresgen_forward.20} parent=0 // loop_pre_header
    _
  $region3: #{dyresgen_forward.20} parent=0 // loop_header
    %s15 = sphi 0, %s19
    %p16 = scmp.ge.s32.totalorder %s15, 4
    %s25 = sphi 0, %s27
    %s28 = sphi 0, %s25
    %s29 = sphi 0, %s28
    %s45 = sphi 0, %s29
    %s49 = sphi 0, %s49
    %s51 = sphi 0, %s49
    %s52 = sphi 0, %s51
    %s66 = sphi 0, %s52
    %s70 = sphi 0, %s70
    %s72 = sphi 0, %s70
    %s73 = sphi 0, %s72
    %s87 = sphi 0, %s73
    %s91 = sphi 0, %s91
    %s93 = sphi 0, %s91
    %s94 = sphi 0, %s93
    %s108 = sphi 0, %s94
    %s112 = sphi 0, %s112
    %s114 = sphi 0, %s112
    %s115 = sphi 0, %s114
    %s129 = sphi 0, %s115
    %s135 = sphi 0, %s137
    %s138 = sphi 0, %s135
    %s139 = sphi 0, %s138
    %s155 = sphi 0, %s139
    %s159 = sphi 0, %s159
    %s161 = sphi 0, %s159
    %s162 = sphi 0, %s161
    %s176 = sphi 0, %s162
    %s182 = sphi 0, %s184
    %s185 = sphi 0, %s182
    %s186 = sphi 0, %s185
    %s202 = sphi 0, %s186
    %s208 = sphi 0, %s210
    %s211 = sphi 0, %s208
    %s212 = sphi 0, %s211
    %s228 = sphi 0, %s212
  $region4: #{dyresgen_forward.20} parent=0 // loop_header_branch
    %18 = sbr.rel (%p16) target = $region8
  $region5: #{dyresgen_forward.20} parent=0 // loop_body
    %s20 = ssub.s32 %s15, 1
    %s21 = ssub.s32 %s15, 2
    %s22 = sadd.s32 %s15, 1
    %s23 = ssub.s32 %s15, %s22
    %p24 = scmp.eq.s32.totalorder %s23, 0
    %s26 = sadd.s32 %s25, 1
    %s27 = scalar_select %p24, %s25, %s26
    %p30 = pneg %p24
    %p31 = scmp.eq.s32.totalorder %s15, 1
    %p32 = por %p30, %p31
    %p33 = scmp.ne.s32.totalorder %s25, %s28
    %p34 = scmp.eq.s32.totalorder %s15, 0
    %p35 = por %p33, %p34
    %p36 = scmp.ne.s32.totalorder %s25, %s28
    %p37 = scmp.eq.s32.totalorder %s20, 1
    %p38 = por %p36, %p37
    %p39 = scmp.ne.s32.totalorder %s28, %s29
    %p40 = scmp.eq.s32.totalorder %s20, 0
    %p41 = por %p39, %p40
    %p42 = scmp.ne.s32.totalorder %s28, %s29
    %p43 = scmp.eq.s32.totalorder %s21, 1
    %p44 = por %p42, %p43
    %p46 = scmp.ne.s32.totalorder %s29, %s45
    %p47 = scmp.eq.s32.totalorder %s21, 0
    %p48 = por %p46, %p47
    %s50 = sadd.s32 %s49, 1
    %p53 = scmp.eq.s32.totalorder %s15, 1
    %p54 = scmp.ne.s32.totalorder %s49, %s51
    %p55 = scmp.eq.s32.totalorder %s15, 0
    %p56 = por %p54, %p55
    %p57 = scmp.ne.s32.totalorder %s49, %s51
    %p58 = scmp.eq.s32.totalorder %s20, 1
    %p59 = por %p57, %p58
    %p60 = scmp.ne.s32.totalorder %s51, %s52
    %p61 = scmp.eq.s32.totalorder %s20, 0
    %p62 = por %p60, %p61
    %p63 = scmp.ne.s32.totalorder %s51, %s52
    %p64 = scmp.eq.s32.totalorder %s21, 1
    %p65 = por %p63, %p64
    %p67 = scmp.ne.s32.totalorder %s52, %s66
    %p68 = scmp.eq.s32.totalorder %s21, 0
    %p69 = por %p67, %p68
    %s71 = sadd.s32 %s70, 1
    %p74 = scmp.eq.s32.totalorder %s15, 1
    %p75 = scmp.ne.s32.totalorder %s70, %s72
    %p76 = scmp.eq.s32.totalorder %s15, 0
    %p77 = por %p75, %p76
    %p78 = scmp.ne.s32.totalorder %s70, %s72
    %p79 = scmp.eq.s32.totalorder %s20, 1
    %p80 = por %p78, %p79
    %p81 = scmp.ne.s32.totalorder %s72, %s73
    %p82 = scmp.eq.s32.totalorder %s20, 0
    %p83 = por %p81, %p82
    %p84 = scmp.ne.s32.totalorder %s72, %s73
    %p85 = scmp.eq.s32.totalorder %s21, 1
    %p86 = por %p84, %p85
    %p88 = scmp.ne.s32.totalorder %s73, %s87
    %p89 = scmp.eq.s32.totalorder %s21, 0
    %p90 = por %p88, %p89
    %s92 = sadd.s32 %s91, 1
    %p95 = scmp.eq.s32.totalorder %s15, 1
    %p96 = scmp.ne.s32.totalorder %s91, %s93
    %p97 = scmp.eq.s32.totalorder %s15, 0
    %p98 = por %p96, %p97
    %p99 = scmp.ne.s32.totalorder %s91, %s93
    %p100 = scmp.eq.s32.totalorder %s20, 1
    %p101 = por %p99, %p100
    %p102 = scmp.ne.s32.totalorder %s93, %s94
    %p103 = scmp.eq.s32.totalorder %s20, 0
    %p104 = por %p102, %p103
    %p105 = scmp.ne.s32.totalorder %s93, %s94
    %p106 = scmp.eq.s32.totalorder %s21, 1
    %p107 = por %p105, %p106
    %p109 = scmp.ne.s32.totalorder %s94, %s108
    %p110 = scmp.eq.s32.totalorder %s21, 0
    %p111 = por %p109, %p110
    %s113 = sadd.s32 %s112, 1
    %p116 = scmp.eq.s32.totalorder %s15, 1
    %p117 = scmp.ne.s32.totalorder %s112, %s114
    %p118 = scmp.eq.s32.totalorder %s15, 0
    %p119 = por %p117, %p118
    %p120 = scmp.ne.s32.totalorder %s112, %s114
    %p121 = scmp.eq.s32.totalorder %s20, 1
    %p122 = por %p120, %p121
    %p123 = scmp.ne.s32.totalorder %s114, %s115
    %p124 = scmp.eq.s32.totalorder %s20, 0
    %p125 = por %p123, %p124
    %p126 = scmp.ne.s32.totalorder %s114, %s115
    %p127 = scmp.eq.s32.totalorder %s21, 1
    %p128 = por %p126, %p127
    %p130 = scmp.ne.s32.totalorder %s115, %s129
    %p131 = scmp.eq.s32.totalorder %s21, 0
    %p132 = por %p130, %p131
    %s133 = ssub.s32 %s15, %s22
    %p134 = scmp.eq.s32.totalorder %s133, 0
    %s136 = sadd.s32 %s135, 1
    %s137 = scalar_select %p134, %s135, %s136
    %p140 = pneg %p134
    %p141 = scmp.eq.s32.totalorder %s15, 1
    %p142 = por %p140, %p141
    %p143 = scmp.ne.s32.totalorder %s135, %s138
    %p144 = scmp.eq.s32.totalorder %s15, 0
    %p145 = por %p143, %p144
    %p146 = scmp.ne.s32.totalorder %s135, %s138
    %p147 = scmp.eq.s32.totalorder %s20, 1
    %p148 = por %p146, %p147
    %p149 = scmp.ne.s32.totalorder %s138, %s139
    %p150 = scmp.eq.s32.totalorder %s20, 0
    %p151 = por %p149, %p150
    %p152 = scmp.ne.s32.totalorder %s138, %s139
    %p153 = scmp.eq.s32.totalorder %s21, 1
    %p154 = por %p152, %p153
    %p156 = scmp.ne.s32.totalorder %s139, %s155
    %p157 = scmp.eq.s32.totalorder %s21, 0
    %p158 = por %p156, %p157
    %s160 = sadd.s32 %s159, 1
    %p163 = scmp.eq.s32.totalorder %s15, 1
    %p164 = scmp.ne.s32.totalorder %s159, %s161
    %p165 = scmp.eq.s32.totalorder %s15, 0
    %p166 = por %p164, %p165
    %p167 = scmp.ne.s32.totalorder %s159, %s161
    %p168 = scmp.eq.s32.totalorder %s20, 1
    %p169 = por %p167, %p168
    %p170 = scmp.ne.s32.totalorder %s161, %s162
    %p171 = scmp.eq.s32.totalorder %s20, 0
    %p172 = por %p170, %p171
    %p173 = scmp.ne.s32.totalorder %s161, %s162
    %p174 = scmp.eq.s32.totalorder %s21, 1
    %p175 = por %p173, %p174
    %p177 = scmp.ne.s32.totalorder %s162, %s176
    %p178 = scmp.eq.s32.totalorder %s21, 0
    %p179 = por %p177, %p178
    %s180 = ssub.s32 %s15, %s22
    %p181 = scmp.eq.s32.totalorder %s180, 0
    %s183 = sadd.s32 %s182, 1
    %s184 = scalar_select %p181, %s182, %s183
    %p187 = pneg %p181
    %p188 = scmp.eq.s32.totalorder %s15, 1
    %p189 = por %p187, %p188
    %p190 = scmp.ne.s32.totalorder %s182, %s185
    %p191 = scmp.eq.s32.totalorder %s15, 0
    %p192 = por %p190, %p191
    %p193 = scmp.ne.s32.totalorder %s182, %s185
    %p194 = scmp.eq.s32.totalorder %s20, 1
    %p195 = por %p193, %p194
    %p196 = scmp.ne.s32.totalorder %s185, %s186
    %p197 = scmp.eq.s32.totalorder %s20, 0
    %p198 = por %p196, %p197
    %p199 = scmp.ne.s32.totalorder %s185, %s186
    %p200 = scmp.eq.s32.totalorder %s21, 1
    %p201 = por %p199, %p200
    %p203 = scmp.ne.s32.totalorder %s186, %s202
    %p204 = scmp.eq.s32.totalorder %s21, 0
    %p205 = por %p203, %p204
    %s206 = ssub.s32 %s15, %s22
    %p207 = scmp.eq.s32.totalorder %s206, 0
    %s209 = sadd.s32 %s208, 1
    %s210 = scalar_select %p207, %s208, %s209
    %p213 = pneg %p207
    %p214 = scmp.eq.s32.totalorder %s15, 1
    %p215 = por %p213, %p214
    %p216 = scmp.ne.s32.totalorder %s208, %s211
    %p217 = scmp.eq.s32.totalorder %s15, 0
    %p218 = por %p216, %p217
    %p219 = scmp.ne.s32.totalorder %s208, %s211
    %p220 = scmp.eq.s32.totalorder %s20, 1
    %p221 = por %p219, %p220
    %p222 = scmp.ne.s32.totalorder %s211, %s212
    %p223 = scmp.eq.s32.totalorder %s20, 0
    %p224 = por %p222, %p223
    %p225 = scmp.ne.s32.totalorder %s211, %s212
    %p226 = scmp.eq.s32.totalorder %s21, 1
    %p227 = por %p225, %p226
    %p229 = scmp.ne.s32.totalorder %s212, %s228
    %p230 = scmp.eq.s32.totalorder %s21, 0
    %p231 = por %p229, %p230
    %p232 = scmp.le.s32.totalorder 1, %s15
    %p233 = scmp.lt.s32.totalorder %s15, 3
    %p234 = pnand %p232, %p233
    %p235 = pneg %p234
    // Predicated region
    $region9: #{dyresgen_forward.20} parent=5 // pred_check
      _
    $region10: #{dyresgen_forward.20} parent=5 // pred_check_branch
      %237 = sbr.rel (%p234) target = $region12
    $region11: #{dyresgen_forward.20} parent=5 // pred_region
      %s238 = ssub.s32 %s15, 1
      // Predicated region
      $region13: #{dyresgen_forward.20} parent=11 // pred_check
        %p239 = pneg %p62
      $region14: #{dyresgen_forward.20} parent=11 // pred_check_branch
        %241 = sbr.rel (%p239) target = $region16
      $region15: #{dyresgen_forward.20} parent=11 // pred_region
        _
      $region16: #{dyresgen_forward.20} parent=11 // pred_fallthru
        _
      // Predicated region
      $region17: #{dyresgen_forward.20} parent=11 // pred_check
        %p242 = pneg %p83
      $region18: #{dyresgen_forward.20} parent=11 // pred_check_branch
        %244 = sbr.rel (%p242) target = $region20
      $region19: #{dyresgen_forward.20} parent=11 // pred_region
        _
      $region20: #{dyresgen_forward.20} parent=11 // pred_fallthru
        _
      // Predicated region
      $region21: #{dyresgen_forward.20} parent=11 // pred_check
        %p245 = pneg %p104
      $region22: #{dyresgen_forward.20} parent=11 // pred_check_branch
        %247 = sbr.rel (%p245) target = $region24
      $region23: #{dyresgen_forward.20} parent=11 // pred_region
        _
      $region24: #{dyresgen_forward.20} parent=11 // pred_fallthru
        _
      // Predicated region
      $region25: #{dyresgen_forward.20} parent=11 // pred_check
        %p248 = pneg %p125
      $region26: #{dyresgen_forward.20} parent=11 // pred_check_branch
        %250 = sbr.rel (%p248) target = $region28
      $region27: #{dyresgen_forward.20} parent=11 // pred_region
        _
      $region28: #{dyresgen_forward.20} parent=11 // pred_fallthru
        _
      // Predicated region
      $region29: #{dyresgen_forward.20} parent=11 // pred_check
        %p251 = pneg %p172
      $region30: #{dyresgen_forward.20} parent=11 // pred_check_branch
        %253 = sbr.rel (%p251) target = $region32
      $region31: #{dyresgen_forward.20} parent=11 // pred_region
        _
      $region32: #{dyresgen_forward.20} parent=11 // pred_fallthru
        _
    $region12: #{dyresgen_forward.20} parent=5 // pred_fallthru
      _
    %p254 = scmp.lt.s32.totalorder %s15, 2
    // Predicated region
    $region33: #{dyresgen_forward.20} parent=5 // pred_check
      %p255 = pneg %p254
    $region34: #{dyresgen_forward.20} parent=5 // pred_check_branch
      %257 = sbr.rel (%p255) target = $region36
    $region35: #{dyresgen_forward.20} parent=5 // pred_region
      // Predicated region
      $region37: #{dyresgen_forward.20} parent=35 // pred_check
        %p258 = pneg %p35
      $region38: #{dyresgen_forward.20} parent=35 // pred_check_branch
        %260 = sbr.rel (%p258) target = $region40
      $region39: #{dyresgen_forward.20} parent=35 // pred_region
        %p261 = scmp.lt.s32.totalorder %s15, 1
        %s262 = scalar_select %p261, %s15, 1
        %s263 = smul.addr %s262, 8
        %s264 = scalar_lea.vmem %s0, %s263
      $region40: #{dyresgen_forward.20} parent=35 // pred_fallthru
        _
      // Predicated region
      $region41: #{dyresgen_forward.20} parent=35 // pred_check
        %p265 = pneg %p145
      $region42: #{dyresgen_forward.20} parent=35 // pred_check_branch
        %267 = sbr.rel (%p265) target = $region44
      $region43: #{dyresgen_forward.20} parent=35 // pred_region
        %p268 = scmp.lt.s32.totalorder %s15, 1
        %s269 = scalar_select %p268, %s15, 1
        %s270 = smul.addr %s269, 8
        %s271 = scalar_lea.vmem %s5, %s270
      $region44: #{dyresgen_forward.20} parent=35 // pred_fallthru
        _
    $region36: #{dyresgen_forward.20} parent=5 // pred_fallthru
      _
    %p272 = scmp.le.s32.totalorder 1, %s15
    %p273 = scmp.lt.s32.totalorder %s15, 3
    %p274 = pnand %p272, %p273
    %p275 = pneg %p274
    // Predicated region
    $region45: #{dyresgen_forward.20} parent=5 // pred_check
      _
    $region46: #{dyresgen_forward.20} parent=5 // pred_check_branch
      %277 = sbr.rel (%p274) target = $region48
    $region47: #{dyresgen_forward.20} parent=5 // pred_region
      %s278 = ssub.s32 %s15, 1
      %p279 = scmp.lt.s32.totalorder %s20, 1
      %s280 = scalar_select %p279, %s20, 1
      %s281 = smul.addr %s280, 8
      %s282 = scalar_lea.vmem %s0, %s281
      %p283 = pneg %p41
      %p284 = pneg %p38
      %p285 = pneg %p62
      %p286 = pneg %p59
      %p287 = pneg %p83
      %p288 = pneg %p80
      %p289 = pneg %p104
      %p290 = pneg %p101
      %p291 = pneg %p125
      %p292 = pneg %p122
      %p293 = scmp.lt.s32.totalorder %s20, 1
      %s294 = scalar_select %p293, %s20, 1
      %s295 = smul.addr %s294, 8
      %s296 = scalar_lea.vmem %s5, %s295
      %p297 = pneg %p151
      %p298 = pneg %p148
      %p299 = pneg %p172
      %p300 = pneg %p169
      %p301 = pneg %p198
      %p302 = pneg %p195
      %p303 = scmp.lt.s32.totalorder %s20, 1
      %s304 = scalar_select %p303, %s20, 1
      %s305 = smul.addr %s304, 8
      %s306 = scalar_lea.vmem %s7, %s305
      %p307 = pneg %p224
      %p308 = pneg %p221
      %p309 = scmp.lt.s32.totalorder %s20, 1
      %s310 = scalar_select %p309, %s20, 1
      %s311 = smul.addr %s310, 8
      %s312 = scalar_lea.vmem %s8, %s311
      %p313 = scmp.lt.s32.totalorder %s20, 1
      %s314 = scalar_select %p313, %s20, 1
      %s315 = smul.addr %s314, 8
      %s316 = scalar_lea.vmem %s0, %s315
      %p317 = scmp.lt.s32.totalorder %s20, 1
      %s318 = scalar_select %p317, %s20, 1
      %s319 = smul.addr %s318, 8
      %s320 = scalar_lea.vmem %s5, %s319
      %p321 = scmp.lt.s32.totalorder %s20, 1
      %s322 = scalar_select %p321, %s20, 1
      %s323 = smul.addr %s322, 8
      %s324 = scalar_lea.vmem %s7, %s323
      %p325 = scmp.lt.s32.totalorder %s20, 1
      %s326 = scalar_select %p325, %s20, 1
      %s327 = smul.addr %s326, 8
      %s328 = scalar_lea.vmem %s8, %s327
      %v330 = vld [vmem:[%s316] sm:$0xff]
      %v331 = vpack.c.bf16 %v330, %v330
      %v332 = vld [vmem:[%s1] sm:$0xf]
      %v333 = vld [vmem:[%s1 + $0x4] sm:$0xf]
      %v334 = vld [vmem:[%s2] sm:$0x1]
      %v336 = vlaneseq
      %v337 = vshrl.u32 %v336, 7
      %v338 = vsub.s32 0, %v337
      %v339 = vrot.slane %v334, %v338
      %v343 = vunpack.c.l.b16 %v332
      %v344 = vunpack.c.l.b16 %v333
      %v345 = vpack.c.b16 %v344, %v343
      %vm347 = vcmask 130048
      %v349 = vsel %vm347, %v331, 0
      %351 = vmatprep.subr.bf16.mxu0 0
      %352 = vmatpush1.bf16.msra.mxu0 %v345
      %353 = vmatprep.subr.bf16.mxu0 0
      %354 = vmatpush1.bf16.msra.mxu0 0
      %355 = vmatprep.subr.bf16.mxu0 0
      %356 = vmatpush1.bf16.msra.mxu0 0
      %357 = vmatprep.subr.bf16.mxu0 0
      %358 = vmatpush1.bf16.msra.mxu0 0
      %359 = vmatprep.subr.bf16.mxu0 0
      %360 = vmatpush1.bf16.msra.mxu0 0
      %361 = vmatprep.subr.bf16.mxu0 0
      %362 = vmatpush1.bf16.msra.mxu0 0
      %363 = vmatprep.subr.bf16.mxu0 0
      %364 = vmatpush1.bf16.msra.mxu0 0
      %365 = vmatprep.subr.bf16.mxu0 0
      %366 = vmatpush1.bf16.msra.mxu0 0
      %367 = vmatprep.subr.bf16.mxu0 0
      %368 = vmatpush1.bf16.msra.mxu0 0
      %369 = vmatprep.subr.bf16.mxu0 0
      %370 = vmatpush1.bf16.msra.mxu0 0
      %371 = vmatprep.subr.bf16.mxu0 0
      %372 = vmatpush1.bf16.msra.mxu0 0
      %373 = vmatprep.subr.bf16.mxu0 0
      %374 = vmatpush1.bf16.msra.mxu0 0
      %375 = vmatprep.subr.bf16.mxu0 0
      %376 = vmatpush1.bf16.msra.mxu0 0
      %377 = vmatprep.subr.bf16.mxu0 0
      %378 = vmatpush1.bf16.msra.mxu0 0
      %379 = vmatprep.subr.bf16.mxu0 0
      %380 = vmatpush1.bf16.msra.mxu0 0
      %381 = vmatprep.subr.bf16.mxu0 0
      %382 = vmatpush1.bf16.msra.mxu0 0
      %383 = vmatprep.mubr.bf16.mxu0 0
      %384 = vmatmul.mubr.bf16.gmra.mrb[0].mxu0 %v349
      %v385 = vpop.f32.mrb[0].mxu0
      %v386 = vadd.f32 %v339, %v385
      %v387 = vpop.f32.mrb[0].mxu0
      %v388 = vpop.f32.mrb[0].mxu0
      %v389 = vpop.f32.mrb[0].mxu0
      %390 = vdwg.mxu0
      %v391 = vmax.f32 %v386, 0.0
      %v392 = vpack.c.bf16 %v391, %v391
      %v393 = vld [vmem:[%s3] sm:$0xf]
      %v394 = vld [vmem:[%s3 + $0x4] sm:$0xf]
      %v395 = vld [vmem:[%s3 + $0x8] sm:$0xf]
      %v396 = vld [vmem:[%s3 + $0xc] sm:$0xf]
      %v397 = vld [vmem:[%s4] sm:$0x1]
      %v399 = vlaneseq
      %v400 = vshrl.u32 %v399, 7
      %v401 = vsub.s32 0, %v400
      %v402 = vrot.slane %v397, %v401
      %v408 = vunpack.c.l.b16 %v393
      %v409 = vunpack.c.l.b16 %v394
      %v410 = vunpack.c.l.b16 %v395
      %v411 = vunpack.c.l.b16 %v396
      %v412 = vpack.c.b16 %v409, %v408
      %v413 = vpack.c.b16 %v411, %v410
      %vm416 = vcmask 261120
      %v418 = vsel %vm416, %v392, 0
      %420 = vmatprep.subr.bf16.mxu0 0
      %421 = vmatpush1.bf16.msra.mxu0 %v412
      %422 = vmatprep.subr.bf16.mxu0 0
      %423 = vmatpush1.bf16.msra.mxu0 %v413
      %424 = vmatprep.subr.bf16.mxu0 0
      %425 = vmatpush1.bf16.msra.mxu0 0
      %426 = vmatprep.subr.bf16.mxu0 0
      %427 = vmatpush1.bf16.msra.mxu0 0
      %428 = vmatprep.subr.bf16.mxu0 0
      %429 = vmatpush1.bf16.msra.mxu0 0
      %430 = vmatprep.subr.bf16.mxu0 0
      %431 = vmatpush1.bf16.msra.mxu0 0
      %432 = vmatprep.subr.bf16.mxu0 0
      %433 = vmatpush1.bf16.msra.mxu0 0
      %434 = vmatprep.subr.bf16.mxu0 0
      %435 = vmatpush1.bf16.msra.mxu0 0
      %436 = vmatprep.subr.bf16.mxu0 0
      %437 = vmatpush1.bf16.msra.mxu0 0
      %438 = vmatprep.subr.bf16.mxu0 0
      %439 = vmatpush1.bf16.msra.mxu0 0
      %440 = vmatprep.subr.bf16.mxu0 0
      %441 = vmatpush1.bf16.msra.mxu0 0
      %442 = vmatprep.subr.bf16.mxu0 0
      %443 = vmatpush1.bf16.msra.mxu0 0
      %444 = vmatprep.subr.bf16.mxu0 0
      %445 = vmatpush1.bf16.msra.mxu0 0
      %446 = vmatprep.subr.bf16.mxu0 0
      %447 = vmatpush1.bf16.msra.mxu0 0
      %448 = vmatprep.subr.bf16.mxu0 0
      %449 = vmatpush1.bf16.msra.mxu0 0
      %450 = vmatprep.subr.bf16.mxu0 0
      %451 = vmatpush1.bf16.msra.mxu0 0
      %452 = vmatprep.mubr.bf16.mxu0 0
      %453 = vmatmul.mubr.bf16.gmra.mrb[0].mxu0 %v418
      %v454 = vpop.f32.mrb[0].mxu0
      %v455 = vadd.f32 %v402, %v454
      %v456 = vpop.f32.mrb[0].mxu0
      %v457 = vpop.f32.mrb[0].mxu0
      %v458 = vpop.f32.mrb[0].mxu0
      %459 = vdwg.mxu0
      %v460 = vld [vmem:[%s320] sm:$0xff]
      %v461 = vadd.f32 %v455, %v460
      %v462 = vmax.f32 %v461, 0.0
      %463 = vst.msk [vmem:[%s324] sm:$0xff] %vm347, %v462
      %v464 = vld [vmem:[%s6] sm:$0x1]
      %v466 = vlaneseq
      %v467 = vshrl.u32 %v466, 7
      %v468 = vsub.s32 0, %v467
      %v469 = vrot.slane %v464, %v468
      %v471 = vmul.f32 %v462, %v469
      %v472 = vsel %vm347, %v471, 0.0
      %473 = vadd.xlane.f32.xlu0 %v472
      %v474 = vpop.xlane.xlu0 %473
      %v475 = vtanh.pop %v474
      %vm476 = vcmask 7168
      %477 = vst.msk [vmem:[%s328] sm:$0xff] %vm476, %v475
      %p478 = scmp.lt.s32.totalorder %s20, 1
      %s479 = scalar_select %p478, %s20, 1
      %s480 = smul.addr %s479, 8
      %s481 = scalar_lea.vmem %s7, %s480
      %p482 = scmp.lt.s32.totalorder %s20, 1
      %s483 = scalar_select %p482, %s20, 1
      %s484 = smul.addr %s483, 8
      %s485 = scalar_lea.vmem %s8, %s484
      // Predicated region
      $region49: #{dyresgen_forward.20} parent=47 // pred_check
        %p486 = pneg %p195
      $region50: #{dyresgen_forward.20} parent=47 // pred_check_branch
        %488 = sbr.rel (%p486) target = $region52
      $region51: #{dyresgen_forward.20} parent=47 // pred_region
        _
      $region52: #{dyresgen_forward.20} parent=47 // pred_fallthru
        _
      // Predicated region
      $region53: #{dyresgen_forward.20} parent=47 // pred_check
        %p489 = pneg %p221
      $region54: #{dyresgen_forward.20} parent=47 // pred_check_branch
        %491 = sbr.rel (%p489) target = $region56
      $region55: #{dyresgen_forward.20} parent=47 // pred_region
        _
      $region56: #{dyresgen_forward.20} parent=47 // pred_fallthru
        _
    $region48: #{dyresgen_forward.20} parent=5 // pred_fallthru
      _
    %p492 = scmp.le.s32.totalorder 2, %s15
    // Predicated region
    $region57: #{dyresgen_forward.20} parent=5 // pred_check
      %p493 = pneg %p492
    $region58: #{dyresgen_forward.20} parent=5 // pred_check_branch
      %495 = sbr.rel (%p493) target = $region60
    $region59: #{dyresgen_forward.20} parent=5 // pred_region
      %s496 = ssub.s32 %s15, 2
      // Predicated region
      $region61: #{dyresgen_forward.20} parent=59 // pred_check
        %p497 = pneg %p201
      $region62: #{dyresgen_forward.20} parent=59 // pred_check_branch
        %499 = sbr.rel (%p497) target = $region64
      $region63: #{dyresgen_forward.20} parent=59 // pred_region
        %p500 = scmp.lt.s32.totalorder %s21, 1
        %s501 = scalar_select %p500, %s21, 1
        %s502 = smul.addr %s501, 8
        %s503 = scalar_lea.vmem %s7, %s502
      $region64: #{dyresgen_forward.20} parent=59 // pred_fallthru
        _
      // Predicated region
      $region65: #{dyresgen_forward.20} parent=59 // pred_check
        %p504 = pneg %p227
      $region66: #{dyresgen_forward.20} parent=59 // pred_check_branch
        %506 = sbr.rel (%p504) target = $region68
      $region67: #{dyresgen_forward.20} parent=59 // pred_region
        %p507 = scmp.lt.s32.totalorder %s21, 1
        %s508 = scalar_select %p507, %s21, 1
        %s509 = smul.addr %s508, 8
        %s510 = scalar_lea.vmem %s8, %s509
      $region68: #{dyresgen_forward.20} parent=59 // pred_fallthru
        _
    $region60: #{dyresgen_forward.20} parent=5 // pred_fallthru
      _
  $region6: #{dyresgen_forward.20} parent=0 // loop_footer
    %s19 = sadd.s32 1, %s15
  $region7: #{dyresgen_forward.20} parent=0 // loop_footer_branch
    %14 = sbr.rel target = $region3
  $region8: #{dyresgen_forward.20} parent=0 // loop_exit
    _

// kernel: dyresgen_forward.17
$region0: #{dyresgen_forward.17}
  #allocation0 [shape = 'u32[]', space=smem, size = 0x4, offset = 0x4, fixed_abs, tag = 'smem constant byte address 0x4 - core index']
  #allocation1 [shape = 'u32[144,128]{1,0:T(1,128)}', space=vmem, size = 0x12000, scoped, tag = 'internal scratch']
  #allocation2 [shape = 'f32[8,16]{1,0:T(8,128)}', space=vmem, size = 0x1000, scoped, tag = 'scratch operand']
  #allocation3 [shape = 'f32[8,16]{1,0:T(8,128)}', space=vmem, size = 0x1000, scoped, tag = 'scratch operand']
  #allocation4 [shape = 'f32[8,16]{1,0:T(8,128)}', space=vmem, size = 0x1000, scoped, tag = 'scratch operand']
  #allocation5 [shape = 'f32[8,1]{1,0:T(8,128)}', space=vmem, size = 0x1000, scoped, tag = 'scratch operand']
  #allocation6 [shape = 'f32[1,1]{1,0:T(1,128)S(6)}', space=smem, size = 0x200, scoped, tag = 'scoped memory for dyresgen_forward.17']
  %s0 = inlined_call_operand.vmem [shape: f32[2,8,16], index: 0, kind: input, shape index: {}, may-alias: {0,1}]
  %s1 = inlined_call_operand.vmem [shape: f32[2,8,16], index: 1, kind: input, shape index: {}, may-alias: {0,1}]
  %s2 = inlined_call_operand.vmem [shape: bf16[2,2,8,8], index: 2, kind: input, shape index: {}]
  %s3 = inlined_call_operand.vmem [shape: bf16[2,8,8], index: 3, kind: input, shape index: {}]
  %s4 = inlined_call_operand.vmem [shape: f32[2,16], index: 4, kind: input, shape index: {}]
  %s5 = inlined_call_operand.vmem [shape: f32[1,16], index: 5, kind: input, shape index: {}]
  %s6 = inlined_call_operand.<no memory space> [shape: f32[1,1], index: 6, kind: input, shape index: {}]
  %s7 = inlined_call_operand.vmem [shape: f32[2,8,16], index: 7, kind: output, shape index: {}]
  %s8 = sld [smem:[#allocation0]]
  $region69: #{dyresgen_forward.17} parent=0
    _
  %s10 = ssub.s32 1, %s8
  %s11 = scalar_select 0, %s10, %s8
  %12 = sst [smem:[#allocation6]] %s6
  loop: start=0, step=1, limit=4
  $region2: #{dyresgen_forward.17} parent=0 // loop_pre_header
    _
  $region3: #{dyresgen_forward.17} parent=0 // loop_header
    %s14 = sphi 0, %s18
    %p15 = scmp.ge.s32.totalorder %s14, 4
    %s21 = sphi 0, %s40
    %s22 = sphi 0, %s36
    %s23 = sphi 0, %s32
    %s24 = sphi 0, %s21
    %s25 = sphi 0, %s22
    %s26 = sphi 0, %s23
    %s27 = sphi 0, %s24
    %s28 = sphi 0, %s25
    %s29 = sphi 0, %s26
    %s45 = sphi 0, %s47
    %s48 = sphi 0, %s45
    %s49 = sphi 0, %s48
    %s65 = sphi 0, %s49
    %s73 = sphi 0, %s75
    %s76 = sphi 0, %s73
    %s77 = sphi 0, %s76
    %s93 = sphi 0, %s77
    %s103 = sphi 0, %s105
    %s106 = sphi 0, %s103
    %s107 = sphi 0, %s106
    %s123 = sphi 0, %s107
    %s133 = sphi 0, %s135
    %s136 = sphi 0, %s133
    %s137 = sphi 0, %s136
    %s153 = sphi 0, %s137
    %s157 = sphi 0, %s157
    %s159 = sphi 0, %s157
    %s160 = sphi 0, %s159
    %s174 = sphi 0, %s160
    %s178 = sphi 0, %s178
    %s180 = sphi 0, %s178
    %s181 = sphi 0, %s180
    %s195 = sphi 0, %s181
    %s199 = sphi 0, %s199
    %s201 = sphi 0, %s199
    %s202 = sphi 0, %s201
    %s216 = sphi 0, %s202
    %s224 = sphi 0, %s226
    %s227 = sphi 0, %s224
    %s228 = sphi 0, %s227
    %s244 = sphi 0, %s228
  $region4: #{dyresgen_forward.17} parent=0 // loop_header_branch
    %17 = sbr.rel (%p15) target = $region8
  $region5: #{dyresgen_forward.17} parent=0 // loop_body
    %s19 = ssub.s32 %s14, 1
    %s20 = ssub.s32 %s14, 2
    %s30 = sadd.s32 1, %s23
    %p31 = scmp.ge.s32.totalorder %s30, 1
    %s32 = scalar_select %p31, 0, %s30
    %s33 = sadd.s32 1, %s22
    %s34 = scalar_select %p31, %s33, %s22
    %p35 = scmp.ge.s32.totalorder %s34, 1
    %s36 = scalar_select %p35, 0, %s34
    %s37 = sadd.s32 1, %s21
    %s38 = scalar_select %p35, %s37, %s21
    %p39 = scmp.ge.s32.totalorder %s38, 2
    %s40 = scalar_select %p39, 0, %s38
    %s41 = ssub.s32 %s21, %s40
    %s42 = ssub.s32 %s23, %s32
    %s43 = sor.u32 %s41, %s42
    %p44 = scmp.eq.s32.totalorder %s43, 0
    %s46 = sadd.s32 %s45, 1
    %s47 = scalar_select %p44, %s45, %s46
    %p50 = pneg %p44
    %p51 = scmp.eq.s32.totalorder %s14, 1
    %p52 = por %p50, %p51
    %p53 = scmp.ne.s32.totalorder %s45, %s48
    %p54 = scmp.eq.s32.totalorder %s14, 0
    %p55 = por %p53, %p54
    %p56 = scmp.ne.s32.totalorder %s45, %s48
    %p57 = scmp.eq.s32.totalorder %s19, 1
    %p58 = por %p56, %p57
    %p59 = scmp.ne.s32.totalorder %s48, %s49
    %p60 = scmp.eq.s32.totalorder %s19, 0
    %p61 = por %p59, %p60
    %p62 = scmp.ne.s32.totalorder %s48, %s49
    %p63 = scmp.eq.s32.totalorder %s20, 1
    %p64 = por %p62, %p63
    %p66 = scmp.ne.s32.totalorder %s49, %s65
    %p67 = scmp.eq.s32.totalorder %s20, 0
    %p68 = por %p66, %p67
    %s69 = ssub.s32 %s21, %s40
    %s70 = ssub.s32 %s22, %s36
    %s71 = sor.u32 %s69, %s70
    %p72 = scmp.eq.s32.totalorder %s71, 0
    %s74 = sadd.s32 %s73, 1
    %s75 = scalar_select %p72, %s73, %s74
    %p78 = pneg %p72
    %p79 = scmp.eq.s32.totalorder %s14, 1
    %p80 = por %p78, %p79
    %p81 = scmp.ne.s32.totalorder %s73, %s76
    %p82 = scmp.eq.s32.totalorder %s14, 0
    %p83 = por %p81, %p82
    %p84 = scmp.ne.s32.totalorder %s73, %s76
    %p85 = scmp.eq.s32.totalorder %s19, 1
    %p86 = por %p84, %p85
    %p87 = scmp.ne.s32.totalorder %s76, %s77
    %p88 = scmp.eq.s32.totalorder %s19, 0
    %p89 = por %p87, %p88
    %p90 = scmp.ne.s32.totalorder %s76, %s77
    %p91 = scmp.eq.s32.totalorder %s20, 1
    %p92 = por %p90, %p91
    %p94 = scmp.ne.s32.totalorder %s77, %s93
    %p95 = scmp.eq.s32.totalorder %s20, 0
    %p96 = por %p94, %p95
    %s97 = ssub.s32 %s21, %s40
    %s98 = ssub.s32 %s22, %s36
    %s99 = sor.u32 %s97, %s98
    %s100 = ssub.s32 %s23, %s32
    %s101 = sor.u32 %s99, %s100
    %p102 = scmp.eq.s32.totalorder %s101, 0
    %s104 = sadd.s32 %s103, 1
    %s105 = scalar_select %p102, %s103, %s104
    %p108 = pneg %p102
    %p109 = scmp.eq.s32.totalorder %s14, 1
    %p110 = por %p108, %p109
    %p111 = scmp.ne.s32.totalorder %s103, %s106
    %p112 = scmp.eq.s32.totalorder %s14, 0
    %p113 = por %p111, %p112
    %p114 = scmp.ne.s32.totalorder %s103, %s106
    %p115 = scmp.eq.s32.totalorder %s19, 1
    %p116 = por %p114, %p115
    %p117 = scmp.ne.s32.totalorder %s106, %s107
    %p118 = scmp.eq.s32.totalorder %s19, 0
    %p119 = por %p117, %p118
    %p120 = scmp.ne.s32.totalorder %s106, %s107
    %p121 = scmp.eq.s32.totalorder %s20, 1
    %p122 = por %p120, %p121
    %p124 = scmp.ne.s32.totalorder %s107, %s123
    %p125 = scmp.eq.s32.totalorder %s20, 0
    %p126 = por %p124, %p125
    %s127 = ssub.s32 %s21, %s40
    %s128 = ssub.s32 %s22, %s36
    %s129 = sor.u32 %s127, %s128
    %s130 = ssub.s32 %s23, %s32
    %s131 = sor.u32 %s129, %s130
    %p132 = scmp.eq.s32.totalorder %s131, 0
    %s134 = sadd.s32 %s133, 1
    %s135 = scalar_select %p132, %s133, %s134
    %p138 = pneg %p132
    %p139 = scmp.eq.s32.totalorder %s14, 1
    %p140 = por %p138, %p139
    %p141 = scmp.ne.s32.totalorder %s133, %s136
    %p142 = scmp.eq.s32.totalorder %s14, 0
    %p143 = por %p141, %p142
    %p144 = scmp.ne.s32.totalorder %s133, %s136
    %p145 = scmp.eq.s32.totalorder %s19, 1
    %p146 = por %p144, %p145
    %p147 = scmp.ne.s32.totalorder %s136, %s137
    %p148 = scmp.eq.s32.totalorder %s19, 0
    %p149 = por %p147, %p148
    %p150 = scmp.ne.s32.totalorder %s136, %s137
    %p151 = scmp.eq.s32.totalorder %s20, 1
    %p152 = por %p150, %p151
    %p154 = scmp.ne.s32.totalorder %s137, %s153
    %p155 = scmp.eq.s32.totalorder %s20, 0
    %p156 = por %p154, %p155
    %s158 = sadd.s32 %s157, 1
    %p161 = scmp.eq.s32.totalorder %s14, 1
    %p162 = scmp.ne.s32.totalorder %s157, %s159
    %p163 = scmp.eq.s32.totalorder %s14, 0
    %p164 = por %p162, %p163
    %p165 = scmp.ne.s32.totalorder %s157, %s159
    %p166 = scmp.eq.s32.totalorder %s19, 1
    %p167 = por %p165, %p166
    %p168 = scmp.ne.s32.totalorder %s159, %s160
    %p169 = scmp.eq.s32.totalorder %s19, 0
    %p170 = por %p168, %p169
    %p171 = scmp.ne.s32.totalorder %s159, %s160
    %p172 = scmp.eq.s32.totalorder %s20, 1
    %p173 = por %p171, %p172
    %p175 = scmp.ne.s32.totalorder %s160, %s174
    %p176 = scmp.eq.s32.totalorder %s20, 0
    %p177 = por %p175, %p176
    %s179 = sadd.s32 %s178, 1
    %p182 = scmp.eq.s32.totalorder %s14, 1
    %p183 = scmp.ne.s32.totalorder %s178, %s180
    %p184 = scmp.eq.s32.totalorder %s14, 0
    %p185 = por %p183, %p184
    %p186 = scmp.ne.s32.totalorder %s178, %s180
    %p187 = scmp.eq.s32.totalorder %s19, 1
    %p188 = por %p186, %p187
    %p189 = scmp.ne.s32.totalorder %s180, %s181
    %p190 = scmp.eq.s32.totalorder %s19, 0
    %p191 = por %p189, %p190
    %p192 = scmp.ne.s32.totalorder %s180, %s181
    %p193 = scmp.eq.s32.totalorder %s20, 1
    %p194 = por %p192, %p193
    %p196 = scmp.ne.s32.totalorder %s181, %s195
    %p197 = scmp.eq.s32.totalorder %s20, 0
    %p198 = por %p196, %p197
    %s200 = sadd.s32 %s199, 1
    %p203 = scmp.eq.s32.totalorder %s14, 1
    %p204 = scmp.ne.s32.totalorder %s199, %s201
    %p205 = scmp.eq.s32.totalorder %s14, 0
    %p206 = por %p204, %p205
    %p207 = scmp.ne.s32.totalorder %s199, %s201
    %p208 = scmp.eq.s32.totalorder %s19, 1
    %p209 = por %p207, %p208
    %p210 = scmp.ne.s32.totalorder %s201, %s202
    %p211 = scmp.eq.s32.totalorder %s19, 0
    %p212 = por %p210, %p211
    %p213 = scmp.ne.s32.totalorder %s201, %s202
    %p214 = scmp.eq.s32.totalorder %s20, 1
    %p215 = por %p213, %p214
    %p217 = scmp.ne.s32.totalorder %s202, %s216
    %p218 = scmp.eq.s32.totalorder %s20, 0
    %p219 = por %p217, %p218
    %s220 = ssub.s32 %s21, %s40
    %s221 = ssub.s32 %s22, %s36
    %s222 = sor.u32 %s220, %s221
    %p223 = scmp.eq.s32.totalorder %s222, 0
    %s225 = sadd.s32 %s224, 1
    %s226 = scalar_select %p223, %s224, %s225
    %p229 = pneg %p223
    %p230 = scmp.eq.s32.totalorder %s14, 1
    %p231 = por %p229, %p230
    %p232 = scmp.ne.s32.totalorder %s224, %s227
    %p233 = scmp.eq.s32.totalorder %s14, 0
    %p234 = por %p232, %p233
    %p235 = scmp.ne.s32.totalorder %s224, %s227
    %p236 = scmp.eq.s32.totalorder %s19, 1
    %p237 = por %p235, %p236
    %p238 = scmp.ne.s32.totalorder %s227, %s228
    %p239 = scmp.eq.s32.totalorder %s19, 0
    %p240 = por %p238, %p239
    %p241 = scmp.ne.s32.totalorder %s227, %s228
    %p242 = scmp.eq.s32.totalorder %s20, 1
    %p243 = por %p241, %p242
    %p245 = scmp.ne.s32.totalorder %s228, %s244
    %p246 = scmp.eq.s32.totalorder %s20, 0
    %p247 = por %p245, %p246
    %p248 = scmp.le.s32.totalorder 1, %s14
    %p249 = scmp.lt.s32.totalorder %s14, 3
    %p250 = pnand %p248, %p249
    %p251 = pneg %p250
    // Predicated region
    $region9: #{dyresgen_forward.17} parent=5 // pred_check
      _
    $region10: #{dyresgen_forward.17} parent=5 // pred_check_branch
      %253 = sbr.rel (%p250) target = $region12
    $region11: #{dyresgen_forward.17} parent=5 // pred_region
      %s254 = ssub.s32 %s14, 1
      // Predicated region
      $region13: #{dyresgen_forward.17} parent=11 // pred_check
        %p255 = pneg %p170
      $region14: #{dyresgen_forward.17} parent=11 // pred_check_branch
        %257 = sbr.rel (%p255) target = $region16
      $region15: #{dyresgen_forward.17} parent=11 // pred_region
        _
      $region16: #{dyresgen_forward.17} parent=11 // pred_fallthru
        _
      // Predicated region
      $region17: #{dyresgen_forward.17} parent=11 // pred_check
        %p258 = pneg %p191
      $region18: #{dyresgen_forward.17} parent=11 // pred_check_branch
        %260 = sbr.rel (%p258) target = $region20
      $region19: #{dyresgen_forward.17} parent=11 // pred_region
        _
      $region20: #{dyresgen_forward.17} parent=11 // pred_fallthru
        _
      // Predicated region
      $region21: #{dyresgen_forward.17} parent=11 // pred_check
        %p261 = pneg %p212
      $region22: #{dyresgen_forward.17} parent=11 // pred_check_branch
        %263 = sbr.rel (%p261) target = $region24
      $region23: #{dyresgen_forward.17} parent=11 // pred_region
        _
      $region24: #{dyresgen_forward.17} parent=11 // pred_fallthru
        _
    $region12: #{dyresgen_forward.17} parent=5 // pred_fallthru
      _
    %p264 = scmp.lt.s32.totalorder %s14, 2
    // Predicated region
    $region25: #{dyresgen_forward.17} parent=5 // pred_check
      %p265 = pneg %p264
    $region26: #{dyresgen_forward.17} parent=5 // pred_check_branch
      %267 = sbr.rel (%p265) target = $region28
    $region27: #{dyresgen_forward.17} parent=5 // pred_region
      // Predicated region
      $region29: #{dyresgen_forward.17} parent=27 // pred_check
        %p268 = pneg %p55
      $region30: #{dyresgen_forward.17} parent=27 // pred_check_branch
        %270 = sbr.rel (%p268) target = $region32
      $region31: #{dyresgen_forward.17} parent=27 // pred_region
        %p271 = scmp.lt.s32.totalorder %s21, 1
        %s272 = scalar_select %p271, %s21, 1
        %p273 = scmp.lt.s32.totalorder %s23, 0
        %s274 = scalar_select %p273, %s23, 0
        %s275 = sadd.s32 %s274, %s272
        %s276 = smul.addr %s275, 8
        %s277 = scalar_lea.vmem %s0, %s276
      $region32: #{dyresgen_forward.17} parent=27 // pred_fallthru
        _
      // Predicated region
      $region33: #{dyresgen_forward.17} parent=27 // pred_check
        %p278 = pneg %p83
      $region34: #{dyresgen_forward.17} parent=27 // pred_check_branch
        %280 = sbr.rel (%p278) target = $region36
      $region35: #{dyresgen_forward.17} parent=27 // pred_region
        %p281 = scmp.lt.s32.totalorder %s21, 1
        %s282 = scalar_select %p281, %s21, 1
        %p283 = scmp.lt.s32.totalorder %s22, 0
        %s284 = scalar_select %p283, %s22, 0
        %s285 = sadd.s32 %s284, %s282
        %s286 = smul.addr %s285, 8
        %s287 = scalar_lea.vmem %s1, %s286
      $region36: #{dyresgen_forward.17} parent=27 // pred_fallthru
        _
      // Predicated region
      $region37: #{dyresgen_forward.17} parent=27 // pred_check
        %p288 = pneg %p113
      $region38: #{dyresgen_forward.17} parent=27 // pred_check_branch
        %290 = sbr.rel (%p288) target = $region40
      $region39: #{dyresgen_forward.17} parent=27 // pred_region
        %p291 = scmp.lt.s32.totalorder %s21, 1
        %s292 = scalar_select %p291, %s21, 1
        %p293 = scmp.lt.s32.totalorder %s22, 0
        %s294 = scalar_select %p293, %s22, 0
        %p295 = scmp.lt.s32.totalorder %s23, 0
        %s296 = scalar_select %p295, %s23, 0
        %s297 = sadd.s32 %s296, %s294
        %s298 = smul.addr %s292, 2
        %s299 = sadd.s32 %s297, %s298
        %s300 = smul.addr %s299, 4
        %s301 = scalar_lea.vmem %s2, %s300
      $region40: #{dyresgen_forward.17} parent=27 // pred_fallthru
        _
      // Predicated region
      $region41: #{dyresgen_forward.17} parent=27 // pred_check
        %p302 = pneg %p143
      $region42: #{dyresgen_forward.17} parent=27 // pred_check_branch
        %304 = sbr.rel (%p302) target = $region44
      $region43: #{dyresgen_forward.17} parent=27 // pred_region
        %p305 = scmp.lt.s32.totalorder %s21, 1
        %s306 = scalar_select %p305, %s21, 1
        %p307 = scmp.lt.s32.totalorder %s22, 0
        %s308 = scalar_select %p307, %s22, 0
        %p309 = scmp.lt.s32.totalorder %s23, 0
        %s310 = scalar_select %p309, %s23, 0
        %s311 = sadd.s32 %s310, %s308
        %s312 = sadd.s32 %s311, %s306
        %s313 = smul.addr %s312, 4
        %s314 = scalar_lea.vmem %s3, %s313
      $region44: #{dyresgen_forward.17} parent=27 // pred_fallthru
        _
    $region28: #{dyresgen_forward.17} parent=5 // pred_fallthru
      _
    %p315 = scmp.le.s32.totalorder 1, %s14
    %p316 = scmp.lt.s32.totalorder %s14, 3
    %p317 = pnand %p315, %p316
    %p318 = pneg %p317
    // Predicated region
    $region45: #{dyresgen_forward.17} parent=5 // pred_check
      _
    $region46: #{dyresgen_forward.17} parent=5 // pred_check_branch
      %320 = sbr.rel (%p317) target = $region48
    $region47: #{dyresgen_forward.17} parent=5 // pred_region
      %s321 = ssub.s32 %s14, 1
      %p322 = scmp.lt.s32.totalorder %s24, 1
      %s323 = scalar_select %p322, %s24, 1
      %p324 = scmp.lt.s32.totalorder %s26, 0
      %s325 = scalar_select %p324, %s26, 0
      %s326 = sadd.s32 %s325, %s323
      %s327 = smul.addr %s326, 8
      %s328 = scalar_lea.vmem %s0, %s327
      %p329 = pneg %p61
      %p330 = pneg %p58
      %p331 = scmp.lt.s32.totalorder %s24, 1
      %s332 = scalar_select %p331, %s24, 1
      %p333 = scmp.lt.s32.totalorder %s25, 0
      %s334 = scalar_select %p333, %s25, 0
      %s335 = sadd.s32 %s334, %s332
      %s336 = smul.addr %s335, 8
      %s337 = scalar_lea.vmem %s1, %s336
      %p338 = pneg %p89
      %p339 = pneg %p86
      %p340 = scmp.lt.s32.totalorder %s24, 1
      %s341 = scalar_select %p340, %s24, 1
      %p342 = scmp.lt.s32.totalorder %s25, 0
      %s343 = scalar_select %p342, %s25, 0
      %p344 = scmp.lt.s32.totalorder %s26, 0
      %s345 = scalar_select %p344, %s26, 0
      %s346 = sadd.s32 %s345, %s343
      %s347 = smul.addr %s341, 2
      %s348 = sadd.s32 %s346, %s347
      %s349 = smul.addr %s348, 4
      %s350 = scalar_lea.vmem %s2, %s349
      %p351 = pneg %p119
      %p352 = pneg %p116
      %p353 = scmp.lt.s32.totalorder %s24, 1
      %s354 = scalar_select %p353, %s24, 1
      %p355 = scmp.lt.s32.totalorder %s25, 0
      %s356 = scalar_select %p355, %s25, 0
      %p357 = scmp.lt.s32.totalorder %s26, 0
      %s358 = scalar_select %p357, %s26, 0
      %s359 = sadd.s32 %s358, %s356
      %s360 = sadd.s32 %s359, %s354
      %s361 = smul.addr %s360, 4
      %s362 = scalar_lea.vmem %s3, %s361
      %p363 = pneg %p149
      %p364 = pneg %p146
      %p365 = pneg %p170
      %p366 = pneg %p167
      %p367 = pneg %p191
      %p368 = pneg %p188
      %p369 = pneg %p212
      %p370 = pneg %p209
      %p371 = pneg %p240
      %p372 = pneg %p237
      %p373 = scmp.lt.s32.totalorder %s24, 1
      %s374 = scalar_select %p373, %s24, 1
      %p375 = scmp.lt.s32.totalorder %s25, 0
      %s376 = scalar_select %p375, %s25, 0
      %s377 = sadd.s32 %s376, %s374
      %s378 = smul.addr %s377, 8
      %s379 = scalar_lea.vmem %s7, %s378
      %p380 = scmp.lt.s32.totalorder %s24, 1
      %s381 = scalar_select %p380, %s24, 1
      %p382 = scmp.lt.s32.totalorder %s26, 0
      %s383 = scalar_select %p382, %s26, 0
      %s384 = sadd.s32 %s383, %s381
      %s385 = smul.addr %s384, 8
      %s386 = scalar_lea.vmem %s0, %s385
      %p387 = scmp.lt.s32.totalorder %s24, 1
      %s388 = scalar_select %p387, %s24, 1
      %p389 = scmp.lt.s32.totalorder %s25, 0
      %s390 = scalar_select %p389, %s25, 0
      %s391 = sadd.s32 %s390, %s388
      %s392 = smul.addr %s391, 8
      %s393 = scalar_lea.vmem %s1, %s392
      %p394 = scmp.lt.s32.totalorder %s24, 1
      %s395 = scalar_select %p394, %s24, 1
      %p396 = scmp.lt.s32.totalorder %s25, 0
      %s397 = scalar_select %p396, %s25, 0
      %p398 = scmp.lt.s32.totalorder %s26, 0
      %s399 = scalar_select %p398, %s26, 0
      %s400 = sadd.s32 %s399, %s397
      %s401 = smul.addr %s395, 2
      %s402 = sadd.s32 %s400, %s401
      %s403 = smul.addr %s402, 4
      %s404 = scalar_lea.vmem %s2, %s403
      %p405 = scmp.lt.s32.totalorder %s24, 1
      %s406 = scalar_select %p405, %s24, 1
      %p407 = scmp.lt.s32.totalorder %s25, 0
      %s408 = scalar_select %p407, %s25, 0
      %p409 = scmp.lt.s32.totalorder %s26, 0
      %s410 = scalar_select %p409, %s26, 0
      %s411 = sadd.s32 %s410, %s408
      %s412 = sadd.s32 %s411, %s406
      %s413 = smul.addr %s412, 4
      %s414 = scalar_lea.vmem %s3, %s413
      %p415 = scmp.lt.s32.totalorder %s24, 1
      %s416 = scalar_select %p415, %s24, 1
      %p417 = scmp.lt.s32.totalorder %s25, 0
      %s418 = scalar_select %p417, %s25, 0
      %s419 = sadd.s32 %s418, %s416
      %s420 = smul.addr %s419, 8
      %s421 = scalar_lea.vmem %s7, %s420
      %p422 = scmp.eq.s32.totalorder %s26, 0
      // Predicated region
      $region49: #{dyresgen_forward.17} parent=47 // pred_check
        %p423 = pneg %p422
      $region50: #{dyresgen_forward.17} parent=47 // pred_check_branch
        %425 = sbr.rel (%p423) target = $region52
      $region51: #{dyresgen_forward.17} parent=47 // pred_region
        %vm426 = vcmask 130048
        %427 = vst.msk [vmem:[#allocation2] sm:$0xff] %vm426, -inf
        %428 = vst.msk [vmem:[#allocation3] sm:$0xff] %vm426, 0.0
        %429 = vst.msk [vmem:[#allocation4] sm:$0xff] %vm426, 0.0
        %vm430 = vcmask 7168
        %431 = vst.msk [vmem:[#allocation5] sm:$0xff] %vm430, 0.0
      $region52: #{dyresgen_forward.17} parent=47 // pred_fallthru
        _
      %v432 = vld [vmem:[%s386] sm:$0xff]
      %v433 = vld [vmem:[%s5] sm:$0x1]
      %v435 = vlaneseq
      %v436 = vshrl.u32 %v435, 7
      %v437 = vsub.s32 0, %v436
      %v438 = vrot.slane %v433, %v437
      %v440 = vadd.f32 %v432, %v438
      %v441 = vld [vmem:[%s404] sm:$0xf]
      %v442 = vld [vmem:[%s404 + $0x4] sm:$0xf]
      %v443 = vunpack.c.l.bf16 %v441
      %v444 = vunpack.c.l.bf16 %v442
      %v445 = vld [vmem:[%s414] sm:$0xf]
      %v446 = vunpack.c.l.bf16 %v445
      %v447 = vld [vmem:[%s4] sm:$0x3]
      %s448 = sld [smem:[#allocation6]]
      %v449 = vlaneseq
      %v450 = vshrl.u32 %v449, 7
      %v451 = vsub.s32 0, %v450
      %v452 = vrot.slane %v443, %v451
      %454 = vbcast.lane.b32.xlu0 %v452, 256
      %v455 = vpop.permute.xlu0 %454
      %v456 = vlaneseq
      %v457 = vshrl.u32 %v456, 7
      %v458 = vsub.s32 1, %v457
      %v459 = vrot.slane %v443, %v458
      %461 = vbcast.lane.b32.xlu0 %v459, 256
      %v462 = vpop.permute.xlu0 %461
      %v463 = vlaneseq
      %v464 = vshrl.u32 %v463, 7
      %v465 = vsub.s32 2, %v464
      %v466 = vrot.slane %v443, %v465
      %468 = vbcast.lane.b32.xlu0 %v466, 256
      %v469 = vpop.permute.xlu0 %468
      %v470 = vlaneseq
      %v471 = vshrl.u32 %v470, 7
      %v472 = vsub.s32 3, %v471
      %v473 = vrot.slane %v443, %v472
      %475 = vbcast.lane.b32.xlu0 %v473, 256
      %v476 = vpop.permute.xlu0 %475
      %v477 = vlaneseq
      %v478 = vshrl.u32 %v477, 7
      %v479 = vsub.s32 4, %v478
      %v480 = vrot.slane %v443, %v479
      %482 = vbcast.lane.b32.xlu0 %v480, 256
      %v483 = vpop.permute.xlu0 %482
      %v484 = vlaneseq
      %v485 = vshrl.u32 %v484, 7
      %v486 = vsub.s32 5, %v485
      %v487 = vrot.slane %v443, %v486
      %489 = vbcast.lane.b32.xlu0 %v487, 256
      %v490 = vpop.permute.xlu0 %489
      %v491 = vlaneseq
      %v492 = vshrl.u32 %v491, 7
      %v493 = vsub.s32 6, %v492
      %v494 = vrot.slane %v443, %v493
      %496 = vbcast.lane.b32.xlu0 %v494, 256
      %v497 = vpop.permute.xlu0 %496
      %v498 = vlaneseq
      %v499 = vshrl.u32 %v498, 7
      %v500 = vsub.s32 7, %v499
      %v501 = vrot.slane %v443, %v500
      %503 = vbcast.lane.b32.xlu0 %v501, 256
      %v504 = vpop.permute.xlu0 %503
      %v505 = vlaneseq
      %v506 = vshrl.u32 %v505, 7
      %v507 = vsub.s32 0, %v506
      %v508 = vrot.slane %v447, %v507
      %v509 = vmul.f32 %v455, %v508
      %v510 = vmul.f32 %v462, %v508
      %v511 = vmul.f32 %v469, %v508
      %v512 = vmul.f32 %v476, %v508
      %v513 = vmul.f32 %v483, %v508
      %v514 = vmul.f32 %v490, %v508
      %v515 = vmul.f32 %v497, %v508
      %v516 = vmul.f32 %v504, %v508
      %v517 = vlaneseq
      %v518 = vshrl.u32 %v517, 7
      %v519 = vsub.s32 0, %v518
      %v520 = vrot.slane %v444, %v519
      %522 = vbcast.lane.b32.xlu0 %v520, 256
      %v523 = vpop.permute.xlu0 %522
      %v524 = vlaneseq
      %v525 = vshrl.u32 %v524, 7
      %v526 = vsub.s32 1, %v525
      %v527 = vrot.slane %v444, %v526
      %529 = vbcast.lane.b32.xlu0 %v527, 256
      %v530 = vpop.permute.xlu0 %529
      %v531 = vlaneseq
      %v532 = vshrl.u32 %v531, 7
      %v533 = vsub.s32 2, %v532
      %v534 = vrot.slane %v444, %v533
      %536 = vbcast.lane.b32.xlu0 %v534, 256
      %v537 = vpop.permute.xlu0 %536
      %v538 = vlaneseq
      %v539 = vshrl.u32 %v538, 7
      %v540 = vsub.s32 3, %v539
      %v541 = vrot.slane %v444, %v540
      %543 = vbcast.lane.b32.xlu0 %v541, 256
      %v544 = vpop.permute.xlu0 %543
      %v545 = vlaneseq
      %v546 = vshrl.u32 %v545, 7
      %v547 = vsub.s32 4, %v546
      %v548 = vrot.slane %v444, %v547
      %550 = vbcast.lane.b32.xlu0 %v548, 256
      %v551 = vpop.permute.xlu0 %550
      %v552 = vlaneseq
      %v553 = vshrl.u32 %v552, 7
      %v554 = vsub.s32 5, %v553
      %v555 = vrot.slane %v444, %v554
      %557 = vbcast.lane.b32.xlu0 %v555, 256
      %v558 = vpop.permute.xlu0 %557
      %v559 = vlaneseq
      %v560 = vshrl.u32 %v559, 7
      %v561 = vsub.s32 6, %v560
      %v562 = vrot.slane %v444, %v561
      %564 = vbcast.lane.b32.xlu0 %v562, 256
      %v565 = vpop.permute.xlu0 %564
      %v566 = vlaneseq
      %v567 = vshrl.u32 %v566, 7
      %v568 = vsub.s32 7, %v567
      %v569 = vrot.slane %v444, %v568
      %571 = vbcast.lane.b32.xlu0 %v569, 256
      %v572 = vpop.permute.xlu0 %571
      %v573 = vlaneseq
      %v574 = vshrl.u32 %v573, 7
      %v575 = vsub.s32 1, %v574
      %v576 = vrot.slane %v447, %v575
      %v577 = vmul.f32 %v523, %v576
      %v578 = vmul.f32 %v530, %v576
      %v579 = vmul.f32 %v537, %v576
      %v580 = vmul.f32 %v544, %v576
      %v581 = vmul.f32 %v551, %v576
      %v582 = vmul.f32 %v558, %v576
      %v583 = vmul.f32 %v565, %v576
      %v584 = vmul.f32 %v572, %v576
      %v585 = vadd.f32 %v509, %v577
      %v586 = vadd.f32 %v510, %v578
      %v587 = vadd.f32 %v511, %v579
      %v588 = vadd.f32 %v512, %v580
      %v589 = vadd.f32 %v513, %v581
      %v590 = vadd.f32 %v514, %v582
      %v591 = vadd.f32 %v515, %v583
      %v592 = vadd.f32 %v516, %v584
      %v593 = vadd.f32 %v440, %v585
      %v594 = vadd.f32 %v440, %v586
      %v595 = vadd.f32 %v440, %v587
      %v596 = vadd.f32 %v440, %v588
      %v597 = vadd.f32 %v440, %v589
      %v598 = vadd.f32 %v440, %v590
      %v599 = vadd.f32 %v440, %v591
      %v600 = vadd.f32 %v440, %v592
      %v601 = vmax.f32 %v593, 0.0
      %v602 = vmax.f32 %v594, 0.0
      %v603 = vmax.f32 %v595, 0.0
      %v604 = vmax.f32 %v596, 0.0
      %v605 = vmax.f32 %v597, 0.0
      %v606 = vmax.f32 %v598, 0.0
      %v607 = vmax.f32 %v599, 0.0
      %v608 = vmax.f32 %v600, 0.0
      %v609 = vadd.f32 %v601, 1e-07
      %v610 = vadd.f32 %v602, 1e-07
      %v611 = vadd.f32 %v603, 1e-07
      %v612 = vadd.f32 %v604, 1e-07
      %v613 = vadd.f32 %v605, 1e-07
      %v614 = vadd.f32 %v606, 1e-07
      %v615 = vadd.f32 %v607, 1e-07
      %v616 = vadd.f32 %v608, 1e-07
      %v617 = vsub.f32 %v446, 1.0
      %v618 = vmul.f32 %v617, 1e+30
      %v619 = vstv %s448
      %v620 = vmul.f32 %v609, %v619
      %v621 = vmul.f32 %v610, %v619
      %v622 = vmul.f32 %v611, %v619
      %v623 = vmul.f32 %v612, %v619
      %v624 = vmul.f32 %v613, %v619
      %v625 = vmul.f32 %v614, %v619
      %v626 = vmul.f32 %v615, %v619
      %v627 = vmul.f32 %v616, %v619
      %v628 = vlaneseq
      %v629 = vshrl.u32 %v628, 7
      %v630 = vsub.s32 0, %v629
      %v631 = vrot.slane %v618, %v630
      %633 = vbcast.lane.b32.xlu0 %v631, 256
      %v634 = vpop.permute.xlu0 %633
      %v635 = vlaneseq
      %v636 = vshrl.u32 %v635, 7
      %v637 = vsub.s32 1, %v636
      %v638 = vrot.slane %v618, %v637
      %640 = vbcast.lane.b32.xlu0 %v638, 256
      %v641 = vpop.permute.xlu0 %640
      %v642 = vlaneseq
      %v643 = vshrl.u32 %v642, 7
      %v644 = vsub.s32 2, %v643
      %v645 = vrot.slane %v618, %v644
      %647 = vbcast.lane.b32.xlu0 %v645, 256
      %v648 = vpop.permute.xlu0 %647
      %v649 = vlaneseq
      %v650 = vshrl.u32 %v649, 7
      %v651 = vsub.s32 3, %v650
      %v652 = vrot.slane %v618, %v651
      %654 = vbcast.lane.b32.xlu0 %v652, 256
      %v655 = vpop.permute.xlu0 %654
      %v656 = vlaneseq
      %v657 = vshrl.u32 %v656, 7
      %v658 = vsub.s32 4, %v657
      %v659 = vrot.slane %v618, %v658
      %661 = vbcast.lane.b32.xlu0 %v659, 256
      %v662 = vpop.permute.xlu0 %661
      %v663 = vlaneseq
      %v664 = vshrl.u32 %v663, 7
      %v665 = vsub.s32 5, %v664
      %v666 = vrot.slane %v618, %v665
      %668 = vbcast.lane.b32.xlu0 %v666, 256
      %v669 = vpop.permute.xlu0 %668
      %v670 = vlaneseq
      %v671 = vshrl.u32 %v670, 7
      %v672 = vsub.s32 6, %v671
      %v673 = vrot.slane %v618, %v672
      %675 = vbcast.lane.b32.xlu0 %v673, 256
      %v676 = vpop.permute.xlu0 %675
      %v677 = vlaneseq
      %v678 = vshrl.u32 %v677, 7
      %v679 = vsub.s32 7, %v678
      %v680 = vrot.slane %v618, %v679
      %682 = vbcast.lane.b32.xlu0 %v680, 256
      %v683 = vpop.permute.xlu0 %682
      %v684 = vadd.f32 %v620, %v634
      %v685 = vadd.f32 %v621, %v641
      %v686 = vadd.f32 %v622, %v648
      %v687 = vadd.f32 %v623, %v655
      %v688 = vadd.f32 %v624, %v662
      %v689 = vadd.f32 %v625, %v669
      %v690 = vadd.f32 %v626, %v676
      %v691 = vadd.f32 %v627, %v683
      %v692 = vld [vmem:[#allocation2] sm:$0xff]
      %vm693 = vcmask 130048
      %v694 = vsel %vm693, %v684, -inf
      %v695 = vrot.slane %v694, 4
      %v696 = vmax.f32 %v694, %v695
      %v697 = vrot.slane %v696, 2
      %v698 = vmax.f32 %v696, %v697
      %v699 = vrot.slane %v698, 1
      %v700 = vmax.f32 %v698, %v699
      %v701 = vsel %vm693, %v685, -inf
      %v702 = vrot.slane %v701, 4
      %v703 = vmax.f32 %v701, %v702
      %v704 = vrot.slane %v703, 2
      %v705 = vmax.f32 %v703, %v704
      %v706 = vrot.slane %v705, 1
      %v707 = vmax.f32 %v705, %v706
      %v708 = vsel %vm693, %v686, -inf
      %v709 = vrot.slane %v708, 4
      %v710 = vmax.f32 %v708, %v709
      %v711 = vrot.slane %v710, 2
      %v712 = vmax.f32 %v710, %v711
      %v713 = vrot.slane %v712, 1
      %v714 = vmax.f32 %v712, %v713
      %v715 = vsel %vm693, %v687, -inf
      %v716 = vrot.slane %v715, 4
      %v717 = vmax.f32 %v715, %v716
      %v718 = vrot.slane %v717, 2
      %v719 = vmax.f32 %v717, %v718
      %v720 = vrot.slane %v719, 1
      %v721 = vmax.f32 %v719, %v720
      %v722 = vsel %vm693, %v688, -inf
      %v723 = vrot.slane %v722, 4
      %v724 = vmax.f32 %v722, %v723
      %v725 = vrot.slane %v724, 2
      %v726 = vmax.f32 %v724, %v725
      %v727 = vrot.slane %v726, 1
      %v728 = vmax.f32 %v726, %v727
      %v729 = vsel %vm693, %v689, -inf
      %v730 = vrot.slane %v729, 4
      %v731 = vmax.f32 %v729, %v730
      %v732 = vrot.slane %v731, 2
      %v733 = vmax.f32 %v731, %v732
      %v734 = vrot.slane %v733, 1
      %v735 = vmax.f32 %v733, %v734
      %v736 = vsel %vm693, %v690, -inf
      %v737 = vrot.slane %v736, 4
      %v738 = vmax.f32 %v736, %v737
      %v739 = vrot.slane %v738, 2
      %v740 = vmax.f32 %v738, %v739
      %v741 = vrot.slane %v740, 1
      %v742 = vmax.f32 %v740, %v741
      %v743 = vsel %vm693, %v691, -inf
      %v744 = vrot.slane %v743, 4
      %v745 = vmax.f32 %v743, %v744
      %v746 = vrot.slane %v745, 2
      %v747 = vmax.f32 %v745, %v746
      %v748 = vrot.slane %v747, 1
      %v749 = vmax.f32 %v747, %v748
      %vm758 = vcmask 1041409
      %v759 = vsel %vm758, %v707, %v700
      %vm760 = vcmask 1042434
      %v761 = vsel %vm760, %v714, %v759
      %vm762 = vcmask 1043459
      %v763 = vsel %vm762, %v721, %v761
      %vm764 = vcmask 1044484
      %v765 = vsel %vm764, %v728, %v763
      %vm766 = vcmask 1045509
      %v767 = vsel %vm766, %v735, %v765
      %vm768 = vcmask 1046534
      %v769 = vsel %vm768, %v742, %v767
      %vm770 = vcmask 1047559
      %v771 = vsel %vm770, %v749, %v769
      %v773 = vmax.f32 %v692, %v771
      %v774 = vsub.f32 %v692, %v773
      %v775 = vmul.f32 %v774, 1.442695
      %v776 = vpow.pop %v775
      %v778 = vcombine.high %v773, %v773
      %v780 = vunpack.c.l.s4 1966171168
      %v781 = vunpack.c.0.s8 %v780
      %v782 = vlaneseq
      %v783 = vshrl.u32 %v782, 7
      %v784 = vsub.s32 %v781, %v783
      %v785 = vrot.slane %v773, %v784
      %v787 = vunpack.c.l.s4 1966171168
      %v788 = vunpack.c.0.s8 %v787
      %v789 = vlaneseq
      %v790 = vshrl.u32 %v789, 7
      %v791 = vsub.s32 %v788, %v790
      %v792 = vrot.slane %v778, %v791
      %v793 = vcombine.high %v785, %v785
      %v794 = vcombine.high %v792, %v792
      %v796 = vunpack.c.l.s4 1966171168
      %v797 = vunpack.c.0.s8 %v796
      %v798 = vlaneseq
      %v799 = vshrl.u32 %v798, 7
      %v800 = vsub.s32 %v797, %v799
      %v801 = vrot.slane %v785, %v800
      %v803 = vunpack.c.l.s4 1966171168
      %v804 = vunpack.c.0.s8 %v803
      %v805 = vlaneseq
      %v806 = vshrl.u32 %v805, 7
      %v807 = vsub.s32 %v804, %v806
      %v808 = vrot.slane %v792, %v807
      %v810 = vunpack.c.l.s4 1966171168
      %v811 = vunpack.c.0.s8 %v810
      %v812 = vlaneseq
      %v813 = vshrl.u32 %v812, 7
      %v814 = vsub.s32 %v811, %v813
      %v815 = vrot.slane %v793, %v814
      %v817 = vunpack.c.l.s4 1966171168
      %v818 = vunpack.c.0.s8 %v817
      %v819 = vlaneseq
      %v820 = vshrl.u32 %v819, 7
      %v821 = vsub.s32 %v818, %v820
      %v822 = vrot.slane %v794, %v821
      %v823 = vcombine.high %v801, %v801
      %v824 = vcombine.high %v808, %v808
      %v825 = vcombine.high %v815, %v815
      %v826 = vcombine.high %v822, %v822
      %v827 = vlaneseq
      %v828 = vshrl.u32 %v827, 7
      %v829 = vsub.s32 0, %v828
      %v830 = vrot.slane %v801, %v829
      %v831 = vlaneseq
      %v832 = vshrl.u32 %v831, 7
      %v833 = vsub.s32 0, %v832
      %v834 = vrot.slane %v815, %v833
      %v835 = vlaneseq
      %v836 = vshrl.u32 %v835, 7
      %v837 = vsub.s32 0, %v836
      %v838 = vrot.slane %v823, %v837
      %v839 = vlaneseq
      %v840 = vshrl.u32 %v839, 7
      %v841 = vsub.s32 0, %v840
      %v842 = vrot.slane %v825, %v841
      %v843 = vlaneseq
      %v844 = vshrl.u32 %v843, 7
      %v845 = vsub.s32 0, %v844
      %v846 = vrot.slane %v808, %v845
      %v847 = vlaneseq
      %v848 = vshrl.u32 %v847, 7
      %v849 = vsub.s32 0, %v848
      %v850 = vrot.slane %v822, %v849
      %v851 = vlaneseq
      %v852 = vshrl.u32 %v851, 7
      %v853 = vsub.s32 0, %v852
      %v854 = vrot.slane %v824, %v853
      %v855 = vlaneseq
      %v856 = vshrl.u32 %v855, 7
      %v857 = vsub.s32 0, %v856
      %v858 = vrot.slane %v826, %v857
      %v867 = vsub.f32 %v684, %v830
      %v868 = vsub.f32 %v685, %v834
      %v869 = vsub.f32 %v686, %v838
      %v870 = vsub.f32 %v687, %v842
      %v871 = vsub.f32 %v688, %v846
      %v872 = vsub.f32 %v689, %v850
      %v873 = vsub.f32 %v690, %v854
      %v874 = vsub.f32 %v691, %v858
      %v875 = vmul.f32 %v867, 1.442695
      %v876 = vpow.pop %v875
      %v877 = vmul.f32 %v868, 1.442695
      %v878 = vpow.pop %v877
      %v879 = vmul.f32 %v869, 1.442695
      %v880 = vpow.pop %v879
      %v881 = vmul.f32 %v870, 1.442695
      %v882 = vpow.pop %v881
      %v883 = vmul.f32 %v871, 1.442695
      %v884 = vpow.pop %v883
      %v885 = vmul.f32 %v872, 1.442695
      %v886 = vpow.pop %v885
      %v887 = vmul.f32 %v873, 1.442695
      %v888 = vpow.pop %v887
      %v889 = vmul.f32 %v874, 1.442695
      %v890 = vpow.pop %v889
      %v891 = vld [vmem:[#allocation3] sm:$0xff]
      %v892 = vmul.f32 %v776, %v891
      %v893 = vsel %vm693, %v876, 0.0
      %v894 = vrot.slane %v893, 4
      %v895 = vadd.f32 %v893, %v894
      %v896 = vrot.slane %v895, 2
      %v897 = vadd.f32 %v895, %v896
      %v898 = vrot.slane %v897, 1
      %v899 = vadd.f32 %v897, %v898
      %v900 = vsel %vm693, %v878, 0.0
      %v901 = vrot.slane %v900, 4
      %v902 = vadd.f32 %v900, %v901
      %v903 = vrot.slane %v902, 2
      %v904 = vadd.f32 %v902, %v903
      %v905 = vrot.slane %v904, 1
      %v906 = vadd.f32 %v904, %v905
      %v907 = vsel %vm693, %v880, 0.0
      %v908 = vrot.slane %v907, 4
      %v909 = vadd.f32 %v907, %v908
      %v910 = vrot.slane %v909, 2
      %v911 = vadd.f32 %v909, %v910
      %v912 = vrot.slane %v911, 1
      %v913 = vadd.f32 %v911, %v912
      %v914 = vsel %vm693, %v882, 0.0
      %v915 = vrot.slane %v914, 4
      %v916 = vadd.f32 %v914, %v915
      %v917 = vrot.slane %v916, 2
      %v918 = vadd.f32 %v916, %v917
      %v919 = vrot.slane %v918, 1
      %v920 = vadd.f32 %v918, %v919
      %v921 = vsel %vm693, %v884, 0.0
      %v922 = vrot.slane %v921, 4
      %v923 = vadd.f32 %v921, %v922
      %v924 = vrot.slane %v923, 2
      %v925 = vadd.f32 %v923, %v924
      %v926 = vrot.slane %v925, 1
      %v927 = vadd.f32 %v925, %v926
      %v928 = vsel %vm693, %v886, 0.0
      %v929 = vrot.slane %v928, 4
      %v930 = vadd.f32 %v928, %v929
      %v931 = vrot.slane %v930, 2
      %v932 = vadd.f32 %v930, %v931
      %v933 = vrot.slane %v932, 1
      %v934 = vadd.f32 %v932, %v933
      %v935 = vsel %vm693, %v888, 0.0
      %v936 = vrot.slane %v935, 4
      %v937 = vadd.f32 %v935, %v936
      %v938 = vrot.slane %v937, 2
      %v939 = vadd.f32 %v937, %v938
      %v940 = vrot.slane %v939, 1
      %v941 = vadd.f32 %v939, %v940
      %v942 = vsel %vm693, %v890, 0.0
      %v943 = vrot.slane %v942, 4
      %v944 = vadd.f32 %v942, %v943
      %v945 = vrot.slane %v944, 2
      %v946 = vadd.f32 %v944, %v945
      %v947 = vrot.slane %v946, 1
      %v948 = vadd.f32 %v946, %v947
      %v957 = vsel %vm758, %v906, %v899
      %v958 = vsel %vm760, %v913, %v957
      %v959 = vsel %vm762, %v920, %v958
      %v960 = vsel %vm764, %v927, %v959
      %v961 = vsel %vm766, %v934, %v960
      %v962 = vsel %vm768, %v941, %v961
      %v963 = vsel %vm770, %v948, %v962
      %v965 = vadd.f32 %v892, %v963
      %966 = vst.msk [vmem:[#allocation3] sm:$0xff] %vm693, %v965
      %v967 = vld [vmem:[#allocation4] sm:$0xff]
      %v968 = vmul.f32 %v776, %v967
      %v969 = vmul.f32 %v876, %v609
      %v970 = vmul.f32 %v878, %v610
      %v971 = vmul.f32 %v880, %v611
      %v972 = vmul.f32 %v882, %v612
      %v973 = vmul.f32 %v884, %v613
      %v974 = vmul.f32 %v886, %v614
      %v975 = vmul.f32 %v888, %v615
      %v976 = vmul.f32 %v890, %v616
      %v977 = vsel %vm693, %v969, 0.0
      %v978 = vrot.slane %v977, 4
      %v979 = vadd.f32 %v977, %v978
      %v980 = vrot.slane %v979, 2
      %v981 = vadd.f32 %v979, %v980
      %v982 = vrot.slane %v981, 1
      %v983 = vadd.f32 %v981, %v982
      %v984 = vsel %vm693, %v970, 0.0
      %v985 = vrot.slane %v984, 4
      %v986 = vadd.f32 %v984, %v985
      %v987 = vrot.slane %v986, 2
      %v988 = vadd.f32 %v986, %v987
      %v989 = vrot.slane %v988, 1
      %v990 = vadd.f32 %v988, %v989
      %v991 = vsel %vm693, %v971, 0.0
      %v992 = vrot.slane %v991, 4
      %v993 = vadd.f32 %v991, %v992
      %v994 = vrot.slane %v993, 2
      %v995 = vadd.f32 %v993, %v994
      %v996 = vrot.slane %v995, 1
      %v997 = vadd.f32 %v995, %v996
      %v998 = vsel %vm693, %v972, 0.0
      %v999 = vrot.slane %v998, 4
      %v1000 = vadd.f32 %v998, %v999
      %v1001 = vrot.slane %v1000, 2
      %v1002 = vadd.f32 %v1000, %v1001
      %v1003 = vrot.slane %v1002, 1
      %v1004 = vadd.f32 %v1002, %v1003
      %v1005 = vsel %vm693, %v973, 0.0
      %v1006 = vrot.slane %v1005, 4
      %v1007 = vadd.f32 %v1005, %v1006
      %v1008 = vrot.slane %v1007, 2
      %v1009 = vadd.f32 %v1007, %v1008
      %v1010 = vrot.slane %v1009, 1
      %v1011 = vadd.f32 %v1009, %v1010
      %v1012 = vsel %vm693, %v974, 0.0
      %v1013 = vrot.slane %v1012, 4
      %v1014 = vadd.f32 %v1012, %v1013
      %v1015 = vrot.slane %v1014, 2
      %v1016 = vadd.f32 %v1014, %v1015
      %v1017 = vrot.slane %v1016, 1
      %v1018 = vadd.f32 %v1016, %v1017
      %v1019 = vsel %vm693, %v975, 0.0
      %v1020 = vrot.slane %v1019, 4
      %v1021 = vadd.f32 %v1019, %v1020
      %v1022 = vrot.slane %v1021, 2
      %v1023 = vadd.f32 %v1021, %v1022
      %v1024 = vrot.slane %v1023, 1
      %v1025 = vadd.f32 %v1023, %v1024
      %v1026 = vsel %vm693, %v976, 0.0
      %v1027 = vrot.slane %v1026, 4
      %v1028 = vadd.f32 %v1026, %v1027
      %v1029 = vrot.slane %v1028, 2
      %v1030 = vadd.f32 %v1028, %v1029
      %v1031 = vrot.slane %v1030, 1
      %v1032 = vadd.f32 %v1030, %v1031
      %v1041 = vsel %vm758, %v990, %v983
      %v1042 = vsel %vm760, %v997, %v1041
      %v1043 = vsel %vm762, %v1004, %v1042
      %v1044 = vsel %vm764, %v1011, %v1043
      %v1045 = vsel %vm766, %v1018, %v1044
      %v1046 = vsel %vm768, %v1025, %v1045
      %v1047 = vsel %vm770, %v1032, %v1046
      %v1049 = vadd.f32 %v968, %v1047
      %1050 = vst.msk [vmem:[#allocation4] sm:$0xff] %vm693, %v1049
      %1051 = vst.msk [vmem:[#allocation2] sm:$0xff] %vm693, %v773
      %v1052 = vld [vmem:[#allocation5] sm:$0xff]
      %vm1053 = vcmask 64512
      %v1054 = vsel %vm1053, %v446, 0.0
      %1055 = vadd.xlane.f32.xlu0 %v1054
      %v1056 = vpop.xlane.xlu0 %1055
      %v1057 = vadd.f32 %v1052, %v1056
      %vm1058 = vcmask 7168
      %1059 = vst.msk [vmem:[#allocation5] sm:$0xff] %vm1058, %v1057
      // Predicated region
      $region53: #{dyresgen_forward.17} parent=47 // pred_check
        %p1060 = pneg %p422
      $region54: #{dyresgen_forward.17} parent=47 // pred_check_branch
        %1062 = sbr.rel (%p1060) target = $region56
      $region55: #{dyresgen_forward.17} parent=47 // pred_region
        %v1063 = vld [vmem:[#allocation3] sm:$0xff]
        %v1064 = vmax.f32 %v1063, 1e-16
        %v1065 = vrcp.pop %v1064
        %v1066 = vld [vmem:[#allocation4] sm:$0xff]
        %v1067 = vmul.f32 %v1066, %v1065
        %v1068 = vld [vmem:[#allocation5] sm:$0xff]
        %vm1069 = vcmp.gt.f32.partialorder %v1068, 0.0
        %v1070 = vsel %vm1069, 1, 0
        %1071 = vset.pattern.permute.xlu0 0
        %1072 = vperm.xlu0 %1071, %v1070
        %v1073 = vpop.permute.xlu0 %1072
        %vm1074 = vcmp.eq.s32.totalorder %v1073, 1
        %v1075 = vsel %vm1074, %v1067, 0.0
        %v1076 = vld [vmem:[%s393] sm:$0xff]
        %v1077 = vadd.f32 %v1075, %v1076
        %1078 = vst.msk [vmem:[%s421] sm:$0xff] %vm693, %v1077
      $region56: #{dyresgen_forward.17} parent=47 // pred_fallthru
        _
      %p1079 = scmp.lt.s32.totalorder %s24, 1
      %s1080 = scalar_select %p1079, %s24, 1
      %p1081 = scmp.lt.s32.totalorder %s25, 0
      %s1082 = scalar_select %p1081, %s25, 0
      %s1083 = sadd.s32 %s1082, %s1080
      %s1084 = smul.addr %s1083, 8
      %s1085 = scalar_lea.vmem %s7, %s1084
      // Predicated region
      $region57: #{dyresgen_forward.17} parent=47 // pred_check
        %p1086 = pneg %p237
      $region58: #{dyresgen_forward.17} parent=47 // pred_check_branch
        %1088 = sbr.rel (%p1086) target = $region60
      $region59: #{dyresgen_forward.17} parent=47 // pred_region
        _
      $region60: #{dyresgen_forward.17} parent=47 // pred_fallthru
        _
    $region48: #{dyresgen_forward.17} parent=5 // pred_fallthru
      _
    %p1089 = scmp.le.s32.totalorder 2, %s14
    // Predicated region
    $region61: #{dyresgen_forward.17} parent=5 // pred_check
      %p1090 = pneg %p1089
    $region62: #{dyresgen_forward.17} parent=5 // pred_check_branch
      %1092 = sbr.rel (%p1090) target = $region64
    $region63: #{dyresgen_forward.17} parent=5 // pred_region
      %s1093 = ssub.s32 %s14, 2
      // Predicated region
      $region65: #{dyresgen_forward.17} parent=63 // pred_check
        %p1094 = pneg %p243
      $region66: #{dyresgen_forward.17} parent=63 // pred_check_branch
        %1096 = sbr.rel (%p1094) target = $region68
      $region67: #{dyresgen_forward.17} parent=63 // pred_region
        %p1097 = scmp.lt.s32.totalorder %s27, 1
        %s1098 = scalar_select %p1097, %s27, 1
        %p1099 = scmp.lt.s32.totalorder %s28, 0
        %s1100 = scalar_select %p1099, %s28, 0
        %s1101 = sadd.s32 %s1100, %s1098
        %s1102 = smul.addr %s1101, 8
        %s1103 = scalar_lea.vmem %s7, %s1102
      $region68: #{dyresgen_forward.17} parent=63 // pred_fallthru
        _
    $region64: #{dyresgen_forward.17} parent=5 // pred_fallthru
      _
  $region6: #{dyresgen_forward.17} parent=0 // loop_footer
    %s18 = sadd.s32 1, %s14
  $region7: #{dyresgen_forward.17} parent=0 // loop_footer_branch
    %13 = sbr.rel target = $region3
  $region8: #{dyresgen_forward.17} parent=0 // loop_exit
    _

// kernel: dyresgen_forward.21
$region0: #{dyresgen_forward.21}
  #allocation0 [shape = 'u32[]', space=smem, size = 0x4, offset = 0x4, fixed_abs, tag = 'smem constant byte address 0x4 - core index']
  #allocation1 [shape = 'u32[144,128]{1,0:T(1,128)}', space=vmem, size = 0x12000, scoped, tag = 'internal scratch']
  %s0 = inlined_call_operand.vmem [shape: f32[2,4,16], index: 0, kind: input, shape index: {}]
  %s1 = inlined_call_operand.vmem [shape: bf16[16,32], index: 1, kind: input, shape index: {}]
  %s2 = inlined_call_operand.vmem [shape: f32[1,32], index: 2, kind: input, shape index: {}]
  %s3 = inlined_call_operand.vmem [shape: bf16[32,8], index: 3, kind: input, shape index: {}]
  %s4 = inlined_call_operand.vmem [shape: f32[1,8], index: 4, kind: input, shape index: {}]
  %s5 = inlined_call_operand.hbm [shape: f32[2,8], index: 5, kind: output, shape index: {}]
  %s6 = sld [smem:[#allocation0]]
  $region30: #{dyresgen_forward.21} parent=0
    _
  %s8 = ssub.s32 1, %s6
  %s9 = scalar_select 0, %s8, %s6
  $region1: #{dyresgen_forward.21} parent=0
    #allocation2 [shape = 'u8[1024]{0}', space=vmem, size = 0x400, scoped, tag = 'output window, operand 0, single buffered']
    #allocation3 [shape = 's32[1]{0}', space=sflag, size = 0x4, scoped, tag = 'scoped memory for dyresgen_forward.21']
    %10 = vsyncpa [#allocation3], 0
    // Predicated region
    $region2: #{dyresgen_forward.21} parent=1 // pred_check
      _
    $region3: #{dyresgen_forward.21} parent=1 // pred_check_branch
      %12 = sbr.rel (0) target = $region5
    $region4: #{dyresgen_forward.21} parent=1 // pred_region
      _
    $region5: #{dyresgen_forward.21} parent=1 // pred_fallthru
      _
    // Predicated region
    $region6: #{dyresgen_forward.21} parent=1 // pred_check
      _
    $region7: #{dyresgen_forward.21} parent=1 // pred_check_branch
      %14 = sbr.rel (0) target = $region9
    $region8: #{dyresgen_forward.21} parent=1 // pred_region
      _
    $region9: #{dyresgen_forward.21} parent=1 // pred_fallthru
      _
    // Predicated region
    $region10: #{dyresgen_forward.21} parent=1 // pred_check
      _
    $region11: #{dyresgen_forward.21} parent=1 // pred_check_branch
      %16 = sbr.rel (0) target = $region13
    $region12: #{dyresgen_forward.21} parent=1 // pred_region
      _
    $region13: #{dyresgen_forward.21} parent=1 // pred_fallthru
      _
    // Predicated region
    $region14: #{dyresgen_forward.21} parent=1 // pred_check
      _
    $region15: #{dyresgen_forward.21} parent=1 // pred_check_branch
      %18 = sbr.rel (0) target = $region17
    $region16: #{dyresgen_forward.21} parent=1 // pred_region
      _
    $region17: #{dyresgen_forward.21} parent=1 // pred_fallthru
      _
    // Predicated region
    $region18: #{dyresgen_forward.21} parent=1 // pred_check
      _
    $region19: #{dyresgen_forward.21} parent=1 // pred_check_branch
      %20 = sbr.rel (0) target = $region21
    $region20: #{dyresgen_forward.21} parent=1 // pred_region
      _
    $region21: #{dyresgen_forward.21} parent=1 // pred_fallthru
      _
    %v22 = vld [vmem:[%s0] sm:$0xf]
    %v23 = vld [vmem:[%s0 + $0x4] sm:$0xf]
    %vm24 = vcmask 125952
    %v25 = vsel %vm24, %v22, 0.0
    %v26 = vrot.slane %v25, 4
    %v27 = vadd.f32 %v25, %v26
    %v28 = vrot.slane %v27, 2
    %v29 = vadd.f32 %v27, %v28
    %v30 = vrot.slane %v29, 1
    %v31 = vadd.f32 %v29, %v30
    %v32 = vsel %vm24, %v23, 0.0
    %v33 = vrot.slane %v32, 4
    %v34 = vadd.f32 %v32, %v33
    %v35 = vrot.slane %v34, 2
    %v36 = vadd.f32 %v34, %v35
    %v37 = vrot.slane %v36, 1
    %v38 = vadd.f32 %v36, %v37
    %v39 = vrcp.pop 4.0
    %v40 = vmul.f32 %v31, %v39
    %v41 = vmul.f32 %v38, %v39
    %v42 = vld [vmem:[%s1] sm:$0xf]
    %v43 = vld [vmem:[%s1 + $0x4] sm:$0xf]
    %v44 = vld [vmem:[%s2] sm:$0x1]
    %v45 = vpack.c.bf16 %v40, %v40
    %v46 = vpack.c.bf16 %v41, %v41
    %v48 = vlaneseq
    %v49 = vshrl.u32 %v48, 7
    %v50 = vsub.s32 0, %v49
    %v51 = vrot.slane %v44, %v50
    %v55 = vunpack.c.l.b16 %v45
    %v56 = vunpack.c.l.b16 %v46
    %vm57 = vcmask 1041409
    %v58 = vsel %vm57, %v56, %v55
    %v59 = vpack.c.b16 %v58, %v58
    %v62 = vunpack.c.l.b16 %v42
    %v63 = vunpack.c.l.b16 %v43
    %v64 = vpack.c.b16 %v63, %v62
    %vm66 = vcmask 130048
    %v68 = vsel %vm66, %v59, 0
    %70 = vmatprep.subr.bf16.mxu0 0
    %71 = vmatpush1.bf16.msra.mxu0 %v64
    %72 = vmatprep.subr.bf16.mxu0 0
    %73 = vmatpush1.bf16.msra.mxu0 0
    %74 = vmatprep.subr.bf16.mxu0 0
    %75 = vmatpush1.bf16.msra.mxu0 0
    %76 = vmatprep.subr.bf16.mxu0 0
    %77 = vmatpush1.bf16.msra.mxu0 0
    %78 = vmatprep.subr.bf16.mxu0 0
    %79 = vmatpush1.bf16.msra.mxu0 0
    %80 = vmatprep.subr.bf16.mxu0 0
    %81 = vmatpush1.bf16.msra.mxu0 0
    %82 = vmatprep.subr.bf16.mxu0 0
    %83 = vmatpush1.bf16.msra.mxu0 0
    %84 = vmatprep.subr.bf16.mxu0 0
    %85 = vmatpush1.bf16.msra.mxu0 0
    %86 = vmatprep.subr.bf16.mxu0 0
    %87 = vmatpush1.bf16.msra.mxu0 0
    %88 = vmatprep.subr.bf16.mxu0 0
    %89 = vmatpush1.bf16.msra.mxu0 0
    %90 = vmatprep.subr.bf16.mxu0 0
    %91 = vmatpush1.bf16.msra.mxu0 0
    %92 = vmatprep.subr.bf16.mxu0 0
    %93 = vmatpush1.bf16.msra.mxu0 0
    %94 = vmatprep.subr.bf16.mxu0 0
    %95 = vmatpush1.bf16.msra.mxu0 0
    %96 = vmatprep.subr.bf16.mxu0 0
    %97 = vmatpush1.bf16.msra.mxu0 0
    %98 = vmatprep.subr.bf16.mxu0 0
    %99 = vmatpush1.bf16.msra.mxu0 0
    %100 = vmatprep.subr.bf16.mxu0 0
    %101 = vmatpush1.bf16.msra.mxu0 0
    %102 = vmatprep.mubr.bf16.mxu0 0
    %103 = vmatmul.mubr.bf16.gmra.mrb[0].mxu0 %v68
    %v104 = vpop.f32.mrb[0].mxu0
    %v105 = vadd.f32 %v51, %v104
    %v106 = vpop.f32.mrb[0].mxu0
    %v107 = vpop.f32.mrb[0].mxu0
    %v108 = vpop.f32.mrb[0].mxu0
    %109 = vdwg.mxu0
    %v110 = vmax.f32 %v105, 0.0
    %v111 = vld [vmem:[%s3] sm:$0xf]
    %v112 = vld [vmem:[%s3 + $0x4] sm:$0xf]
    %v113 = vld [vmem:[%s3 + $0x8] sm:$0xf]
    %v114 = vld [vmem:[%s3 + $0xc] sm:$0xf]
    %v115 = vld [vmem:[%s4] sm:$0x1]
    %v116 = vpack.c.bf16 %v110, %v110
    %v118 = vlaneseq
    %v119 = vshrl.u32 %v118, 7
    %v120 = vsub.s32 0, %v119
    %v121 = vrot.slane %v115, %v120
    %v127 = vunpack.c.l.b16 %v111
    %v128 = vunpack.c.l.b16 %v112
    %v129 = vunpack.c.l.b16 %v113
    %v130 = vunpack.c.l.b16 %v114
    %v131 = vpack.c.b16 %v128, %v127
    %v132 = vpack.c.b16 %v130, %v129
    %vm135 = vcmask 261120
    %v137 = vsel %vm135, %v116, 0
    %139 = vmatprep.subr.bf16.mxu0 0
    %140 = vmatpush1.bf16.msra.mxu0 %v131
    %141 = vmatprep.subr.bf16.mxu0 0
    %142 = vmatpush1.bf16.msra.mxu0 %v132
    %143 = vmatprep.subr.bf16.mxu0 0
    %144 = vmatpush1.bf16.msra.mxu0 0
    %145 = vmatprep.subr.bf16.mxu0 0
    %146 = vmatpush1.bf16.msra.mxu0 0
    %147 = vmatprep.subr.bf16.mxu0 0
    %148 = vmatpush1.bf16.msra.mxu0 0
    %149 = vmatprep.subr.bf16.mxu0 0
    %150 = vmatpush1.bf16.msra.mxu0 0
    %151 = vmatprep.subr.bf16.mxu0 0
    %152 = vmatpush1.bf16.msra.mxu0 0
    %153 = vmatprep.subr.bf16.mxu0 0
    %154 = vmatpush1.bf16.msra.mxu0 0
    %155 = vmatprep.subr.bf16.mxu0 0
    %156 = vmatpush1.bf16.msra.mxu0 0
    %157 = vmatprep.subr.bf16.mxu0 0
    %158 = vmatpush1.bf16.msra.mxu0 0
    %159 = vmatprep.subr.bf16.mxu0 0
    %160 = vmatpush1.bf16.msra.mxu0 0
    %161 = vmatprep.subr.bf16.mxu0 0
    %162 = vmatpush1.bf16.msra.mxu0 0
    %163 = vmatprep.subr.bf16.mxu0 0
    %164 = vmatpush1.bf16.msra.mxu0 0
    %165 = vmatprep.subr.bf16.mxu0 0
    %166 = vmatpush1.bf16.msra.mxu0 0
    %167 = vmatprep.subr.bf16.mxu0 0
    %168 = vmatpush1.bf16.msra.mxu0 0
    %169 = vmatprep.subr.bf16.mxu0 0
    %170 = vmatpush1.bf16.msra.mxu0 0
    %171 = vmatprep.mubr.bf16.mxu0 0
    %172 = vmatmul.mubr.bf16.gmra.mrb[0].mxu0 %v137
    %v173 = vpop.f32.mrb[0].mxu0
    %v174 = vadd.f32 %v121, %v173
    %v175 = vpop.f32.mrb[0].mxu0
    %v176 = vpop.f32.mrb[0].mxu0
    %v177 = vpop.f32.mrb[0].mxu0
    %178 = vdwg.mxu0
    %v179 = vmax.f32 %v174, 0.0
    %vm180 = vcmask 58368
    %181 = vst.msk [vmem:[#allocation2] sm:$0x3] %vm180, %v179
    // Predicated region
    $region22: #{dyresgen_forward.21} parent=1 // pred_check
      _
    $region23: #{dyresgen_forward.21} parent=1 // pred_check_branch
      %183 = sbr.rel (0) target = $region25
    $region24: #{dyresgen_forward.21} parent=1 // pred_region
      %s185 = ssub.s32 32, 32
      %186 = vsyncadd [#allocation3], %s185
      %s188 = sshll.u32 [#allocation2], 4
      %s189 = int_to_ptr.vmem [resolvable:$true] %s188
      %191 = dma.vmem_to_hbm [thread:$0]  %s189, 32, %s5, [#allocation3]
    $region25: #{dyresgen_forward.21} parent=1 // pred_fallthru
      _
    // Predicated region
    $region26: #{dyresgen_forward.21} parent=1 // pred_check
      _
    $region27: #{dyresgen_forward.21} parent=1 // pred_check_branch
      %193 = sbr.rel (0) target = $region29
    $region28: #{dyresgen_forward.21} parent=1 // pred_region
      %194 = dma.done [#allocation3], 32
    $region29: #{dyresgen_forward.21} parent=1 // pred_fallthru
      _
    %195 = vsyncpa [#allocation3], 1

</llo_original>
